<compile_context>
chip_gen: v7x
topology: tpu7x:2x2x1
jax: 0.10.0
libtpu: 0.0.40
codegen_flags: <defaults>
</compile_context>

<pallas_src>
import jax
import jax.numpy as jnp
from jax import lax
from jax.experimental import pallas as pl
from jax.experimental.pallas import tpu as pltpu


# ---------------------------------------------------------------------------
# Fused kernel: ConvTranspose2d(2,2) + concat + pad(1) + Conv2d(3) + ReLU
# ---------------------------------------------------------------------------
def _decoder_kernel(x1t_ref, x2_ref, wup_ref, bup_ref, wcu_ref, wcx_ref, bc_ref,
                    o_ref,
                    upadt_ref, x2pad_ref, imcu_ref, imcx_ref, acc_ref):
    # Per grid step (one image):
    #   x1t_ref : (1, H*W, Cin)      x1 with spatial on the sublane axis
    #   x2_ref  : (1, Cskip, OH, OW) skip tensor, native NCHW
    #   wup_ref : (4, Cin, Cout)     ConvTranspose2d weight, tap-major (kh*2+kw)
    #   bup_ref : (1, Cout)
    #   wcu_ref : (Cout, 9*Cout)     Conv2d weight, up-channel half, (tap, c)
    #   wcx_ref : (Cout, 9*Cskip)    Conv2d weight, skip-channel half
    #   bc_ref  : (Cout, 1)
    #   o_ref   : (1, Cout, OH, OW)  native NCHW output
    # Scratch (VMEM):
    #   upadt_ref: (FR*P, Cout)   padded up image, spatially flattened, transposed
    #   x2pad_ref: (Cskip, FR*P)  padded skip image, spatially flattened
    #   imcu_ref : (OH*P, 9*Cout) transposed im2col of the up channels
    #   imcx_ref : (9*Cskip, OH*P) im2col of the skip channels
    #   acc_ref  : (Cout, OH*P)   conv accumulator (valid cols = ow < OW)
    _, Cskip, OH, OW = x2_ref.shape
    H, W = OH // 2, OW // 2
    Cout = wup_ref.shape[2]
    P = OW + 2            # padded row pitch
    FR = OH + 3           # 1 halo row top, 1 bottom, +1 overrun row for windows

    # ---- 1. ConvTranspose2d(k=2, s=2): one tiny matmul per 2x2 tap ----------
    x1t = x1t_ref[0]                                              # (H*W, Cin)
    taps = []
    for k in range(4):                                            # k = kh*2+kw
        t_k = jnp.dot(x1t, wup_ref[k], preferred_element_type=jnp.float32)
        taps.append(t_k + bup_ref[...])                           # (H*W, Cout)

    # ---- 2. tap -> spatial interleave + zero pad, entirely in registers -----
    # Every reshape keeps the minor (channel) axis intact => row-space
    # regrouping only, no lane shuffles / relayout copies.
    def _pair(a, b):
        return jnp.concatenate([a[:, None, :], b[:, None, :]], axis=1)

    v0 = _pair(taps[0], taps[1]).reshape(H * OW, Cout)   # rows h*OW + (2w+kw), kh=0
    v1 = _pair(taps[2], taps[3]).reshape(H * OW, Cout)   # kh=1
    v0 = v0.reshape(H, OW, Cout)
    v1 = v1.reshape(H, OW, Cout)
    u = jnp.concatenate([v0[:, None], v1[:, None]], axis=1)       # (H, 2, OW, C)
    u = u.reshape(OH, OW, Cout)                                   # u[oh, ow, c]

    zcol = jnp.zeros((OH, 1, Cout), jnp.float32)
    u = jnp.concatenate([zcol, u, zcol], axis=1)                  # (OH, P, C)
    u = u.reshape(OH * P, Cout)
    ztop = jnp.zeros((P, Cout), jnp.float32)
    zbot = jnp.zeros((2 * P, Cout), jnp.float32)
    upadt_ref[...] = jnp.concatenate([ztop, u, zbot], axis=0)     # (FR*P, Cout)

    # ---- 3. zero-pad + flatten the skip tensor (consumed in native NCHW) ----
    x2pad_ref[...] = jnp.zeros_like(x2pad_ref)
    for r in range(OH):
        base = (r + 1) * P + 1
        x2pad_ref[:, base:base + OW] = x2_ref[0, :, r, :]

    # ---- 4. im2col: 9 contiguous window copies per source, then 2 matmuls ---
    # Flattened-padded-row trick: the window of tap (dh, dw) is a contiguous
    # slice at offset dh*P + dw; the OH*P columns include P-OW "wrap" columns
    # per row which are simply never written to the output.
    for dh in range(3):
        for dw in range(3):
            tap = dh * 3 + dw
            off = dh * P + dw
            imcu_ref[:, tap * Cout:(tap + 1) * Cout] = \
                upadt_ref[off:off + OH * P, :]
            imcx_ref[tap * Cskip:(tap + 1) * Cskip, :] = \
                x2pad_ref[:, off:off + OH * P]

    acc = lax.dot_general(wcu_ref[...], imcu_ref[...],              # A @ B^T
                          dimension_numbers=(((1,), (1,)), ((), ())),
                          preferred_element_type=jnp.float32)
    acc = acc + jnp.dot(wcx_ref[...], imcx_ref[...],
                        preferred_element_type=jnp.float32)
    acc_ref[...] = jnp.maximum(acc + bc_ref[...], 0.0)              # (Cout, OH*P)

    # ---- 5. store valid columns back as native NCHW rows ---------------------
    for oh in range(OH):
        o_ref[0, :, oh, :] = acc_ref[:, oh * P:oh * P + OW]


# ---------------------------------------------------------------------------
# Wrapper: weight packing (tiny, one-off) + the single fused pallas_call.
# ---------------------------------------------------------------------------
def decoder_forward(x1_nchw, x2_nchw, params):
    wt, bt = params["up_w"], params["up_b"]          # (Cin, Cout, 2, 2), (Cout,)
    wc, bcv = params["conv_w"], params["conv_b"]     # (Cout, Cmid, 3, 3), (Cout,)

    N, Cin, H, W = x1_nchw.shape
    Cout = wt.shape[1]
    Cskip = x2_nchw.shape[1]
    assert wc.shape[1] == Cout + Cskip, "middle_channels must equal Cout + Cskip"
    OH, OW = 2 * H, 2 * W
    P = OW + 2
    FR = OH + 3

    # Only remaining XLA glue: transpose of x1 (4x smaller than any other
    # tensor) so every in-kernel matmul uses a plain, well-supported layout.
    x1t = jnp.swapaxes(x1_nchw.reshape(N, Cin, H * W), 1, 2)       # (N, H*W, Cin)

    wup4 = jnp.transpose(wt, (2, 3, 0, 1)).reshape(4, Cin, Cout)    # tap-major
    bup = bt.reshape(1, Cout)
    wcu = jnp.transpose(wc[:, :Cout], (0, 2, 3, 1)).reshape(Cout, 9 * Cout)
    wcx = jnp.transpose(wc[:, Cout:], (0, 2, 3, 1)).reshape(Cout, 9 * Cskip)
    bcc = bcv.reshape(Cout, 1)

    return pl.pallas_call(
        _decoder_kernel,
        out_shape=jax.ShapeDtypeStruct((N, Cout, OH, OW), jnp.float32),
        grid=(N,),
        in_specs=[
            pl.BlockSpec((1, H * W, Cin), lambda n: (n, 0, 0)),
            pl.BlockSpec((1, Cskip, OH, OW), lambda n: (n, 0, 0, 0)),
            pl.BlockSpec((4, Cin, Cout), lambda n: (0, 0, 0)),
            pl.BlockSpec((1, Cout), lambda n: (0, 0)),
            pl.BlockSpec((Cout, 9 * Cout), lambda n: (0, 0)),
            pl.BlockSpec((Cout, 9 * Cskip), lambda n: (0, 0)),
            pl.BlockSpec((Cout, 1), lambda n: (0, 0)),
        ],
        out_specs=pl.BlockSpec((1, Cout, OH, OW), lambda n: (n, 0, 0, 0)),
        scratch_shapes=[
            pltpu.VMEM((FR * P, Cout), jnp.float32),     # padded up image (T)
            pltpu.VMEM((Cskip, FR * P), jnp.float32),    # padded skip image
            pltpu.VMEM((OH * P, 9 * Cout), jnp.float32), # im2col (up, transposed)
            pltpu.VMEM((9 * Cskip, OH * P), jnp.float32),# im2col (skip)
            pltpu.VMEM((Cout, OH * P), jnp.float32),     # conv accumulator
        ],
        compiler_params=pltpu.CompilerParams(dimension_semantics=("parallel",)),
    )(x1t, x2_nchw, wup4, bup, wcu, wcx, bcc)


# ---------------------------------------------------------------------------
# Pure-JAX reference implementing the exact PyTorch semantics (NCHW).
# ---------------------------------------------------------------------------
def decoder_reference(x1, x2, params):
    wt, bt = params["up_w"], params["up_b"]
    wc, bc = params["conv_w"], params["conv_b"]
    N, Cin, H, W = x1.shape
    Cout = wt.shape[1]
    OH, OW = 2 * H, 2 * W

    # ConvTranspose2d(k=2, s=2)
    y = jnp.einsum('nihw,iokl->nohwkl', x1, wt)
    y = jnp.transpose(y, (0, 1, 2, 4, 3, 5)).reshape(N, Cout, OH, OW)
    y = y + bt[None, :, None, None]

    xc = jnp.concatenate([y, x2], axis=1)
    xp = jnp.pad(xc, ((0, 0), (0, 0), (1, 1), (1, 1)))
    acc = jnp.zeros((N, Cout, OH, OW), jnp.float32)
    for kh in range(3):
        for kw in range(3):
            acc = acc + jnp.einsum('nchw,oc->nohw',
                                   xp[:, :, kh:kh + OH, kw:kw + OW],
                                   wc[:, :, kh, kw])
    return jnp.maximum(acc + bc[None, :, None, None], 0.0)


if __name__ == "__main__":
    # Decoder(in_channels=8, middle_channels=8, out_channels=4)
    N, Cin, H, W = 2, 8, 8, 8
    Cout = 4
    Cmid = 8
    Cskip = Cmid - Cout          # x2 supplies the remaining channels

    key = jax.random.PRNGKey(0)
    k1, k2, k3, k4, k5, k6 = jax.random.split(key, 6)

    params = {
        # nn.ConvTranspose2d(Cin, Cout, 2, 2): weight (Cin, Cout, 2, 2)
        "up_w": 0.1 * jax.random.normal(k1, (Cin, Cout, 2, 2), jnp.float32),
        "up_b": 0.1 * jax.random.normal(k2, (Cout,), jnp.float32),
        # nn.Conv2d(Cmid, Cout, 3, padding=1): weight (Cout, Cmid, 3, 3)
        "conv_w": 0.1 * jax.random.normal(k3, (Cout, Cmid, 3, 3), jnp.float32),
        "conv_b": 0.1 * jax.random.normal(k4, (Cout,), jnp.float32),
    }

    x1 = jax.random.normal(k5, (N, Cin, H, W), jnp.float32)            # NCHW
    x2 = jax.random.normal(k6, (N, Cskip, 2 * H, 2 * W), jnp.float32)  # NCHW

    out = jax.jit(decoder_forward)(x1, x2, params)
    out = jax.block_until_ready(out)

    ref = decoder_reference(x1, x2, params)
    assert out.shape == (N, Cout, 2 * H, 2 * W), out.shape
    assert jnp.allclose(out, ref, rtol=1e-4, atol=1e-4), \
        f"max abs err {jnp.max(jnp.abs(out - ref))}"

    print("KERNEL_OK")
</pallas_src>

<mosaic_0001>
module attributes {stable_mosaic.version = 11 : i64} {
  func.func @_decoder_kernel(%arg0: i32, %arg1: memref<1x64x8xf32, #tpu.memory_space<vmem>>, %arg2: memref<1x4x16x16xf32, #tpu.memory_space<vmem>>, %arg3: memref<4x8x4xf32, #tpu.memory_space<vmem>>, %arg4: memref<1x4xf32, #tpu.memory_space<vmem>>, %arg5: memref<4x36xf32, #tpu.memory_space<vmem>>, %arg6: memref<4x36xf32, #tpu.memory_space<vmem>>, %arg7: memref<4x1xf32, #tpu.memory_space<vmem>>, %arg8: memref<1x4x16x16xf32, #tpu.memory_space<vmem>>, %arg9: memref<342x4xf32, #tpu.memory_space<vmem>>, %arg10: memref<4x342xf32, #tpu.memory_space<vmem>>, %arg11: memref<288x36xf32, #tpu.memory_space<vmem>>, %arg12: memref<36x288xf32, #tpu.memory_space<vmem>>, %arg13: memref<4x288xf32, #tpu.memory_space<vmem>>) attributes {dimension_semantics = [#tpu.dimension_semantics<parallel>], iteration_bounds = array<i64: 2>, scalar_prefetch = 0 : i64, scratch_operands = 5 : i64, tpu.core_type = #tpu.core_type<tc>, window_params = [{transform_indices = @transform_0, window_bounds = array<i64: 1, 64, 8>}, {transform_indices = @transform_1, window_bounds = array<i64: 1, 4, 16, 16>}, {pipeline_mode = #tpu.pipeline_mode<synchronous>, transform_indices = @transform_2, window_bounds = array<i64: 4, 8, 4>}, {pipeline_mode = #tpu.pipeline_mode<synchronous>, transform_indices = @transform_3, window_bounds = array<i64: 1, 4>}, {pipeline_mode = #tpu.pipeline_mode<synchronous>, transform_indices = @transform_4, window_bounds = array<i64: 4, 36>}, {pipeline_mode = #tpu.pipeline_mode<synchronous>, transform_indices = @transform_5, window_bounds = array<i64: 4, 36>}, {pipeline_mode = #tpu.pipeline_mode<synchronous>, transform_indices = @transform_6, window_bounds = array<i64: 4, 1>}, {transform_indices = @transform_7, window_bounds = array<i64: 1, 4, 16, 16>}]} {
    %c0 = arith.constant 0 : index
    %c0_0 = arith.constant 0 : index
    %c0_1 = arith.constant 0 : index
    %0 = vector.load %arg1[%c0, %c0_0, %c0_1] : memref<1x64x8xf32, #tpu.memory_space<vmem>>, vector<1x64x8xf32>
    %1 = vector.shape_cast %0 : vector<1x64x8xf32> to vector<64x8xf32>
    %c0_2 = arith.constant 0 : index
    %c0_3 = arith.constant 0 : index
    %c0_4 = arith.constant 0 : index
    %2 = vector.load %arg3[%c0_2, %c0_3, %c0_4] : memref<4x8x4xf32, #tpu.memory_space<vmem>>, vector<1x8x4xf32>
    %3 = vector.shape_cast %2 : vector<1x8x4xf32> to vector<8x4xf32>
    %cst = arith.constant dense<0.000000e+00> : vector<64x4xf32>
    %4 = tpu.matmul %1, %3, %cst {dimension_numbers = #tpu.dot_dimension_numbers<[1], [0], [0], [1], [0, 0, 1, 1], [], []>} : vector<64x8xf32>, vector<8x4xf32>, vector<64x4xf32> -> vector<64x4xf32>
    %c0_5 = arith.constant 0 : index
    %c0_6 = arith.constant 0 : index
    %5 = vector.load %arg4[%c0_5, %c0_6] : memref<1x4xf32, #tpu.memory_space<vmem>>, vector<1x4xf32>
    %6 = vector.broadcast %5 : vector<1x4xf32> to vector<64x4xf32>
    %7 = arith.addf %4, %6 : vector<64x4xf32>
    %c1 = arith.constant 1 : index
    %c0_7 = arith.constant 0 : index
    %c0_8 = arith.constant 0 : index
    %8 = vector.load %arg3[%c1, %c0_7, %c0_8] : memref<4x8x4xf32, #tpu.memory_space<vmem>>, vector<1x8x4xf32>
    %9 = vector.shape_cast %8 : vector<1x8x4xf32> to vector<8x4xf32>
    %cst_9 = arith.constant dense<0.000000e+00> : vector<64x4xf32>
    %10 = tpu.matmul %1, %9, %cst_9 {dimension_numbers = #tpu.dot_dimension_numbers<[1], [0], [0], [1], [0, 0, 1, 1], [], []>} : vector<64x8xf32>, vector<8x4xf32>, vector<64x4xf32> -> vector<64x4xf32>
    %c0_10 = arith.constant 0 : index
    %c0_11 = arith.constant 0 : index
    %11 = vector.load %arg4[%c0_10, %c0_11] : memref<1x4xf32, #tpu.memory_space<vmem>>, vector<1x4xf32>
    %12 = vector.broadcast %11 : vector<1x4xf32> to vector<64x4xf32>
    %13 = arith.addf %10, %12 : vector<64x4xf32>
    %c2 = arith.constant 2 : index
    %c0_12 = arith.constant 0 : index
    %c0_13 = arith.constant 0 : index
    %14 = vector.load %arg3[%c2, %c0_12, %c0_13] : memref<4x8x4xf32, #tpu.memory_space<vmem>>, vector<1x8x4xf32>
    %15 = vector.shape_cast %14 : vector<1x8x4xf32> to vector<8x4xf32>
    %cst_14 = arith.constant dense<0.000000e+00> : vector<64x4xf32>
    %16 = tpu.matmul %1, %15, %cst_14 {dimension_numbers = #tpu.dot_dimension_numbers<[1], [0], [0], [1], [0, 0, 1, 1], [], []>} : vector<64x8xf32>, vector<8x4xf32>, vector<64x4xf32> -> vector<64x4xf32>
    %c0_15 = arith.constant 0 : index
    %c0_16 = arith.constant 0 : index
    %17 = vector.load %arg4[%c0_15, %c0_16] : memref<1x4xf32, #tpu.memory_space<vmem>>, vector<1x4xf32>
    %18 = vector.broadcast %17 : vector<1x4xf32> to vector<64x4xf32>
    %19 = arith.addf %16, %18 : vector<64x4xf32>
    %c3 = arith.constant 3 : index
    %c0_17 = arith.constant 0 : index
    %c0_18 = arith.constant 0 : index
    %20 = vector.load %arg3[%c3, %c0_17, %c0_18] : memref<4x8x4xf32, #tpu.memory_space<vmem>>, vector<1x8x4xf32>
    %21 = vector.shape_cast %20 : vector<1x8x4xf32> to vector<8x4xf32>
    %cst_19 = arith.constant dense<0.000000e+00> : vector<64x4xf32>
    %22 = tpu.matmul %1, %21, %cst_19 {dimension_numbers = #tpu.dot_dimension_numbers<[1], [0], [0], [1], [0, 0, 1, 1], [], []>} : vector<64x8xf32>, vector<8x4xf32>, vector<64x4xf32> -> vector<64x4xf32>
    %c0_20 = arith.constant 0 : index
    %c0_21 = arith.constant 0 : index
    %23 = vector.load %arg4[%c0_20, %c0_21] : memref<1x4xf32, #tpu.memory_space<vmem>>, vector<1x4xf32>
    %24 = vector.broadcast %23 : vector<1x4xf32> to vector<64x4xf32>
    %25 = arith.addf %22, %24 : vector<64x4xf32>
    %26 = vector.shape_cast %7 : vector<64x4xf32> to vector<64x1x4xf32>
    %27 = vector.shape_cast %13 : vector<64x4xf32> to vector<64x1x4xf32>
    %28 = tpu.concatenate %26, %27 in 1 : vector<64x1x4xf32>, vector<64x1x4xf32> -> vector<64x2x4xf32>
    %29 = vector.shape_cast %28 : vector<64x2x4xf32> to vector<128x4xf32>
    %30 = vector.shape_cast %19 : vector<64x4xf32> to vector<64x1x4xf32>
    %31 = vector.shape_cast %25 : vector<64x4xf32> to vector<64x1x4xf32>
    %32 = tpu.concatenate %30, %31 in 1 : vector<64x1x4xf32>, vector<64x1x4xf32> -> vector<64x2x4xf32>
    %33 = vector.shape_cast %32 : vector<64x2x4xf32> to vector<128x4xf32>
    %34 = vector.shape_cast %29 : vector<128x4xf32> to vector<8x16x4xf32>
    %35 = vector.shape_cast %33 : vector<128x4xf32> to vector<8x16x4xf32>
    %36 = vector.shape_cast %34 : vector<8x16x4xf32> to vector<8x1x16x4xf32>
    %37 = vector.shape_cast %35 : vector<8x16x4xf32> to vector<8x1x16x4xf32>
    %38 = tpu.concatenate %36, %37 in 1 : vector<8x1x16x4xf32>, vector<8x1x16x4xf32> -> vector<8x2x16x4xf32>
    %39 = vector.shape_cast %38 : vector<8x2x16x4xf32> to vector<16x16x4xf32>
    %cst_22 = arith.constant 0.000000e+00 : f32
    %40 = vector.broadcast %cst_22 : f32 to vector<16x1x4xf32>
    %41 = tpu.concatenate %40, %39, %40 in 1 : vector<16x1x4xf32>, vector<16x16x4xf32>, vector<16x1x4xf32> -> vector<16x18x4xf32>
    %42 = vector.shape_cast %41 : vector<16x18x4xf32> to vector<288x4xf32>
    %cst_23 = arith.constant 0.000000e+00 : f32
    %43 = vector.broadcast %cst_23 : f32 to vector<18x4xf32>
    %cst_24 = arith.constant 0.000000e+00 : f32
    %44 = vector.broadcast %cst_24 : f32 to vector<36x4xf32>
    %45 = tpu.concatenate %43, %42, %44 in 0 : vector<18x4xf32>, vector<288x4xf32>, vector<36x4xf32> -> vector<342x4xf32>
    %c0_25 = arith.constant 0 : index
    %c0_26 = arith.constant 0 : index
    %46 = vector.load %arg9[%c0_25, %c0_26] : memref<342x4xf32, #tpu.memory_space<vmem>>, vector<342x4xf32>
    tpu.vector_store %arg9[%c0_25, %c0_26], %45 {strides = array<i32>} : memref<342x4xf32, #tpu.memory_space<vmem>>, vector<342x4xf32>,
    %cst_27 = arith.constant 0.000000e+00 : f32
    %47 = vector.broadcast %cst_27 : f32 to vector<4x342xf32>
    %c0_28 = arith.constant 0 : index
    %c0_29 = arith.constant 0 : index
    %48 = vector.load %arg10[%c0_28, %c0_29] : memref<4x342xf32, #tpu.memory_space<vmem>>, vector<4x342xf32>
    tpu.vector_store %arg10[%c0_28, %c0_29], %47 {strides = array<i32>} : memref<4x342xf32, #tpu.memory_space<vmem>>, vector<4x342xf32>,
    %c0_30 = arith.constant 0 : index
    %c0_31 = arith.constant 0 : index
    %c0_32 = arith.constant 0 : index
    %c0_33 = arith.constant 0 : index
    %49 = vector.load %arg2[%c0_30, %c0_31, %c0_32, %c0_33] : memref<1x4x16x16xf32, #tpu.memory_space<vmem>>, vector<1x4x1x16xf32>
    %50 = vector.shape_cast %49 : vector<1x4x1x16xf32> to vector<4x16xf32>
    %c0_34 = arith.constant 0 : index
    %c19 = arith.constant 19 : index
    %51 = vector.load %arg10[%c0_34, %c19] : memref<4x342xf32, #tpu.memory_space<vmem>>, vector<4x16xf32>
    tpu.vector_store %arg10[%c0_34, %c19], %50 {strides = array<i32>} : memref<4x342xf32, #tpu.memory_space<vmem>>, vector<4x16xf32>,
    %c0_35 = arith.constant 0 : index
    %c0_36 = arith.constant 0 : index
    %c1_37 = arith.constant 1 : index
    %c0_38 = arith.constant 0 : index
    %52 = vector.load %arg2[%c0_35, %c0_36, %c1_37, %c0_38] : memref<1x4x16x16xf32, #tpu.memory_space<vmem>>, vector<1x4x1x16xf32>
    %53 = vector.shape_cast %52 : vector<1x4x1x16xf32> to vector<4x16xf32>
    %c0_39 = arith.constant 0 : index
    %c37 = arith.constant 37 : index
    %54 = vector.load %arg10[%c0_39, %c37] : memref<4x342xf32, #tpu.memory_space<vmem>>, vector<4x16xf32>
    tpu.vector_store %arg10[%c0_39, %c37], %53 {strides = array<i32>} : memref<4x342xf32, #tpu.memory_space<vmem>>, vector<4x16xf32>,
    %c0_40 = arith.constant 0 : index
    %c0_41 = arith.constant 0 : index
    %c2_42 = arith.constant 2 : index
    %c0_43 = arith.constant 0 : index
    %55 = vector.load %arg2[%c0_40, %c0_41, %c2_42, %c0_43] : memref<1x4x16x16xf32, #tpu.memory_space<vmem>>, vector<1x4x1x16xf32>
    %56 = vector.shape_cast %55 : vector<1x4x1x16xf32> to vector<4x16xf32>
    %c0_44 = arith.constant 0 : index
    %c55 = arith.constant 55 : index
    %57 = vector.load %arg10[%c0_44, %c55] : memref<4x342xf32, #tpu.memory_space<vmem>>, vector<4x16xf32>
    tpu.vector_store %arg10[%c0_44, %c55], %56 {strides = array<i32>} : memref<4x342xf32, #tpu.memory_space<vmem>>, vector<4x16xf32>,
    %c0_45 = arith.constant 0 : index
    %c0_46 = arith.constant 0 : index
    %c3_47 = arith.constant 3 : index
    %c0_48 = arith.constant 0 : index
    %58 = vector.load %arg2[%c0_45, %c0_46, %c3_47, %c0_48] : memref<1x4x16x16xf32, #tpu.memory_space<vmem>>, vector<1x4x1x16xf32>
    %59 = vector.shape_cast %58 : vector<1x4x1x16xf32> to vector<4x16xf32>
    %c0_49 = arith.constant 0 : index
    %c73 = arith.constant 73 : index
    %60 = vector.load %arg10[%c0_49, %c73] : memref<4x342xf32, #tpu.memory_space<vmem>>, vector<4x16xf32>
    tpu.vector_store %arg10[%c0_49, %c73], %59 {strides = array<i32>} : memref<4x342xf32, #tpu.memory_space<vmem>>, vector<4x16xf32>,
    %c0_50 = arith.constant 0 : index
    %c0_51 = arith.constant 0 : index
    %c4 = arith.constant 4 : index
    %c0_52 = arith.constant 0 : index
    %61 = vector.load %arg2[%c0_50, %c0_51, %c4, %c0_52] : memref<1x4x16x16xf32, #tpu.memory_space<vmem>>, vector<1x4x1x16xf32>
    %62 = vector.shape_cast %61 : vector<1x4x1x16xf32> to vector<4x16xf32>
    %c0_53 = arith.constant 0 : index
    %c91 = arith.constant 91 : index
    %63 = vector.load %arg10[%c0_53, %c91] : memref<4x342xf32, #tpu.memory_space<vmem>>, vector<4x16xf32>
    tpu.vector_store %arg10[%c0_53, %c91], %62 {strides = array<i32>} : memref<4x342xf32, #tpu.memory_space<vmem>>, vector<4x16xf32>,
    %c0_54 = arith.constant 0 : index
    %c0_55 = arith.constant 0 : index
    %c5 = arith.constant 5 : index
    %c0_56 = arith.constant 0 : index
    %64 = vector.load %arg2[%c0_54, %c0_55, %c5, %c0_56] : memref<1x4x16x16xf32, #tpu.memory_space<vmem>>, vector<1x4x1x16xf32>
    %65 = vector.shape_cast %64 : vector<1x4x1x16xf32> to vector<4x16xf32>
    %c0_57 = arith.constant 0 : index
    %c109 = arith.constant 109 : index
    %66 = vector.load %arg10[%c0_57, %c109] : memref<4x342xf32, #tpu.memory_space<vmem>>, vector<4x16xf32>
    tpu.vector_store %arg10[%c0_57, %c109], %65 {strides = array<i32>} : memref<4x342xf32, #tpu.memory_space<vmem>>, vector<4x16xf32>,
    %c0_58 = arith.constant 0 : index
    %c0_59 = arith.constant 0 : index
    %c6 = arith.constant 6 : index
    %c0_60 = arith.constant 0 : index
    %67 = vector.load %arg2[%c0_58, %c0_59, %c6, %c0_60] : memref<1x4x16x16xf32, #tpu.memory_space<vmem>>, vector<1x4x1x16xf32>
    %68 = vector.shape_cast %67 : vector<1x4x1x16xf32> to vector<4x16xf32>
    %c0_61 = arith.constant 0 : index
    %c127 = arith.constant 127 : index
    %69 = vector.load %arg10[%c0_61, %c127] : memref<4x342xf32, #tpu.memory_space<vmem>>, vector<4x16xf32>
    tpu.vector_store %arg10[%c0_61, %c127], %68 {strides = array<i32>} : memref<4x342xf32, #tpu.memory_space<vmem>>, vector<4x16xf32>,
    %c0_62 = arith.constant 0 : index
    %c0_63 = arith.constant 0 : index
    %c7 = arith.constant 7 : index
    %c0_64 = arith.constant 0 : index
    %70 = vector.load %arg2[%c0_62, %c0_63, %c7, %c0_64] : memref<1x4x16x16xf32, #tpu.memory_space<vmem>>, vector<1x4x1x16xf32>
    %71 = vector.shape_cast %70 : vector<1x4x1x16xf32> to vector<4x16xf32>
    %c0_65 = arith.constant 0 : index
    %c145 = arith.constant 145 : index
    %72 = vector.load %arg10[%c0_65, %c145] : memref<4x342xf32, #tpu.memory_space<vmem>>, vector<4x16xf32>
    tpu.vector_store %arg10[%c0_65, %c145], %71 {strides = array<i32>} : memref<4x342xf32, #tpu.memory_space<vmem>>, vector<4x16xf32>,
    %c0_66 = arith.constant 0 : index
    %c0_67 = arith.constant 0 : index
    %c8 = arith.constant 8 : index
    %c0_68 = arith.constant 0 : index
    %73 = vector.load %arg2[%c0_66, %c0_67, %c8, %c0_68] : memref<1x4x16x16xf32, #tpu.memory_space<vmem>>, vector<1x4x1x16xf32>
    %74 = vector.shape_cast %73 : vector<1x4x1x16xf32> to vector<4x16xf32>
    %c0_69 = arith.constant 0 : index
    %c163 = arith.constant 163 : index
    %75 = vector.load %arg10[%c0_69, %c163] : memref<4x342xf32, #tpu.memory_space<vmem>>, vector<4x16xf32>
    tpu.vector_store %arg10[%c0_69, %c163], %74 {strides = array<i32>} : memref<4x342xf32, #tpu.memory_space<vmem>>, vector<4x16xf32>,
    %c0_70 = arith.constant 0 : index
    %c0_71 = arith.constant 0 : index
    %c9 = arith.constant 9 : index
    %c0_72 = arith.constant 0 : index
    %76 = vector.load %arg2[%c0_70, %c0_71, %c9, %c0_72] : memref<1x4x16x16xf32, #tpu.memory_space<vmem>>, vector<1x4x1x16xf32>
    %77 = vector.shape_cast %76 : vector<1x4x1x16xf32> to vector<4x16xf32>
    %c0_73 = arith.constant 0 : index
    %c181 = arith.constant 181 : index
    %78 = vector.load %arg10[%c0_73, %c181] : memref<4x342xf32, #tpu.memory_space<vmem>>, vector<4x16xf32>
    tpu.vector_store %arg10[%c0_73, %c181], %77 {strides = array<i32>} : memref<4x342xf32, #tpu.memory_space<vmem>>, vector<4x16xf32>,
    %c0_74 = arith.constant 0 : index
    %c0_75 = arith.constant 0 : index
    %c10 = arith.constant 10 : index
    %c0_76 = arith.constant 0 : index
    %79 = vector.load %arg2[%c0_74, %c0_75, %c10, %c0_76] : memref<1x4x16x16xf32, #tpu.memory_space<vmem>>, vector<1x4x1x16xf32>
    %80 = vector.shape_cast %79 : vector<1x4x1x16xf32> to vector<4x16xf32>
    %c0_77 = arith.constant 0 : index
    %c199 = arith.constant 199 : index
    %81 = vector.load %arg10[%c0_77, %c199] : memref<4x342xf32, #tpu.memory_space<vmem>>, vector<4x16xf32>
    tpu.vector_store %arg10[%c0_77, %c199], %80 {strides = array<i32>} : memref<4x342xf32, #tpu.memory_space<vmem>>, vector<4x16xf32>,
    %c0_78 = arith.constant 0 : index
    %c0_79 = arith.constant 0 : index
    %c11 = arith.constant 11 : index
    %c0_80 = arith.constant 0 : index
    %82 = vector.load %arg2[%c0_78, %c0_79, %c11, %c0_80] : memref<1x4x16x16xf32, #tpu.memory_space<vmem>>, vector<1x4x1x16xf32>
    %83 = vector.shape_cast %82 : vector<1x4x1x16xf32> to vector<4x16xf32>
    %c0_81 = arith.constant 0 : index
    %c217 = arith.constant 217 : index
    %84 = vector.load %arg10[%c0_81, %c217] : memref<4x342xf32, #tpu.memory_space<vmem>>, vector<4x16xf32>
    tpu.vector_store %arg10[%c0_81, %c217], %83 {strides = array<i32>} : memref<4x342xf32, #tpu.memory_space<vmem>>, vector<4x16xf32>,
    %c0_82 = arith.constant 0 : index
    %c0_83 = arith.constant 0 : index
    %c12 = arith.constant 12 : index
    %c0_84 = arith.constant 0 : index
    %85 = vector.load %arg2[%c0_82, %c0_83, %c12, %c0_84] : memref<1x4x16x16xf32, #tpu.memory_space<vmem>>, vector<1x4x1x16xf32>
    %86 = vector.shape_cast %85 : vector<1x4x1x16xf32> to vector<4x16xf32>
    %c0_85 = arith.constant 0 : index
    %c235 = arith.constant 235 : index
    %87 = vector.load %arg10[%c0_85, %c235] : memref<4x342xf32, #tpu.memory_space<vmem>>, vector<4x16xf32>
    tpu.vector_store %arg10[%c0_85, %c235], %86 {strides = array<i32>} : memref<4x342xf32, #tpu.memory_space<vmem>>, vector<4x16xf32>,
    %c0_86 = arith.constant 0 : index
    %c0_87 = arith.constant 0 : index
    %c13 = arith.constant 13 : index
    %c0_88 = arith.constant 0 : index
    %88 = vector.load %arg2[%c0_86, %c0_87, %c13, %c0_88] : memref<1x4x16x16xf32, #tpu.memory_space<vmem>>, vector<1x4x1x16xf32>
    %89 = vector.shape_cast %88 : vector<1x4x1x16xf32> to vector<4x16xf32>
    %c0_89 = arith.constant 0 : index
    %c253 = arith.constant 253 : index
    %90 = vector.load %arg10[%c0_89, %c253] : memref<4x342xf32, #tpu.memory_space<vmem>>, vector<4x16xf32>
    tpu.vector_store %arg10[%c0_89, %c253], %89 {strides = array<i32>} : memref<4x342xf32, #tpu.memory_space<vmem>>, vector<4x16xf32>,
    %c0_90 = arith.constant 0 : index
    %c0_91 = arith.constant 0 : index
    %c14 = arith.constant 14 : index
    %c0_92 = arith.constant 0 : index
    %91 = vector.load %arg2[%c0_90, %c0_91, %c14, %c0_92] : memref<1x4x16x16xf32, #tpu.memory_space<vmem>>, vector<1x4x1x16xf32>
    %92 = vector.shape_cast %91 : vector<1x4x1x16xf32> to vector<4x16xf32>
    %c0_93 = arith.constant 0 : index
    %c271 = arith.constant 271 : index
    %93 = vector.load %arg10[%c0_93, %c271] : memref<4x342xf32, #tpu.memory_space<vmem>>, vector<4x16xf32>
    tpu.vector_store %arg10[%c0_93, %c271], %92 {strides = array<i32>} : memref<4x342xf32, #tpu.memory_space<vmem>>, vector<4x16xf32>,
    %c0_94 = arith.constant 0 : index
    %c0_95 = arith.constant 0 : index
    %c15 = arith.constant 15 : index
    %c0_96 = arith.constant 0 : index
    %94 = vector.load %arg2[%c0_94, %c0_95, %c15, %c0_96] : memref<1x4x16x16xf32, #tpu.memory_space<vmem>>, vector<1x4x1x16xf32>
    %95 = vector.shape_cast %94 : vector<1x4x1x16xf32> to vector<4x16xf32>
    %c0_97 = arith.constant 0 : index
    %c289 = arith.constant 289 : index
    %96 = vector.load %arg10[%c0_97, %c289] : memref<4x342xf32, #tpu.memory_space<vmem>>, vector<4x16xf32>
    tpu.vector_store %arg10[%c0_97, %c289], %95 {strides = array<i32>} : memref<4x342xf32, #tpu.memory_space<vmem>>, vector<4x16xf32>,
    %c0_98 = arith.constant 0 : index
    %c0_99 = arith.constant 0 : index
    %97 = vector.load %arg9[%c0_98, %c0_99] : memref<342x4xf32, #tpu.memory_space<vmem>>, vector<288x4xf32>
    %c0_100 = arith.constant 0 : index
    %c0_101 = arith.constant 0 : index
    %98 = vector.load %arg11[%c0_100, %c0_101] : memref<288x36xf32, #tpu.memory_space<vmem>>, vector<288x4xf32>
    tpu.vector_store %arg11[%c0_100, %c0_101], %97 {strides = array<i32>} : memref<288x36xf32, #tpu.memory_space<vmem>>, vector<288x4xf32>,
    %c0_102 = arith.constant 0 : index
    %c0_103 = arith.constant 0 : index
    %99 = vector.load %arg10[%c0_102, %c0_103] : memref<4x342xf32, #tpu.memory_space<vmem>>, vector<4x288xf32>
    %c0_104 = arith.constant 0 : index
    %c0_105 = arith.constant 0 : index
    %100 = vector.load %arg12[%c0_104, %c0_105] : memref<36x288xf32, #tpu.memory_space<vmem>>, vector<4x288xf32>
    tpu.vector_store %arg12[%c0_104, %c0_105], %99 {strides = array<i32>} : memref<36x288xf32, #tpu.memory_space<vmem>>, vector<4x288xf32>,
    %c1_106 = arith.constant 1 : index
    %c0_107 = arith.constant 0 : index
    %101 = vector.load %arg9[%c1_106, %c0_107] : memref<342x4xf32, #tpu.memory_space<vmem>>, vector<288x4xf32>
    %c0_108 = arith.constant 0 : index
    %c4_109 = arith.constant 4 : index
    %102 = vector.load %arg11[%c0_108, %c4_109] : memref<288x36xf32, #tpu.memory_space<vmem>>, vector<288x4xf32>
    tpu.vector_store %arg11[%c0_108, %c4_109], %101 {strides = array<i32>} : memref<288x36xf32, #tpu.memory_space<vmem>>, vector<288x4xf32>,
    %c0_110 = arith.constant 0 : index
    %c1_111 = arith.constant 1 : index
    %103 = vector.load %arg10[%c0_110, %c1_111] : memref<4x342xf32, #tpu.memory_space<vmem>>, vector<4x288xf32>
    %c4_112 = arith.constant 4 : index
    %c0_113 = arith.constant 0 : index
    %104 = vector.load %arg12[%c4_112, %c0_113] : memref<36x288xf32, #tpu.memory_space<vmem>>, vector<4x288xf32>
    tpu.vector_store %arg12[%c4_112, %c0_113], %103 {strides = array<i32>} : memref<36x288xf32, #tpu.memory_space<vmem>>, vector<4x288xf32>,
    %c2_114 = arith.constant 2 : index
    %c0_115 = arith.constant 0 : index
    %105 = vector.load %arg9[%c2_114, %c0_115] : memref<342x4xf32, #tpu.memory_space<vmem>>, vector<288x4xf32>
    %c0_116 = arith.constant 0 : index
    %c8_117 = arith.constant 8 : index
    %106 = vector.load %arg11[%c0_116, %c8_117] : memref<288x36xf32, #tpu.memory_space<vmem>>, vector<288x4xf32>
    tpu.vector_store %arg11[%c0_116, %c8_117], %105 {strides = array<i32>} : memref<288x36xf32, #tpu.memory_space<vmem>>, vector<288x4xf32>,
    %c0_118 = arith.constant 0 : index
    %c2_119 = arith.constant 2 : index
    %107 = vector.load %arg10[%c0_118, %c2_119] : memref<4x342xf32, #tpu.memory_space<vmem>>, vector<4x288xf32>
    %c8_120 = arith.constant 8 : index
    %c0_121 = arith.constant 0 : index
    %108 = vector.load %arg12[%c8_120, %c0_121] : memref<36x288xf32, #tpu.memory_space<vmem>>, vector<4x288xf32>
    tpu.vector_store %arg12[%c8_120, %c0_121], %107 {strides = array<i32>} : memref<36x288xf32, #tpu.memory_space<vmem>>, vector<4x288xf32>,
    %c18 = arith.constant 18 : index
    %c0_122 = arith.constant 0 : index
    %109 = vector.load %arg9[%c18, %c0_122] : memref<342x4xf32, #tpu.memory_space<vmem>>, vector<288x4xf32>
    %c0_123 = arith.constant 0 : index
    %c12_124 = arith.constant 12 : index
    %110 = vector.load %arg11[%c0_123, %c12_124] : memref<288x36xf32, #tpu.memory_space<vmem>>, vector<288x4xf32>
    tpu.vector_store %arg11[%c0_123, %c12_124], %109 {strides = array<i32>} : memref<288x36xf32, #tpu.memory_space<vmem>>, vector<288x4xf32>,
    %c0_125 = arith.constant 0 : index
    %c18_126 = arith.constant 18 : index
    %111 = vector.load %arg10[%c0_125, %c18_126] : memref<4x342xf32, #tpu.memory_space<vmem>>, vector<4x288xf32>
    %c12_127 = arith.constant 12 : index
    %c0_128 = arith.constant 0 : index
    %112 = vector.load %arg12[%c12_127, %c0_128] : memref<36x288xf32, #tpu.memory_space<vmem>>, vector<4x288xf32>
    tpu.vector_store %arg12[%c12_127, %c0_128], %111 {strides = array<i32>} : memref<36x288xf32, #tpu.memory_space<vmem>>, vector<4x288xf32>,
    %c19_129 = arith.constant 19 : index
    %c0_130 = arith.constant 0 : index
    %113 = vector.load %arg9[%c19_129, %c0_130] : memref<342x4xf32, #tpu.memory_space<vmem>>, vector<288x4xf32>
    %c0_131 = arith.constant 0 : index
    %c16 = arith.constant 16 : index
    %114 = vector.load %arg11[%c0_131, %c16] : memref<288x36xf32, #tpu.memory_space<vmem>>, vector<288x4xf32>
    tpu.vector_store %arg11[%c0_131, %c16], %113 {strides = array<i32>} : memref<288x36xf32, #tpu.memory_space<vmem>>, vector<288x4xf32>,
    %c0_132 = arith.constant 0 : index
    %c19_133 = arith.constant 19 : index
    %115 = vector.load %arg10[%c0_132, %c19_133] : memref<4x342xf32, #tpu.memory_space<vmem>>, vector<4x288xf32>
    %c16_134 = arith.constant 16 : index
    %c0_135 = arith.constant 0 : index
    %116 = vector.load %arg12[%c16_134, %c0_135] : memref<36x288xf32, #tpu.memory_space<vmem>>, vector<4x288xf32>
    tpu.vector_store %arg12[%c16_134, %c0_135], %115 {strides = array<i32>} : memref<36x288xf32, #tpu.memory_space<vmem>>, vector<4x288xf32>,
    %c20 = arith.constant 20 : index
    %c0_136 = arith.constant 0 : index
    %117 = vector.load %arg9[%c20, %c0_136] : memref<342x4xf32, #tpu.memory_space<vmem>>, vector<288x4xf32>
    %c0_137 = arith.constant 0 : index
    %c20_138 = arith.constant 20 : index
    %118 = vector.load %arg11[%c0_137, %c20_138] : memref<288x36xf32, #tpu.memory_space<vmem>>, vector<288x4xf32>
    tpu.vector_store %arg11[%c0_137, %c20_138], %117 {strides = array<i32>} : memref<288x36xf32, #tpu.memory_space<vmem>>, vector<288x4xf32>,
    %c0_139 = arith.constant 0 : index
    %c20_140 = arith.constant 20 : index
    %119 = vector.load %arg10[%c0_139, %c20_140] : memref<4x342xf32, #tpu.memory_space<vmem>>, vector<4x288xf32>
    %c20_141 = arith.constant 20 : index
    %c0_142 = arith.constant 0 : index
    %120 = vector.load %arg12[%c20_141, %c0_142] : memref<36x288xf32, #tpu.memory_space<vmem>>, vector<4x288xf32>
    tpu.vector_store %arg12[%c20_141, %c0_142], %119 {strides = array<i32>} : memref<36x288xf32, #tpu.memory_space<vmem>>, vector<4x288xf32>,
    %c36 = arith.constant 36 : index
    %c0_143 = arith.constant 0 : index
    %121 = vector.load %arg9[%c36, %c0_143] : memref<342x4xf32, #tpu.memory_space<vmem>>, vector<288x4xf32>
    %c0_144 = arith.constant 0 : index
    %c24 = arith.constant 24 : index
    %122 = vector.load %arg11[%c0_144, %c24] : memref<288x36xf32, #tpu.memory_space<vmem>>, vector<288x4xf32>
    tpu.vector_store %arg11[%c0_144, %c24], %121 {strides = array<i32>} : memref<288x36xf32, #tpu.memory_space<vmem>>, vector<288x4xf32>,
    %c0_145 = arith.constant 0 : index
    %c36_146 = arith.constant 36 : index
    %123 = vector.load %arg10[%c0_145, %c36_146] : memref<4x342xf32, #tpu.memory_space<vmem>>, vector<4x288xf32>
    %c24_147 = arith.constant 24 : index
    %c0_148 = arith.constant 0 : index
    %124 = vector.load %arg12[%c24_147, %c0_148] : memref<36x288xf32, #tpu.memory_space<vmem>>, vector<4x288xf32>
    tpu.vector_store %arg12[%c24_147, %c0_148], %123 {strides = array<i32>} : memref<36x288xf32, #tpu.memory_space<vmem>>, vector<4x288xf32>,
    %c37_149 = arith.constant 37 : index
    %c0_150 = arith.constant 0 : index
    %125 = vector.load %arg9[%c37_149, %c0_150] : memref<342x4xf32, #tpu.memory_space<vmem>>, vector<288x4xf32>
    %c0_151 = arith.constant 0 : index
    %c28 = arith.constant 28 : index
    %126 = vector.load %arg11[%c0_151, %c28] : memref<288x36xf32, #tpu.memory_space<vmem>>, vector<288x4xf32>
    tpu.vector_store %arg11[%c0_151, %c28], %125 {strides = array<i32>} : memref<288x36xf32, #tpu.memory_space<vmem>>, vector<288x4xf32>,
    %c0_152 = arith.constant 0 : index
    %c37_153 = arith.constant 37 : index
    %127 = vector.load %arg10[%c0_152, %c37_153] : memref<4x342xf32, #tpu.memory_space<vmem>>, vector<4x288xf32>
    %c28_154 = arith.constant 28 : index
    %c0_155 = arith.constant 0 : index
    %128 = vector.load %arg12[%c28_154, %c0_155] : memref<36x288xf32, #tpu.memory_space<vmem>>, vector<4x288xf32>
    tpu.vector_store %arg12[%c28_154, %c0_155], %127 {strides = array<i32>} : memref<36x288xf32, #tpu.memory_space<vmem>>, vector<4x288xf32>,
    %c38 = arith.constant 38 : index
    %c0_156 = arith.constant 0 : index
    %129 = vector.load %arg9[%c38, %c0_156] : memref<342x4xf32, #tpu.memory_space<vmem>>, vector<288x4xf32>
    %c0_157 = arith.constant 0 : index
    %c32 = arith.constant 32 : index
    %130 = vector.load %arg11[%c0_157, %c32] : memref<288x36xf32, #tpu.memory_space<vmem>>, vector<288x4xf32>
    tpu.vector_store %arg11[%c0_157, %c32], %129 {strides = array<i32>} : memref<288x36xf32, #tpu.memory_space<vmem>>, vector<288x4xf32>,
    %c0_158 = arith.constant 0 : index
    %c38_159 = arith.constant 38 : index
    %131 = vector.load %arg10[%c0_158, %c38_159] : memref<4x342xf32, #tpu.memory_space<vmem>>, vector<4x288xf32>
    %c32_160 = arith.constant 32 : index
    %c0_161 = arith.constant 0 : index
    %132 = vector.load %arg12[%c32_160, %c0_161] : memref<36x288xf32, #tpu.memory_space<vmem>>, vector<4x288xf32>
    tpu.vector_store %arg12[%c32_160, %c0_161], %131 {strides = array<i32>} : memref<36x288xf32, #tpu.memory_space<vmem>>, vector<4x288xf32>,
    %c0_162 = arith.constant 0 : index
    %c0_163 = arith.constant 0 : index
    %133 = vector.load %arg5[%c0_162, %c0_163] : memref<4x36xf32, #tpu.memory_space<vmem>>, vector<4x36xf32>
    %c0_164 = arith.constant 0 : index
    %c0_165 = arith.constant 0 : index
    %134 = vector.load %arg11[%c0_164, %c0_165] : memref<288x36xf32, #tpu.memory_space<vmem>>, vector<288x36xf32>
    %cst_166 = arith.constant dense<0.000000e+00> : vector<4x288xf32>
    %135 = tpu.matmul %133, %134, %cst_166 {dimension_numbers = #tpu.dot_dimension_numbers<[1], [1], [0], [0], [0, 0, 1, 0], [], []>} : vector<4x36xf32>, vector<288x36xf32>, vector<4x288xf32> -> vector<4x288xf32>
    %c0_167 = arith.constant 0 : index
    %c0_168 = arith.constant 0 : index
    %136 = vector.load %arg6[%c0_167, %c0_168] : memref<4x36xf32, #tpu.memory_space<vmem>>, vector<4x36xf32>
    %c0_169 = arith.constant 0 : index
    %c0_170 = arith.constant 0 : index
    %137 = vector.load %arg12[%c0_169, %c0_170] : memref<36x288xf32, #tpu.memory_space<vmem>>, vector<36x288xf32>
    %cst_171 = arith.constant dense<0.000000e+00> : vector<4x288xf32>
    %138 = tpu.matmul %136, %137, %cst_171 {dimension_numbers = #tpu.dot_dimension_numbers<[1], [0], [0], [1], [0, 0, 1, 1], [], []>} : vector<4x36xf32>, vector<36x288xf32>, vector<4x288xf32> -> vector<4x288xf32>
    %139 = arith.addf %135, %138 : vector<4x288xf32>
    %c0_172 = arith.constant 0 : index
    %c0_173 = arith.constant 0 : index
    %140 = vector.load %arg7[%c0_172, %c0_173] : memref<4x1xf32, #tpu.memory_space<vmem>>, vector<4x1xf32>
    %141 = vector.broadcast %140 : vector<4x1xf32> to vector<4x288xf32>
    %142 = arith.addf %139, %141 : vector<4x288xf32>
    %cst_174 = arith.constant 0.000000e+00 : f32
    %143 = vector.broadcast %cst_174 : f32 to vector<4x288xf32>
    %144 = arith.maximumf %142, %143 : vector<4x288xf32>
    %c0_175 = arith.constant 0 : index
    %c0_176 = arith.constant 0 : index
    %145 = vector.load %arg13[%c0_175, %c0_176] : memref<4x288xf32, #tpu.memory_space<vmem>>, vector<4x288xf32>
    tpu.vector_store %arg13[%c0_175, %c0_176], %144 {strides = array<i32>} : memref<4x288xf32, #tpu.memory_space<vmem>>, vector<4x288xf32>,
    %c0_177 = arith.constant 0 : index
    %c0_178 = arith.constant 0 : index
    %146 = vector.load %arg13[%c0_177, %c0_178] : memref<4x288xf32, #tpu.memory_space<vmem>>, vector<4x16xf32>
    %c0_179 = arith.constant 0 : index
    %c0_180 = arith.constant 0 : index
    %c0_181 = arith.constant 0 : index
    %c0_182 = arith.constant 0 : index
    %147 = vector.load %arg8[%c0_179, %c0_180, %c0_181, %c0_182] : memref<1x4x16x16xf32, #tpu.memory_space<vmem>>, vector<1x4x1x16xf32>
    %148 = vector.shape_cast %147 : vector<1x4x1x16xf32> to vector<4x16xf32>
    %149 = vector.shape_cast %146 : vector<4x16xf32> to vector<1x4x1x16xf32>
    tpu.vector_store %arg8[%c0_179, %c0_180, %c0_181, %c0_182], %149 {strides = array<i32>} : memref<1x4x16x16xf32, #tpu.memory_space<vmem>>, vector<1x4x1x16xf32>,
    %c0_183 = arith.constant 0 : index
    %c18_184 = arith.constant 18 : index
    %150 = vector.load %arg13[%c0_183, %c18_184] : memref<4x288xf32, #tpu.memory_space<vmem>>, vector<4x16xf32>
    %c0_185 = arith.constant 0 : index
    %c0_186 = arith.constant 0 : index
    %c1_187 = arith.constant 1 : index
    %c0_188 = arith.constant 0 : index
    %151 = vector.load %arg8[%c0_185, %c0_186, %c1_187, %c0_188] : memref<1x4x16x16xf32, #tpu.memory_space<vmem>>, vector<1x4x1x16xf32>
    %152 = vector.shape_cast %151 : vector<1x4x1x16xf32> to vector<4x16xf32>
    %153 = vector.shape_cast %150 : vector<4x16xf32> to vector<1x4x1x16xf32>
    tpu.vector_store %arg8[%c0_185, %c0_186, %c1_187, %c0_188], %153 {strides = array<i32>} : memref<1x4x16x16xf32, #tpu.memory_space<vmem>>, vector<1x4x1x16xf32>,
    %c0_189 = arith.constant 0 : index
    %c36_190 = arith.constant 36 : index
    %154 = vector.load %arg13[%c0_189, %c36_190] : memref<4x288xf32, #tpu.memory_space<vmem>>, vector<4x16xf32>
    %c0_191 = arith.constant 0 : index
    %c0_192 = arith.constant 0 : index
    %c2_193 = arith.constant 2 : index
    %c0_194 = arith.constant 0 : index
    %155 = vector.load %arg8[%c0_191, %c0_192, %c2_193, %c0_194] : memref<1x4x16x16xf32, #tpu.memory_space<vmem>>, vector<1x4x1x16xf32>
    %156 = vector.shape_cast %155 : vector<1x4x1x16xf32> to vector<4x16xf32>
    %157 = vector.shape_cast %154 : vector<4x16xf32> to vector<1x4x1x16xf32>
    tpu.vector_store %arg8[%c0_191, %c0_192, %c2_193, %c0_194], %157 {strides = array<i32>} : memref<1x4x16x16xf32, #tpu.memory_space<vmem>>, vector<1x4x1x16xf32>,
    %c0_195 = arith.constant 0 : index
    %c54 = arith.constant 54 : index
    %158 = vector.load %arg13[%c0_195, %c54] : memref<4x288xf32, #tpu.memory_space<vmem>>, vector<4x16xf32>
    %c0_196 = arith.constant 0 : index
    %c0_197 = arith.constant 0 : index
    %c3_198 = arith.constant 3 : index
    %c0_199 = arith.constant 0 : index
    %159 = vector.load %arg8[%c0_196, %c0_197, %c3_198, %c0_199] : memref<1x4x16x16xf32, #tpu.memory_space<vmem>>, vector<1x4x1x16xf32>
    %160 = vector.shape_cast %159 : vector<1x4x1x16xf32> to vector<4x16xf32>
    %161 = vector.shape_cast %158 : vector<4x16xf32> to vector<1x4x1x16xf32>
    tpu.vector_store %arg8[%c0_196, %c0_197, %c3_198, %c0_199], %161 {strides = array<i32>} : memref<1x4x16x16xf32, #tpu.memory_space<vmem>>, vector<1x4x1x16xf32>,
    %c0_200 = arith.constant 0 : index
    %c72 = arith.constant 72 : index
    %162 = vector.load %arg13[%c0_200, %c72] : memref<4x288xf32, #tpu.memory_space<vmem>>, vector<4x16xf32>
    %c0_201 = arith.constant 0 : index
    %c0_202 = arith.constant 0 : index
    %c4_203 = arith.constant 4 : index
    %c0_204 = arith.constant 0 : index
    %163 = vector.load %arg8[%c0_201, %c0_202, %c4_203, %c0_204] : memref<1x4x16x16xf32, #tpu.memory_space<vmem>>, vector<1x4x1x16xf32>
    %164 = vector.shape_cast %163 : vector<1x4x1x16xf32> to vector<4x16xf32>
    %165 = vector.shape_cast %162 : vector<4x16xf32> to vector<1x4x1x16xf32>
    tpu.vector_store %arg8[%c0_201, %c0_202, %c4_203, %c0_204], %165 {strides = array<i32>} : memref<1x4x16x16xf32, #tpu.memory_space<vmem>>, vector<1x4x1x16xf32>,
    %c0_205 = arith.constant 0 : index
    %c90 = arith.constant 90 : index
    %166 = vector.load %arg13[%c0_205, %c90] : memref<4x288xf32, #tpu.memory_space<vmem>>, vector<4x16xf32>
    %c0_206 = arith.constant 0 : index
    %c0_207 = arith.constant 0 : index
    %c5_208 = arith.constant 5 : index
    %c0_209 = arith.constant 0 : index
    %167 = vector.load %arg8[%c0_206, %c0_207, %c5_208, %c0_209] : memref<1x4x16x16xf32, #tpu.memory_space<vmem>>, vector<1x4x1x16xf32>
    %168 = vector.shape_cast %167 : vector<1x4x1x16xf32> to vector<4x16xf32>
    %169 = vector.shape_cast %166 : vector<4x16xf32> to vector<1x4x1x16xf32>
    tpu.vector_store %arg8[%c0_206, %c0_207, %c5_208, %c0_209], %169 {strides = array<i32>} : memref<1x4x16x16xf32, #tpu.memory_space<vmem>>, vector<1x4x1x16xf32>,
    %c0_210 = arith.constant 0 : index
    %c108 = arith.constant 108 : index
    %170 = vector.load %arg13[%c0_210, %c108] : memref<4x288xf32, #tpu.memory_space<vmem>>, vector<4x16xf32>
    %c0_211 = arith.constant 0 : index
    %c0_212 = arith.constant 0 : index
    %c6_213 = arith.constant 6 : index
    %c0_214 = arith.constant 0 : index
    %171 = vector.load %arg8[%c0_211, %c0_212, %c6_213, %c0_214] : memref<1x4x16x16xf32, #tpu.memory_space<vmem>>, vector<1x4x1x16xf32>
    %172 = vector.shape_cast %171 : vector<1x4x1x16xf32> to vector<4x16xf32>
    %173 = vector.shape_cast %170 : vector<4x16xf32> to vector<1x4x1x16xf32>
    tpu.vector_store %arg8[%c0_211, %c0_212, %c6_213, %c0_214], %173 {strides = array<i32>} : memref<1x4x16x16xf32, #tpu.memory_space<vmem>>, vector<1x4x1x16xf32>,
    %c0_215 = arith.constant 0 : index
    %c126 = arith.constant 126 : index
    %174 = vector.load %arg13[%c0_215, %c126] : memref<4x288xf32, #tpu.memory_space<vmem>>, vector<4x16xf32>
    %c0_216 = arith.constant 0 : index
    %c0_217 = arith.constant 0 : index
    %c7_218 = arith.constant 7 : index
    %c0_219 = arith.constant 0 : index
    %175 = vector.load %arg8[%c0_216, %c0_217, %c7_218, %c0_219] : memref<1x4x16x16xf32, #tpu.memory_space<vmem>>, vector<1x4x1x16xf32>
    %176 = vector.shape_cast %175 : vector<1x4x1x16xf32> to vector<4x16xf32>
    %177 = vector.shape_cast %174 : vector<4x16xf32> to vector<1x4x1x16xf32>
    tpu.vector_store %arg8[%c0_216, %c0_217, %c7_218, %c0_219], %177 {strides = array<i32>} : memref<1x4x16x16xf32, #tpu.memory_space<vmem>>, vector<1x4x1x16xf32>,
    %c0_220 = arith.constant 0 : index
    %c144 = arith.constant 144 : index
    %178 = vector.load %arg13[%c0_220, %c144] : memref<4x288xf32, #tpu.memory_space<vmem>>, vector<4x16xf32>
    %c0_221 = arith.constant 0 : index
    %c0_222 = arith.constant 0 : index
    %c8_223 = arith.constant 8 : index
    %c0_224 = arith.constant 0 : index
    %179 = vector.load %arg8[%c0_221, %c0_222, %c8_223, %c0_224] : memref<1x4x16x16xf32, #tpu.memory_space<vmem>>, vector<1x4x1x16xf32>
    %180 = vector.shape_cast %179 : vector<1x4x1x16xf32> to vector<4x16xf32>
    %181 = vector.shape_cast %178 : vector<4x16xf32> to vector<1x4x1x16xf32>
    tpu.vector_store %arg8[%c0_221, %c0_222, %c8_223, %c0_224], %181 {strides = array<i32>} : memref<1x4x16x16xf32, #tpu.memory_space<vmem>>, vector<1x4x1x16xf32>,
    %c0_225 = arith.constant 0 : index
    %c162 = arith.constant 162 : index
    %182 = vector.load %arg13[%c0_225, %c162] : memref<4x288xf32, #tpu.memory_space<vmem>>, vector<4x16xf32>
    %c0_226 = arith.constant 0 : index
    %c0_227 = arith.constant 0 : index
    %c9_228 = arith.constant 9 : index
    %c0_229 = arith.constant 0 : index
    %183 = vector.load %arg8[%c0_226, %c0_227, %c9_228, %c0_229] : memref<1x4x16x16xf32, #tpu.memory_space<vmem>>, vector<1x4x1x16xf32>
    %184 = vector.shape_cast %183 : vector<1x4x1x16xf32> to vector<4x16xf32>
    %185 = vector.shape_cast %182 : vector<4x16xf32> to vector<1x4x1x16xf32>
    tpu.vector_store %arg8[%c0_226, %c0_227, %c9_228, %c0_229], %185 {strides = array<i32>} : memref<1x4x16x16xf32, #tpu.memory_space<vmem>>, vector<1x4x1x16xf32>,
    %c0_230 = arith.constant 0 : index
    %c180 = arith.constant 180 : index
    %186 = vector.load %arg13[%c0_230, %c180] : memref<4x288xf32, #tpu.memory_space<vmem>>, vector<4x16xf32>
    %c0_231 = arith.constant 0 : index
    %c0_232 = arith.constant 0 : index
    %c10_233 = arith.constant 10 : index
    %c0_234 = arith.constant 0 : index
    %187 = vector.load %arg8[%c0_231, %c0_232, %c10_233, %c0_234] : memref<1x4x16x16xf32, #tpu.memory_space<vmem>>, vector<1x4x1x16xf32>
    %188 = vector.shape_cast %187 : vector<1x4x1x16xf32> to vector<4x16xf32>
    %189 = vector.shape_cast %186 : vector<4x16xf32> to vector<1x4x1x16xf32>
    tpu.vector_store %arg8[%c0_231, %c0_232, %c10_233, %c0_234], %189 {strides = array<i32>} : memref<1x4x16x16xf32, #tpu.memory_space<vmem>>, vector<1x4x1x16xf32>,
    %c0_235 = arith.constant 0 : index
    %c198 = arith.constant 198 : index
    %190 = vector.load %arg13[%c0_235, %c198] : memref<4x288xf32, #tpu.memory_space<vmem>>, vector<4x16xf32>
    %c0_236 = arith.constant 0 : index
    %c0_237 = arith.constant 0 : index
    %c11_238 = arith.constant 11 : index
    %c0_239 = arith.constant 0 : index
    %191 = vector.load %arg8[%c0_236, %c0_237, %c11_238, %c0_239] : memref<1x4x16x16xf32, #tpu.memory_space<vmem>>, vector<1x4x1x16xf32>
    %192 = vector.shape_cast %191 : vector<1x4x1x16xf32> to vector<4x16xf32>
    %193 = vector.shape_cast %190 : vector<4x16xf32> to vector<1x4x1x16xf32>
    tpu.vector_store %arg8[%c0_236, %c0_237, %c11_238, %c0_239], %193 {strides = array<i32>} : memref<1x4x16x16xf32, #tpu.memory_space<vmem>>, vector<1x4x1x16xf32>,
    %c0_240 = arith.constant 0 : index
    %c216 = arith.constant 216 : index
    %194 = vector.load %arg13[%c0_240, %c216] : memref<4x288xf32, #tpu.memory_space<vmem>>, vector<4x16xf32>
    %c0_241 = arith.constant 0 : index
    %c0_242 = arith.constant 0 : index
    %c12_243 = arith.constant 12 : index
    %c0_244 = arith.constant 0 : index
    %195 = vector.load %arg8[%c0_241, %c0_242, %c12_243, %c0_244] : memref<1x4x16x16xf32, #tpu.memory_space<vmem>>, vector<1x4x1x16xf32>
    %196 = vector.shape_cast %195 : vector<1x4x1x16xf32> to vector<4x16xf32>
    %197 = vector.shape_cast %194 : vector<4x16xf32> to vector<1x4x1x16xf32>
    tpu.vector_store %arg8[%c0_241, %c0_242, %c12_243, %c0_244], %197 {strides = array<i32>} : memref<1x4x16x16xf32, #tpu.memory_space<vmem>>, vector<1x4x1x16xf32>,
    %c0_245 = arith.constant 0 : index
    %c234 = arith.constant 234 : index
    %198 = vector.load %arg13[%c0_245, %c234] : memref<4x288xf32, #tpu.memory_space<vmem>>, vector<4x16xf32>
    %c0_246 = arith.constant 0 : index
    %c0_247 = arith.constant 0 : index
    %c13_248 = arith.constant 13 : index
    %c0_249 = arith.constant 0 : index
    %199 = vector.load %arg8[%c0_246, %c0_247, %c13_248, %c0_249] : memref<1x4x16x16xf32, #tpu.memory_space<vmem>>, vector<1x4x1x16xf32>
    %200 = vector.shape_cast %199 : vector<1x4x1x16xf32> to vector<4x16xf32>
    %201 = vector.shape_cast %198 : vector<4x16xf32> to vector<1x4x1x16xf32>
    tpu.vector_store %arg8[%c0_246, %c0_247, %c13_248, %c0_249], %201 {strides = array<i32>} : memref<1x4x16x16xf32, #tpu.memory_space<vmem>>, vector<1x4x1x16xf32>,
    %c0_250 = arith.constant 0 : index
    %c252 = arith.constant 252 : index
    %202 = vector.load %arg13[%c0_250, %c252] : memref<4x288xf32, #tpu.memory_space<vmem>>, vector<4x16xf32>
    %c0_251 = arith.constant 0 : index
    %c0_252 = arith.constant 0 : index
    %c14_253 = arith.constant 14 : index
    %c0_254 = arith.constant 0 : index
    %203 = vector.load %arg8[%c0_251, %c0_252, %c14_253, %c0_254] : memref<1x4x16x16xf32, #tpu.memory_space<vmem>>, vector<1x4x1x16xf32>
    %204 = vector.shape_cast %203 : vector<1x4x1x16xf32> to vector<4x16xf32>
    %205 = vector.shape_cast %202 : vector<4x16xf32> to vector<1x4x1x16xf32>
    tpu.vector_store %arg8[%c0_251, %c0_252, %c14_253, %c0_254], %205 {strides = array<i32>} : memref<1x4x16x16xf32, #tpu.memory_space<vmem>>, vector<1x4x1x16xf32>,
    %c0_255 = arith.constant 0 : index
    %c270 = arith.constant 270 : index
    %206 = vector.load %arg13[%c0_255, %c270] : memref<4x288xf32, #tpu.memory_space<vmem>>, vector<4x16xf32>
    %c0_256 = arith.constant 0 : index
    %c0_257 = arith.constant 0 : index
    %c15_258 = arith.constant 15 : index
    %c0_259 = arith.constant 0 : index
    %207 = vector.load %arg8[%c0_256, %c0_257, %c15_258, %c0_259] : memref<1x4x16x16xf32, #tpu.memory_space<vmem>>, vector<1x4x1x16xf32>
    %208 = vector.shape_cast %207 : vector<1x4x1x16xf32> to vector<4x16xf32>
    %209 = vector.shape_cast %206 : vector<4x16xf32> to vector<1x4x1x16xf32>
    tpu.vector_store %arg8[%c0_256, %c0_257, %c15_258, %c0_259], %209 {strides = array<i32>} : memref<1x4x16x16xf32, #tpu.memory_space<vmem>>, vector<1x4x1x16xf32>,
    return
  }
  func.func @transform_0(%arg0: i32) -> (i32, i32, i32) {
    %c0_i32 = arith.constant 0 : i32
    %c0_i32_0 = arith.constant 0 : i32
    %c0_i32_1 = arith.constant 0 : i32
    return %arg0, %c0_i32, %c0_i32_0 : i32, i32, i32
  }
  func.func @transform_1(%arg0: i32) -> (i32, i32, i32, i32) {
    %c0_i32 = arith.constant 0 : i32
    %c0_i32_0 = arith.constant 0 : i32
    %c0_i32_1 = arith.constant 0 : i32
    %c0_i32_2 = arith.constant 0 : i32
    return %arg0, %c0_i32, %c0_i32_0, %c0_i32_1 : i32, i32, i32, i32
  }
  func.func @transform_2(%arg0: i32) -> (i32, i32, i32) {
    %c0_i32 = arith.constant 0 : i32
    %c0_i32_0 = arith.constant 0 : i32
    %c0_i32_1 = arith.constant 0 : i32
    %c0_i32_2 = arith.constant 0 : i32
    return %c0_i32, %c0_i32_0, %c0_i32_1 : i32, i32, i32
  }
  func.func @transform_3(%arg0: i32) -> (i32, i32) {
    %c0_i32 = arith.constant 0 : i32
    %c0_i32_0 = arith.constant 0 : i32
    %c0_i32_1 = arith.constant 0 : i32
    return %c0_i32, %c0_i32_0 : i32, i32
  }
  func.func @transform_4(%arg0: i32) -> (i32, i32) {
    %c0_i32 = arith.constant 0 : i32
    %c0_i32_0 = arith.constant 0 : i32
    %c0_i32_1 = arith.constant 0 : i32
    return %c0_i32, %c0_i32_0 : i32, i32
  }
  func.func @transform_5(%arg0: i32) -> (i32, i32) {
    %c0_i32 = arith.constant 0 : i32
    %c0_i32_0 = arith.constant 0 : i32
    %c0_i32_1 = arith.constant 0 : i32
    return %c0_i32, %c0_i32_0 : i32, i32
  }
  func.func @transform_6(%arg0: i32) -> (i32, i32) {
    %c0_i32 = arith.constant 0 : i32
    %c0_i32_0 = arith.constant 0 : i32
    %c0_i32_1 = arith.constant 0 : i32
    return %c0_i32, %c0_i32_0 : i32, i32
  }
  func.func @transform_7(%arg0: i32) -> (i32, i32, i32, i32) {
    %c0_i32 = arith.constant 0 : i32
    %c0_i32_0 = arith.constant 0 : i32
    %c0_i32_1 = arith.constant 0 : i32
    %c0_i32_2 = arith.constant 0 : i32
    return %arg0, %c0_i32, %c0_i32_0, %c0_i32_1 : i32, i32, i32, i32
  }
}

</mosaic_0001>

<llo_original>
// kernel: decoder_forward.1
$region0: #{decoder_forward.1}
  #allocation0 [shape = 'u32[]', space=smem, size = 0x4, offset = 0x4, fixed_abs, tag = 'smem constant byte address 0x4 - core index']
  #allocation1 [shape = 'u32[144,128]{1,0:T(1,128)}', space=vmem, size = 0x12000, scoped, tag = 'internal scratch']
  #allocation2 [shape = 'f32[342,4]{1,0:T(8,128)}', space=vmem, size = 0x2b000, scoped, tag = 'scratch operand']
  #allocation3 [shape = 'f32[4,342]{1,0:T(4,128)}', space=vmem, size = 0x1800, scoped, tag = 'scratch operand']
  #allocation4 [shape = 'f32[288,36]{1,0:T(8,128)}', space=vmem, size = 0x24000, scoped, tag = 'scratch operand']
  #allocation5 [shape = 'f32[36,288]{1,0:T(8,128)}', space=vmem, size = 0xf000, scoped, tag = 'scratch operand']
  #allocation6 [shape = 'f32[4,288]{1,0:T(4,128)}', space=vmem, size = 0x1800, scoped, tag = 'scratch operand']
  %s0 = inlined_call_operand.vmem [shape: f32[2,64,8], index: 0, kind: input, shape index: {}]
  %s1 = inlined_call_operand.vmem [shape: f32[2,4,16,16], index: 1, kind: input, shape index: {}]
  %s2 = inlined_call_operand.vmem [shape: f32[4,8,4], index: 2, kind: input, shape index: {}]
  %s3 = inlined_call_operand.vmem [shape: f32[1,4], index: 3, kind: input, shape index: {}]
  %s4 = inlined_call_operand.vmem [shape: f32[4,36], index: 4, kind: input, shape index: {}]
  %s5 = inlined_call_operand.vmem [shape: f32[4,36], index: 5, kind: input, shape index: {}]
  %s6 = inlined_call_operand.vmem [shape: f32[4,1], index: 6, kind: input, shape index: {}]
  %s7 = inlined_call_operand.hbm [shape: f32[2,4,16,16], index: 7, kind: output, shape index: {}]
  %s8 = sld [smem:[#allocation0]]
  $region61: #{decoder_forward.1} parent=0
    _
  %s10 = ssub.s32 1, %s8
  %s11 = scalar_select 0, %s10, %s8
  $region1: #{decoder_forward.1} parent=0
    #allocation7 [shape = 'u8[65536]{0}', space=vmem, size = 0x10000, scoped, tag = 'output window, operand 0']
    #allocation8 [shape = 's32[2]{0}', space=sflag, size = 0x8, scoped, tag = 'scoped memory for decoder_forward.1']
    %12 = vsyncpa [#allocation8], 0
    %s13 = scalar_lea.sflag [#allocation8], 1
    %14 = vsyncpa %s13, 0
    loop: start=0, step=1, limit=4
    $region2: #{decoder_forward.1} parent=1 // loop_pre_header
      _
    $region3: #{decoder_forward.1} parent=1 // loop_header
      %s16 = sphi 0, %s20
      %p17 = scmp.ge.s32.totalorder %s16, 4
      %s26 = sphi 0, %s28
      %s29 = sphi 0, %s26
      %s30 = sphi 0, %s29
      %s46 = sphi 0, %s30
      %s52 = sphi 0, %s54
      %s55 = sphi 0, %s52
      %s56 = sphi 0, %s55
      %s72 = sphi 0, %s56
      %s76 = sphi 0, %s76
      %s78 = sphi 0, %s76
      %s79 = sphi 0, %s78
      %s93 = sphi 0, %s79
      %s97 = sphi 0, %s97
      %s99 = sphi 0, %s97
      %s100 = sphi 0, %s99
      %s114 = sphi 0, %s100
      %s118 = sphi 0, %s118
      %s120 = sphi 0, %s118
      %s121 = sphi 0, %s120
      %s135 = sphi 0, %s121
      %s139 = sphi 0, %s139
      %s141 = sphi 0, %s139
      %s142 = sphi 0, %s141
      %s156 = sphi 0, %s142
      %s160 = sphi 0, %s160
      %s162 = sphi 0, %s160
      %s163 = sphi 0, %s162
      %s177 = sphi 0, %s163
      %s183 = sphi 0, %s185
      %s186 = sphi 0, %s183
      %s187 = sphi 0, %s186
      %s203 = sphi 0, %s187
    $region4: #{decoder_forward.1} parent=1 // loop_header_branch
      %19 = sbr.rel (%p17) target = $region8
    $region5: #{decoder_forward.1} parent=1 // loop_body
      %s21 = ssub.s32 %s16, 1
      %s22 = ssub.s32 %s16, 2
      %s23 = sadd.s32 %s16, 1
      %s24 = ssub.s32 %s16, %s23
      %p25 = scmp.eq.s32.totalorder %s24, 0
      %s27 = sadd.s32 %s26, 1
      %s28 = scalar_select %p25, %s26, %s27
      %p31 = pneg %p25
      %p32 = scmp.eq.s32.totalorder %s16, 1
      %p33 = por %p31, %p32
      %p34 = scmp.ne.s32.totalorder %s26, %s29
      %p35 = scmp.eq.s32.totalorder %s16, 0
      %p36 = por %p34, %p35
      %p37 = scmp.ne.s32.totalorder %s26, %s29
      %p38 = scmp.eq.s32.totalorder %s21, 1
      %p39 = por %p37, %p38
      %p40 = scmp.ne.s32.totalorder %s29, %s30
      %p41 = scmp.eq.s32.totalorder %s21, 0
      %p42 = por %p40, %p41
      %p43 = scmp.ne.s32.totalorder %s29, %s30
      %p44 = scmp.eq.s32.totalorder %s22, 1
      %p45 = por %p43, %p44
      %p47 = scmp.ne.s32.totalorder %s30, %s46
      %p48 = scmp.eq.s32.totalorder %s22, 0
      %p49 = por %p47, %p48
      %s50 = ssub.s32 %s16, %s23
      %p51 = scmp.eq.s32.totalorder %s50, 0
      %s53 = sadd.s32 %s52, 1
      %s54 = scalar_select %p51, %s52, %s53
      %p57 = pneg %p51
      %p58 = scmp.eq.s32.totalorder %s16, 1
      %p59 = por %p57, %p58
      %p60 = scmp.ne.s32.totalorder %s52, %s55
      %p61 = scmp.eq.s32.totalorder %s16, 0
      %p62 = por %p60, %p61
      %p63 = scmp.ne.s32.totalorder %s52, %s55
      %p64 = scmp.eq.s32.totalorder %s21, 1
      %p65 = por %p63, %p64
      %p66 = scmp.ne.s32.totalorder %s55, %s56
      %p67 = scmp.eq.s32.totalorder %s21, 0
      %p68 = por %p66, %p67
      %p69 = scmp.ne.s32.totalorder %s55, %s56
      %p70 = scmp.eq.s32.totalorder %s22, 1
      %p71 = por %p69, %p70
      %p73 = scmp.ne.s32.totalorder %s56, %s72
      %p74 = scmp.eq.s32.totalorder %s22, 0
      %p75 = por %p73, %p74
      %s77 = sadd.s32 %s76, 1
      %p80 = scmp.eq.s32.totalorder %s16, 1
      %p81 = scmp.ne.s32.totalorder %s76, %s78
      %p82 = scmp.eq.s32.totalorder %s16, 0
      %p83 = por %p81, %p82
      %p84 = scmp.ne.s32.totalorder %s76, %s78
      %p85 = scmp.eq.s32.totalorder %s21, 1
      %p86 = por %p84, %p85
      %p87 = scmp.ne.s32.totalorder %s78, %s79
      %p88 = scmp.eq.s32.totalorder %s21, 0
      %p89 = por %p87, %p88
      %p90 = scmp.ne.s32.totalorder %s78, %s79
      %p91 = scmp.eq.s32.totalorder %s22, 1
      %p92 = por %p90, %p91
      %p94 = scmp.ne.s32.totalorder %s79, %s93
      %p95 = scmp.eq.s32.totalorder %s22, 0
      %p96 = por %p94, %p95
      %s98 = sadd.s32 %s97, 1
      %p101 = scmp.eq.s32.totalorder %s16, 1
      %p102 = scmp.ne.s32.totalorder %s97, %s99
      %p103 = scmp.eq.s32.totalorder %s16, 0
      %p104 = por %p102, %p103
      %p105 = scmp.ne.s32.totalorder %s97, %s99
      %p106 = scmp.eq.s32.totalorder %s21, 1
      %p107 = por %p105, %p106
      %p108 = scmp.ne.s32.totalorder %s99, %s100
      %p109 = scmp.eq.s32.totalorder %s21, 0
      %p110 = por %p108, %p109
      %p111 = scmp.ne.s32.totalorder %s99, %s100
      %p112 = scmp.eq.s32.totalorder %s22, 1
      %p113 = por %p111, %p112
      %p115 = scmp.ne.s32.totalorder %s100, %s114
      %p116 = scmp.eq.s32.totalorder %s22, 0
      %p117 = por %p115, %p116
      %s119 = sadd.s32 %s118, 1
      %p122 = scmp.eq.s32.totalorder %s16, 1
      %p123 = scmp.ne.s32.totalorder %s118, %s120
      %p124 = scmp.eq.s32.totalorder %s16, 0
      %p125 = por %p123, %p124
      %p126 = scmp.ne.s32.totalorder %s118, %s120
      %p127 = scmp.eq.s32.totalorder %s21, 1
      %p128 = por %p126, %p127
      %p129 = scmp.ne.s32.totalorder %s120, %s121
      %p130 = scmp.eq.s32.totalorder %s21, 0
      %p131 = por %p129, %p130
      %p132 = scmp.ne.s32.totalorder %s120, %s121
      %p133 = scmp.eq.s32.totalorder %s22, 1
      %p134 = por %p132, %p133
      %p136 = scmp.ne.s32.totalorder %s121, %s135
      %p137 = scmp.eq.s32.totalorder %s22, 0
      %p138 = por %p136, %p137
      %s140 = sadd.s32 %s139, 1
      %p143 = scmp.eq.s32.totalorder %s16, 1
      %p144 = scmp.ne.s32.totalorder %s139, %s141
      %p145 = scmp.eq.s32.totalorder %s16, 0
      %p146 = por %p144, %p145
      %p147 = scmp.ne.s32.totalorder %s139, %s141
      %p148 = scmp.eq.s32.totalorder %s21, 1
      %p149 = por %p147, %p148
      %p150 = scmp.ne.s32.totalorder %s141, %s142
      %p151 = scmp.eq.s32.totalorder %s21, 0
      %p152 = por %p150, %p151
      %p153 = scmp.ne.s32.totalorder %s141, %s142
      %p154 = scmp.eq.s32.totalorder %s22, 1
      %p155 = por %p153, %p154
      %p157 = scmp.ne.s32.totalorder %s142, %s156
      %p158 = scmp.eq.s32.totalorder %s22, 0
      %p159 = por %p157, %p158
      %s161 = sadd.s32 %s160, 1
      %p164 = scmp.eq.s32.totalorder %s16, 1
      %p165 = scmp.ne.s32.totalorder %s160, %s162
      %p166 = scmp.eq.s32.totalorder %s16, 0
      %p167 = por %p165, %p166
      %p168 = scmp.ne.s32.totalorder %s160, %s162
      %p169 = scmp.eq.s32.totalorder %s21, 1
      %p170 = por %p168, %p169
      %p171 = scmp.ne.s32.totalorder %s162, %s163
      %p172 = scmp.eq.s32.totalorder %s21, 0
      %p173 = por %p171, %p172
      %p174 = scmp.ne.s32.totalorder %s162, %s163
      %p175 = scmp.eq.s32.totalorder %s22, 1
      %p176 = por %p174, %p175
      %p178 = scmp.ne.s32.totalorder %s163, %s177
      %p179 = scmp.eq.s32.totalorder %s22, 0
      %p180 = por %p178, %p179
      %s181 = ssub.s32 %s16, %s23
      %p182 = scmp.eq.s32.totalorder %s181, 0
      %s184 = sadd.s32 %s183, 1
      %s185 = scalar_select %p182, %s183, %s184
      %p188 = pneg %p182
      %p189 = scmp.eq.s32.totalorder %s16, 1
      %p190 = por %p188, %p189
      %p191 = scmp.ne.s32.totalorder %s183, %s186
      %p192 = scmp.eq.s32.totalorder %s16, 0
      %p193 = por %p191, %p192
      %p194 = scmp.ne.s32.totalorder %s183, %s186
      %p195 = scmp.eq.s32.totalorder %s21, 1
      %p196 = por %p194, %p195
      %p197 = scmp.ne.s32.totalorder %s186, %s187
      %p198 = scmp.eq.s32.totalorder %s21, 0
      %p199 = por %p197, %p198
      %p200 = scmp.ne.s32.totalorder %s186, %s187
      %p201 = scmp.eq.s32.totalorder %s22, 1
      %p202 = por %p200, %p201
      %p204 = scmp.ne.s32.totalorder %s187, %s203
      %p205 = scmp.eq.s32.totalorder %s22, 0
      %p206 = por %p204, %p205
      %p207 = scmp.le.s32.totalorder 1, %s16
      %p208 = scmp.lt.s32.totalorder %s16, 3
      %p209 = pnand %p207, %p208
      %p210 = pneg %p209
      // Predicated region
      $region9: #{decoder_forward.1} parent=5 // pred_check
        _
      $region10: #{decoder_forward.1} parent=5 // pred_check_branch
        %212 = sbr.rel (%p209) target = $region12
      $region11: #{decoder_forward.1} parent=5 // pred_region
        %s213 = ssub.s32 %s16, 1
        // Predicated region
        $region13: #{decoder_forward.1} parent=11 // pred_check
          %p214 = pneg %p89
        $region14: #{decoder_forward.1} parent=11 // pred_check_branch
          %216 = sbr.rel (%p214) target = $region16
        $region15: #{decoder_forward.1} parent=11 // pred_region
          _
        $region16: #{decoder_forward.1} parent=11 // pred_fallthru
          _
        // Predicated region
        $region17: #{decoder_forward.1} parent=11 // pred_check
          %p217 = pneg %p110
        $region18: #{decoder_forward.1} parent=11 // pred_check_branch
          %219 = sbr.rel (%p217) target = $region20
        $region19: #{decoder_forward.1} parent=11 // pred_region
          _
        $region20: #{decoder_forward.1} parent=11 // pred_fallthru
          _
        // Predicated region
        $region21: #{decoder_forward.1} parent=11 // pred_check
          %p220 = pneg %p131
        $region22: #{decoder_forward.1} parent=11 // pred_check_branch
          %222 = sbr.rel (%p220) target = $region24
        $region23: #{decoder_forward.1} parent=11 // pred_region
          _
        $region24: #{decoder_forward.1} parent=11 // pred_fallthru
          _
        // Predicated region
        $region25: #{decoder_forward.1} parent=11 // pred_check
          %p223 = pneg %p152
        $region26: #{decoder_forward.1} parent=11 // pred_check_branch
          %225 = sbr.rel (%p223) target = $region28
        $region27: #{decoder_forward.1} parent=11 // pred_region
          _
        $region28: #{decoder_forward.1} parent=11 // pred_fallthru
          _
        // Predicated region
        $region29: #{decoder_forward.1} parent=11 // pred_check
          %p226 = pneg %p173
        $region30: #{decoder_forward.1} parent=11 // pred_check_branch
          %228 = sbr.rel (%p226) target = $region32
        $region31: #{decoder_forward.1} parent=11 // pred_region
          _
        $region32: #{decoder_forward.1} parent=11 // pred_fallthru
          _
      $region12: #{decoder_forward.1} parent=5 // pred_fallthru
        _
      %p229 = scmp.lt.s32.totalorder %s16, 2
      // Predicated region
      $region33: #{decoder_forward.1} parent=5 // pred_check
        %p230 = pneg %p229
      $region34: #{decoder_forward.1} parent=5 // pred_check_branch
        %232 = sbr.rel (%p230) target = $region36
      $region35: #{decoder_forward.1} parent=5 // pred_region
        // Predicated region
        $region37: #{decoder_forward.1} parent=35 // pred_check
          %p233 = pneg %p36
        $region38: #{decoder_forward.1} parent=35 // pred_check_branch
          %235 = sbr.rel (%p233) target = $region40
        $region39: #{decoder_forward.1} parent=35 // pred_region
          %p236 = scmp.lt.s32.totalorder %s16, 1
          %s237 = scalar_select %p236, %s16, 1
          %s238 = smul.addr %s237, 8
          %s239 = smul.addr %s238, 8
          %s240 = scalar_lea.vmem %s0, %s239
        $region40: #{decoder_forward.1} parent=35 // pred_fallthru
          _
        // Predicated region
        $region41: #{decoder_forward.1} parent=35 // pred_check
          %p241 = pneg %p62
        $region42: #{decoder_forward.1} parent=35 // pred_check_branch
          %243 = sbr.rel (%p241) target = $region44
        $region43: #{decoder_forward.1} parent=35 // pred_region
          %p244 = scmp.lt.s32.totalorder %s16, 1
          %s245 = scalar_select %p244, %s16, 1
          %s246 = smul.addr %s245, 8
          %s247 = smul.addr %s246, 8
          %s248 = scalar_lea.vmem %s1, %s247
        $region44: #{decoder_forward.1} parent=35 // pred_fallthru
          _
      $region36: #{decoder_forward.1} parent=5 // pred_fallthru
        _
      %p249 = scmp.le.s32.totalorder 1, %s16
      %p250 = scmp.lt.s32.totalorder %s16, 3
      %p251 = pnand %p249, %p250
      %p252 = pneg %p251
      // Predicated region
      $region45: #{decoder_forward.1} parent=5 // pred_check
        _
      $region46: #{decoder_forward.1} parent=5 // pred_check_branch
        %254 = sbr.rel (%p251) target = $region48
      $region47: #{decoder_forward.1} parent=5 // pred_region
        %s255 = ssub.s32 %s16, 1
        %p256 = scmp.lt.s32.totalorder %s21, 1
        %s257 = scalar_select %p256, %s21, 1
        %s258 = smul.addr %s257, 8
        %s259 = smul.addr %s258, 8
        %s260 = scalar_lea.vmem %s0, %s259
        %p261 = pneg %p42
        %p262 = pneg %p39
        %p263 = scmp.lt.s32.totalorder %s21, 1
        %s264 = scalar_select %p263, %s21, 1
        %s265 = smul.addr %s264, 8
        %s266 = smul.addr %s265, 8
        %s267 = scalar_lea.vmem %s1, %s266
        %p268 = pneg %p68
        %p269 = pneg %p65
        %p270 = pneg %p89
        %p271 = pneg %p86
        %p272 = pneg %p110
        %p273 = pneg %p107
        %p274 = pneg %p131
        %p275 = pneg %p128
        %p276 = pneg %p152
        %p277 = pneg %p149
        %p278 = pneg %p173
        %p279 = pneg %p170
        %p280 = pneg %p199
        %p281 = pneg %p196
        %s282 = sand.u32 %s186, 1
        %s283 = scalar_lea.sflag [#allocation8], %s282
        %s284 = sand.u32 %s186, 1
        %s285 = smul.addr %s284, 64
        %s286 = scalar_lea.vmem [#allocation7], %s285
        %p287 = scmp.lt.s32.totalorder %s21, 1
        %s288 = scalar_select %p287, %s21, 1
        %s289 = smul.addr %s288, 8
        %s290 = smul.addr %s289, 8
        %s291 = scalar_lea.vmem %s0, %s290
        %p292 = scmp.lt.s32.totalorder %s21, 1
        %s293 = scalar_select %p292, %s21, 1
        %s294 = smul.addr %s293, 8
        %s295 = smul.addr %s294, 8
        %s296 = scalar_lea.vmem %s1, %s295
        %v297 = vld [vmem:[%s291] sm:$0xff]
        %v298 = vld [vmem:[%s291 + $0x8] sm:$0xff]
        %v299 = vld [vmem:[%s291 + $0x10] sm:$0xff]
        %v300 = vld [vmem:[%s291 + $0x18] sm:$0xff]
        %v301 = vld [vmem:[%s291 + $0x20] sm:$0xff]
        %v302 = vld [vmem:[%s291 + $0x28] sm:$0xff]
        %v303 = vld [vmem:[%s291 + $0x30] sm:$0xff]
        %v304 = vld [vmem:[%s291 + $0x38] sm:$0xff]
        %v305 = vld [vmem:[%s2] sm:$0xff]
        %v306 = vld [vmem:[%s3] sm:$0x1]
        %v308 = vlaneseq
        %v309 = vshrl.u32 %v308, 7
        %v310 = vsub.s32 0, %v309
        %v311 = vrot.slane %v306, %v310
        %vm313 = vcmask 64512
        %v315 = vsel %vm313, %v297, 0
        %v318 = vsel %vm313, %v298, 0
        %v321 = vsel %vm313, %v299, 0
        %v324 = vsel %vm313, %v300, 0
        %v327 = vsel %vm313, %v301, 0
        %v330 = vsel %vm313, %v302, 0
        %v333 = vsel %vm313, %v303, 0
        %v336 = vsel %vm313, %v304, 0
        %338 = vmatprep.subr.mxu0 0.0
        %339 = vmatpush1.msra.mxu0 %v305
        %340 = vmatprep.subr.mxu0 0.0
        %341 = vmatpush1.msra.mxu0 0.0
        %342 = vmatprep.subr.mxu0 0.0
        %343 = vmatpush1.msra.mxu0 0.0
        %344 = vmatprep.subr.mxu0 0.0
        %345 = vmatpush1.msra.mxu0 0.0
        %346 = vmatprep.subr.mxu0 0.0
        %347 = vmatpush1.msra.mxu0 0.0
        %348 = vmatprep.subr.mxu0 0.0
        %349 = vmatpush1.msra.mxu0 0.0
        %350 = vmatprep.subr.mxu0 0.0
        %351 = vmatpush1.msra.mxu0 0.0
        %352 = vmatprep.subr.mxu0 0.0
        %353 = vmatpush1.msra.mxu0 0.0
        %354 = vmatprep.subr.mxu0 0.0
        %355 = vmatpush1.msra.mxu0 0.0
        %356 = vmatprep.subr.mxu0 0.0
        %357 = vmatpush1.msra.mxu0 0.0
        %358 = vmatprep.subr.mxu0 0.0
        %359 = vmatpush1.msra.mxu0 0.0
        %360 = vmatprep.subr.mxu0 0.0
        %361 = vmatpush1.msra.mxu0 0.0
        %362 = vmatprep.subr.mxu0 0.0
        %363 = vmatpush1.msra.mxu0 0.0
        %364 = vmatprep.subr.mxu0 0.0
        %365 = vmatpush1.msra.mxu0 0.0
        %366 = vmatprep.subr.mxu0 0.0
        %367 = vmatpush1.msra.mxu0 0.0
        %368 = vmatprep.subr.mxu0 0.0
        %369 = vmatpush1.msra.mxu0 0.0
        %370 = vmatprep.subr.mxu0 0.0
        %371 = vmatpush1.msra.mxu0 0.0
        %372 = vmatprep.subr.mxu0 0.0
        %373 = vmatpush1.msra.mxu0 0.0
        %374 = vmatprep.subr.mxu0 0.0
        %375 = vmatpush1.msra.mxu0 0.0
        %376 = vmatprep.subr.mxu0 0.0
        %377 = vmatpush1.msra.mxu0 0.0
        %378 = vmatprep.subr.mxu0 0.0
        %379 = vmatpush1.msra.mxu0 0.0
        %380 = vmatprep.subr.mxu0 0.0
        %381 = vmatpush1.msra.mxu0 0.0
        %382 = vmatprep.subr.mxu0 0.0
        %383 = vmatpush1.msra.mxu0 0.0
        %384 = vmatprep.subr.mxu0 0.0
        %385 = vmatpush1.msra.mxu0 0.0
        %386 = vmatprep.subr.mxu0 0.0
        %387 = vmatpush1.msra.mxu0 0.0
        %388 = vmatprep.subr.mxu0 0.0
        %389 = vmatpush1.msra.mxu0 0.0
        %390 = vmatprep.subr.mxu0 0.0
        %391 = vmatpush1.msra.mxu0 0.0
        %392 = vmatprep.subr.mxu0 0.0
        %393 = vmatpush1.msra.mxu0 0.0
        %394 = vmatprep.subr.mxu0 0.0
        %395 = vmatpush1.msra.mxu0 0.0
        %396 = vmatprep.subr.mxu0 0.0
        %397 = vmatpush1.msra.mxu0 0.0
        %398 = vmatprep.subr.mxu0 0.0
        %399 = vmatpush1.msra.mxu0 0.0
        %400 = vmatprep.subr.mxu0 0.0
        %401 = vmatpush1.msra.mxu0 0.0
        %402 = vmatprep.mubr.f32.mxu0 0.0
        %403 = vmatmul.mubr.f32.gmra.mrb[0].mxu0 %v315
        %v404 = vpop.f32.mrb[0].mxu0
        %v405 = vadd.f32 %v311, %v404
        %v406 = vpop.f32.mrb[0].mxu0
        %407 = vmatprep.mubr.f32.mxu0 0.0
        %408 = vmatmul.mubr.f32.gmra.mrb[0].mxu0 %v318
        %v409 = vpop.f32.mrb[0].mxu0
        %v410 = vadd.f32 %v311, %v409
        %v411 = vpop.f32.mrb[0].mxu0
        %412 = vmatprep.mubr.f32.mxu0 0.0
        %413 = vmatmul.mubr.f32.gmra.mrb[0].mxu0 %v321
        %v414 = vpop.f32.mrb[0].mxu0
        %v415 = vadd.f32 %v311, %v414
        %v416 = vpop.f32.mrb[0].mxu0
        %417 = vmatprep.mubr.f32.mxu0 0.0
        %418 = vmatmul.mubr.f32.gmra.mrb[0].mxu0 %v324
        %v419 = vpop.f32.mrb[0].mxu0
        %v420 = vadd.f32 %v311, %v419
        %v421 = vpop.f32.mrb[0].mxu0
        %422 = vmatprep.mubr.f32.mxu0 0.0
        %423 = vmatmul.mubr.f32.gmra.mrb[0].mxu0 %v327
        %v424 = vpop.f32.mrb[0].mxu0
        %v425 = vadd.f32 %v311, %v424
        %v426 = vpop.f32.mrb[0].mxu0
        %427 = vmatprep.mubr.f32.mxu0 0.0
        %428 = vmatmul.mubr.f32.gmra.mrb[0].mxu0 %v330
        %v429 = vpop.f32.mrb[0].mxu0
        %v430 = vadd.f32 %v311, %v429
        %v431 = vpop.f32.mrb[0].mxu0
        %432 = vmatprep.mubr.f32.mxu0 0.0
        %433 = vmatmul.mubr.f32.gmra.mrb[0].mxu0 %v333
        %v434 = vpop.f32.mrb[0].mxu0
        %v435 = vadd.f32 %v311, %v434
        %v436 = vpop.f32.mrb[0].mxu0
        %437 = vmatprep.mubr.f32.mxu0 0.0
        %438 = vmatmul.mubr.f32.gmra.mrb[0].mxu0 %v336
        %v439 = vpop.f32.mrb[0].mxu0
        %v440 = vadd.f32 %v311, %v439
        %v441 = vpop.f32.mrb[0].mxu0
        %442 = vdwg.mxu0
        %s443 = scalar_lea.vmem %s2, 8
        %v444 = vld [vmem:[%s443] sm:$0xff]
        %445 = vmatprep.subr.mxu0 0.0
        %446 = vmatpush1.msra.mxu0 %v444
        %447 = vmatprep.subr.mxu0 0.0
        %448 = vmatpush1.msra.mxu0 0.0
        %449 = vmatprep.subr.mxu0 0.0
        %450 = vmatpush1.msra.mxu0 0.0
        %451 = vmatprep.subr.mxu0 0.0
        %452 = vmatpush1.msra.mxu0 0.0
        %453 = vmatprep.subr.mxu0 0.0
        %454 = vmatpush1.msra.mxu0 0.0
        %455 = vmatprep.subr.mxu0 0.0
        %456 = vmatpush1.msra.mxu0 0.0
        %457 = vmatprep.subr.mxu0 0.0
        %458 = vmatpush1.msra.mxu0 0.0
        %459 = vmatprep.subr.mxu0 0.0
        %460 = vmatpush1.msra.mxu0 0.0
        %461 = vmatprep.subr.mxu0 0.0
        %462 = vmatpush1.msra.mxu0 0.0
        %463 = vmatprep.subr.mxu0 0.0
        %464 = vmatpush1.msra.mxu0 0.0
        %465 = vmatprep.subr.mxu0 0.0
        %466 = vmatpush1.msra.mxu0 0.0
        %467 = vmatprep.subr.mxu0 0.0
        %468 = vmatpush1.msra.mxu0 0.0
        %469 = vmatprep.subr.mxu0 0.0
        %470 = vmatpush1.msra.mxu0 0.0
        %471 = vmatprep.subr.mxu0 0.0
        %472 = vmatpush1.msra.mxu0 0.0
        %473 = vmatprep.subr.mxu0 0.0
        %474 = vmatpush1.msra.mxu0 0.0
        %475 = vmatprep.subr.mxu0 0.0
        %476 = vmatpush1.msra.mxu0 0.0
        %477 = vmatprep.subr.mxu0 0.0
        %478 = vmatpush1.msra.mxu0 0.0
        %479 = vmatprep.subr.mxu0 0.0
        %480 = vmatpush1.msra.mxu0 0.0
        %481 = vmatprep.subr.mxu0 0.0
        %482 = vmatpush1.msra.mxu0 0.0
        %483 = vmatprep.subr.mxu0 0.0
        %484 = vmatpush1.msra.mxu0 0.0
        %485 = vmatprep.subr.mxu0 0.0
        %486 = vmatpush1.msra.mxu0 0.0
        %487 = vmatprep.subr.mxu0 0.0
        %488 = vmatpush1.msra.mxu0 0.0
        %489 = vmatprep.subr.mxu0 0.0
        %490 = vmatpush1.msra.mxu0 0.0
        %491 = vmatprep.subr.mxu0 0.0
        %492 = vmatpush1.msra.mxu0 0.0
        %493 = vmatprep.subr.mxu0 0.0
        %494 = vmatpush1.msra.mxu0 0.0
        %495 = vmatprep.subr.mxu0 0.0
        %496 = vmatpush1.msra.mxu0 0.0
        %497 = vmatprep.subr.mxu0 0.0
        %498 = vmatpush1.msra.mxu0 0.0
        %499 = vmatprep.subr.mxu0 0.0
        %500 = vmatpush1.msra.mxu0 0.0
        %501 = vmatprep.subr.mxu0 0.0
        %502 = vmatpush1.msra.mxu0 0.0
        %503 = vmatprep.subr.mxu0 0.0
        %504 = vmatpush1.msra.mxu0 0.0
        %505 = vmatprep.subr.mxu0 0.0
        %506 = vmatpush1.msra.mxu0 0.0
        %507 = vmatprep.subr.mxu0 0.0
        %508 = vmatpush1.msra.mxu0 0.0
        %509 = vmatprep.mubr.f32.mxu0 0.0
        %510 = vmatmul.mubr.f32.gmra.mrb[0].mxu0 %v315
        %v511 = vpop.f32.mrb[0].mxu0
        %v512 = vadd.f32 %v311, %v511
        %v513 = vpop.f32.mrb[0].mxu0
        %514 = vmatprep.mubr.f32.mxu0 0.0
        %515 = vmatmul.mubr.f32.gmra.mrb[0].mxu0 %v318
        %v516 = vpop.f32.mrb[0].mxu0
        %v517 = vadd.f32 %v311, %v516
        %v518 = vpop.f32.mrb[0].mxu0
        %519 = vmatprep.mubr.f32.mxu0 0.0
        %520 = vmatmul.mubr.f32.gmra.mrb[0].mxu0 %v321
        %v521 = vpop.f32.mrb[0].mxu0
        %v522 = vadd.f32 %v311, %v521
        %v523 = vpop.f32.mrb[0].mxu0
        %524 = vmatprep.mubr.f32.mxu0 0.0
        %525 = vmatmul.mubr.f32.gmra.mrb[0].mxu0 %v324
        %v526 = vpop.f32.mrb[0].mxu0
        %v527 = vadd.f32 %v311, %v526
        %v528 = vpop.f32.mrb[0].mxu0
        %529 = vmatprep.mubr.f32.mxu0 0.0
        %530 = vmatmul.mubr.f32.gmra.mrb[0].mxu0 %v327
        %v531 = vpop.f32.mrb[0].mxu0
        %v532 = vadd.f32 %v311, %v531
        %v533 = vpop.f32.mrb[0].mxu0
        %534 = vmatprep.mubr.f32.mxu0 0.0
        %535 = vmatmul.mubr.f32.gmra.mrb[0].mxu0 %v330
        %v536 = vpop.f32.mrb[0].mxu0
        %v537 = vadd.f32 %v311, %v536
        %v538 = vpop.f32.mrb[0].mxu0
        %539 = vmatprep.mubr.f32.mxu0 0.0
        %540 = vmatmul.mubr.f32.gmra.mrb[0].mxu0 %v333
        %v541 = vpop.f32.mrb[0].mxu0
        %v542 = vadd.f32 %v311, %v541
        %v543 = vpop.f32.mrb[0].mxu0
        %544 = vmatprep.mubr.f32.mxu0 0.0
        %545 = vmatmul.mubr.f32.gmra.mrb[0].mxu0 %v336
        %v546 = vpop.f32.mrb[0].mxu0
        %v547 = vadd.f32 %v311, %v546
        %v548 = vpop.f32.mrb[0].mxu0
        %549 = vdwg.mxu0
        %s550 = scalar_lea.vmem %s2, 16
        %v551 = vld [vmem:[%s550] sm:$0xff]
        %552 = vmatprep.subr.mxu0 0.0
        %553 = vmatpush1.msra.mxu0 %v551
        %554 = vmatprep.subr.mxu0 0.0
        %555 = vmatpush1.msra.mxu0 0.0
        %556 = vmatprep.subr.mxu0 0.0
        %557 = vmatpush1.msra.mxu0 0.0
        %558 = vmatprep.subr.mxu0 0.0
        %559 = vmatpush1.msra.mxu0 0.0
        %560 = vmatprep.subr.mxu0 0.0
        %561 = vmatpush1.msra.mxu0 0.0
        %562 = vmatprep.subr.mxu0 0.0
        %563 = vmatpush1.msra.mxu0 0.0
        %564 = vmatprep.subr.mxu0 0.0
        %565 = vmatpush1.msra.mxu0 0.0
        %566 = vmatprep.subr.mxu0 0.0
        %567 = vmatpush1.msra.mxu0 0.0
        %568 = vmatprep.subr.mxu0 0.0
        %569 = vmatpush1.msra.mxu0 0.0
        %570 = vmatprep.subr.mxu0 0.0
        %571 = vmatpush1.msra.mxu0 0.0
        %572 = vmatprep.subr.mxu0 0.0
        %573 = vmatpush1.msra.mxu0 0.0
        %574 = vmatprep.subr.mxu0 0.0
        %575 = vmatpush1.msra.mxu0 0.0
        %576 = vmatprep.subr.mxu0 0.0
        %577 = vmatpush1.msra.mxu0 0.0
        %578 = vmatprep.subr.mxu0 0.0
        %579 = vmatpush1.msra.mxu0 0.0
        %580 = vmatprep.subr.mxu0 0.0
        %581 = vmatpush1.msra.mxu0 0.0
        %582 = vmatprep.subr.mxu0 0.0
        %583 = vmatpush1.msra.mxu0 0.0
        %584 = vmatprep.subr.mxu0 0.0
        %585 = vmatpush1.msra.mxu0 0.0
        %586 = vmatprep.subr.mxu0 0.0
        %587 = vmatpush1.msra.mxu0 0.0
        %588 = vmatprep.subr.mxu0 0.0
        %589 = vmatpush1.msra.mxu0 0.0
        %590 = vmatprep.subr.mxu0 0.0
        %591 = vmatpush1.msra.mxu0 0.0
        %592 = vmatprep.subr.mxu0 0.0
        %593 = vmatpush1.msra.mxu0 0.0
        %594 = vmatprep.subr.mxu0 0.0
        %595 = vmatpush1.msra.mxu0 0.0
        %596 = vmatprep.subr.mxu0 0.0
        %597 = vmatpush1.msra.mxu0 0.0
        %598 = vmatprep.subr.mxu0 0.0
        %599 = vmatpush1.msra.mxu0 0.0
        %600 = vmatprep.subr.mxu0 0.0
        %601 = vmatpush1.msra.mxu0 0.0
        %602 = vmatprep.subr.mxu0 0.0
        %603 = vmatpush1.msra.mxu0 0.0
        %604 = vmatprep.subr.mxu0 0.0
        %605 = vmatpush1.msra.mxu0 0.0
        %606 = vmatprep.subr.mxu0 0.0
        %607 = vmatpush1.msra.mxu0 0.0
        %608 = vmatprep.subr.mxu0 0.0
        %609 = vmatpush1.msra.mxu0 0.0
        %610 = vmatprep.subr.mxu0 0.0
        %611 = vmatpush1.msra.mxu0 0.0
        %612 = vmatprep.subr.mxu0 0.0
        %613 = vmatpush1.msra.mxu0 0.0
        %614 = vmatprep.subr.mxu0 0.0
        %615 = vmatpush1.msra.mxu0 0.0
        %616 = vmatprep.mubr.f32.mxu0 0.0
        %617 = vmatmul.mubr.f32.gmra.mrb[0].mxu0 %v315
        %v618 = vpop.f32.mrb[0].mxu0
        %v619 = vadd.f32 %v311, %v618
        %v620 = vpop.f32.mrb[0].mxu0
        %621 = vmatprep.mubr.f32.mxu0 0.0
        %622 = vmatmul.mubr.f32.gmra.mrb[0].mxu0 %v318
        %v623 = vpop.f32.mrb[0].mxu0
        %v624 = vadd.f32 %v311, %v623
        %v625 = vpop.f32.mrb[0].mxu0
        %626 = vmatprep.mubr.f32.mxu0 0.0
        %627 = vmatmul.mubr.f32.gmra.mrb[0].mxu0 %v321
        %v628 = vpop.f32.mrb[0].mxu0
        %v629 = vadd.f32 %v311, %v628
        %v630 = vpop.f32.mrb[0].mxu0
        %631 = vmatprep.mubr.f32.mxu0 0.0
        %632 = vmatmul.mubr.f32.gmra.mrb[0].mxu0 %v324
        %v633 = vpop.f32.mrb[0].mxu0
        %v634 = vadd.f32 %v311, %v633
        %v635 = vpop.f32.mrb[0].mxu0
        %636 = vmatprep.mubr.f32.mxu0 0.0
        %637 = vmatmul.mubr.f32.gmra.mrb[0].mxu0 %v327
        %v638 = vpop.f32.mrb[0].mxu0
        %v639 = vadd.f32 %v311, %v638
        %v640 = vpop.f32.mrb[0].mxu0
        %641 = vmatprep.mubr.f32.mxu0 0.0
        %642 = vmatmul.mubr.f32.gmra.mrb[0].mxu0 %v330
        %v643 = vpop.f32.mrb[0].mxu0
        %v644 = vadd.f32 %v311, %v643
        %v645 = vpop.f32.mrb[0].mxu0
        %646 = vmatprep.mubr.f32.mxu0 0.0
        %647 = vmatmul.mubr.f32.gmra.mrb[0].mxu0 %v333
        %v648 = vpop.f32.mrb[0].mxu0
        %v649 = vadd.f32 %v311, %v648
        %v650 = vpop.f32.mrb[0].mxu0
        %651 = vmatprep.mubr.f32.mxu0 0.0
        %652 = vmatmul.mubr.f32.gmra.mrb[0].mxu0 %v336
        %v653 = vpop.f32.mrb[0].mxu0
        %v654 = vadd.f32 %v311, %v653
        %v655 = vpop.f32.mrb[0].mxu0
        %656 = vdwg.mxu0
        %s657 = scalar_lea.vmem %s2, 24
        %v658 = vld [vmem:[%s657] sm:$0xff]
        %659 = vmatprep.subr.mxu0 0.0
        %660 = vmatpush1.msra.mxu0 %v658
        %661 = vmatprep.subr.mxu0 0.0
        %662 = vmatpush1.msra.mxu0 0.0
        %663 = vmatprep.subr.mxu0 0.0
        %664 = vmatpush1.msra.mxu0 0.0
        %665 = vmatprep.subr.mxu0 0.0
        %666 = vmatpush1.msra.mxu0 0.0
        %667 = vmatprep.subr.mxu0 0.0
        %668 = vmatpush1.msra.mxu0 0.0
        %669 = vmatprep.subr.mxu0 0.0
        %670 = vmatpush1.msra.mxu0 0.0
        %671 = vmatprep.subr.mxu0 0.0
        %672 = vmatpush1.msra.mxu0 0.0
        %673 = vmatprep.subr.mxu0 0.0
        %674 = vmatpush1.msra.mxu0 0.0
        %675 = vmatprep.subr.mxu0 0.0
        %676 = vmatpush1.msra.mxu0 0.0
        %677 = vmatprep.subr.mxu0 0.0
        %678 = vmatpush1.msra.mxu0 0.0
        %679 = vmatprep.subr.mxu0 0.0
        %680 = vmatpush1.msra.mxu0 0.0
        %681 = vmatprep.subr.mxu0 0.0
        %682 = vmatpush1.msra.mxu0 0.0
        %683 = vmatprep.subr.mxu0 0.0
        %684 = vmatpush1.msra.mxu0 0.0
        %685 = vmatprep.subr.mxu0 0.0
        %686 = vmatpush1.msra.mxu0 0.0
        %687 = vmatprep.subr.mxu0 0.0
        %688 = vmatpush1.msra.mxu0 0.0
        %689 = vmatprep.subr.mxu0 0.0
        %690 = vmatpush1.msra.mxu0 0.0
        %691 = vmatprep.subr.mxu0 0.0
        %692 = vmatpush1.msra.mxu0 0.0
        %693 = vmatprep.subr.mxu0 0.0
        %694 = vmatpush1.msra.mxu0 0.0
        %695 = vmatprep.subr.mxu0 0.0
        %696 = vmatpush1.msra.mxu0 0.0
        %697 = vmatprep.subr.mxu0 0.0
        %698 = vmatpush1.msra.mxu0 0.0
        %699 = vmatprep.subr.mxu0 0.0
        %700 = vmatpush1.msra.mxu0 0.0
        %701 = vmatprep.subr.mxu0 0.0
        %702 = vmatpush1.msra.mxu0 0.0
        %703 = vmatprep.subr.mxu0 0.0
        %704 = vmatpush1.msra.mxu0 0.0
        %705 = vmatprep.subr.mxu0 0.0
        %706 = vmatpush1.msra.mxu0 0.0
        %707 = vmatprep.subr.mxu0 0.0
        %708 = vmatpush1.msra.mxu0 0.0
        %709 = vmatprep.subr.mxu0 0.0
        %710 = vmatpush1.msra.mxu0 0.0
        %711 = vmatprep.subr.mxu0 0.0
        %712 = vmatpush1.msra.mxu0 0.0
        %713 = vmatprep.subr.mxu0 0.0
        %714 = vmatpush1.msra.mxu0 0.0
        %715 = vmatprep.subr.mxu0 0.0
        %716 = vmatpush1.msra.mxu0 0.0
        %717 = vmatprep.subr.mxu0 0.0
        %718 = vmatpush1.msra.mxu0 0.0
        %719 = vmatprep.subr.mxu0 0.0
        %720 = vmatpush1.msra.mxu0 0.0
        %721 = vmatprep.subr.mxu0 0.0
        %722 = vmatpush1.msra.mxu0 0.0
        %723 = vmatprep.mubr.f32.mxu0 0.0
        %724 = vmatmul.mubr.f32.gmra.mrb[0].mxu0 %v315
        %v725 = vpop.f32.mrb[0].mxu0
        %v726 = vadd.f32 %v311, %v725
        %v727 = vpop.f32.mrb[0].mxu0
        %728 = vmatprep.mubr.f32.mxu0 0.0
        %729 = vmatmul.mubr.f32.gmra.mrb[0].mxu0 %v318
        %v730 = vpop.f32.mrb[0].mxu0
        %v731 = vadd.f32 %v311, %v730
        %v732 = vpop.f32.mrb[0].mxu0
        %733 = vmatprep.mubr.f32.mxu0 0.0
        %734 = vmatmul.mubr.f32.gmra.mrb[0].mxu0 %v321
        %v735 = vpop.f32.mrb[0].mxu0
        %v736 = vadd.f32 %v311, %v735
        %v737 = vpop.f32.mrb[0].mxu0
        %738 = vmatprep.mubr.f32.mxu0 0.0
        %739 = vmatmul.mubr.f32.gmra.mrb[0].mxu0 %v324
        %v740 = vpop.f32.mrb[0].mxu0
        %v741 = vadd.f32 %v311, %v740
        %v742 = vpop.f32.mrb[0].mxu0
        %743 = vmatprep.mubr.f32.mxu0 0.0
        %744 = vmatmul.mubr.f32.gmra.mrb[0].mxu0 %v327
        %v745 = vpop.f32.mrb[0].mxu0
        %v746 = vadd.f32 %v311, %v745
        %v747 = vpop.f32.mrb[0].mxu0
        %748 = vmatprep.mubr.f32.mxu0 0.0
        %749 = vmatmul.mubr.f32.gmra.mrb[0].mxu0 %v330
        %v750 = vpop.f32.mrb[0].mxu0
        %v751 = vadd.f32 %v311, %v750
        %v752 = vpop.f32.mrb[0].mxu0
        %753 = vmatprep.mubr.f32.mxu0 0.0
        %754 = vmatmul.mubr.f32.gmra.mrb[0].mxu0 %v333
        %v755 = vpop.f32.mrb[0].mxu0
        %v756 = vadd.f32 %v311, %v755
        %v757 = vpop.f32.mrb[0].mxu0
        %758 = vmatprep.mubr.f32.mxu0 0.0
        %759 = vmatmul.mubr.f32.gmra.mrb[0].mxu0 %v336
        %v760 = vpop.f32.mrb[0].mxu0
        %v761 = vadd.f32 %v311, %v760
        %v762 = vpop.f32.mrb[0].mxu0
        %763 = vdwg.mxu0
        %v772 = vcombine.high %v405, %v405
        %v774 = vunpack.c.l.s4 1966171168
        %v775 = vunpack.c.0.s8 %v774
        %v776 = vlaneseq
        %v777 = vshrl.u32 %v776, 7
        %v778 = vsub.s32 %v775, %v777
        %v779 = vrot.slane %v405, %v778
        %v781 = vunpack.c.l.s4 1966171168
        %v782 = vunpack.c.0.s8 %v781
        %v783 = vlaneseq
        %v784 = vshrl.u32 %v783, 7
        %v785 = vsub.s32 %v782, %v784
        %v786 = vrot.slane %v772, %v785
        %v787 = vcombine.high %v779, %v779
        %v788 = vcombine.high %v786, %v786
        %v790 = vunpack.c.l.s4 1966171168
        %v791 = vunpack.c.0.s8 %v790
        %v792 = vlaneseq
        %v793 = vshrl.u32 %v792, 7
        %v794 = vsub.s32 %v791, %v793
        %v795 = vrot.slane %v779, %v794
        %v797 = vunpack.c.l.s4 1966171168
        %v798 = vunpack.c.0.s8 %v797
        %v799 = vlaneseq
        %v800 = vshrl.u32 %v799, 7
        %v801 = vsub.s32 %v798, %v800
        %v802 = vrot.slane %v786, %v801
        %v804 = vunpack.c.l.s4 1966171168
        %v805 = vunpack.c.0.s8 %v804
        %v806 = vlaneseq
        %v807 = vshrl.u32 %v806, 7
        %v808 = vsub.s32 %v805, %v807
        %v809 = vrot.slane %v787, %v808
        %v811 = vunpack.c.l.s4 1966171168
        %v812 = vunpack.c.0.s8 %v811
        %v813 = vlaneseq
        %v814 = vshrl.u32 %v813, 7
        %v815 = vsub.s32 %v812, %v814
        %v816 = vrot.slane %v788, %v815
        %v817 = vcombine.high %v795, %v795
        %v818 = vcombine.high %v802, %v802
        %v819 = vcombine.high %v809, %v809
        %v820 = vcombine.high %v816, %v816
        %v821 = vcombine.high %v410, %v410
        %v823 = vunpack.c.l.s4 1966171168
        %v824 = vunpack.c.0.s8 %v823
        %v825 = vlaneseq
        %v826 = vshrl.u32 %v825, 7
        %v827 = vsub.s32 %v824, %v826
        %v828 = vrot.slane %v410, %v827
        %v830 = vunpack.c.l.s4 1966171168
        %v831 = vunpack.c.0.s8 %v830
        %v832 = vlaneseq
        %v833 = vshrl.u32 %v832, 7
        %v834 = vsub.s32 %v831, %v833
        %v835 = vrot.slane %v821, %v834
        %v836 = vcombine.high %v828, %v828
        %v837 = vcombine.high %v835, %v835
        %v839 = vunpack.c.l.s4 1966171168
        %v840 = vunpack.c.0.s8 %v839
        %v841 = vlaneseq
        %v842 = vshrl.u32 %v841, 7
        %v843 = vsub.s32 %v840, %v842
        %v844 = vrot.slane %v828, %v843
        %v846 = vunpack.c.l.s4 1966171168
        %v847 = vunpack.c.0.s8 %v846
        %v848 = vlaneseq
        %v849 = vshrl.u32 %v848, 7
        %v850 = vsub.s32 %v847, %v849
        %v851 = vrot.slane %v835, %v850
        %v853 = vunpack.c.l.s4 1966171168
        %v854 = vunpack.c.0.s8 %v853
        %v855 = vlaneseq
        %v856 = vshrl.u32 %v855, 7
        %v857 = vsub.s32 %v854, %v856
        %v858 = vrot.slane %v836, %v857
        %v860 = vunpack.c.l.s4 1966171168
        %v861 = vunpack.c.0.s8 %v860
        %v862 = vlaneseq
        %v863 = vshrl.u32 %v862, 7
        %v864 = vsub.s32 %v861, %v863
        %v865 = vrot.slane %v837, %v864
        %v866 = vcombine.high %v844, %v844
        %v867 = vcombine.high %v851, %v851
        %v868 = vcombine.high %v858, %v858
        %v869 = vcombine.high %v865, %v865
        %v870 = vcombine.high %v415, %v415
        %v872 = vunpack.c.l.s4 1966171168
        %v873 = vunpack.c.0.s8 %v872
        %v874 = vlaneseq
        %v875 = vshrl.u32 %v874, 7
        %v876 = vsub.s32 %v873, %v875
        %v877 = vrot.slane %v415, %v876
        %v879 = vunpack.c.l.s4 1966171168
        %v880 = vunpack.c.0.s8 %v879
        %v881 = vlaneseq
        %v882 = vshrl.u32 %v881, 7
        %v883 = vsub.s32 %v880, %v882
        %v884 = vrot.slane %v870, %v883
        %v885 = vcombine.high %v877, %v877
        %v886 = vcombine.high %v884, %v884
        %v888 = vunpack.c.l.s4 1966171168
        %v889 = vunpack.c.0.s8 %v888
        %v890 = vlaneseq
        %v891 = vshrl.u32 %v890, 7
        %v892 = vsub.s32 %v889, %v891
        %v893 = vrot.slane %v877, %v892
        %v895 = vunpack.c.l.s4 1966171168
        %v896 = vunpack.c.0.s8 %v895
        %v897 = vlaneseq
        %v898 = vshrl.u32 %v897, 7
        %v899 = vsub.s32 %v896, %v898
        %v900 = vrot.slane %v884, %v899
        %v902 = vunpack.c.l.s4 1966171168
        %v903 = vunpack.c.0.s8 %v902
        %v904 = vlaneseq
        %v905 = vshrl.u32 %v904, 7
        %v906 = vsub.s32 %v903, %v905
        %v907 = vrot.slane %v885, %v906
        %v909 = vunpack.c.l.s4 1966171168
        %v910 = vunpack.c.0.s8 %v909
        %v911 = vlaneseq
        %v912 = vshrl.u32 %v911, 7
        %v913 = vsub.s32 %v910, %v912
        %v914 = vrot.slane %v886, %v913
        %v915 = vcombine.high %v893, %v893
        %v916 = vcombine.high %v900, %v900
        %v917 = vcombine.high %v907, %v907
        %v918 = vcombine.high %v914, %v914
        %v919 = vcombine.high %v420, %v420
        %v921 = vunpack.c.l.s4 1966171168
        %v922 = vunpack.c.0.s8 %v921
        %v923 = vlaneseq
        %v924 = vshrl.u32 %v923, 7
        %v925 = vsub.s32 %v922, %v924
        %v926 = vrot.slane %v420, %v925
        %v928 = vunpack.c.l.s4 1966171168
        %v929 = vunpack.c.0.s8 %v928
        %v930 = vlaneseq
        %v931 = vshrl.u32 %v930, 7
        %v932 = vsub.s32 %v929, %v931
        %v933 = vrot.slane %v919, %v932
        %v934 = vcombine.high %v926, %v926
        %v935 = vcombine.high %v933, %v933
        %v937 = vunpack.c.l.s4 1966171168
        %v938 = vunpack.c.0.s8 %v937
        %v939 = vlaneseq
        %v940 = vshrl.u32 %v939, 7
        %v941 = vsub.s32 %v938, %v940
        %v942 = vrot.slane %v926, %v941
        %v944 = vunpack.c.l.s4 1966171168
        %v945 = vunpack.c.0.s8 %v944
        %v946 = vlaneseq
        %v947 = vshrl.u32 %v946, 7
        %v948 = vsub.s32 %v945, %v947
        %v949 = vrot.slane %v933, %v948
        %v951 = vunpack.c.l.s4 1966171168
        %v952 = vunpack.c.0.s8 %v951
        %v953 = vlaneseq
        %v954 = vshrl.u32 %v953, 7
        %v955 = vsub.s32 %v952, %v954
        %v956 = vrot.slane %v934, %v955
        %v958 = vunpack.c.l.s4 1966171168
        %v959 = vunpack.c.0.s8 %v958
        %v960 = vlaneseq
        %v961 = vshrl.u32 %v960, 7
        %v962 = vsub.s32 %v959, %v961
        %v963 = vrot.slane %v935, %v962
        %v964 = vcombine.high %v942, %v942
        %v965 = vcombine.high %v949, %v949
        %v966 = vcombine.high %v956, %v956
        %v967 = vcombine.high %v963, %v963
        %v968 = vcombine.high %v425, %v425
        %v970 = vunpack.c.l.s4 1966171168
        %v971 = vunpack.c.0.s8 %v970
        %v972 = vlaneseq
        %v973 = vshrl.u32 %v972, 7
        %v974 = vsub.s32 %v971, %v973
        %v975 = vrot.slane %v425, %v974
        %v977 = vunpack.c.l.s4 1966171168
        %v978 = vunpack.c.0.s8 %v977
        %v979 = vlaneseq
        %v980 = vshrl.u32 %v979, 7
        %v981 = vsub.s32 %v978, %v980
        %v982 = vrot.slane %v968, %v981
        %v983 = vcombine.high %v975, %v975
        %v984 = vcombine.high %v982, %v982
        %v986 = vunpack.c.l.s4 1966171168
        %v987 = vunpack.c.0.s8 %v986
        %v988 = vlaneseq
        %v989 = vshrl.u32 %v988, 7
        %v990 = vsub.s32 %v987, %v989
        %v991 = vrot.slane %v975, %v990
        %v993 = vunpack.c.l.s4 1966171168
        %v994 = vunpack.c.0.s8 %v993
        %v995 = vlaneseq
        %v996 = vshrl.u32 %v995, 7
        %v997 = vsub.s32 %v994, %v996
        %v998 = vrot.slane %v982, %v997
        %v1000 = vunpack.c.l.s4 1966171168
        %v1001 = vunpack.c.0.s8 %v1000
        %v1002 = vlaneseq
        %v1003 = vshrl.u32 %v1002, 7
        %v1004 = vsub.s32 %v1001, %v1003
        %v1005 = vrot.slane %v983, %v1004
        %v1007 = vunpack.c.l.s4 1966171168
        %v1008 = vunpack.c.0.s8 %v1007
        %v1009 = vlaneseq
        %v1010 = vshrl.u32 %v1009, 7
        %v1011 = vsub.s32 %v1008, %v1010
        %v1012 = vrot.slane %v984, %v1011
        %v1013 = vcombine.high %v991, %v991
        %v1014 = vcombine.high %v998, %v998
        %v1015 = vcombine.high %v1005, %v1005
        %v1016 = vcombine.high %v1012, %v1012
        %v1017 = vcombine.high %v430, %v430
        %v1019 = vunpack.c.l.s4 1966171168
        %v1020 = vunpack.c.0.s8 %v1019
        %v1021 = vlaneseq
        %v1022 = vshrl.u32 %v1021, 7
        %v1023 = vsub.s32 %v1020, %v1022
        %v1024 = vrot.slane %v430, %v1023
        %v1026 = vunpack.c.l.s4 1966171168
        %v1027 = vunpack.c.0.s8 %v1026
        %v1028 = vlaneseq
        %v1029 = vshrl.u32 %v1028, 7
        %v1030 = vsub.s32 %v1027, %v1029
        %v1031 = vrot.slane %v1017, %v1030
        %v1032 = vcombine.high %v1024, %v1024
        %v1033 = vcombine.high %v1031, %v1031
        %v1035 = vunpack.c.l.s4 1966171168
        %v1036 = vunpack.c.0.s8 %v1035
        %v1037 = vlaneseq
        %v1038 = vshrl.u32 %v1037, 7
        %v1039 = vsub.s32 %v1036, %v1038
        %v1040 = vrot.slane %v1024, %v1039
        %v1042 = vunpack.c.l.s4 1966171168
        %v1043 = vunpack.c.0.s8 %v1042
        %v1044 = vlaneseq
        %v1045 = vshrl.u32 %v1044, 7
        %v1046 = vsub.s32 %v1043, %v1045
        %v1047 = vrot.slane %v1031, %v1046
        %v1049 = vunpack.c.l.s4 1966171168
        %v1050 = vunpack.c.0.s8 %v1049
        %v1051 = vlaneseq
        %v1052 = vshrl.u32 %v1051, 7
        %v1053 = vsub.s32 %v1050, %v1052
        %v1054 = vrot.slane %v1032, %v1053
        %v1056 = vunpack.c.l.s4 1966171168
        %v1057 = vunpack.c.0.s8 %v1056
        %v1058 = vlaneseq
        %v1059 = vshrl.u32 %v1058, 7
        %v1060 = vsub.s32 %v1057, %v1059
        %v1061 = vrot.slane %v1033, %v1060
        %v1062 = vcombine.high %v1040, %v1040
        %v1063 = vcombine.high %v1047, %v1047
        %v1064 = vcombine.high %v1054, %v1054
        %v1065 = vcombine.high %v1061, %v1061
        %v1066 = vcombine.high %v435, %v435
        %v1068 = vunpack.c.l.s4 1966171168
        %v1069 = vunpack.c.0.s8 %v1068
        %v1070 = vlaneseq
        %v1071 = vshrl.u32 %v1070, 7
        %v1072 = vsub.s32 %v1069, %v1071
        %v1073 = vrot.slane %v435, %v1072
        %v1075 = vunpack.c.l.s4 1966171168
        %v1076 = vunpack.c.0.s8 %v1075
        %v1077 = vlaneseq
        %v1078 = vshrl.u32 %v1077, 7
        %v1079 = vsub.s32 %v1076, %v1078
        %v1080 = vrot.slane %v1066, %v1079
        %v1081 = vcombine.high %v1073, %v1073
        %v1082 = vcombine.high %v1080, %v1080
        %v1084 = vunpack.c.l.s4 1966171168
        %v1085 = vunpack.c.0.s8 %v1084
        %v1086 = vlaneseq
        %v1087 = vshrl.u32 %v1086, 7
        %v1088 = vsub.s32 %v1085, %v1087
        %v1089 = vrot.slane %v1073, %v1088
        %v1091 = vunpack.c.l.s4 1966171168
        %v1092 = vunpack.c.0.s8 %v1091
        %v1093 = vlaneseq
        %v1094 = vshrl.u32 %v1093, 7
        %v1095 = vsub.s32 %v1092, %v1094
        %v1096 = vrot.slane %v1080, %v1095
        %v1098 = vunpack.c.l.s4 1966171168
        %v1099 = vunpack.c.0.s8 %v1098
        %v1100 = vlaneseq
        %v1101 = vshrl.u32 %v1100, 7
        %v1102 = vsub.s32 %v1099, %v1101
        %v1103 = vrot.slane %v1081, %v1102
        %v1105 = vunpack.c.l.s4 1966171168
        %v1106 = vunpack.c.0.s8 %v1105
        %v1107 = vlaneseq
        %v1108 = vshrl.u32 %v1107, 7
        %v1109 = vsub.s32 %v1106, %v1108
        %v1110 = vrot.slane %v1082, %v1109
        %v1111 = vcombine.high %v1089, %v1089
        %v1112 = vcombine.high %v1096, %v1096
        %v1113 = vcombine.high %v1103, %v1103
        %v1114 = vcombine.high %v1110, %v1110
        %v1115 = vcombine.high %v440, %v440
        %v1117 = vunpack.c.l.s4 1966171168
        %v1118 = vunpack.c.0.s8 %v1117
        %v1119 = vlaneseq
        %v1120 = vshrl.u32 %v1119, 7
        %v1121 = vsub.s32 %v1118, %v1120
        %v1122 = vrot.slane %v440, %v1121
        %v1124 = vunpack.c.l.s4 1966171168
        %v1125 = vunpack.c.0.s8 %v1124
        %v1126 = vlaneseq
        %v1127 = vshrl.u32 %v1126, 7
        %v1128 = vsub.s32 %v1125, %v1127
        %v1129 = vrot.slane %v1115, %v1128
        %v1130 = vcombine.high %v1122, %v1122
        %v1131 = vcombine.high %v1129, %v1129
        %v1133 = vunpack.c.l.s4 1966171168
        %v1134 = vunpack.c.0.s8 %v1133
        %v1135 = vlaneseq
        %v1136 = vshrl.u32 %v1135, 7
        %v1137 = vsub.s32 %v1134, %v1136
        %v1138 = vrot.slane %v1122, %v1137
        %v1140 = vunpack.c.l.s4 1966171168
        %v1141 = vunpack.c.0.s8 %v1140
        %v1142 = vlaneseq
        %v1143 = vshrl.u32 %v1142, 7
        %v1144 = vsub.s32 %v1141, %v1143
        %v1145 = vrot.slane %v1129, %v1144
        %v1147 = vunpack.c.l.s4 1966171168
        %v1148 = vunpack.c.0.s8 %v1147
        %v1149 = vlaneseq
        %v1150 = vshrl.u32 %v1149, 7
        %v1151 = vsub.s32 %v1148, %v1150
        %v1152 = vrot.slane %v1130, %v1151
        %v1154 = vunpack.c.l.s4 1966171168
        %v1155 = vunpack.c.0.s8 %v1154
        %v1156 = vlaneseq
        %v1157 = vshrl.u32 %v1156, 7
        %v1158 = vsub.s32 %v1155, %v1157
        %v1159 = vrot.slane %v1131, %v1158
        %v1160 = vcombine.high %v1138, %v1138
        %v1161 = vcombine.high %v1145, %v1145
        %v1162 = vcombine.high %v1152, %v1152
        %v1163 = vcombine.high %v1159, %v1159
        %v1236 = vcombine.high %v512, %v512
        %v1238 = vunpack.c.l.s4 1966171168
        %v1239 = vunpack.c.0.s8 %v1238
        %v1240 = vlaneseq
        %v1241 = vshrl.u32 %v1240, 7
        %v1242 = vsub.s32 %v1239, %v1241
        %v1243 = vrot.slane %v512, %v1242
        %v1245 = vunpack.c.l.s4 1966171168
        %v1246 = vunpack.c.0.s8 %v1245
        %v1247 = vlaneseq
        %v1248 = vshrl.u32 %v1247, 7
        %v1249 = vsub.s32 %v1246, %v1248
        %v1250 = vrot.slane %v1236, %v1249
        %v1251 = vcombine.high %v1243, %v1243
        %v1252 = vcombine.high %v1250, %v1250
        %v1254 = vunpack.c.l.s4 1966171168
        %v1255 = vunpack.c.0.s8 %v1254
        %v1256 = vlaneseq
        %v1257 = vshrl.u32 %v1256, 7
        %v1258 = vsub.s32 %v1255, %v1257
        %v1259 = vrot.slane %v1243, %v1258
        %v1261 = vunpack.c.l.s4 1966171168
        %v1262 = vunpack.c.0.s8 %v1261
        %v1263 = vlaneseq
        %v1264 = vshrl.u32 %v1263, 7
        %v1265 = vsub.s32 %v1262, %v1264
        %v1266 = vrot.slane %v1250, %v1265
        %v1268 = vunpack.c.l.s4 1966171168
        %v1269 = vunpack.c.0.s8 %v1268
        %v1270 = vlaneseq
        %v1271 = vshrl.u32 %v1270, 7
        %v1272 = vsub.s32 %v1269, %v1271
        %v1273 = vrot.slane %v1251, %v1272
        %v1275 = vunpack.c.l.s4 1966171168
        %v1276 = vunpack.c.0.s8 %v1275
        %v1277 = vlaneseq
        %v1278 = vshrl.u32 %v1277, 7
        %v1279 = vsub.s32 %v1276, %v1278
        %v1280 = vrot.slane %v1252, %v1279
        %v1281 = vcombine.high %v1259, %v1259
        %v1282 = vcombine.high %v1266, %v1266
        %v1283 = vcombine.high %v1273, %v1273
        %v1284 = vcombine.high %v1280, %v1280
        %v1285 = vcombine.high %v517, %v517
        %v1287 = vunpack.c.l.s4 1966171168
        %v1288 = vunpack.c.0.s8 %v1287
        %v1289 = vlaneseq
        %v1290 = vshrl.u32 %v1289, 7
        %v1291 = vsub.s32 %v1288, %v1290
        %v1292 = vrot.slane %v517, %v1291
        %v1294 = vunpack.c.l.s4 1966171168
        %v1295 = vunpack.c.0.s8 %v1294
        %v1296 = vlaneseq
        %v1297 = vshrl.u32 %v1296, 7
        %v1298 = vsub.s32 %v1295, %v1297
        %v1299 = vrot.slane %v1285, %v1298
        %v1300 = vcombine.high %v1292, %v1292
        %v1301 = vcombine.high %v1299, %v1299
        %v1303 = vunpack.c.l.s4 1966171168
        %v1304 = vunpack.c.0.s8 %v1303
        %v1305 = vlaneseq
        %v1306 = vshrl.u32 %v1305, 7
        %v1307 = vsub.s32 %v1304, %v1306
        %v1308 = vrot.slane %v1292, %v1307
        %v1310 = vunpack.c.l.s4 1966171168
        %v1311 = vunpack.c.0.s8 %v1310
        %v1312 = vlaneseq
        %v1313 = vshrl.u32 %v1312, 7
        %v1314 = vsub.s32 %v1311, %v1313
        %v1315 = vrot.slane %v1299, %v1314
        %v1317 = vunpack.c.l.s4 1966171168
        %v1318 = vunpack.c.0.s8 %v1317
        %v1319 = vlaneseq
        %v1320 = vshrl.u32 %v1319, 7
        %v1321 = vsub.s32 %v1318, %v1320
        %v1322 = vrot.slane %v1300, %v1321
        %v1324 = vunpack.c.l.s4 1966171168
        %v1325 = vunpack.c.0.s8 %v1324
        %v1326 = vlaneseq
        %v1327 = vshrl.u32 %v1326, 7
        %v1328 = vsub.s32 %v1325, %v1327
        %v1329 = vrot.slane %v1301, %v1328
        %v1330 = vcombine.high %v1308, %v1308
        %v1331 = vcombine.high %v1315, %v1315
        %v1332 = vcombine.high %v1322, %v1322
        %v1333 = vcombine.high %v1329, %v1329
        %v1334 = vcombine.high %v522, %v522
        %v1336 = vunpack.c.l.s4 1966171168
        %v1337 = vunpack.c.0.s8 %v1336
        %v1338 = vlaneseq
        %v1339 = vshrl.u32 %v1338, 7
        %v1340 = vsub.s32 %v1337, %v1339
        %v1341 = vrot.slane %v522, %v1340
        %v1343 = vunpack.c.l.s4 1966171168
        %v1344 = vunpack.c.0.s8 %v1343
        %v1345 = vlaneseq
        %v1346 = vshrl.u32 %v1345, 7
        %v1347 = vsub.s32 %v1344, %v1346
        %v1348 = vrot.slane %v1334, %v1347
        %v1349 = vcombine.high %v1341, %v1341
        %v1350 = vcombine.high %v1348, %v1348
        %v1352 = vunpack.c.l.s4 1966171168
        %v1353 = vunpack.c.0.s8 %v1352
        %v1354 = vlaneseq
        %v1355 = vshrl.u32 %v1354, 7
        %v1356 = vsub.s32 %v1353, %v1355
        %v1357 = vrot.slane %v1341, %v1356
        %v1359 = vunpack.c.l.s4 1966171168
        %v1360 = vunpack.c.0.s8 %v1359
        %v1361 = vlaneseq
        %v1362 = vshrl.u32 %v1361, 7
        %v1363 = vsub.s32 %v1360, %v1362
        %v1364 = vrot.slane %v1348, %v1363
        %v1366 = vunpack.c.l.s4 1966171168
        %v1367 = vunpack.c.0.s8 %v1366
        %v1368 = vlaneseq
        %v1369 = vshrl.u32 %v1368, 7
        %v1370 = vsub.s32 %v1367, %v1369
        %v1371 = vrot.slane %v1349, %v1370
        %v1373 = vunpack.c.l.s4 1966171168
        %v1374 = vunpack.c.0.s8 %v1373
        %v1375 = vlaneseq
        %v1376 = vshrl.u32 %v1375, 7
        %v1377 = vsub.s32 %v1374, %v1376
        %v1378 = vrot.slane %v1350, %v1377
        %v1379 = vcombine.high %v1357, %v1357
        %v1380 = vcombine.high %v1364, %v1364
        %v1381 = vcombine.high %v1371, %v1371
        %v1382 = vcombine.high %v1378, %v1378
        %v1383 = vcombine.high %v527, %v527
        %v1385 = vunpack.c.l.s4 1966171168
        %v1386 = vunpack.c.0.s8 %v1385
        %v1387 = vlaneseq
        %v1388 = vshrl.u32 %v1387, 7
        %v1389 = vsub.s32 %v1386, %v1388
        %v1390 = vrot.slane %v527, %v1389
        %v1392 = vunpack.c.l.s4 1966171168
        %v1393 = vunpack.c.0.s8 %v1392
        %v1394 = vlaneseq
        %v1395 = vshrl.u32 %v1394, 7
        %v1396 = vsub.s32 %v1393, %v1395
        %v1397 = vrot.slane %v1383, %v1396
        %v1398 = vcombine.high %v1390, %v1390
        %v1399 = vcombine.high %v1397, %v1397
        %v1401 = vunpack.c.l.s4 1966171168
        %v1402 = vunpack.c.0.s8 %v1401
        %v1403 = vlaneseq
        %v1404 = vshrl.u32 %v1403, 7
        %v1405 = vsub.s32 %v1402, %v1404
        %v1406 = vrot.slane %v1390, %v1405
        %v1408 = vunpack.c.l.s4 1966171168
        %v1409 = vunpack.c.0.s8 %v1408
        %v1410 = vlaneseq
        %v1411 = vshrl.u32 %v1410, 7
        %v1412 = vsub.s32 %v1409, %v1411
        %v1413 = vrot.slane %v1397, %v1412
        %v1415 = vunpack.c.l.s4 1966171168
        %v1416 = vunpack.c.0.s8 %v1415
        %v1417 = vlaneseq
        %v1418 = vshrl.u32 %v1417, 7
        %v1419 = vsub.s32 %v1416, %v1418
        %v1420 = vrot.slane %v1398, %v1419
        %v1422 = vunpack.c.l.s4 1966171168
        %v1423 = vunpack.c.0.s8 %v1422
        %v1424 = vlaneseq
        %v1425 = vshrl.u32 %v1424, 7
        %v1426 = vsub.s32 %v1423, %v1425
        %v1427 = vrot.slane %v1399, %v1426
        %v1428 = vcombine.high %v1406, %v1406
        %v1429 = vcombine.high %v1413, %v1413
        %v1430 = vcombine.high %v1420, %v1420
        %v1431 = vcombine.high %v1427, %v1427
        %v1432 = vcombine.high %v532, %v532
        %v1434 = vunpack.c.l.s4 1966171168
        %v1435 = vunpack.c.0.s8 %v1434
        %v1436 = vlaneseq
        %v1437 = vshrl.u32 %v1436, 7
        %v1438 = vsub.s32 %v1435, %v1437
        %v1439 = vrot.slane %v532, %v1438
        %v1441 = vunpack.c.l.s4 1966171168
        %v1442 = vunpack.c.0.s8 %v1441
        %v1443 = vlaneseq
        %v1444 = vshrl.u32 %v1443, 7
        %v1445 = vsub.s32 %v1442, %v1444
        %v1446 = vrot.slane %v1432, %v1445
        %v1447 = vcombine.high %v1439, %v1439
        %v1448 = vcombine.high %v1446, %v1446
        %v1450 = vunpack.c.l.s4 1966171168
        %v1451 = vunpack.c.0.s8 %v1450
        %v1452 = vlaneseq
        %v1453 = vshrl.u32 %v1452, 7
        %v1454 = vsub.s32 %v1451, %v1453
        %v1455 = vrot.slane %v1439, %v1454
        %v1457 = vunpack.c.l.s4 1966171168
        %v1458 = vunpack.c.0.s8 %v1457
        %v1459 = vlaneseq
        %v1460 = vshrl.u32 %v1459, 7
        %v1461 = vsub.s32 %v1458, %v1460
        %v1462 = vrot.slane %v1446, %v1461
        %v1464 = vunpack.c.l.s4 1966171168
        %v1465 = vunpack.c.0.s8 %v1464
        %v1466 = vlaneseq
        %v1467 = vshrl.u32 %v1466, 7
        %v1468 = vsub.s32 %v1465, %v1467
        %v1469 = vrot.slane %v1447, %v1468
        %v1471 = vunpack.c.l.s4 1966171168
        %v1472 = vunpack.c.0.s8 %v1471
        %v1473 = vlaneseq
        %v1474 = vshrl.u32 %v1473, 7
        %v1475 = vsub.s32 %v1472, %v1474
        %v1476 = vrot.slane %v1448, %v1475
        %v1477 = vcombine.high %v1455, %v1455
        %v1478 = vcombine.high %v1462, %v1462
        %v1479 = vcombine.high %v1469, %v1469
        %v1480 = vcombine.high %v1476, %v1476
        %v1481 = vcombine.high %v537, %v537
        %v1483 = vunpack.c.l.s4 1966171168
        %v1484 = vunpack.c.0.s8 %v1483
        %v1485 = vlaneseq
        %v1486 = vshrl.u32 %v1485, 7
        %v1487 = vsub.s32 %v1484, %v1486
        %v1488 = vrot.slane %v537, %v1487
        %v1490 = vunpack.c.l.s4 1966171168
        %v1491 = vunpack.c.0.s8 %v1490
        %v1492 = vlaneseq
        %v1493 = vshrl.u32 %v1492, 7
        %v1494 = vsub.s32 %v1491, %v1493
        %v1495 = vrot.slane %v1481, %v1494
        %v1496 = vcombine.high %v1488, %v1488
        %v1497 = vcombine.high %v1495, %v1495
        %v1499 = vunpack.c.l.s4 1966171168
        %v1500 = vunpack.c.0.s8 %v1499
        %v1501 = vlaneseq
        %v1502 = vshrl.u32 %v1501, 7
        %v1503 = vsub.s32 %v1500, %v1502
        %v1504 = vrot.slane %v1488, %v1503
        %v1506 = vunpack.c.l.s4 1966171168
        %v1507 = vunpack.c.0.s8 %v1506
        %v1508 = vlaneseq
        %v1509 = vshrl.u32 %v1508, 7
        %v1510 = vsub.s32 %v1507, %v1509
        %v1511 = vrot.slane %v1495, %v1510
        %v1513 = vunpack.c.l.s4 1966171168
        %v1514 = vunpack.c.0.s8 %v1513
        %v1515 = vlaneseq
        %v1516 = vshrl.u32 %v1515, 7
        %v1517 = vsub.s32 %v1514, %v1516
        %v1518 = vrot.slane %v1496, %v1517
        %v1520 = vunpack.c.l.s4 1966171168
        %v1521 = vunpack.c.0.s8 %v1520
        %v1522 = vlaneseq
        %v1523 = vshrl.u32 %v1522, 7
        %v1524 = vsub.s32 %v1521, %v1523
        %v1525 = vrot.slane %v1497, %v1524
        %v1526 = vcombine.high %v1504, %v1504
        %v1527 = vcombine.high %v1511, %v1511
        %v1528 = vcombine.high %v1518, %v1518
        %v1529 = vcombine.high %v1525, %v1525
        %v1530 = vcombine.high %v542, %v542
        %v1532 = vunpack.c.l.s4 1966171168
        %v1533 = vunpack.c.0.s8 %v1532
        %v1534 = vlaneseq
        %v1535 = vshrl.u32 %v1534, 7
        %v1536 = vsub.s32 %v1533, %v1535
        %v1537 = vrot.slane %v542, %v1536
        %v1539 = vunpack.c.l.s4 1966171168
        %v1540 = vunpack.c.0.s8 %v1539
        %v1541 = vlaneseq
        %v1542 = vshrl.u32 %v1541, 7
        %v1543 = vsub.s32 %v1540, %v1542
        %v1544 = vrot.slane %v1530, %v1543
        %v1545 = vcombine.high %v1537, %v1537
        %v1546 = vcombine.high %v1544, %v1544
        %v1548 = vunpack.c.l.s4 1966171168
        %v1549 = vunpack.c.0.s8 %v1548
        %v1550 = vlaneseq
        %v1551 = vshrl.u32 %v1550, 7
        %v1552 = vsub.s32 %v1549, %v1551
        %v1553 = vrot.slane %v1537, %v1552
        %v1555 = vunpack.c.l.s4 1966171168
        %v1556 = vunpack.c.0.s8 %v1555
        %v1557 = vlaneseq
        %v1558 = vshrl.u32 %v1557, 7
        %v1559 = vsub.s32 %v1556, %v1558
        %v1560 = vrot.slane %v1544, %v1559
        %v1562 = vunpack.c.l.s4 1966171168
        %v1563 = vunpack.c.0.s8 %v1562
        %v1564 = vlaneseq
        %v1565 = vshrl.u32 %v1564, 7
        %v1566 = vsub.s32 %v1563, %v1565
        %v1567 = vrot.slane %v1545, %v1566
        %v1569 = vunpack.c.l.s4 1966171168
        %v1570 = vunpack.c.0.s8 %v1569
        %v1571 = vlaneseq
        %v1572 = vshrl.u32 %v1571, 7
        %v1573 = vsub.s32 %v1570, %v1572
        %v1574 = vrot.slane %v1546, %v1573
        %v1575 = vcombine.high %v1553, %v1553
        %v1576 = vcombine.high %v1560, %v1560
        %v1577 = vcombine.high %v1567, %v1567
        %v1578 = vcombine.high %v1574, %v1574
        %v1579 = vcombine.high %v547, %v547
        %v1581 = vunpack.c.l.s4 1966171168
        %v1582 = vunpack.c.0.s8 %v1581
        %v1583 = vlaneseq
        %v1584 = vshrl.u32 %v1583, 7
        %v1585 = vsub.s32 %v1582, %v1584
        %v1586 = vrot.slane %v547, %v1585
        %v1588 = vunpack.c.l.s4 1966171168
        %v1589 = vunpack.c.0.s8 %v1588
        %v1590 = vlaneseq
        %v1591 = vshrl.u32 %v1590, 7
        %v1592 = vsub.s32 %v1589, %v1591
        %v1593 = vrot.slane %v1579, %v1592
        %v1594 = vcombine.high %v1586, %v1586
        %v1595 = vcombine.high %v1593, %v1593
        %v1597 = vunpack.c.l.s4 1966171168
        %v1598 = vunpack.c.0.s8 %v1597
        %v1599 = vlaneseq
        %v1600 = vshrl.u32 %v1599, 7
        %v1601 = vsub.s32 %v1598, %v1600
        %v1602 = vrot.slane %v1586, %v1601
        %v1604 = vunpack.c.l.s4 1966171168
        %v1605 = vunpack.c.0.s8 %v1604
        %v1606 = vlaneseq
        %v1607 = vshrl.u32 %v1606, 7
        %v1608 = vsub.s32 %v1605, %v1607
        %v1609 = vrot.slane %v1593, %v1608
        %v1611 = vunpack.c.l.s4 1966171168
        %v1612 = vunpack.c.0.s8 %v1611
        %v1613 = vlaneseq
        %v1614 = vshrl.u32 %v1613, 7
        %v1615 = vsub.s32 %v1612, %v1614
        %v1616 = vrot.slane %v1594, %v1615
        %v1618 = vunpack.c.l.s4 1966171168
        %v1619 = vunpack.c.0.s8 %v1618
        %v1620 = vlaneseq
        %v1621 = vshrl.u32 %v1620, 7
        %v1622 = vsub.s32 %v1619, %v1621
        %v1623 = vrot.slane %v1595, %v1622
        %v1624 = vcombine.high %v1602, %v1602
        %v1625 = vcombine.high %v1609, %v1609
        %v1626 = vcombine.high %v1616, %v1616
        %v1627 = vcombine.high %v1623, %v1623
        %v1628 = vlaneseq
        %v1629 = vshrl.u32 %v1628, 7
        %v1630 = vsub.s32 0, %v1629
        %v1631 = vrot.slane %v1259, %v1630
        %v1632 = vlaneseq
        %v1633 = vshrl.u32 %v1632, 7
        %v1634 = vsub.s32 0, %v1633
        %v1635 = vrot.slane %v1273, %v1634
        %v1636 = vlaneseq
        %v1637 = vshrl.u32 %v1636, 7
        %v1638 = vsub.s32 0, %v1637
        %v1639 = vrot.slane %v1281, %v1638
        %v1640 = vlaneseq
        %v1641 = vshrl.u32 %v1640, 7
        %v1642 = vsub.s32 0, %v1641
        %v1643 = vrot.slane %v1283, %v1642
        %v1644 = vlaneseq
        %v1645 = vshrl.u32 %v1644, 7
        %v1646 = vsub.s32 0, %v1645
        %v1647 = vrot.slane %v1266, %v1646
        %v1648 = vlaneseq
        %v1649 = vshrl.u32 %v1648, 7
        %v1650 = vsub.s32 0, %v1649
        %v1651 = vrot.slane %v1280, %v1650
        %v1652 = vlaneseq
        %v1653 = vshrl.u32 %v1652, 7
        %v1654 = vsub.s32 0, %v1653
        %v1655 = vrot.slane %v1282, %v1654
        %v1656 = vlaneseq
        %v1657 = vshrl.u32 %v1656, 7
        %v1658 = vsub.s32 0, %v1657
        %v1659 = vrot.slane %v1284, %v1658
        %v1660 = vlaneseq
        %v1661 = vshrl.u32 %v1660, 7
        %v1662 = vsub.s32 0, %v1661
        %v1663 = vrot.slane %v1308, %v1662
        %v1664 = vlaneseq
        %v1665 = vshrl.u32 %v1664, 7
        %v1666 = vsub.s32 0, %v1665
        %v1667 = vrot.slane %v1322, %v1666
        %v1668 = vlaneseq
        %v1669 = vshrl.u32 %v1668, 7
        %v1670 = vsub.s32 0, %v1669
        %v1671 = vrot.slane %v1330, %v1670
        %v1672 = vlaneseq
        %v1673 = vshrl.u32 %v1672, 7
        %v1674 = vsub.s32 0, %v1673
        %v1675 = vrot.slane %v1332, %v1674
        %v1676 = vlaneseq
        %v1677 = vshrl.u32 %v1676, 7
        %v1678 = vsub.s32 0, %v1677
        %v1679 = vrot.slane %v1315, %v1678
        %v1680 = vlaneseq
        %v1681 = vshrl.u32 %v1680, 7
        %v1682 = vsub.s32 0, %v1681
        %v1683 = vrot.slane %v1329, %v1682
        %v1684 = vlaneseq
        %v1685 = vshrl.u32 %v1684, 7
        %v1686 = vsub.s32 0, %v1685
        %v1687 = vrot.slane %v1331, %v1686
        %v1688 = vlaneseq
        %v1689 = vshrl.u32 %v1688, 7
        %v1690 = vsub.s32 0, %v1689
        %v1691 = vrot.slane %v1333, %v1690
        %v1692 = vlaneseq
        %v1693 = vshrl.u32 %v1692, 7
        %v1694 = vsub.s32 0, %v1693
        %v1695 = vrot.slane %v1357, %v1694
        %v1696 = vlaneseq
        %v1697 = vshrl.u32 %v1696, 7
        %v1698 = vsub.s32 0, %v1697
        %v1699 = vrot.slane %v1371, %v1698
        %v1700 = vlaneseq
        %v1701 = vshrl.u32 %v1700, 7
        %v1702 = vsub.s32 0, %v1701
        %v1703 = vrot.slane %v1379, %v1702
        %v1704 = vlaneseq
        %v1705 = vshrl.u32 %v1704, 7
        %v1706 = vsub.s32 0, %v1705
        %v1707 = vrot.slane %v1381, %v1706
        %v1708 = vlaneseq
        %v1709 = vshrl.u32 %v1708, 7
        %v1710 = vsub.s32 0, %v1709
        %v1711 = vrot.slane %v1364, %v1710
        %v1712 = vlaneseq
        %v1713 = vshrl.u32 %v1712, 7
        %v1714 = vsub.s32 0, %v1713
        %v1715 = vrot.slane %v1378, %v1714
        %v1716 = vlaneseq
        %v1717 = vshrl.u32 %v1716, 7
        %v1718 = vsub.s32 0, %v1717
        %v1719 = vrot.slane %v1380, %v1718
        %v1720 = vlaneseq
        %v1721 = vshrl.u32 %v1720, 7
        %v1722 = vsub.s32 0, %v1721
        %v1723 = vrot.slane %v1382, %v1722
        %v1724 = vlaneseq
        %v1725 = vshrl.u32 %v1724, 7
        %v1726 = vsub.s32 0, %v1725
        %v1727 = vrot.slane %v1406, %v1726
        %v1728 = vlaneseq
        %v1729 = vshrl.u32 %v1728, 7
        %v1730 = vsub.s32 0, %v1729
        %v1731 = vrot.slane %v1420, %v1730
        %v1732 = vlaneseq
        %v1733 = vshrl.u32 %v1732, 7
        %v1734 = vsub.s32 0, %v1733
        %v1735 = vrot.slane %v1428, %v1734
        %v1736 = vlaneseq
        %v1737 = vshrl.u32 %v1736, 7
        %v1738 = vsub.s32 0, %v1737
        %v1739 = vrot.slane %v1430, %v1738
        %v1740 = vlaneseq
        %v1741 = vshrl.u32 %v1740, 7
        %v1742 = vsub.s32 0, %v1741
        %v1743 = vrot.slane %v1413, %v1742
        %v1744 = vlaneseq
        %v1745 = vshrl.u32 %v1744, 7
        %v1746 = vsub.s32 0, %v1745
        %v1747 = vrot.slane %v1427, %v1746
        %v1748 = vlaneseq
        %v1749 = vshrl.u32 %v1748, 7
        %v1750 = vsub.s32 0, %v1749
        %v1751 = vrot.slane %v1429, %v1750
        %v1752 = vlaneseq
        %v1753 = vshrl.u32 %v1752, 7
        %v1754 = vsub.s32 0, %v1753
        %v1755 = vrot.slane %v1431, %v1754
        %v1756 = vlaneseq
        %v1757 = vshrl.u32 %v1756, 7
        %v1758 = vsub.s32 0, %v1757
        %v1759 = vrot.slane %v1455, %v1758
        %v1760 = vlaneseq
        %v1761 = vshrl.u32 %v1760, 7
        %v1762 = vsub.s32 0, %v1761
        %v1763 = vrot.slane %v1469, %v1762
        %v1764 = vlaneseq
        %v1765 = vshrl.u32 %v1764, 7
        %v1766 = vsub.s32 0, %v1765
        %v1767 = vrot.slane %v1477, %v1766
        %v1768 = vlaneseq
        %v1769 = vshrl.u32 %v1768, 7
        %v1770 = vsub.s32 0, %v1769
        %v1771 = vrot.slane %v1479, %v1770
        %v1772 = vlaneseq
        %v1773 = vshrl.u32 %v1772, 7
        %v1774 = vsub.s32 0, %v1773
        %v1775 = vrot.slane %v1462, %v1774
        %v1776 = vlaneseq
        %v1777 = vshrl.u32 %v1776, 7
        %v1778 = vsub.s32 0, %v1777
        %v1779 = vrot.slane %v1476, %v1778
        %v1780 = vlaneseq
        %v1781 = vshrl.u32 %v1780, 7
        %v1782 = vsub.s32 0, %v1781
        %v1783 = vrot.slane %v1478, %v1782
        %v1784 = vlaneseq
        %v1785 = vshrl.u32 %v1784, 7
        %v1786 = vsub.s32 0, %v1785
        %v1787 = vrot.slane %v1480, %v1786
        %v1788 = vlaneseq
        %v1789 = vshrl.u32 %v1788, 7
        %v1790 = vsub.s32 0, %v1789
        %v1791 = vrot.slane %v1504, %v1790
        %v1792 = vlaneseq
        %v1793 = vshrl.u32 %v1792, 7
        %v1794 = vsub.s32 0, %v1793
        %v1795 = vrot.slane %v1518, %v1794
        %v1796 = vlaneseq
        %v1797 = vshrl.u32 %v1796, 7
        %v1798 = vsub.s32 0, %v1797
        %v1799 = vrot.slane %v1526, %v1798
        %v1800 = vlaneseq
        %v1801 = vshrl.u32 %v1800, 7
        %v1802 = vsub.s32 0, %v1801
        %v1803 = vrot.slane %v1528, %v1802
        %v1804 = vlaneseq
        %v1805 = vshrl.u32 %v1804, 7
        %v1806 = vsub.s32 0, %v1805
        %v1807 = vrot.slane %v1511, %v1806
        %v1808 = vlaneseq
        %v1809 = vshrl.u32 %v1808, 7
        %v1810 = vsub.s32 0, %v1809
        %v1811 = vrot.slane %v1525, %v1810
        %v1812 = vlaneseq
        %v1813 = vshrl.u32 %v1812, 7
        %v1814 = vsub.s32 0, %v1813
        %v1815 = vrot.slane %v1527, %v1814
        %v1816 = vlaneseq
        %v1817 = vshrl.u32 %v1816, 7
        %v1818 = vsub.s32 0, %v1817
        %v1819 = vrot.slane %v1529, %v1818
        %v1820 = vlaneseq
        %v1821 = vshrl.u32 %v1820, 7
        %v1822 = vsub.s32 0, %v1821
        %v1823 = vrot.slane %v1553, %v1822
        %v1824 = vlaneseq
        %v1825 = vshrl.u32 %v1824, 7
        %v1826 = vsub.s32 0, %v1825
        %v1827 = vrot.slane %v1567, %v1826
        %v1828 = vlaneseq
        %v1829 = vshrl.u32 %v1828, 7
        %v1830 = vsub.s32 0, %v1829
        %v1831 = vrot.slane %v1575, %v1830
        %v1832 = vlaneseq
        %v1833 = vshrl.u32 %v1832, 7
        %v1834 = vsub.s32 0, %v1833
        %v1835 = vrot.slane %v1577, %v1834
        %v1836 = vlaneseq
        %v1837 = vshrl.u32 %v1836, 7
        %v1838 = vsub.s32 0, %v1837
        %v1839 = vrot.slane %v1560, %v1838
        %v1840 = vlaneseq
        %v1841 = vshrl.u32 %v1840, 7
        %v1842 = vsub.s32 0, %v1841
        %v1843 = vrot.slane %v1574, %v1842
        %v1844 = vlaneseq
        %v1845 = vshrl.u32 %v1844, 7
        %v1846 = vsub.s32 0, %v1845
        %v1847 = vrot.slane %v1576, %v1846
        %v1848 = vlaneseq
        %v1849 = vshrl.u32 %v1848, 7
        %v1850 = vsub.s32 0, %v1849
        %v1851 = vrot.slane %v1578, %v1850
        %v1852 = vlaneseq
        %v1853 = vshrl.u32 %v1852, 7
        %v1854 = vsub.s32 0, %v1853
        %v1855 = vrot.slane %v1602, %v1854
        %v1856 = vlaneseq
        %v1857 = vshrl.u32 %v1856, 7
        %v1858 = vsub.s32 0, %v1857
        %v1859 = vrot.slane %v1616, %v1858
        %v1860 = vlaneseq
        %v1861 = vshrl.u32 %v1860, 7
        %v1862 = vsub.s32 0, %v1861
        %v1863 = vrot.slane %v1624, %v1862
        %v1864 = vlaneseq
        %v1865 = vshrl.u32 %v1864, 7
        %v1866 = vsub.s32 0, %v1865
        %v1867 = vrot.slane %v1626, %v1866
        %v1868 = vlaneseq
        %v1869 = vshrl.u32 %v1868, 7
        %v1870 = vsub.s32 0, %v1869
        %v1871 = vrot.slane %v1609, %v1870
        %v1872 = vlaneseq
        %v1873 = vshrl.u32 %v1872, 7
        %v1874 = vsub.s32 0, %v1873
        %v1875 = vrot.slane %v1623, %v1874
        %v1876 = vlaneseq
        %v1877 = vshrl.u32 %v1876, 7
        %v1878 = vsub.s32 0, %v1877
        %v1879 = vrot.slane %v1625, %v1878
        %v1880 = vlaneseq
        %v1881 = vshrl.u32 %v1880, 7
        %v1882 = vsub.s32 0, %v1881
        %v1883 = vrot.slane %v1627, %v1882
        %vm1948 = vcmask 1040384
        %v1949 = vsel %vm1948, %v795, %v1631
        %v1950 = vsel %vm1948, %v809, %v1635
        %v1951 = vsel %vm1948, %v817, %v1639
        %v1952 = vsel %vm1948, %v819, %v1643
        %v1953 = vsel %vm1948, %v802, %v1647
        %v1954 = vsel %vm1948, %v816, %v1651
        %v1955 = vsel %vm1948, %v818, %v1655
        %v1956 = vsel %vm1948, %v820, %v1659
        %v1957 = vsel %vm1948, %v844, %v1663
        %v1958 = vsel %vm1948, %v858, %v1667
        %v1959 = vsel %vm1948, %v866, %v1671
        %v1960 = vsel %vm1948, %v868, %v1675
        %v1961 = vsel %vm1948, %v851, %v1679
        %v1962 = vsel %vm1948, %v865, %v1683
        %v1963 = vsel %vm1948, %v867, %v1687
        %v1964 = vsel %vm1948, %v869, %v1691
        %v1965 = vsel %vm1948, %v893, %v1695
        %v1966 = vsel %vm1948, %v907, %v1699
        %v1967 = vsel %vm1948, %v915, %v1703
        %v1968 = vsel %vm1948, %v917, %v1707
        %v1969 = vsel %vm1948, %v900, %v1711
        %v1970 = vsel %vm1948, %v914, %v1715
        %v1971 = vsel %vm1948, %v916, %v1719
        %v1972 = vsel %vm1948, %v918, %v1723
        %v1973 = vsel %vm1948, %v942, %v1727
        %v1974 = vsel %vm1948, %v956, %v1731
        %v1975 = vsel %vm1948, %v964, %v1735
        %v1976 = vsel %vm1948, %v966, %v1739
        %v1977 = vsel %vm1948, %v949, %v1743
        %v1978 = vsel %vm1948, %v963, %v1747
        %v1979 = vsel %vm1948, %v965, %v1751
        %v1980 = vsel %vm1948, %v967, %v1755
        %v1981 = vsel %vm1948, %v991, %v1759
        %v1982 = vsel %vm1948, %v1005, %v1763
        %v1983 = vsel %vm1948, %v1013, %v1767
        %v1984 = vsel %vm1948, %v1015, %v1771
        %v1985 = vsel %vm1948, %v998, %v1775
        %v1986 = vsel %vm1948, %v1012, %v1779
        %v1987 = vsel %vm1948, %v1014, %v1783
        %v1988 = vsel %vm1948, %v1016, %v1787
        %v1989 = vsel %vm1948, %v1040, %v1791
        %v1990 = vsel %vm1948, %v1054, %v1795
        %v1991 = vsel %vm1948, %v1062, %v1799
        %v1992 = vsel %vm1948, %v1064, %v1803
        %v1993 = vsel %vm1948, %v1047, %v1807
        %v1994 = vsel %vm1948, %v1061, %v1811
        %v1995 = vsel %vm1948, %v1063, %v1815
        %v1996 = vsel %vm1948, %v1065, %v1819
        %v1997 = vsel %vm1948, %v1089, %v1823
        %v1998 = vsel %vm1948, %v1103, %v1827
        %v1999 = vsel %vm1948, %v1111, %v1831
        %v2000 = vsel %vm1948, %v1113, %v1835
        %v2001 = vsel %vm1948, %v1096, %v1839
        %v2002 = vsel %vm1948, %v1110, %v1843
        %v2003 = vsel %vm1948, %v1112, %v1847
        %v2004 = vsel %vm1948, %v1114, %v1851
        %v2005 = vsel %vm1948, %v1138, %v1855
        %v2006 = vsel %vm1948, %v1152, %v1859
        %v2007 = vsel %vm1948, %v1160, %v1863
        %v2008 = vsel %vm1948, %v1162, %v1867
        %v2009 = vsel %vm1948, %v1145, %v1871
        %v2010 = vsel %vm1948, %v1159, %v1875
        %v2011 = vsel %vm1948, %v1161, %v1879
        %v2012 = vsel %vm1948, %v1163, %v1883
        %v2021 = vcombine.high %v619, %v619
        %v2023 = vunpack.c.l.s4 1966171168
        %v2024 = vunpack.c.0.s8 %v2023
        %v2025 = vlaneseq
        %v2026 = vshrl.u32 %v2025, 7
        %v2027 = vsub.s32 %v2024, %v2026
        %v2028 = vrot.slane %v619, %v2027
        %v2030 = vunpack.c.l.s4 1966171168
        %v2031 = vunpack.c.0.s8 %v2030
        %v2032 = vlaneseq
        %v2033 = vshrl.u32 %v2032, 7
        %v2034 = vsub.s32 %v2031, %v2033
        %v2035 = vrot.slane %v2021, %v2034
        %v2036 = vcombine.high %v2028, %v2028
        %v2037 = vcombine.high %v2035, %v2035
        %v2039 = vunpack.c.l.s4 1966171168
        %v2040 = vunpack.c.0.s8 %v2039
        %v2041 = vlaneseq
        %v2042 = vshrl.u32 %v2041, 7
        %v2043 = vsub.s32 %v2040, %v2042
        %v2044 = vrot.slane %v2028, %v2043
        %v2046 = vunpack.c.l.s4 1966171168
        %v2047 = vunpack.c.0.s8 %v2046
        %v2048 = vlaneseq
        %v2049 = vshrl.u32 %v2048, 7
        %v2050 = vsub.s32 %v2047, %v2049
        %v2051 = vrot.slane %v2035, %v2050
        %v2053 = vunpack.c.l.s4 1966171168
        %v2054 = vunpack.c.0.s8 %v2053
        %v2055 = vlaneseq
        %v2056 = vshrl.u32 %v2055, 7
        %v2057 = vsub.s32 %v2054, %v2056
        %v2058 = vrot.slane %v2036, %v2057
        %v2060 = vunpack.c.l.s4 1966171168
        %v2061 = vunpack.c.0.s8 %v2060
        %v2062 = vlaneseq
        %v2063 = vshrl.u32 %v2062, 7
        %v2064 = vsub.s32 %v2061, %v2063
        %v2065 = vrot.slane %v2037, %v2064
        %v2066 = vcombine.high %v2044, %v2044
        %v2067 = vcombine.high %v2051, %v2051
        %v2068 = vcombine.high %v2058, %v2058
        %v2069 = vcombine.high %v2065, %v2065
        %v2070 = vcombine.high %v624, %v624
        %v2072 = vunpack.c.l.s4 1966171168
        %v2073 = vunpack.c.0.s8 %v2072
        %v2074 = vlaneseq
        %v2075 = vshrl.u32 %v2074, 7
        %v2076 = vsub.s32 %v2073, %v2075
        %v2077 = vrot.slane %v624, %v2076
        %v2079 = vunpack.c.l.s4 1966171168
        %v2080 = vunpack.c.0.s8 %v2079
        %v2081 = vlaneseq
        %v2082 = vshrl.u32 %v2081, 7
        %v2083 = vsub.s32 %v2080, %v2082
        %v2084 = vrot.slane %v2070, %v2083
        %v2085 = vcombine.high %v2077, %v2077
        %v2086 = vcombine.high %v2084, %v2084
        %v2088 = vunpack.c.l.s4 1966171168
        %v2089 = vunpack.c.0.s8 %v2088
        %v2090 = vlaneseq
        %v2091 = vshrl.u32 %v2090, 7
        %v2092 = vsub.s32 %v2089, %v2091
        %v2093 = vrot.slane %v2077, %v2092
        %v2095 = vunpack.c.l.s4 1966171168
        %v2096 = vunpack.c.0.s8 %v2095
        %v2097 = vlaneseq
        %v2098 = vshrl.u32 %v2097, 7
        %v2099 = vsub.s32 %v2096, %v2098
        %v2100 = vrot.slane %v2084, %v2099
        %v2102 = vunpack.c.l.s4 1966171168
        %v2103 = vunpack.c.0.s8 %v2102
        %v2104 = vlaneseq
        %v2105 = vshrl.u32 %v2104, 7
        %v2106 = vsub.s32 %v2103, %v2105
        %v2107 = vrot.slane %v2085, %v2106
        %v2109 = vunpack.c.l.s4 1966171168
        %v2110 = vunpack.c.0.s8 %v2109
        %v2111 = vlaneseq
        %v2112 = vshrl.u32 %v2111, 7
        %v2113 = vsub.s32 %v2110, %v2112
        %v2114 = vrot.slane %v2086, %v2113
        %v2115 = vcombine.high %v2093, %v2093
        %v2116 = vcombine.high %v2100, %v2100
        %v2117 = vcombine.high %v2107, %v2107
        %v2118 = vcombine.high %v2114, %v2114
        %v2119 = vcombine.high %v629, %v629
        %v2121 = vunpack.c.l.s4 1966171168
        %v2122 = vunpack.c.0.s8 %v2121
        %v2123 = vlaneseq
        %v2124 = vshrl.u32 %v2123, 7
        %v2125 = vsub.s32 %v2122, %v2124
        %v2126 = vrot.slane %v629, %v2125
        %v2128 = vunpack.c.l.s4 1966171168
        %v2129 = vunpack.c.0.s8 %v2128
        %v2130 = vlaneseq
        %v2131 = vshrl.u32 %v2130, 7
        %v2132 = vsub.s32 %v2129, %v2131
        %v2133 = vrot.slane %v2119, %v2132
        %v2134 = vcombine.high %v2126, %v2126
        %v2135 = vcombine.high %v2133, %v2133
        %v2137 = vunpack.c.l.s4 1966171168
        %v2138 = vunpack.c.0.s8 %v2137
        %v2139 = vlaneseq
        %v2140 = vshrl.u32 %v2139, 7
        %v2141 = vsub.s32 %v2138, %v2140
        %v2142 = vrot.slane %v2126, %v2141
        %v2144 = vunpack.c.l.s4 1966171168
        %v2145 = vunpack.c.0.s8 %v2144
        %v2146 = vlaneseq
        %v2147 = vshrl.u32 %v2146, 7
        %v2148 = vsub.s32 %v2145, %v2147
        %v2149 = vrot.slane %v2133, %v2148
        %v2151 = vunpack.c.l.s4 1966171168
        %v2152 = vunpack.c.0.s8 %v2151
        %v2153 = vlaneseq
        %v2154 = vshrl.u32 %v2153, 7
        %v2155 = vsub.s32 %v2152, %v2154
        %v2156 = vrot.slane %v2134, %v2155
        %v2158 = vunpack.c.l.s4 1966171168
        %v2159 = vunpack.c.0.s8 %v2158
        %v2160 = vlaneseq
        %v2161 = vshrl.u32 %v2160, 7
        %v2162 = vsub.s32 %v2159, %v2161
        %v2163 = vrot.slane %v2135, %v2162
        %v2164 = vcombine.high %v2142, %v2142
        %v2165 = vcombine.high %v2149, %v2149
        %v2166 = vcombine.high %v2156, %v2156
        %v2167 = vcombine.high %v2163, %v2163
        %v2168 = vcombine.high %v634, %v634
        %v2170 = vunpack.c.l.s4 1966171168
        %v2171 = vunpack.c.0.s8 %v2170
        %v2172 = vlaneseq
        %v2173 = vshrl.u32 %v2172, 7
        %v2174 = vsub.s32 %v2171, %v2173
        %v2175 = vrot.slane %v634, %v2174
        %v2177 = vunpack.c.l.s4 1966171168
        %v2178 = vunpack.c.0.s8 %v2177
        %v2179 = vlaneseq
        %v2180 = vshrl.u32 %v2179, 7
        %v2181 = vsub.s32 %v2178, %v2180
        %v2182 = vrot.slane %v2168, %v2181
        %v2183 = vcombine.high %v2175, %v2175
        %v2184 = vcombine.high %v2182, %v2182
        %v2186 = vunpack.c.l.s4 1966171168
        %v2187 = vunpack.c.0.s8 %v2186
        %v2188 = vlaneseq
        %v2189 = vshrl.u32 %v2188, 7
        %v2190 = vsub.s32 %v2187, %v2189
        %v2191 = vrot.slane %v2175, %v2190
        %v2193 = vunpack.c.l.s4 1966171168
        %v2194 = vunpack.c.0.s8 %v2193
        %v2195 = vlaneseq
        %v2196 = vshrl.u32 %v2195, 7
        %v2197 = vsub.s32 %v2194, %v2196
        %v2198 = vrot.slane %v2182, %v2197
        %v2200 = vunpack.c.l.s4 1966171168
        %v2201 = vunpack.c.0.s8 %v2200
        %v2202 = vlaneseq
        %v2203 = vshrl.u32 %v2202, 7
        %v2204 = vsub.s32 %v2201, %v2203
        %v2205 = vrot.slane %v2183, %v2204
        %v2207 = vunpack.c.l.s4 1966171168
        %v2208 = vunpack.c.0.s8 %v2207
        %v2209 = vlaneseq
        %v2210 = vshrl.u32 %v2209, 7
        %v2211 = vsub.s32 %v2208, %v2210
        %v2212 = vrot.slane %v2184, %v2211
        %v2213 = vcombine.high %v2191, %v2191
        %v2214 = vcombine.high %v2198, %v2198
        %v2215 = vcombine.high %v2205, %v2205
        %v2216 = vcombine.high %v2212, %v2212
        %v2217 = vcombine.high %v639, %v639
        %v2219 = vunpack.c.l.s4 1966171168
        %v2220 = vunpack.c.0.s8 %v2219
        %v2221 = vlaneseq
        %v2222 = vshrl.u32 %v2221, 7
        %v2223 = vsub.s32 %v2220, %v2222
        %v2224 = vrot.slane %v639, %v2223
        %v2226 = vunpack.c.l.s4 1966171168
        %v2227 = vunpack.c.0.s8 %v2226
        %v2228 = vlaneseq
        %v2229 = vshrl.u32 %v2228, 7
        %v2230 = vsub.s32 %v2227, %v2229
        %v2231 = vrot.slane %v2217, %v2230
        %v2232 = vcombine.high %v2224, %v2224
        %v2233 = vcombine.high %v2231, %v2231
        %v2235 = vunpack.c.l.s4 1966171168
        %v2236 = vunpack.c.0.s8 %v2235
        %v2237 = vlaneseq
        %v2238 = vshrl.u32 %v2237, 7
        %v2239 = vsub.s32 %v2236, %v2238
        %v2240 = vrot.slane %v2224, %v2239
        %v2242 = vunpack.c.l.s4 1966171168
        %v2243 = vunpack.c.0.s8 %v2242
        %v2244 = vlaneseq
        %v2245 = vshrl.u32 %v2244, 7
        %v2246 = vsub.s32 %v2243, %v2245
        %v2247 = vrot.slane %v2231, %v2246
        %v2249 = vunpack.c.l.s4 1966171168
        %v2250 = vunpack.c.0.s8 %v2249
        %v2251 = vlaneseq
        %v2252 = vshrl.u32 %v2251, 7
        %v2253 = vsub.s32 %v2250, %v2252
        %v2254 = vrot.slane %v2232, %v2253
        %v2256 = vunpack.c.l.s4 1966171168
        %v2257 = vunpack.c.0.s8 %v2256
        %v2258 = vlaneseq
        %v2259 = vshrl.u32 %v2258, 7
        %v2260 = vsub.s32 %v2257, %v2259
        %v2261 = vrot.slane %v2233, %v2260
        %v2262 = vcombine.high %v2240, %v2240
        %v2263 = vcombine.high %v2247, %v2247
        %v2264 = vcombine.high %v2254, %v2254
        %v2265 = vcombine.high %v2261, %v2261
        %v2266 = vcombine.high %v644, %v644
        %v2268 = vunpack.c.l.s4 1966171168
        %v2269 = vunpack.c.0.s8 %v2268
        %v2270 = vlaneseq
        %v2271 = vshrl.u32 %v2270, 7
        %v2272 = vsub.s32 %v2269, %v2271
        %v2273 = vrot.slane %v644, %v2272
        %v2275 = vunpack.c.l.s4 1966171168
        %v2276 = vunpack.c.0.s8 %v2275
        %v2277 = vlaneseq
        %v2278 = vshrl.u32 %v2277, 7
        %v2279 = vsub.s32 %v2276, %v2278
        %v2280 = vrot.slane %v2266, %v2279
        %v2281 = vcombine.high %v2273, %v2273
        %v2282 = vcombine.high %v2280, %v2280
        %v2284 = vunpack.c.l.s4 1966171168
        %v2285 = vunpack.c.0.s8 %v2284
        %v2286 = vlaneseq
        %v2287 = vshrl.u32 %v2286, 7
        %v2288 = vsub.s32 %v2285, %v2287
        %v2289 = vrot.slane %v2273, %v2288
        %v2291 = vunpack.c.l.s4 1966171168
        %v2292 = vunpack.c.0.s8 %v2291
        %v2293 = vlaneseq
        %v2294 = vshrl.u32 %v2293, 7
        %v2295 = vsub.s32 %v2292, %v2294
        %v2296 = vrot.slane %v2280, %v2295
        %v2298 = vunpack.c.l.s4 1966171168
        %v2299 = vunpack.c.0.s8 %v2298
        %v2300 = vlaneseq
        %v2301 = vshrl.u32 %v2300, 7
        %v2302 = vsub.s32 %v2299, %v2301
        %v2303 = vrot.slane %v2281, %v2302
        %v2305 = vunpack.c.l.s4 1966171168
        %v2306 = vunpack.c.0.s8 %v2305
        %v2307 = vlaneseq
        %v2308 = vshrl.u32 %v2307, 7
        %v2309 = vsub.s32 %v2306, %v2308
        %v2310 = vrot.slane %v2282, %v2309
        %v2311 = vcombine.high %v2289, %v2289
        %v2312 = vcombine.high %v2296, %v2296
        %v2313 = vcombine.high %v2303, %v2303
        %v2314 = vcombine.high %v2310, %v2310
        %v2315 = vcombine.high %v649, %v649
        %v2317 = vunpack.c.l.s4 1966171168
        %v2318 = vunpack.c.0.s8 %v2317
        %v2319 = vlaneseq
        %v2320 = vshrl.u32 %v2319, 7
        %v2321 = vsub.s32 %v2318, %v2320
        %v2322 = vrot.slane %v649, %v2321
        %v2324 = vunpack.c.l.s4 1966171168
        %v2325 = vunpack.c.0.s8 %v2324
        %v2326 = vlaneseq
        %v2327 = vshrl.u32 %v2326, 7
        %v2328 = vsub.s32 %v2325, %v2327
        %v2329 = vrot.slane %v2315, %v2328
        %v2330 = vcombine.high %v2322, %v2322
        %v2331 = vcombine.high %v2329, %v2329
        %v2333 = vunpack.c.l.s4 1966171168
        %v2334 = vunpack.c.0.s8 %v2333
        %v2335 = vlaneseq
        %v2336 = vshrl.u32 %v2335, 7
        %v2337 = vsub.s32 %v2334, %v2336
        %v2338 = vrot.slane %v2322, %v2337
        %v2340 = vunpack.c.l.s4 1966171168
        %v2341 = vunpack.c.0.s8 %v2340
        %v2342 = vlaneseq
        %v2343 = vshrl.u32 %v2342, 7
        %v2344 = vsub.s32 %v2341, %v2343
        %v2345 = vrot.slane %v2329, %v2344
        %v2347 = vunpack.c.l.s4 1966171168
        %v2348 = vunpack.c.0.s8 %v2347
        %v2349 = vlaneseq
        %v2350 = vshrl.u32 %v2349, 7
        %v2351 = vsub.s32 %v2348, %v2350
        %v2352 = vrot.slane %v2330, %v2351
        %v2354 = vunpack.c.l.s4 1966171168
        %v2355 = vunpack.c.0.s8 %v2354
        %v2356 = vlaneseq
        %v2357 = vshrl.u32 %v2356, 7
        %v2358 = vsub.s32 %v2355, %v2357
        %v2359 = vrot.slane %v2331, %v2358
        %v2360 = vcombine.high %v2338, %v2338
        %v2361 = vcombine.high %v2345, %v2345
        %v2362 = vcombine.high %v2352, %v2352
        %v2363 = vcombine.high %v2359, %v2359
        %v2364 = vcombine.high %v654, %v654
        %v2366 = vunpack.c.l.s4 1966171168
        %v2367 = vunpack.c.0.s8 %v2366
        %v2368 = vlaneseq
        %v2369 = vshrl.u32 %v2368, 7
        %v2370 = vsub.s32 %v2367, %v2369
        %v2371 = vrot.slane %v654, %v2370
        %v2373 = vunpack.c.l.s4 1966171168
        %v2374 = vunpack.c.0.s8 %v2373
        %v2375 = vlaneseq
        %v2376 = vshrl.u32 %v2375, 7
        %v2377 = vsub.s32 %v2374, %v2376
        %v2378 = vrot.slane %v2364, %v2377
        %v2379 = vcombine.high %v2371, %v2371
        %v2380 = vcombine.high %v2378, %v2378
        %v2382 = vunpack.c.l.s4 1966171168
        %v2383 = vunpack.c.0.s8 %v2382
        %v2384 = vlaneseq
        %v2385 = vshrl.u32 %v2384, 7
        %v2386 = vsub.s32 %v2383, %v2385
        %v2387 = vrot.slane %v2371, %v2386
        %v2389 = vunpack.c.l.s4 1966171168
        %v2390 = vunpack.c.0.s8 %v2389
        %v2391 = vlaneseq
        %v2392 = vshrl.u32 %v2391, 7
        %v2393 = vsub.s32 %v2390, %v2392
        %v2394 = vrot.slane %v2378, %v2393
        %v2396 = vunpack.c.l.s4 1966171168
        %v2397 = vunpack.c.0.s8 %v2396
        %v2398 = vlaneseq
        %v2399 = vshrl.u32 %v2398, 7
        %v2400 = vsub.s32 %v2397, %v2399
        %v2401 = vrot.slane %v2379, %v2400
        %v2403 = vunpack.c.l.s4 1966171168
        %v2404 = vunpack.c.0.s8 %v2403
        %v2405 = vlaneseq
        %v2406 = vshrl.u32 %v2405, 7
        %v2407 = vsub.s32 %v2404, %v2406
        %v2408 = vrot.slane %v2380, %v2407
        %v2409 = vcombine.high %v2387, %v2387
        %v2410 = vcombine.high %v2394, %v2394
        %v2411 = vcombine.high %v2401, %v2401
        %v2412 = vcombine.high %v2408, %v2408
        %v2485 = vcombine.high %v726, %v726
        %v2487 = vunpack.c.l.s4 1966171168
        %v2488 = vunpack.c.0.s8 %v2487
        %v2489 = vlaneseq
        %v2490 = vshrl.u32 %v2489, 7
        %v2491 = vsub.s32 %v2488, %v2490
        %v2492 = vrot.slane %v726, %v2491
        %v2494 = vunpack.c.l.s4 1966171168
        %v2495 = vunpack.c.0.s8 %v2494
        %v2496 = vlaneseq
        %v2497 = vshrl.u32 %v2496, 7
        %v2498 = vsub.s32 %v2495, %v2497
        %v2499 = vrot.slane %v2485, %v2498
        %v2500 = vcombine.high %v2492, %v2492
        %v2501 = vcombine.high %v2499, %v2499
        %v2503 = vunpack.c.l.s4 1966171168
        %v2504 = vunpack.c.0.s8 %v2503
        %v2505 = vlaneseq
        %v2506 = vshrl.u32 %v2505, 7
        %v2507 = vsub.s32 %v2504, %v2506
        %v2508 = vrot.slane %v2492, %v2507
        %v2510 = vunpack.c.l.s4 1966171168
        %v2511 = vunpack.c.0.s8 %v2510
        %v2512 = vlaneseq
        %v2513 = vshrl.u32 %v2512, 7
        %v2514 = vsub.s32 %v2511, %v2513
        %v2515 = vrot.slane %v2499, %v2514
        %v2517 = vunpack.c.l.s4 1966171168
        %v2518 = vunpack.c.0.s8 %v2517
        %v2519 = vlaneseq
        %v2520 = vshrl.u32 %v2519, 7
        %v2521 = vsub.s32 %v2518, %v2520
        %v2522 = vrot.slane %v2500, %v2521
        %v2524 = vunpack.c.l.s4 1966171168
        %v2525 = vunpack.c.0.s8 %v2524
        %v2526 = vlaneseq
        %v2527 = vshrl.u32 %v2526, 7
        %v2528 = vsub.s32 %v2525, %v2527
        %v2529 = vrot.slane %v2501, %v2528
        %v2530 = vcombine.high %v2508, %v2508
        %v2531 = vcombine.high %v2515, %v2515
        %v2532 = vcombine.high %v2522, %v2522
        %v2533 = vcombine.high %v2529, %v2529
        %v2534 = vcombine.high %v731, %v731
        %v2536 = vunpack.c.l.s4 1966171168
        %v2537 = vunpack.c.0.s8 %v2536
        %v2538 = vlaneseq
        %v2539 = vshrl.u32 %v2538, 7
        %v2540 = vsub.s32 %v2537, %v2539
        %v2541 = vrot.slane %v731, %v2540
        %v2543 = vunpack.c.l.s4 1966171168
        %v2544 = vunpack.c.0.s8 %v2543
        %v2545 = vlaneseq
        %v2546 = vshrl.u32 %v2545, 7
        %v2547 = vsub.s32 %v2544, %v2546
        %v2548 = vrot.slane %v2534, %v2547
        %v2549 = vcombine.high %v2541, %v2541
        %v2550 = vcombine.high %v2548, %v2548
        %v2552 = vunpack.c.l.s4 1966171168
        %v2553 = vunpack.c.0.s8 %v2552
        %v2554 = vlaneseq
        %v2555 = vshrl.u32 %v2554, 7
        %v2556 = vsub.s32 %v2553, %v2555
        %v2557 = vrot.slane %v2541, %v2556
        %v2559 = vunpack.c.l.s4 1966171168
        %v2560 = vunpack.c.0.s8 %v2559
        %v2561 = vlaneseq
        %v2562 = vshrl.u32 %v2561, 7
        %v2563 = vsub.s32 %v2560, %v2562
        %v2564 = vrot.slane %v2548, %v2563
        %v2566 = vunpack.c.l.s4 1966171168
        %v2567 = vunpack.c.0.s8 %v2566
        %v2568 = vlaneseq
        %v2569 = vshrl.u32 %v2568, 7
        %v2570 = vsub.s32 %v2567, %v2569
        %v2571 = vrot.slane %v2549, %v2570
        %v2573 = vunpack.c.l.s4 1966171168
        %v2574 = vunpack.c.0.s8 %v2573
        %v2575 = vlaneseq
        %v2576 = vshrl.u32 %v2575, 7
        %v2577 = vsub.s32 %v2574, %v2576
        %v2578 = vrot.slane %v2550, %v2577
        %v2579 = vcombine.high %v2557, %v2557
        %v2580 = vcombine.high %v2564, %v2564
        %v2581 = vcombine.high %v2571, %v2571
        %v2582 = vcombine.high %v2578, %v2578
        %v2583 = vcombine.high %v736, %v736
        %v2585 = vunpack.c.l.s4 1966171168
        %v2586 = vunpack.c.0.s8 %v2585
        %v2587 = vlaneseq
        %v2588 = vshrl.u32 %v2587, 7
        %v2589 = vsub.s32 %v2586, %v2588
        %v2590 = vrot.slane %v736, %v2589
        %v2592 = vunpack.c.l.s4 1966171168
        %v2593 = vunpack.c.0.s8 %v2592
        %v2594 = vlaneseq
        %v2595 = vshrl.u32 %v2594, 7
        %v2596 = vsub.s32 %v2593, %v2595
        %v2597 = vrot.slane %v2583, %v2596
        %v2598 = vcombine.high %v2590, %v2590
        %v2599 = vcombine.high %v2597, %v2597
        %v2601 = vunpack.c.l.s4 1966171168
        %v2602 = vunpack.c.0.s8 %v2601
        %v2603 = vlaneseq
        %v2604 = vshrl.u32 %v2603, 7
        %v2605 = vsub.s32 %v2602, %v2604
        %v2606 = vrot.slane %v2590, %v2605
        %v2608 = vunpack.c.l.s4 1966171168
        %v2609 = vunpack.c.0.s8 %v2608
        %v2610 = vlaneseq
        %v2611 = vshrl.u32 %v2610, 7
        %v2612 = vsub.s32 %v2609, %v2611
        %v2613 = vrot.slane %v2597, %v2612
        %v2615 = vunpack.c.l.s4 1966171168
        %v2616 = vunpack.c.0.s8 %v2615
        %v2617 = vlaneseq
        %v2618 = vshrl.u32 %v2617, 7
        %v2619 = vsub.s32 %v2616, %v2618
        %v2620 = vrot.slane %v2598, %v2619
        %v2622 = vunpack.c.l.s4 1966171168
        %v2623 = vunpack.c.0.s8 %v2622
        %v2624 = vlaneseq
        %v2625 = vshrl.u32 %v2624, 7
        %v2626 = vsub.s32 %v2623, %v2625
        %v2627 = vrot.slane %v2599, %v2626
        %v2628 = vcombine.high %v2606, %v2606
        %v2629 = vcombine.high %v2613, %v2613
        %v2630 = vcombine.high %v2620, %v2620
        %v2631 = vcombine.high %v2627, %v2627
        %v2632 = vcombine.high %v741, %v741
        %v2634 = vunpack.c.l.s4 1966171168
        %v2635 = vunpack.c.0.s8 %v2634
        %v2636 = vlaneseq
        %v2637 = vshrl.u32 %v2636, 7
        %v2638 = vsub.s32 %v2635, %v2637
        %v2639 = vrot.slane %v741, %v2638
        %v2641 = vunpack.c.l.s4 1966171168
        %v2642 = vunpack.c.0.s8 %v2641
        %v2643 = vlaneseq
        %v2644 = vshrl.u32 %v2643, 7
        %v2645 = vsub.s32 %v2642, %v2644
        %v2646 = vrot.slane %v2632, %v2645
        %v2647 = vcombine.high %v2639, %v2639
        %v2648 = vcombine.high %v2646, %v2646
        %v2650 = vunpack.c.l.s4 1966171168
        %v2651 = vunpack.c.0.s8 %v2650
        %v2652 = vlaneseq
        %v2653 = vshrl.u32 %v2652, 7
        %v2654 = vsub.s32 %v2651, %v2653
        %v2655 = vrot.slane %v2639, %v2654
        %v2657 = vunpack.c.l.s4 1966171168
        %v2658 = vunpack.c.0.s8 %v2657
        %v2659 = vlaneseq
        %v2660 = vshrl.u32 %v2659, 7
        %v2661 = vsub.s32 %v2658, %v2660
        %v2662 = vrot.slane %v2646, %v2661
        %v2664 = vunpack.c.l.s4 1966171168
        %v2665 = vunpack.c.0.s8 %v2664
        %v2666 = vlaneseq
        %v2667 = vshrl.u32 %v2666, 7
        %v2668 = vsub.s32 %v2665, %v2667
        %v2669 = vrot.slane %v2647, %v2668
        %v2671 = vunpack.c.l.s4 1966171168
        %v2672 = vunpack.c.0.s8 %v2671
        %v2673 = vlaneseq
        %v2674 = vshrl.u32 %v2673, 7
        %v2675 = vsub.s32 %v2672, %v2674
        %v2676 = vrot.slane %v2648, %v2675
        %v2677 = vcombine.high %v2655, %v2655
        %v2678 = vcombine.high %v2662, %v2662
        %v2679 = vcombine.high %v2669, %v2669
        %v2680 = vcombine.high %v2676, %v2676
        %v2681 = vcombine.high %v746, %v746
        %v2683 = vunpack.c.l.s4 1966171168
        %v2684 = vunpack.c.0.s8 %v2683
        %v2685 = vlaneseq
        %v2686 = vshrl.u32 %v2685, 7
        %v2687 = vsub.s32 %v2684, %v2686
        %v2688 = vrot.slane %v746, %v2687
        %v2690 = vunpack.c.l.s4 1966171168
        %v2691 = vunpack.c.0.s8 %v2690
        %v2692 = vlaneseq
        %v2693 = vshrl.u32 %v2692, 7
        %v2694 = vsub.s32 %v2691, %v2693
        %v2695 = vrot.slane %v2681, %v2694
        %v2696 = vcombine.high %v2688, %v2688
        %v2697 = vcombine.high %v2695, %v2695
        %v2699 = vunpack.c.l.s4 1966171168
        %v2700 = vunpack.c.0.s8 %v2699
        %v2701 = vlaneseq
        %v2702 = vshrl.u32 %v2701, 7
        %v2703 = vsub.s32 %v2700, %v2702
        %v2704 = vrot.slane %v2688, %v2703
        %v2706 = vunpack.c.l.s4 1966171168
        %v2707 = vunpack.c.0.s8 %v2706
        %v2708 = vlaneseq
        %v2709 = vshrl.u32 %v2708, 7
        %v2710 = vsub.s32 %v2707, %v2709
        %v2711 = vrot.slane %v2695, %v2710
        %v2713 = vunpack.c.l.s4 1966171168
        %v2714 = vunpack.c.0.s8 %v2713
        %v2715 = vlaneseq
        %v2716 = vshrl.u32 %v2715, 7
        %v2717 = vsub.s32 %v2714, %v2716
        %v2718 = vrot.slane %v2696, %v2717
        %v2720 = vunpack.c.l.s4 1966171168
        %v2721 = vunpack.c.0.s8 %v2720
        %v2722 = vlaneseq
        %v2723 = vshrl.u32 %v2722, 7
        %v2724 = vsub.s32 %v2721, %v2723
        %v2725 = vrot.slane %v2697, %v2724
        %v2726 = vcombine.high %v2704, %v2704
        %v2727 = vcombine.high %v2711, %v2711
        %v2728 = vcombine.high %v2718, %v2718
        %v2729 = vcombine.high %v2725, %v2725
        %v2730 = vcombine.high %v751, %v751
        %v2732 = vunpack.c.l.s4 1966171168
        %v2733 = vunpack.c.0.s8 %v2732
        %v2734 = vlaneseq
        %v2735 = vshrl.u32 %v2734, 7
        %v2736 = vsub.s32 %v2733, %v2735
        %v2737 = vrot.slane %v751, %v2736
        %v2739 = vunpack.c.l.s4 1966171168
        %v2740 = vunpack.c.0.s8 %v2739
        %v2741 = vlaneseq
        %v2742 = vshrl.u32 %v2741, 7
        %v2743 = vsub.s32 %v2740, %v2742
        %v2744 = vrot.slane %v2730, %v2743
        %v2745 = vcombine.high %v2737, %v2737
        %v2746 = vcombine.high %v2744, %v2744
        %v2748 = vunpack.c.l.s4 1966171168
        %v2749 = vunpack.c.0.s8 %v2748
        %v2750 = vlaneseq
        %v2751 = vshrl.u32 %v2750, 7
        %v2752 = vsub.s32 %v2749, %v2751
        %v2753 = vrot.slane %v2737, %v2752
        %v2755 = vunpack.c.l.s4 1966171168
        %v2756 = vunpack.c.0.s8 %v2755
        %v2757 = vlaneseq
        %v2758 = vshrl.u32 %v2757, 7
        %v2759 = vsub.s32 %v2756, %v2758
        %v2760 = vrot.slane %v2744, %v2759
        %v2762 = vunpack.c.l.s4 1966171168
        %v2763 = vunpack.c.0.s8 %v2762
        %v2764 = vlaneseq
        %v2765 = vshrl.u32 %v2764, 7
        %v2766 = vsub.s32 %v2763, %v2765
        %v2767 = vrot.slane %v2745, %v2766
        %v2769 = vunpack.c.l.s4 1966171168
        %v2770 = vunpack.c.0.s8 %v2769
        %v2771 = vlaneseq
        %v2772 = vshrl.u32 %v2771, 7
        %v2773 = vsub.s32 %v2770, %v2772
        %v2774 = vrot.slane %v2746, %v2773
        %v2775 = vcombine.high %v2753, %v2753
        %v2776 = vcombine.high %v2760, %v2760
        %v2777 = vcombine.high %v2767, %v2767
        %v2778 = vcombine.high %v2774, %v2774
        %v2779 = vcombine.high %v756, %v756
        %v2781 = vunpack.c.l.s4 1966171168
        %v2782 = vunpack.c.0.s8 %v2781
        %v2783 = vlaneseq
        %v2784 = vshrl.u32 %v2783, 7
        %v2785 = vsub.s32 %v2782, %v2784
        %v2786 = vrot.slane %v756, %v2785
        %v2788 = vunpack.c.l.s4 1966171168
        %v2789 = vunpack.c.0.s8 %v2788
        %v2790 = vlaneseq
        %v2791 = vshrl.u32 %v2790, 7
        %v2792 = vsub.s32 %v2789, %v2791
        %v2793 = vrot.slane %v2779, %v2792
        %v2794 = vcombine.high %v2786, %v2786
        %v2795 = vcombine.high %v2793, %v2793
        %v2797 = vunpack.c.l.s4 1966171168
        %v2798 = vunpack.c.0.s8 %v2797
        %v2799 = vlaneseq
        %v2800 = vshrl.u32 %v2799, 7
        %v2801 = vsub.s32 %v2798, %v2800
        %v2802 = vrot.slane %v2786, %v2801
        %v2804 = vunpack.c.l.s4 1966171168
        %v2805 = vunpack.c.0.s8 %v2804
        %v2806 = vlaneseq
        %v2807 = vshrl.u32 %v2806, 7
        %v2808 = vsub.s32 %v2805, %v2807
        %v2809 = vrot.slane %v2793, %v2808
        %v2811 = vunpack.c.l.s4 1966171168
        %v2812 = vunpack.c.0.s8 %v2811
        %v2813 = vlaneseq
        %v2814 = vshrl.u32 %v2813, 7
        %v2815 = vsub.s32 %v2812, %v2814
        %v2816 = vrot.slane %v2794, %v2815
        %v2818 = vunpack.c.l.s4 1966171168
        %v2819 = vunpack.c.0.s8 %v2818
        %v2820 = vlaneseq
        %v2821 = vshrl.u32 %v2820, 7
        %v2822 = vsub.s32 %v2819, %v2821
        %v2823 = vrot.slane %v2795, %v2822
        %v2824 = vcombine.high %v2802, %v2802
        %v2825 = vcombine.high %v2809, %v2809
        %v2826 = vcombine.high %v2816, %v2816
        %v2827 = vcombine.high %v2823, %v2823
        %v2828 = vcombine.high %v761, %v761
        %v2830 = vunpack.c.l.s4 1966171168
        %v2831 = vunpack.c.0.s8 %v2830
        %v2832 = vlaneseq
        %v2833 = vshrl.u32 %v2832, 7
        %v2834 = vsub.s32 %v2831, %v2833
        %v2835 = vrot.slane %v761, %v2834
        %v2837 = vunpack.c.l.s4 1966171168
        %v2838 = vunpack.c.0.s8 %v2837
        %v2839 = vlaneseq
        %v2840 = vshrl.u32 %v2839, 7
        %v2841 = vsub.s32 %v2838, %v2840
        %v2842 = vrot.slane %v2828, %v2841
        %v2843 = vcombine.high %v2835, %v2835
        %v2844 = vcombine.high %v2842, %v2842
        %v2846 = vunpack.c.l.s4 1966171168
        %v2847 = vunpack.c.0.s8 %v2846
        %v2848 = vlaneseq
        %v2849 = vshrl.u32 %v2848, 7
        %v2850 = vsub.s32 %v2847, %v2849
        %v2851 = vrot.slane %v2835, %v2850
        %v2853 = vunpack.c.l.s4 1966171168
        %v2854 = vunpack.c.0.s8 %v2853
        %v2855 = vlaneseq
        %v2856 = vshrl.u32 %v2855, 7
        %v2857 = vsub.s32 %v2854, %v2856
        %v2858 = vrot.slane %v2842, %v2857
        %v2860 = vunpack.c.l.s4 1966171168
        %v2861 = vunpack.c.0.s8 %v2860
        %v2862 = vlaneseq
        %v2863 = vshrl.u32 %v2862, 7
        %v2864 = vsub.s32 %v2861, %v2863
        %v2865 = vrot.slane %v2843, %v2864
        %v2867 = vunpack.c.l.s4 1966171168
        %v2868 = vunpack.c.0.s8 %v2867
        %v2869 = vlaneseq
        %v2870 = vshrl.u32 %v2869, 7
        %v2871 = vsub.s32 %v2868, %v2870
        %v2872 = vrot.slane %v2844, %v2871
        %v2873 = vcombine.high %v2851, %v2851
        %v2874 = vcombine.high %v2858, %v2858
        %v2875 = vcombine.high %v2865, %v2865
        %v2876 = vcombine.high %v2872, %v2872
        %v2877 = vlaneseq
        %v2878 = vshrl.u32 %v2877, 7
        %v2879 = vsub.s32 0, %v2878
        %v2880 = vrot.slane %v2508, %v2879
        %v2881 = vlaneseq
        %v2882 = vshrl.u32 %v2881, 7
        %v2883 = vsub.s32 0, %v2882
        %v2884 = vrot.slane %v2522, %v2883
        %v2885 = vlaneseq
        %v2886 = vshrl.u32 %v2885, 7
        %v2887 = vsub.s32 0, %v2886
        %v2888 = vrot.slane %v2530, %v2887
        %v2889 = vlaneseq
        %v2890 = vshrl.u32 %v2889, 7
        %v2891 = vsub.s32 0, %v2890
        %v2892 = vrot.slane %v2532, %v2891
        %v2893 = vlaneseq
        %v2894 = vshrl.u32 %v2893, 7
        %v2895 = vsub.s32 0, %v2894
        %v2896 = vrot.slane %v2515, %v2895
        %v2897 = vlaneseq
        %v2898 = vshrl.u32 %v2897, 7
        %v2899 = vsub.s32 0, %v2898
        %v2900 = vrot.slane %v2529, %v2899
        %v2901 = vlaneseq
        %v2902 = vshrl.u32 %v2901, 7
        %v2903 = vsub.s32 0, %v2902
        %v2904 = vrot.slane %v2531, %v2903
        %v2905 = vlaneseq
        %v2906 = vshrl.u32 %v2905, 7
        %v2907 = vsub.s32 0, %v2906
        %v2908 = vrot.slane %v2533, %v2907
        %v2909 = vlaneseq
        %v2910 = vshrl.u32 %v2909, 7
        %v2911 = vsub.s32 0, %v2910
        %v2912 = vrot.slane %v2557, %v2911
        %v2913 = vlaneseq
        %v2914 = vshrl.u32 %v2913, 7
        %v2915 = vsub.s32 0, %v2914
        %v2916 = vrot.slane %v2571, %v2915
        %v2917 = vlaneseq
        %v2918 = vshrl.u32 %v2917, 7
        %v2919 = vsub.s32 0, %v2918
        %v2920 = vrot.slane %v2579, %v2919
        %v2921 = vlaneseq
        %v2922 = vshrl.u32 %v2921, 7
        %v2923 = vsub.s32 0, %v2922
        %v2924 = vrot.slane %v2581, %v2923
        %v2925 = vlaneseq
        %v2926 = vshrl.u32 %v2925, 7
        %v2927 = vsub.s32 0, %v2926
        %v2928 = vrot.slane %v2564, %v2927
        %v2929 = vlaneseq
        %v2930 = vshrl.u32 %v2929, 7
        %v2931 = vsub.s32 0, %v2930
        %v2932 = vrot.slane %v2578, %v2931
        %v2933 = vlaneseq
        %v2934 = vshrl.u32 %v2933, 7
        %v2935 = vsub.s32 0, %v2934
        %v2936 = vrot.slane %v2580, %v2935
        %v2937 = vlaneseq
        %v2938 = vshrl.u32 %v2937, 7
        %v2939 = vsub.s32 0, %v2938
        %v2940 = vrot.slane %v2582, %v2939
        %v2941 = vlaneseq
        %v2942 = vshrl.u32 %v2941, 7
        %v2943 = vsub.s32 0, %v2942
        %v2944 = vrot.slane %v2606, %v2943
        %v2945 = vlaneseq
        %v2946 = vshrl.u32 %v2945, 7
        %v2947 = vsub.s32 0, %v2946
        %v2948 = vrot.slane %v2620, %v2947
        %v2949 = vlaneseq
        %v2950 = vshrl.u32 %v2949, 7
        %v2951 = vsub.s32 0, %v2950
        %v2952 = vrot.slane %v2628, %v2951
        %v2953 = vlaneseq
        %v2954 = vshrl.u32 %v2953, 7
        %v2955 = vsub.s32 0, %v2954
        %v2956 = vrot.slane %v2630, %v2955
        %v2957 = vlaneseq
        %v2958 = vshrl.u32 %v2957, 7
        %v2959 = vsub.s32 0, %v2958
        %v2960 = vrot.slane %v2613, %v2959
        %v2961 = vlaneseq
        %v2962 = vshrl.u32 %v2961, 7
        %v2963 = vsub.s32 0, %v2962
        %v2964 = vrot.slane %v2627, %v2963
        %v2965 = vlaneseq
        %v2966 = vshrl.u32 %v2965, 7
        %v2967 = vsub.s32 0, %v2966
        %v2968 = vrot.slane %v2629, %v2967
        %v2969 = vlaneseq
        %v2970 = vshrl.u32 %v2969, 7
        %v2971 = vsub.s32 0, %v2970
        %v2972 = vrot.slane %v2631, %v2971
        %v2973 = vlaneseq
        %v2974 = vshrl.u32 %v2973, 7
        %v2975 = vsub.s32 0, %v2974
        %v2976 = vrot.slane %v2655, %v2975
        %v2977 = vlaneseq
        %v2978 = vshrl.u32 %v2977, 7
        %v2979 = vsub.s32 0, %v2978
        %v2980 = vrot.slane %v2669, %v2979
        %v2981 = vlaneseq
        %v2982 = vshrl.u32 %v2981, 7
        %v2983 = vsub.s32 0, %v2982
        %v2984 = vrot.slane %v2677, %v2983
        %v2985 = vlaneseq
        %v2986 = vshrl.u32 %v2985, 7
        %v2987 = vsub.s32 0, %v2986
        %v2988 = vrot.slane %v2679, %v2987
        %v2989 = vlaneseq
        %v2990 = vshrl.u32 %v2989, 7
        %v2991 = vsub.s32 0, %v2990
        %v2992 = vrot.slane %v2662, %v2991
        %v2993 = vlaneseq
        %v2994 = vshrl.u32 %v2993, 7
        %v2995 = vsub.s32 0, %v2994
        %v2996 = vrot.slane %v2676, %v2995
        %v2997 = vlaneseq
        %v2998 = vshrl.u32 %v2997, 7
        %v2999 = vsub.s32 0, %v2998
        %v3000 = vrot.slane %v2678, %v2999
        %v3001 = vlaneseq
        %v3002 = vshrl.u32 %v3001, 7
        %v3003 = vsub.s32 0, %v3002
        %v3004 = vrot.slane %v2680, %v3003
        %v3005 = vlaneseq
        %v3006 = vshrl.u32 %v3005, 7
        %v3007 = vsub.s32 0, %v3006
        %v3008 = vrot.slane %v2704, %v3007
        %v3009 = vlaneseq
        %v3010 = vshrl.u32 %v3009, 7
        %v3011 = vsub.s32 0, %v3010
        %v3012 = vrot.slane %v2718, %v3011
        %v3013 = vlaneseq
        %v3014 = vshrl.u32 %v3013, 7
        %v3015 = vsub.s32 0, %v3014
        %v3016 = vrot.slane %v2726, %v3015
        %v3017 = vlaneseq
        %v3018 = vshrl.u32 %v3017, 7
        %v3019 = vsub.s32 0, %v3018
        %v3020 = vrot.slane %v2728, %v3019
        %v3021 = vlaneseq
        %v3022 = vshrl.u32 %v3021, 7
        %v3023 = vsub.s32 0, %v3022
        %v3024 = vrot.slane %v2711, %v3023
        %v3025 = vlaneseq
        %v3026 = vshrl.u32 %v3025, 7
        %v3027 = vsub.s32 0, %v3026
        %v3028 = vrot.slane %v2725, %v3027
        %v3029 = vlaneseq
        %v3030 = vshrl.u32 %v3029, 7
        %v3031 = vsub.s32 0, %v3030
        %v3032 = vrot.slane %v2727, %v3031
        %v3033 = vlaneseq
        %v3034 = vshrl.u32 %v3033, 7
        %v3035 = vsub.s32 0, %v3034
        %v3036 = vrot.slane %v2729, %v3035
        %v3037 = vlaneseq
        %v3038 = vshrl.u32 %v3037, 7
        %v3039 = vsub.s32 0, %v3038
        %v3040 = vrot.slane %v2753, %v3039
        %v3041 = vlaneseq
        %v3042 = vshrl.u32 %v3041, 7
        %v3043 = vsub.s32 0, %v3042
        %v3044 = vrot.slane %v2767, %v3043
        %v3045 = vlaneseq
        %v3046 = vshrl.u32 %v3045, 7
        %v3047 = vsub.s32 0, %v3046
        %v3048 = vrot.slane %v2775, %v3047
        %v3049 = vlaneseq
        %v3050 = vshrl.u32 %v3049, 7
        %v3051 = vsub.s32 0, %v3050
        %v3052 = vrot.slane %v2777, %v3051
        %v3053 = vlaneseq
        %v3054 = vshrl.u32 %v3053, 7
        %v3055 = vsub.s32 0, %v3054
        %v3056 = vrot.slane %v2760, %v3055
        %v3057 = vlaneseq
        %v3058 = vshrl.u32 %v3057, 7
        %v3059 = vsub.s32 0, %v3058
        %v3060 = vrot.slane %v2774, %v3059
        %v3061 = vlaneseq
        %v3062 = vshrl.u32 %v3061, 7
        %v3063 = vsub.s32 0, %v3062
        %v3064 = vrot.slane %v2776, %v3063
        %v3065 = vlaneseq
        %v3066 = vshrl.u32 %v3065, 7
        %v3067 = vsub.s32 0, %v3066
        %v3068 = vrot.slane %v2778, %v3067
        %v3069 = vlaneseq
        %v3070 = vshrl.u32 %v3069, 7
        %v3071 = vsub.s32 0, %v3070
        %v3072 = vrot.slane %v2802, %v3071
        %v3073 = vlaneseq
        %v3074 = vshrl.u32 %v3073, 7
        %v3075 = vsub.s32 0, %v3074
        %v3076 = vrot.slane %v2816, %v3075
        %v3077 = vlaneseq
        %v3078 = vshrl.u32 %v3077, 7
        %v3079 = vsub.s32 0, %v3078
        %v3080 = vrot.slane %v2824, %v3079
        %v3081 = vlaneseq
        %v3082 = vshrl.u32 %v3081, 7
        %v3083 = vsub.s32 0, %v3082
        %v3084 = vrot.slane %v2826, %v3083
        %v3085 = vlaneseq
        %v3086 = vshrl.u32 %v3085, 7
        %v3087 = vsub.s32 0, %v3086
        %v3088 = vrot.slane %v2809, %v3087
        %v3089 = vlaneseq
        %v3090 = vshrl.u32 %v3089, 7
        %v3091 = vsub.s32 0, %v3090
        %v3092 = vrot.slane %v2823, %v3091
        %v3093 = vlaneseq
        %v3094 = vshrl.u32 %v3093, 7
        %v3095 = vsub.s32 0, %v3094
        %v3096 = vrot.slane %v2825, %v3095
        %v3097 = vlaneseq
        %v3098 = vshrl.u32 %v3097, 7
        %v3099 = vsub.s32 0, %v3098
        %v3100 = vrot.slane %v2827, %v3099
        %v3101 = vlaneseq
        %v3102 = vshrl.u32 %v3101, 7
        %v3103 = vsub.s32 0, %v3102
        %v3104 = vrot.slane %v2851, %v3103
        %v3105 = vlaneseq
        %v3106 = vshrl.u32 %v3105, 7
        %v3107 = vsub.s32 0, %v3106
        %v3108 = vrot.slane %v2865, %v3107
        %v3109 = vlaneseq
        %v3110 = vshrl.u32 %v3109, 7
        %v3111 = vsub.s32 0, %v3110
        %v3112 = vrot.slane %v2873, %v3111
        %v3113 = vlaneseq
        %v3114 = vshrl.u32 %v3113, 7
        %v3115 = vsub.s32 0, %v3114
        %v3116 = vrot.slane %v2875, %v3115
        %v3117 = vlaneseq
        %v3118 = vshrl.u32 %v3117, 7
        %v3119 = vsub.s32 0, %v3118
        %v3120 = vrot.slane %v2858, %v3119
        %v3121 = vlaneseq
        %v3122 = vshrl.u32 %v3121, 7
        %v3123 = vsub.s32 0, %v3122
        %v3124 = vrot.slane %v2872, %v3123
        %v3125 = vlaneseq
        %v3126 = vshrl.u32 %v3125, 7
        %v3127 = vsub.s32 0, %v3126
        %v3128 = vrot.slane %v2874, %v3127
        %v3129 = vlaneseq
        %v3130 = vshrl.u32 %v3129, 7
        %v3131 = vsub.s32 0, %v3130
        %v3132 = vrot.slane %v2876, %v3131
        %v3197 = vsel %vm1948, %v2044, %v2880
        %v3198 = vsel %vm1948, %v2058, %v2884
        %v3199 = vsel %vm1948, %v2066, %v2888
        %v3200 = vsel %vm1948, %v2068, %v2892
        %v3201 = vsel %vm1948, %v2051, %v2896
        %v3202 = vsel %vm1948, %v2065, %v2900
        %v3203 = vsel %vm1948, %v2067, %v2904
        %v3204 = vsel %vm1948, %v2069, %v2908
        %v3205 = vsel %vm1948, %v2093, %v2912
        %v3206 = vsel %vm1948, %v2107, %v2916
        %v3207 = vsel %vm1948, %v2115, %v2920
        %v3208 = vsel %vm1948, %v2117, %v2924
        %v3209 = vsel %vm1948, %v2100, %v2928
        %v3210 = vsel %vm1948, %v2114, %v2932
        %v3211 = vsel %vm1948, %v2116, %v2936
        %v3212 = vsel %vm1948, %v2118, %v2940
        %v3213 = vsel %vm1948, %v2142, %v2944
        %v3214 = vsel %vm1948, %v2156, %v2948
        %v3215 = vsel %vm1948, %v2164, %v2952
        %v3216 = vsel %vm1948, %v2166, %v2956
        %v3217 = vsel %vm1948, %v2149, %v2960
        %v3218 = vsel %vm1948, %v2163, %v2964
        %v3219 = vsel %vm1948, %v2165, %v2968
        %v3220 = vsel %vm1948, %v2167, %v2972
        %v3221 = vsel %vm1948, %v2191, %v2976
        %v3222 = vsel %vm1948, %v2205, %v2980
        %v3223 = vsel %vm1948, %v2213, %v2984
        %v3224 = vsel %vm1948, %v2215, %v2988
        %v3225 = vsel %vm1948, %v2198, %v2992
        %v3226 = vsel %vm1948, %v2212, %v2996
        %v3227 = vsel %vm1948, %v2214, %v3000
        %v3228 = vsel %vm1948, %v2216, %v3004
        %v3229 = vsel %vm1948, %v2240, %v3008
        %v3230 = vsel %vm1948, %v2254, %v3012
        %v3231 = vsel %vm1948, %v2262, %v3016
        %v3232 = vsel %vm1948, %v2264, %v3020
        %v3233 = vsel %vm1948, %v2247, %v3024
        %v3234 = vsel %vm1948, %v2261, %v3028
        %v3235 = vsel %vm1948, %v2263, %v3032
        %v3236 = vsel %vm1948, %v2265, %v3036
        %v3237 = vsel %vm1948, %v2289, %v3040
        %v3238 = vsel %vm1948, %v2303, %v3044
        %v3239 = vsel %vm1948, %v2311, %v3048
        %v3240 = vsel %vm1948, %v2313, %v3052
        %v3241 = vsel %vm1948, %v2296, %v3056
        %v3242 = vsel %vm1948, %v2310, %v3060
        %v3243 = vsel %vm1948, %v2312, %v3064
        %v3244 = vsel %vm1948, %v2314, %v3068
        %v3245 = vsel %vm1948, %v2338, %v3072
        %v3246 = vsel %vm1948, %v2352, %v3076
        %v3247 = vsel %vm1948, %v2360, %v3080
        %v3248 = vsel %vm1948, %v2362, %v3084
        %v3249 = vsel %vm1948, %v2345, %v3088
        %v3250 = vsel %vm1948, %v2359, %v3092
        %v3251 = vsel %vm1948, %v2361, %v3096
        %v3252 = vsel %vm1948, %v2363, %v3100
        %v3253 = vsel %vm1948, %v2387, %v3104
        %v3254 = vsel %vm1948, %v2401, %v3108
        %v3255 = vsel %vm1948, %v2409, %v3112
        %v3256 = vsel %vm1948, %v2411, %v3116
        %v3257 = vsel %vm1948, %v2394, %v3120
        %v3258 = vsel %vm1948, %v2408, %v3124
        %v3259 = vsel %vm1948, %v2410, %v3128
        %v3260 = vsel %vm1948, %v2412, %v3132
        %v3389 = vcombine.low %v1949, %v1950
        %v3390 = vcombine.low %v1951, %v1952
        %v3392 = vunpack.c.l.s4 1983009808
        %v3393 = vunpack.c.0.s8 %v3392
        %v3394 = vlaneseq
        %v3395 = vshrl.u32 %v3394, 7
        %v3396 = vsub.s32 %v3393, %v3395
        %v3397 = vrot.slane %v3389, %v3396
        %v3399 = vunpack.c.l.s4 1983009808
        %v3400 = vunpack.c.0.s8 %v3399
        %v3401 = vlaneseq
        %v3402 = vshrl.u32 %v3401, 7
        %v3403 = vsub.s32 %v3400, %v3402
        %v3404 = vrot.slane %v3390, %v3403
        %v3405 = vcombine.low %v3397, %v3404
        %v3406 = vcombine.low %v1953, %v1954
        %v3407 = vcombine.low %v1955, %v1956
        %v3409 = vunpack.c.l.s4 1983009808
        %v3410 = vunpack.c.0.s8 %v3409
        %v3411 = vlaneseq
        %v3412 = vshrl.u32 %v3411, 7
        %v3413 = vsub.s32 %v3410, %v3412
        %v3414 = vrot.slane %v3406, %v3413
        %v3416 = vunpack.c.l.s4 1983009808
        %v3417 = vunpack.c.0.s8 %v3416
        %v3418 = vlaneseq
        %v3419 = vshrl.u32 %v3418, 7
        %v3420 = vsub.s32 %v3417, %v3419
        %v3421 = vrot.slane %v3407, %v3420
        %v3422 = vcombine.low %v3414, %v3421
        %v3423 = vcombine.low %v3197, %v3198
        %v3424 = vcombine.low %v3199, %v3200
        %v3426 = vunpack.c.l.s4 1983009808
        %v3427 = vunpack.c.0.s8 %v3426
        %v3428 = vlaneseq
        %v3429 = vshrl.u32 %v3428, 7
        %v3430 = vsub.s32 %v3427, %v3429
        %v3431 = vrot.slane %v3423, %v3430
        %v3433 = vunpack.c.l.s4 1983009808
        %v3434 = vunpack.c.0.s8 %v3433
        %v3435 = vlaneseq
        %v3436 = vshrl.u32 %v3435, 7
        %v3437 = vsub.s32 %v3434, %v3436
        %v3438 = vrot.slane %v3424, %v3437
        %v3439 = vcombine.low %v3431, %v3438
        %v3440 = vcombine.low %v3201, %v3202
        %v3441 = vcombine.low %v3203, %v3204
        %v3443 = vunpack.c.l.s4 1983009808
        %v3444 = vunpack.c.0.s8 %v3443
        %v3445 = vlaneseq
        %v3446 = vshrl.u32 %v3445, 7
        %v3447 = vsub.s32 %v3444, %v3446
        %v3448 = vrot.slane %v3440, %v3447
        %v3450 = vunpack.c.l.s4 1983009808
        %v3451 = vunpack.c.0.s8 %v3450
        %v3452 = vlaneseq
        %v3453 = vshrl.u32 %v3452, 7
        %v3454 = vsub.s32 %v3451, %v3453
        %v3455 = vrot.slane %v3441, %v3454
        %v3456 = vcombine.low %v3448, %v3455
        %v3457 = vcombine.low %v1957, %v1958
        %v3458 = vcombine.low %v1959, %v1960
        %v3460 = vunpack.c.l.s4 1983009808
        %v3461 = vunpack.c.0.s8 %v3460
        %v3462 = vlaneseq
        %v3463 = vshrl.u32 %v3462, 7
        %v3464 = vsub.s32 %v3461, %v3463
        %v3465 = vrot.slane %v3457, %v3464
        %v3467 = vunpack.c.l.s4 1983009808
        %v3468 = vunpack.c.0.s8 %v3467
        %v3469 = vlaneseq
        %v3470 = vshrl.u32 %v3469, 7
        %v3471 = vsub.s32 %v3468, %v3470
        %v3472 = vrot.slane %v3458, %v3471
        %v3473 = vcombine.low %v3465, %v3472
        %v3474 = vcombine.low %v1961, %v1962
        %v3475 = vcombine.low %v1963, %v1964
        %v3477 = vunpack.c.l.s4 1983009808
        %v3478 = vunpack.c.0.s8 %v3477
        %v3479 = vlaneseq
        %v3480 = vshrl.u32 %v3479, 7
        %v3481 = vsub.s32 %v3478, %v3480
        %v3482 = vrot.slane %v3474, %v3481
        %v3484 = vunpack.c.l.s4 1983009808
        %v3485 = vunpack.c.0.s8 %v3484
        %v3486 = vlaneseq
        %v3487 = vshrl.u32 %v3486, 7
        %v3488 = vsub.s32 %v3485, %v3487
        %v3489 = vrot.slane %v3475, %v3488
        %v3490 = vcombine.low %v3482, %v3489
        %v3491 = vcombine.low %v3205, %v3206
        %v3492 = vcombine.low %v3207, %v3208
        %v3494 = vunpack.c.l.s4 1983009808
        %v3495 = vunpack.c.0.s8 %v3494
        %v3496 = vlaneseq
        %v3497 = vshrl.u32 %v3496, 7
        %v3498 = vsub.s32 %v3495, %v3497
        %v3499 = vrot.slane %v3491, %v3498
        %v3501 = vunpack.c.l.s4 1983009808
        %v3502 = vunpack.c.0.s8 %v3501
        %v3503 = vlaneseq
        %v3504 = vshrl.u32 %v3503, 7
        %v3505 = vsub.s32 %v3502, %v3504
        %v3506 = vrot.slane %v3492, %v3505
        %v3507 = vcombine.low %v3499, %v3506
        %v3508 = vcombine.low %v3209, %v3210
        %v3509 = vcombine.low %v3211, %v3212
        %v3511 = vunpack.c.l.s4 1983009808
        %v3512 = vunpack.c.0.s8 %v3511
        %v3513 = vlaneseq
        %v3514 = vshrl.u32 %v3513, 7
        %v3515 = vsub.s32 %v3512, %v3514
        %v3516 = vrot.slane %v3508, %v3515
        %v3518 = vunpack.c.l.s4 1983009808
        %v3519 = vunpack.c.0.s8 %v3518
        %v3520 = vlaneseq
        %v3521 = vshrl.u32 %v3520, 7
        %v3522 = vsub.s32 %v3519, %v3521
        %v3523 = vrot.slane %v3509, %v3522
        %v3524 = vcombine.low %v3516, %v3523
        %v3525 = vcombine.low %v1965, %v1966
        %v3526 = vcombine.low %v1967, %v1968
        %v3528 = vunpack.c.l.s4 1983009808
        %v3529 = vunpack.c.0.s8 %v3528
        %v3530 = vlaneseq
        %v3531 = vshrl.u32 %v3530, 7
        %v3532 = vsub.s32 %v3529, %v3531
        %v3533 = vrot.slane %v3525, %v3532
        %v3535 = vunpack.c.l.s4 1983009808
        %v3536 = vunpack.c.0.s8 %v3535
        %v3537 = vlaneseq
        %v3538 = vshrl.u32 %v3537, 7
        %v3539 = vsub.s32 %v3536, %v3538
        %v3540 = vrot.slane %v3526, %v3539
        %v3541 = vcombine.low %v3533, %v3540
        %v3542 = vcombine.low %v1969, %v1970
        %v3543 = vcombine.low %v1971, %v1972
        %v3545 = vunpack.c.l.s4 1983009808
        %v3546 = vunpack.c.0.s8 %v3545
        %v3547 = vlaneseq
        %v3548 = vshrl.u32 %v3547, 7
        %v3549 = vsub.s32 %v3546, %v3548
        %v3550 = vrot.slane %v3542, %v3549
        %v3552 = vunpack.c.l.s4 1983009808
        %v3553 = vunpack.c.0.s8 %v3552
        %v3554 = vlaneseq
        %v3555 = vshrl.u32 %v3554, 7
        %v3556 = vsub.s32 %v3553, %v3555
        %v3557 = vrot.slane %v3543, %v3556
        %v3558 = vcombine.low %v3550, %v3557
        %v3559 = vcombine.low %v3213, %v3214
        %v3560 = vcombine.low %v3215, %v3216
        %v3562 = vunpack.c.l.s4 1983009808
        %v3563 = vunpack.c.0.s8 %v3562
        %v3564 = vlaneseq
        %v3565 = vshrl.u32 %v3564, 7
        %v3566 = vsub.s32 %v3563, %v3565
        %v3567 = vrot.slane %v3559, %v3566
        %v3569 = vunpack.c.l.s4 1983009808
        %v3570 = vunpack.c.0.s8 %v3569
        %v3571 = vlaneseq
        %v3572 = vshrl.u32 %v3571, 7
        %v3573 = vsub.s32 %v3570, %v3572
        %v3574 = vrot.slane %v3560, %v3573
        %v3575 = vcombine.low %v3567, %v3574
        %v3576 = vcombine.low %v3217, %v3218
        %v3577 = vcombine.low %v3219, %v3220
        %v3579 = vunpack.c.l.s4 1983009808
        %v3580 = vunpack.c.0.s8 %v3579
        %v3581 = vlaneseq
        %v3582 = vshrl.u32 %v3581, 7
        %v3583 = vsub.s32 %v3580, %v3582
        %v3584 = vrot.slane %v3576, %v3583
        %v3586 = vunpack.c.l.s4 1983009808
        %v3587 = vunpack.c.0.s8 %v3586
        %v3588 = vlaneseq
        %v3589 = vshrl.u32 %v3588, 7
        %v3590 = vsub.s32 %v3587, %v3589
        %v3591 = vrot.slane %v3577, %v3590
        %v3592 = vcombine.low %v3584, %v3591
        %v3593 = vcombine.low %v1973, %v1974
        %v3594 = vcombine.low %v1975, %v1976
        %v3596 = vunpack.c.l.s4 1983009808
        %v3597 = vunpack.c.0.s8 %v3596
        %v3598 = vlaneseq
        %v3599 = vshrl.u32 %v3598, 7
        %v3600 = vsub.s32 %v3597, %v3599
        %v3601 = vrot.slane %v3593, %v3600
        %v3603 = vunpack.c.l.s4 1983009808
        %v3604 = vunpack.c.0.s8 %v3603
        %v3605 = vlaneseq
        %v3606 = vshrl.u32 %v3605, 7
        %v3607 = vsub.s32 %v3604, %v3606
        %v3608 = vrot.slane %v3594, %v3607
        %v3609 = vcombine.low %v3601, %v3608
        %v3610 = vcombine.low %v1977, %v1978
        %v3611 = vcombine.low %v1979, %v1980
        %v3613 = vunpack.c.l.s4 1983009808
        %v3614 = vunpack.c.0.s8 %v3613
        %v3615 = vlaneseq
        %v3616 = vshrl.u32 %v3615, 7
        %v3617 = vsub.s32 %v3614, %v3616
        %v3618 = vrot.slane %v3610, %v3617
        %v3620 = vunpack.c.l.s4 1983009808
        %v3621 = vunpack.c.0.s8 %v3620
        %v3622 = vlaneseq
        %v3623 = vshrl.u32 %v3622, 7
        %v3624 = vsub.s32 %v3621, %v3623
        %v3625 = vrot.slane %v3611, %v3624
        %v3626 = vcombine.low %v3618, %v3625
        %v3627 = vcombine.low %v3221, %v3222
        %v3628 = vcombine.low %v3223, %v3224
        %v3630 = vunpack.c.l.s4 1983009808
        %v3631 = vunpack.c.0.s8 %v3630
        %v3632 = vlaneseq
        %v3633 = vshrl.u32 %v3632, 7
        %v3634 = vsub.s32 %v3631, %v3633
        %v3635 = vrot.slane %v3627, %v3634
        %v3637 = vunpack.c.l.s4 1983009808
        %v3638 = vunpack.c.0.s8 %v3637
        %v3639 = vlaneseq
        %v3640 = vshrl.u32 %v3639, 7
        %v3641 = vsub.s32 %v3638, %v3640
        %v3642 = vrot.slane %v3628, %v3641
        %v3643 = vcombine.low %v3635, %v3642
        %v3644 = vcombine.low %v3225, %v3226
        %v3645 = vcombine.low %v3227, %v3228
        %v3647 = vunpack.c.l.s4 1983009808
        %v3648 = vunpack.c.0.s8 %v3647
        %v3649 = vlaneseq
        %v3650 = vshrl.u32 %v3649, 7
        %v3651 = vsub.s32 %v3648, %v3650
        %v3652 = vrot.slane %v3644, %v3651
        %v3654 = vunpack.c.l.s4 1983009808
        %v3655 = vunpack.c.0.s8 %v3654
        %v3656 = vlaneseq
        %v3657 = vshrl.u32 %v3656, 7
        %v3658 = vsub.s32 %v3655, %v3657
        %v3659 = vrot.slane %v3645, %v3658
        %v3660 = vcombine.low %v3652, %v3659
        %v3661 = vcombine.low %v1981, %v1982
        %v3662 = vcombine.low %v1983, %v1984
        %v3664 = vunpack.c.l.s4 1983009808
        %v3665 = vunpack.c.0.s8 %v3664
        %v3666 = vlaneseq
        %v3667 = vshrl.u32 %v3666, 7
        %v3668 = vsub.s32 %v3665, %v3667
        %v3669 = vrot.slane %v3661, %v3668
        %v3671 = vunpack.c.l.s4 1983009808
        %v3672 = vunpack.c.0.s8 %v3671
        %v3673 = vlaneseq
        %v3674 = vshrl.u32 %v3673, 7
        %v3675 = vsub.s32 %v3672, %v3674
        %v3676 = vrot.slane %v3662, %v3675
        %v3677 = vcombine.low %v3669, %v3676
        %v3678 = vcombine.low %v1985, %v1986
        %v3679 = vcombine.low %v1987, %v1988
        %v3681 = vunpack.c.l.s4 1983009808
        %v3682 = vunpack.c.0.s8 %v3681
        %v3683 = vlaneseq
        %v3684 = vshrl.u32 %v3683, 7
        %v3685 = vsub.s32 %v3682, %v3684
        %v3686 = vrot.slane %v3678, %v3685
        %v3688 = vunpack.c.l.s4 1983009808
        %v3689 = vunpack.c.0.s8 %v3688
        %v3690 = vlaneseq
        %v3691 = vshrl.u32 %v3690, 7
        %v3692 = vsub.s32 %v3689, %v3691
        %v3693 = vrot.slane %v3679, %v3692
        %v3694 = vcombine.low %v3686, %v3693
        %v3695 = vcombine.low %v3229, %v3230
        %v3696 = vcombine.low %v3231, %v3232
        %v3698 = vunpack.c.l.s4 1983009808
        %v3699 = vunpack.c.0.s8 %v3698
        %v3700 = vlaneseq
        %v3701 = vshrl.u32 %v3700, 7
        %v3702 = vsub.s32 %v3699, %v3701
        %v3703 = vrot.slane %v3695, %v3702
        %v3705 = vunpack.c.l.s4 1983009808
        %v3706 = vunpack.c.0.s8 %v3705
        %v3707 = vlaneseq
        %v3708 = vshrl.u32 %v3707, 7
        %v3709 = vsub.s32 %v3706, %v3708
        %v3710 = vrot.slane %v3696, %v3709
        %v3711 = vcombine.low %v3703, %v3710
        %v3712 = vcombine.low %v3233, %v3234
        %v3713 = vcombine.low %v3235, %v3236
        %v3715 = vunpack.c.l.s4 1983009808
        %v3716 = vunpack.c.0.s8 %v3715
        %v3717 = vlaneseq
        %v3718 = vshrl.u32 %v3717, 7
        %v3719 = vsub.s32 %v3716, %v3718
        %v3720 = vrot.slane %v3712, %v3719
        %v3722 = vunpack.c.l.s4 1983009808
        %v3723 = vunpack.c.0.s8 %v3722
        %v3724 = vlaneseq
        %v3725 = vshrl.u32 %v3724, 7
        %v3726 = vsub.s32 %v3723, %v3725
        %v3727 = vrot.slane %v3713, %v3726
        %v3728 = vcombine.low %v3720, %v3727
        %v3729 = vcombine.low %v1989, %v1990
        %v3730 = vcombine.low %v1991, %v1992
        %v3732 = vunpack.c.l.s4 1983009808
        %v3733 = vunpack.c.0.s8 %v3732
        %v3734 = vlaneseq
        %v3735 = vshrl.u32 %v3734, 7
        %v3736 = vsub.s32 %v3733, %v3735
        %v3737 = vrot.slane %v3729, %v3736
        %v3739 = vunpack.c.l.s4 1983009808
        %v3740 = vunpack.c.0.s8 %v3739
        %v3741 = vlaneseq
        %v3742 = vshrl.u32 %v3741, 7
        %v3743 = vsub.s32 %v3740, %v3742
        %v3744 = vrot.slane %v3730, %v3743
        %v3745 = vcombine.low %v3737, %v3744
        %v3746 = vcombine.low %v1993, %v1994
        %v3747 = vcombine.low %v1995, %v1996
        %v3749 = vunpack.c.l.s4 1983009808
        %v3750 = vunpack.c.0.s8 %v3749
        %v3751 = vlaneseq
        %v3752 = vshrl.u32 %v3751, 7
        %v3753 = vsub.s32 %v3750, %v3752
        %v3754 = vrot.slane %v3746, %v3753
        %v3756 = vunpack.c.l.s4 1983009808
        %v3757 = vunpack.c.0.s8 %v3756
        %v3758 = vlaneseq
        %v3759 = vshrl.u32 %v3758, 7
        %v3760 = vsub.s32 %v3757, %v3759
        %v3761 = vrot.slane %v3747, %v3760
        %v3762 = vcombine.low %v3754, %v3761
        %v3763 = vcombine.low %v3237, %v3238
        %v3764 = vcombine.low %v3239, %v3240
        %v3766 = vunpack.c.l.s4 1983009808
        %v3767 = vunpack.c.0.s8 %v3766
        %v3768 = vlaneseq
        %v3769 = vshrl.u32 %v3768, 7
        %v3770 = vsub.s32 %v3767, %v3769
        %v3771 = vrot.slane %v3763, %v3770
        %v3773 = vunpack.c.l.s4 1983009808
        %v3774 = vunpack.c.0.s8 %v3773
        %v3775 = vlaneseq
        %v3776 = vshrl.u32 %v3775, 7
        %v3777 = vsub.s32 %v3774, %v3776
        %v3778 = vrot.slane %v3764, %v3777
        %v3779 = vcombine.low %v3771, %v3778
        %v3780 = vcombine.low %v3241, %v3242
        %v3781 = vcombine.low %v3243, %v3244
        %v3783 = vunpack.c.l.s4 1983009808
        %v3784 = vunpack.c.0.s8 %v3783
        %v3785 = vlaneseq
        %v3786 = vshrl.u32 %v3785, 7
        %v3787 = vsub.s32 %v3784, %v3786
        %v3788 = vrot.slane %v3780, %v3787
        %v3790 = vunpack.c.l.s4 1983009808
        %v3791 = vunpack.c.0.s8 %v3790
        %v3792 = vlaneseq
        %v3793 = vshrl.u32 %v3792, 7
        %v3794 = vsub.s32 %v3791, %v3793
        %v3795 = vrot.slane %v3781, %v3794
        %v3796 = vcombine.low %v3788, %v3795
        %v3797 = vcombine.low %v1997, %v1998
        %v3798 = vcombine.low %v1999, %v2000
        %v3800 = vunpack.c.l.s4 1983009808
        %v3801 = vunpack.c.0.s8 %v3800
        %v3802 = vlaneseq
        %v3803 = vshrl.u32 %v3802, 7
        %v3804 = vsub.s32 %v3801, %v3803
        %v3805 = vrot.slane %v3797, %v3804
        %v3807 = vunpack.c.l.s4 1983009808
        %v3808 = vunpack.c.0.s8 %v3807
        %v3809 = vlaneseq
        %v3810 = vshrl.u32 %v3809, 7
        %v3811 = vsub.s32 %v3808, %v3810
        %v3812 = vrot.slane %v3798, %v3811
        %v3813 = vcombine.low %v3805, %v3812
        %v3814 = vcombine.low %v2001, %v2002
        %v3815 = vcombine.low %v2003, %v2004
        %v3817 = vunpack.c.l.s4 1983009808
        %v3818 = vunpack.c.0.s8 %v3817
        %v3819 = vlaneseq
        %v3820 = vshrl.u32 %v3819, 7
        %v3821 = vsub.s32 %v3818, %v3820
        %v3822 = vrot.slane %v3814, %v3821
        %v3824 = vunpack.c.l.s4 1983009808
        %v3825 = vunpack.c.0.s8 %v3824
        %v3826 = vlaneseq
        %v3827 = vshrl.u32 %v3826, 7
        %v3828 = vsub.s32 %v3825, %v3827
        %v3829 = vrot.slane %v3815, %v3828
        %v3830 = vcombine.low %v3822, %v3829
        %v3831 = vcombine.low %v3245, %v3246
        %v3832 = vcombine.low %v3247, %v3248
        %v3834 = vunpack.c.l.s4 1983009808
        %v3835 = vunpack.c.0.s8 %v3834
        %v3836 = vlaneseq
        %v3837 = vshrl.u32 %v3836, 7
        %v3838 = vsub.s32 %v3835, %v3837
        %v3839 = vrot.slane %v3831, %v3838
        %v3841 = vunpack.c.l.s4 1983009808
        %v3842 = vunpack.c.0.s8 %v3841
        %v3843 = vlaneseq
        %v3844 = vshrl.u32 %v3843, 7
        %v3845 = vsub.s32 %v3842, %v3844
        %v3846 = vrot.slane %v3832, %v3845
        %v3847 = vcombine.low %v3839, %v3846
        %v3848 = vcombine.low %v3249, %v3250
        %v3849 = vcombine.low %v3251, %v3252
        %v3851 = vunpack.c.l.s4 1983009808
        %v3852 = vunpack.c.0.s8 %v3851
        %v3853 = vlaneseq
        %v3854 = vshrl.u32 %v3853, 7
        %v3855 = vsub.s32 %v3852, %v3854
        %v3856 = vrot.slane %v3848, %v3855
        %v3858 = vunpack.c.l.s4 1983009808
        %v3859 = vunpack.c.0.s8 %v3858
        %v3860 = vlaneseq
        %v3861 = vshrl.u32 %v3860, 7
        %v3862 = vsub.s32 %v3859, %v3861
        %v3863 = vrot.slane %v3849, %v3862
        %v3864 = vcombine.low %v3856, %v3863
        %v3865 = vcombine.low %v2005, %v2006
        %v3866 = vcombine.low %v2007, %v2008
        %v3868 = vunpack.c.l.s4 1983009808
        %v3869 = vunpack.c.0.s8 %v3868
        %v3870 = vlaneseq
        %v3871 = vshrl.u32 %v3870, 7
        %v3872 = vsub.s32 %v3869, %v3871
        %v3873 = vrot.slane %v3865, %v3872
        %v3875 = vunpack.c.l.s4 1983009808
        %v3876 = vunpack.c.0.s8 %v3875
        %v3877 = vlaneseq
        %v3878 = vshrl.u32 %v3877, 7
        %v3879 = vsub.s32 %v3876, %v3878
        %v3880 = vrot.slane %v3866, %v3879
        %v3881 = vcombine.low %v3873, %v3880
        %v3882 = vcombine.low %v2009, %v2010
        %v3883 = vcombine.low %v2011, %v2012
        %v3885 = vunpack.c.l.s4 1983009808
        %v3886 = vunpack.c.0.s8 %v3885
        %v3887 = vlaneseq
        %v3888 = vshrl.u32 %v3887, 7
        %v3889 = vsub.s32 %v3886, %v3888
        %v3890 = vrot.slane %v3882, %v3889
        %v3892 = vunpack.c.l.s4 1983009808
        %v3893 = vunpack.c.0.s8 %v3892
        %v3894 = vlaneseq
        %v3895 = vshrl.u32 %v3894, 7
        %v3896 = vsub.s32 %v3893, %v3895
        %v3897 = vrot.slane %v3883, %v3896
        %v3898 = vcombine.low %v3890, %v3897
        %v3899 = vcombine.low %v3253, %v3254
        %v3900 = vcombine.low %v3255, %v3256
        %v3902 = vunpack.c.l.s4 1983009808
        %v3903 = vunpack.c.0.s8 %v3902
        %v3904 = vlaneseq
        %v3905 = vshrl.u32 %v3904, 7
        %v3906 = vsub.s32 %v3903, %v3905
        %v3907 = vrot.slane %v3899, %v3906
        %v3909 = vunpack.c.l.s4 1983009808
        %v3910 = vunpack.c.0.s8 %v3909
        %v3911 = vlaneseq
        %v3912 = vshrl.u32 %v3911, 7
        %v3913 = vsub.s32 %v3910, %v3912
        %v3914 = vrot.slane %v3900, %v3913
        %v3915 = vcombine.low %v3907, %v3914
        %v3916 = vcombine.low %v3257, %v3258
        %v3917 = vcombine.low %v3259, %v3260
        %v3919 = vunpack.c.l.s4 1983009808
        %v3920 = vunpack.c.0.s8 %v3919
        %v3921 = vlaneseq
        %v3922 = vshrl.u32 %v3921, 7
        %v3923 = vsub.s32 %v3920, %v3922
        %v3924 = vrot.slane %v3916, %v3923
        %v3926 = vunpack.c.l.s4 1983009808
        %v3927 = vunpack.c.0.s8 %v3926
        %v3928 = vlaneseq
        %v3929 = vshrl.u32 %v3928, 7
        %v3930 = vsub.s32 %v3927, %v3929
        %v3931 = vrot.slane %v3917, %v3930
        %v3932 = vcombine.low %v3924, %v3931
        %v3933 = vrot.slane %v3405, 7
        %v3934 = vrot.slane %v3422, 7
        %v3935 = vsel %vm1948, %v3933, %v3934
        %v3936 = vrot.slane %v3439, 7
        %v3937 = vrot.slane %v3456, 7
        %v3938 = vsel %vm1948, %v3936, %v3937
        %v3939 = vrot.slane %v3473, 7
        %v3940 = vrot.slane %v3490, 7
        %v3941 = vsel %vm1948, %v3939, %v3940
        %v3942 = vrot.slane %v3507, 7
        %v3943 = vrot.slane %v3524, 7
        %v3944 = vsel %vm1948, %v3942, %v3943
        %v3945 = vrot.slane %v3541, 7
        %v3946 = vrot.slane %v3558, 7
        %v3947 = vsel %vm1948, %v3945, %v3946
        %v3948 = vrot.slane %v3575, 7
        %v3949 = vrot.slane %v3592, 7
        %v3950 = vsel %vm1948, %v3948, %v3949
        %v3951 = vrot.slane %v3609, 7
        %v3952 = vrot.slane %v3626, 7
        %v3953 = vsel %vm1948, %v3951, %v3952
        %v3954 = vrot.slane %v3643, 7
        %v3955 = vrot.slane %v3660, 7
        %v3956 = vsel %vm1948, %v3954, %v3955
        %v3957 = vrot.slane %v3677, 7
        %v3958 = vrot.slane %v3694, 7
        %v3959 = vsel %vm1948, %v3957, %v3958
        %v3960 = vrot.slane %v3711, 7
        %v3961 = vrot.slane %v3728, 7
        %v3962 = vsel %vm1948, %v3960, %v3961
        %v3963 = vrot.slane %v3745, 7
        %v3964 = vrot.slane %v3762, 7
        %v3965 = vsel %vm1948, %v3963, %v3964
        %v3966 = vrot.slane %v3779, 7
        %v3967 = vrot.slane %v3796, 7
        %v3968 = vsel %vm1948, %v3966, %v3967
        %v3969 = vrot.slane %v3813, 7
        %v3970 = vrot.slane %v3830, 7
        %v3971 = vsel %vm1948, %v3969, %v3970
        %v3972 = vrot.slane %v3847, 7
        %v3973 = vrot.slane %v3864, 7
        %v3974 = vsel %vm1948, %v3972, %v3973
        %v3975 = vrot.slane %v3881, 7
        %v3976 = vrot.slane %v3898, 7
        %v3977 = vsel %vm1948, %v3975, %v3976
        %v3978 = vrot.slane %v3915, 7
        %v3979 = vrot.slane %v3932, 7
        %v3980 = vsel %vm1948, %v3978, %v3979
        %v4013 = vsel %vm1948, 0.0, %v3933
        %v4014 = vsel %vm1948, 0.0, %v3936
        %v4015 = vsel %vm1948, 0.0, %v3939
        %v4016 = vsel %vm1948, 0.0, %v3942
        %v4017 = vsel %vm1948, 0.0, %v3945
        %v4018 = vsel %vm1948, 0.0, %v3948
        %v4019 = vsel %vm1948, 0.0, %v3951
        %v4020 = vsel %vm1948, 0.0, %v3954
        %v4021 = vsel %vm1948, 0.0, %v3957
        %v4022 = vsel %vm1948, 0.0, %v3960
        %v4023 = vsel %vm1948, 0.0, %v3963
        %v4024 = vsel %vm1948, 0.0, %v3966
        %v4025 = vsel %vm1948, 0.0, %v3969
        %v4026 = vsel %vm1948, 0.0, %v3972
        %v4027 = vsel %vm1948, 0.0, %v3975
        %v4028 = vsel %vm1948, 0.0, %v3978
        %v4029 = vsel %vm1948, %v3934, 0.0
        %v4030 = vsel %vm1948, %v3937, 0.0
        %v4031 = vsel %vm1948, %v3940, 0.0
        %v4032 = vsel %vm1948, %v3943, 0.0
        %v4033 = vsel %vm1948, %v3946, 0.0
        %v4034 = vsel %vm1948, %v3949, 0.0
        %v4035 = vsel %vm1948, %v3952, 0.0
        %v4036 = vsel %vm1948, %v3955, 0.0
        %v4037 = vsel %vm1948, %v3958, 0.0
        %v4038 = vsel %vm1948, %v3961, 0.0
        %v4039 = vsel %vm1948, %v3964, 0.0
        %v4040 = vsel %vm1948, %v3967, 0.0
        %v4041 = vsel %vm1948, %v3970, 0.0
        %v4042 = vsel %vm1948, %v3973, 0.0
        %v4043 = vsel %vm1948, %v3976, 0.0
        %v4044 = vsel %vm1948, %v3979, 0.0
        %v4077 = vcombine.high %v4013, %v4013
        %v4079 = vunpack.c.l.s4 1983009808
        %v4080 = vunpack.c.0.s8 %v4079
        %v4081 = vlaneseq
        %v4082 = vshrl.u32 %v4081, 7
        %v4083 = vsub.s32 %v4080, %v4082
        %v4084 = vrot.slane %v4013, %v4083
        %v4086 = vunpack.c.l.s4 1983009808
        %v4087 = vunpack.c.0.s8 %v4086
        %v4088 = vlaneseq
        %v4089 = vshrl.u32 %v4088, 7
        %v4090 = vsub.s32 %v4087, %v4089
        %v4091 = vrot.slane %v4077, %v4090
        %v4092 = vcombine.high %v4084, %v4084
        %v4093 = vcombine.high %v4091, %v4091
        %v4094 = vcombine.high %v3935, %v3935
        %v4096 = vunpack.c.l.s4 1983009808
        %v4097 = vunpack.c.0.s8 %v4096
        %v4098 = vlaneseq
        %v4099 = vshrl.u32 %v4098, 7
        %v4100 = vsub.s32 %v4097, %v4099
        %v4101 = vrot.slane %v3935, %v4100
        %v4103 = vunpack.c.l.s4 1983009808
        %v4104 = vunpack.c.0.s8 %v4103
        %v4105 = vlaneseq
        %v4106 = vshrl.u32 %v4105, 7
        %v4107 = vsub.s32 %v4104, %v4106
        %v4108 = vrot.slane %v4094, %v4107
        %v4109 = vcombine.high %v4101, %v4101
        %v4110 = vcombine.high %v4108, %v4108
        %v4112 = vunpack.c.l.s4 1983009808
        %v4113 = vunpack.c.0.s8 %v4112
        %v4114 = vlaneseq
        %v4115 = vshrl.u32 %v4114, 7
        %v4116 = vsub.s32 %v4113, %v4115
        %v4117 = vrot.slane %v4029, %v4116
        %v4118 = vcombine.high %v4014, %v4014
        %v4120 = vunpack.c.l.s4 1983009808
        %v4121 = vunpack.c.0.s8 %v4120
        %v4122 = vlaneseq
        %v4123 = vshrl.u32 %v4122, 7
        %v4124 = vsub.s32 %v4121, %v4123
        %v4125 = vrot.slane %v4014, %v4124
        %v4127 = vunpack.c.l.s4 1983009808
        %v4128 = vunpack.c.0.s8 %v4127
        %v4129 = vlaneseq
        %v4130 = vshrl.u32 %v4129, 7
        %v4131 = vsub.s32 %v4128, %v4130
        %v4132 = vrot.slane %v4118, %v4131
        %v4133 = vcombine.high %v4125, %v4125
        %v4134 = vcombine.high %v4132, %v4132
        %v4135 = vcombine.high %v3938, %v3938
        %v4137 = vunpack.c.l.s4 1983009808
        %v4138 = vunpack.c.0.s8 %v4137
        %v4139 = vlaneseq
        %v4140 = vshrl.u32 %v4139, 7
        %v4141 = vsub.s32 %v4138, %v4140
        %v4142 = vrot.slane %v3938, %v4141
        %v4144 = vunpack.c.l.s4 1983009808
        %v4145 = vunpack.c.0.s8 %v4144
        %v4146 = vlaneseq
        %v4147 = vshrl.u32 %v4146, 7
        %v4148 = vsub.s32 %v4145, %v4147
        %v4149 = vrot.slane %v4135, %v4148
        %v4150 = vcombine.high %v4142, %v4142
        %v4151 = vcombine.high %v4149, %v4149
        %v4153 = vunpack.c.l.s4 1983009808
        %v4154 = vunpack.c.0.s8 %v4153
        %v4155 = vlaneseq
        %v4156 = vshrl.u32 %v4155, 7
        %v4157 = vsub.s32 %v4154, %v4156
        %v4158 = vrot.slane %v4030, %v4157
        %v4159 = vcombine.high %v4015, %v4015
        %v4161 = vunpack.c.l.s4 1983009808
        %v4162 = vunpack.c.0.s8 %v4161
        %v4163 = vlaneseq
        %v4164 = vshrl.u32 %v4163, 7
        %v4165 = vsub.s32 %v4162, %v4164
        %v4166 = vrot.slane %v4015, %v4165
        %v4168 = vunpack.c.l.s4 1983009808
        %v4169 = vunpack.c.0.s8 %v4168
        %v4170 = vlaneseq
        %v4171 = vshrl.u32 %v4170, 7
        %v4172 = vsub.s32 %v4169, %v4171
        %v4173 = vrot.slane %v4159, %v4172
        %v4174 = vcombine.high %v4166, %v4166
        %v4175 = vcombine.high %v4173, %v4173
        %v4176 = vcombine.high %v3941, %v3941
        %v4178 = vunpack.c.l.s4 1983009808
        %v4179 = vunpack.c.0.s8 %v4178
        %v4180 = vlaneseq
        %v4181 = vshrl.u32 %v4180, 7
        %v4182 = vsub.s32 %v4179, %v4181
        %v4183 = vrot.slane %v3941, %v4182
        %v4185 = vunpack.c.l.s4 1983009808
        %v4186 = vunpack.c.0.s8 %v4185
        %v4187 = vlaneseq
        %v4188 = vshrl.u32 %v4187, 7
        %v4189 = vsub.s32 %v4186, %v4188
        %v4190 = vrot.slane %v4176, %v4189
        %v4191 = vcombine.high %v4183, %v4183
        %v4192 = vcombine.high %v4190, %v4190
        %v4194 = vunpack.c.l.s4 1983009808
        %v4195 = vunpack.c.0.s8 %v4194
        %v4196 = vlaneseq
        %v4197 = vshrl.u32 %v4196, 7
        %v4198 = vsub.s32 %v4195, %v4197
        %v4199 = vrot.slane %v4031, %v4198
        %v4200 = vcombine.high %v4016, %v4016
        %v4202 = vunpack.c.l.s4 1983009808
        %v4203 = vunpack.c.0.s8 %v4202
        %v4204 = vlaneseq
        %v4205 = vshrl.u32 %v4204, 7
        %v4206 = vsub.s32 %v4203, %v4205
        %v4207 = vrot.slane %v4016, %v4206
        %v4209 = vunpack.c.l.s4 1983009808
        %v4210 = vunpack.c.0.s8 %v4209
        %v4211 = vlaneseq
        %v4212 = vshrl.u32 %v4211, 7
        %v4213 = vsub.s32 %v4210, %v4212
        %v4214 = vrot.slane %v4200, %v4213
        %v4215 = vcombine.high %v4207, %v4207
        %v4216 = vcombine.high %v4214, %v4214
        %v4217 = vcombine.high %v3944, %v3944
        %v4219 = vunpack.c.l.s4 1983009808
        %v4220 = vunpack.c.0.s8 %v4219
        %v4221 = vlaneseq
        %v4222 = vshrl.u32 %v4221, 7
        %v4223 = vsub.s32 %v4220, %v4222
        %v4224 = vrot.slane %v3944, %v4223
        %v4226 = vunpack.c.l.s4 1983009808
        %v4227 = vunpack.c.0.s8 %v4226
        %v4228 = vlaneseq
        %v4229 = vshrl.u32 %v4228, 7
        %v4230 = vsub.s32 %v4227, %v4229
        %v4231 = vrot.slane %v4217, %v4230
        %v4232 = vcombine.high %v4224, %v4224
        %v4233 = vcombine.high %v4231, %v4231
        %v4235 = vunpack.c.l.s4 1983009808
        %v4236 = vunpack.c.0.s8 %v4235
        %v4237 = vlaneseq
        %v4238 = vshrl.u32 %v4237, 7
        %v4239 = vsub.s32 %v4236, %v4238
        %v4240 = vrot.slane %v4032, %v4239
        %v4241 = vcombine.high %v4017, %v4017
        %v4243 = vunpack.c.l.s4 1983009808
        %v4244 = vunpack.c.0.s8 %v4243
        %v4245 = vlaneseq
        %v4246 = vshrl.u32 %v4245, 7
        %v4247 = vsub.s32 %v4244, %v4246
        %v4248 = vrot.slane %v4017, %v4247
        %v4250 = vunpack.c.l.s4 1983009808
        %v4251 = vunpack.c.0.s8 %v4250
        %v4252 = vlaneseq
        %v4253 = vshrl.u32 %v4252, 7
        %v4254 = vsub.s32 %v4251, %v4253
        %v4255 = vrot.slane %v4241, %v4254
        %v4256 = vcombine.high %v4248, %v4248
        %v4257 = vcombine.high %v4255, %v4255
        %v4258 = vcombine.high %v3947, %v3947
        %v4260 = vunpack.c.l.s4 1983009808
        %v4261 = vunpack.c.0.s8 %v4260
        %v4262 = vlaneseq
        %v4263 = vshrl.u32 %v4262, 7
        %v4264 = vsub.s32 %v4261, %v4263
        %v4265 = vrot.slane %v3947, %v4264
        %v4267 = vunpack.c.l.s4 1983009808
        %v4268 = vunpack.c.0.s8 %v4267
        %v4269 = vlaneseq
        %v4270 = vshrl.u32 %v4269, 7
        %v4271 = vsub.s32 %v4268, %v4270
        %v4272 = vrot.slane %v4258, %v4271
        %v4273 = vcombine.high %v4265, %v4265
        %v4274 = vcombine.high %v4272, %v4272
        %v4276 = vunpack.c.l.s4 1983009808
        %v4277 = vunpack.c.0.s8 %v4276
        %v4278 = vlaneseq
        %v4279 = vshrl.u32 %v4278, 7
        %v4280 = vsub.s32 %v4277, %v4279
        %v4281 = vrot.slane %v4033, %v4280
        %v4282 = vcombine.high %v4018, %v4018
        %v4284 = vunpack.c.l.s4 1983009808
        %v4285 = vunpack.c.0.s8 %v4284
        %v4286 = vlaneseq
        %v4287 = vshrl.u32 %v4286, 7
        %v4288 = vsub.s32 %v4285, %v4287
        %v4289 = vrot.slane %v4018, %v4288
        %v4291 = vunpack.c.l.s4 1983009808
        %v4292 = vunpack.c.0.s8 %v4291
        %v4293 = vlaneseq
        %v4294 = vshrl.u32 %v4293, 7
        %v4295 = vsub.s32 %v4292, %v4294
        %v4296 = vrot.slane %v4282, %v4295
        %v4297 = vcombine.high %v4289, %v4289
        %v4298 = vcombine.high %v4296, %v4296
        %v4299 = vcombine.high %v3950, %v3950
        %v4301 = vunpack.c.l.s4 1983009808
        %v4302 = vunpack.c.0.s8 %v4301
        %v4303 = vlaneseq
        %v4304 = vshrl.u32 %v4303, 7
        %v4305 = vsub.s32 %v4302, %v4304
        %v4306 = vrot.slane %v3950, %v4305
        %v4308 = vunpack.c.l.s4 1983009808
        %v4309 = vunpack.c.0.s8 %v4308
        %v4310 = vlaneseq
        %v4311 = vshrl.u32 %v4310, 7
        %v4312 = vsub.s32 %v4309, %v4311
        %v4313 = vrot.slane %v4299, %v4312
        %v4314 = vcombine.high %v4306, %v4306
        %v4315 = vcombine.high %v4313, %v4313
        %v4317 = vunpack.c.l.s4 1983009808
        %v4318 = vunpack.c.0.s8 %v4317
        %v4319 = vlaneseq
        %v4320 = vshrl.u32 %v4319, 7
        %v4321 = vsub.s32 %v4318, %v4320
        %v4322 = vrot.slane %v4034, %v4321
        %v4323 = vcombine.high %v4019, %v4019
        %v4325 = vunpack.c.l.s4 1983009808
        %v4326 = vunpack.c.0.s8 %v4325
        %v4327 = vlaneseq
        %v4328 = vshrl.u32 %v4327, 7
        %v4329 = vsub.s32 %v4326, %v4328
        %v4330 = vrot.slane %v4019, %v4329
        %v4332 = vunpack.c.l.s4 1983009808
        %v4333 = vunpack.c.0.s8 %v4332
        %v4334 = vlaneseq
        %v4335 = vshrl.u32 %v4334, 7
        %v4336 = vsub.s32 %v4333, %v4335
        %v4337 = vrot.slane %v4323, %v4336
        %v4338 = vcombine.high %v4330, %v4330
        %v4339 = vcombine.high %v4337, %v4337
        %v4340 = vcombine.high %v3953, %v3953
        %v4342 = vunpack.c.l.s4 1983009808
        %v4343 = vunpack.c.0.s8 %v4342
        %v4344 = vlaneseq
        %v4345 = vshrl.u32 %v4344, 7
        %v4346 = vsub.s32 %v4343, %v4345
        %v4347 = vrot.slane %v3953, %v4346
        %v4349 = vunpack.c.l.s4 1983009808
        %v4350 = vunpack.c.0.s8 %v4349
        %v4351 = vlaneseq
        %v4352 = vshrl.u32 %v4351, 7
        %v4353 = vsub.s32 %v4350, %v4352
        %v4354 = vrot.slane %v4340, %v4353
        %v4355 = vcombine.high %v4347, %v4347
        %v4356 = vcombine.high %v4354, %v4354
        %v4358 = vunpack.c.l.s4 1983009808
        %v4359 = vunpack.c.0.s8 %v4358
        %v4360 = vlaneseq
        %v4361 = vshrl.u32 %v4360, 7
        %v4362 = vsub.s32 %v4359, %v4361
        %v4363 = vrot.slane %v4035, %v4362
        %v4364 = vcombine.high %v4020, %v4020
        %v4366 = vunpack.c.l.s4 1983009808
        %v4367 = vunpack.c.0.s8 %v4366
        %v4368 = vlaneseq
        %v4369 = vshrl.u32 %v4368, 7
        %v4370 = vsub.s32 %v4367, %v4369
        %v4371 = vrot.slane %v4020, %v4370
        %v4373 = vunpack.c.l.s4 1983009808
        %v4374 = vunpack.c.0.s8 %v4373
        %v4375 = vlaneseq
        %v4376 = vshrl.u32 %v4375, 7
        %v4377 = vsub.s32 %v4374, %v4376
        %v4378 = vrot.slane %v4364, %v4377
        %v4379 = vcombine.high %v4371, %v4371
        %v4380 = vcombine.high %v4378, %v4378
        %v4381 = vcombine.high %v3956, %v3956
        %v4383 = vunpack.c.l.s4 1983009808
        %v4384 = vunpack.c.0.s8 %v4383
        %v4385 = vlaneseq
        %v4386 = vshrl.u32 %v4385, 7
        %v4387 = vsub.s32 %v4384, %v4386
        %v4388 = vrot.slane %v3956, %v4387
        %v4390 = vunpack.c.l.s4 1983009808
        %v4391 = vunpack.c.0.s8 %v4390
        %v4392 = vlaneseq
        %v4393 = vshrl.u32 %v4392, 7
        %v4394 = vsub.s32 %v4391, %v4393
        %v4395 = vrot.slane %v4381, %v4394
        %v4396 = vcombine.high %v4388, %v4388
        %v4397 = vcombine.high %v4395, %v4395
        %v4399 = vunpack.c.l.s4 1983009808
        %v4400 = vunpack.c.0.s8 %v4399
        %v4401 = vlaneseq
        %v4402 = vshrl.u32 %v4401, 7
        %v4403 = vsub.s32 %v4400, %v4402
        %v4404 = vrot.slane %v4036, %v4403
        %v4405 = vcombine.high %v4021, %v4021
        %v4407 = vunpack.c.l.s4 1983009808
        %v4408 = vunpack.c.0.s8 %v4407
        %v4409 = vlaneseq
        %v4410 = vshrl.u32 %v4409, 7
        %v4411 = vsub.s32 %v4408, %v4410
        %v4412 = vrot.slane %v4021, %v4411
        %v4414 = vunpack.c.l.s4 1983009808
        %v4415 = vunpack.c.0.s8 %v4414
        %v4416 = vlaneseq
        %v4417 = vshrl.u32 %v4416, 7
        %v4418 = vsub.s32 %v4415, %v4417
        %v4419 = vrot.slane %v4405, %v4418
        %v4420 = vcombine.high %v4412, %v4412
        %v4421 = vcombine.high %v4419, %v4419
        %v4422 = vcombine.high %v3959, %v3959
        %v4424 = vunpack.c.l.s4 1983009808
        %v4425 = vunpack.c.0.s8 %v4424
        %v4426 = vlaneseq
        %v4427 = vshrl.u32 %v4426, 7
        %v4428 = vsub.s32 %v4425, %v4427
        %v4429 = vrot.slane %v3959, %v4428
        %v4431 = vunpack.c.l.s4 1983009808
        %v4432 = vunpack.c.0.s8 %v4431
        %v4433 = vlaneseq
        %v4434 = vshrl.u32 %v4433, 7
        %v4435 = vsub.s32 %v4432, %v4434
        %v4436 = vrot.slane %v4422, %v4435
        %v4437 = vcombine.high %v4429, %v4429
        %v4438 = vcombine.high %v4436, %v4436
        %v4440 = vunpack.c.l.s4 1983009808
        %v4441 = vunpack.c.0.s8 %v4440
        %v4442 = vlaneseq
        %v4443 = vshrl.u32 %v4442, 7
        %v4444 = vsub.s32 %v4441, %v4443
        %v4445 = vrot.slane %v4037, %v4444
        %v4446 = vcombine.high %v4022, %v4022
        %v4448 = vunpack.c.l.s4 1983009808
        %v4449 = vunpack.c.0.s8 %v4448
        %v4450 = vlaneseq
        %v4451 = vshrl.u32 %v4450, 7
        %v4452 = vsub.s32 %v4449, %v4451
        %v4453 = vrot.slane %v4022, %v4452
        %v4455 = vunpack.c.l.s4 1983009808
        %v4456 = vunpack.c.0.s8 %v4455
        %v4457 = vlaneseq
        %v4458 = vshrl.u32 %v4457, 7
        %v4459 = vsub.s32 %v4456, %v4458
        %v4460 = vrot.slane %v4446, %v4459
        %v4461 = vcombine.high %v4453, %v4453
        %v4462 = vcombine.high %v4460, %v4460
        %v4463 = vcombine.high %v3962, %v3962
        %v4465 = vunpack.c.l.s4 1983009808
        %v4466 = vunpack.c.0.s8 %v4465
        %v4467 = vlaneseq
        %v4468 = vshrl.u32 %v4467, 7
        %v4469 = vsub.s32 %v4466, %v4468
        %v4470 = vrot.slane %v3962, %v4469
        %v4472 = vunpack.c.l.s4 1983009808
        %v4473 = vunpack.c.0.s8 %v4472
        %v4474 = vlaneseq
        %v4475 = vshrl.u32 %v4474, 7
        %v4476 = vsub.s32 %v4473, %v4475
        %v4477 = vrot.slane %v4463, %v4476
        %v4478 = vcombine.high %v4470, %v4470
        %v4479 = vcombine.high %v4477, %v4477
        %v4481 = vunpack.c.l.s4 1983009808
        %v4482 = vunpack.c.0.s8 %v4481
        %v4483 = vlaneseq
        %v4484 = vshrl.u32 %v4483, 7
        %v4485 = vsub.s32 %v4482, %v4484
        %v4486 = vrot.slane %v4038, %v4485
        %v4487 = vcombine.high %v4023, %v4023
        %v4489 = vunpack.c.l.s4 1983009808
        %v4490 = vunpack.c.0.s8 %v4489
        %v4491 = vlaneseq
        %v4492 = vshrl.u32 %v4491, 7
        %v4493 = vsub.s32 %v4490, %v4492
        %v4494 = vrot.slane %v4023, %v4493
        %v4496 = vunpack.c.l.s4 1983009808
        %v4497 = vunpack.c.0.s8 %v4496
        %v4498 = vlaneseq
        %v4499 = vshrl.u32 %v4498, 7
        %v4500 = vsub.s32 %v4497, %v4499
        %v4501 = vrot.slane %v4487, %v4500
        %v4502 = vcombine.high %v4494, %v4494
        %v4503 = vcombine.high %v4501, %v4501
        %v4504 = vcombine.high %v3965, %v3965
        %v4506 = vunpack.c.l.s4 1983009808
        %v4507 = vunpack.c.0.s8 %v4506
        %v4508 = vlaneseq
        %v4509 = vshrl.u32 %v4508, 7
        %v4510 = vsub.s32 %v4507, %v4509
        %v4511 = vrot.slane %v3965, %v4510
        %v4513 = vunpack.c.l.s4 1983009808
        %v4514 = vunpack.c.0.s8 %v4513
        %v4515 = vlaneseq
        %v4516 = vshrl.u32 %v4515, 7
        %v4517 = vsub.s32 %v4514, %v4516
        %v4518 = vrot.slane %v4504, %v4517
        %v4519 = vcombine.high %v4511, %v4511
        %v4520 = vcombine.high %v4518, %v4518
        %v4522 = vunpack.c.l.s4 1983009808
        %v4523 = vunpack.c.0.s8 %v4522
        %v4524 = vlaneseq
        %v4525 = vshrl.u32 %v4524, 7
        %v4526 = vsub.s32 %v4523, %v4525
        %v4527 = vrot.slane %v4039, %v4526
        %v4528 = vcombine.high %v4024, %v4024
        %v4530 = vunpack.c.l.s4 1983009808
        %v4531 = vunpack.c.0.s8 %v4530
        %v4532 = vlaneseq
        %v4533 = vshrl.u32 %v4532, 7
        %v4534 = vsub.s32 %v4531, %v4533
        %v4535 = vrot.slane %v4024, %v4534
        %v4537 = vunpack.c.l.s4 1983009808
        %v4538 = vunpack.c.0.s8 %v4537
        %v4539 = vlaneseq
        %v4540 = vshrl.u32 %v4539, 7
        %v4541 = vsub.s32 %v4538, %v4540
        %v4542 = vrot.slane %v4528, %v4541
        %v4543 = vcombine.high %v4535, %v4535
        %v4544 = vcombine.high %v4542, %v4542
        %v4545 = vcombine.high %v3968, %v3968
        %v4547 = vunpack.c.l.s4 1983009808
        %v4548 = vunpack.c.0.s8 %v4547
        %v4549 = vlaneseq
        %v4550 = vshrl.u32 %v4549, 7
        %v4551 = vsub.s32 %v4548, %v4550
        %v4552 = vrot.slane %v3968, %v4551
        %v4554 = vunpack.c.l.s4 1983009808
        %v4555 = vunpack.c.0.s8 %v4554
        %v4556 = vlaneseq
        %v4557 = vshrl.u32 %v4556, 7
        %v4558 = vsub.s32 %v4555, %v4557
        %v4559 = vrot.slane %v4545, %v4558
        %v4560 = vcombine.high %v4552, %v4552
        %v4561 = vcombine.high %v4559, %v4559
        %v4563 = vunpack.c.l.s4 1983009808
        %v4564 = vunpack.c.0.s8 %v4563
        %v4565 = vlaneseq
        %v4566 = vshrl.u32 %v4565, 7
        %v4567 = vsub.s32 %v4564, %v4566
        %v4568 = vrot.slane %v4040, %v4567
        %v4569 = vcombine.high %v4025, %v4025
        %v4571 = vunpack.c.l.s4 1983009808
        %v4572 = vunpack.c.0.s8 %v4571
        %v4573 = vlaneseq
        %v4574 = vshrl.u32 %v4573, 7
        %v4575 = vsub.s32 %v4572, %v4574
        %v4576 = vrot.slane %v4025, %v4575
        %v4578 = vunpack.c.l.s4 1983009808
        %v4579 = vunpack.c.0.s8 %v4578
        %v4580 = vlaneseq
        %v4581 = vshrl.u32 %v4580, 7
        %v4582 = vsub.s32 %v4579, %v4581
        %v4583 = vrot.slane %v4569, %v4582
        %v4584 = vcombine.high %v4576, %v4576
        %v4585 = vcombine.high %v4583, %v4583
        %v4586 = vcombine.high %v3971, %v3971
        %v4588 = vunpack.c.l.s4 1983009808
        %v4589 = vunpack.c.0.s8 %v4588
        %v4590 = vlaneseq
        %v4591 = vshrl.u32 %v4590, 7
        %v4592 = vsub.s32 %v4589, %v4591
        %v4593 = vrot.slane %v3971, %v4592
        %v4595 = vunpack.c.l.s4 1983009808
        %v4596 = vunpack.c.0.s8 %v4595
        %v4597 = vlaneseq
        %v4598 = vshrl.u32 %v4597, 7
        %v4599 = vsub.s32 %v4596, %v4598
        %v4600 = vrot.slane %v4586, %v4599
        %v4601 = vcombine.high %v4593, %v4593
        %v4602 = vcombine.high %v4600, %v4600
        %v4604 = vunpack.c.l.s4 1983009808
        %v4605 = vunpack.c.0.s8 %v4604
        %v4606 = vlaneseq
        %v4607 = vshrl.u32 %v4606, 7
        %v4608 = vsub.s32 %v4605, %v4607
        %v4609 = vrot.slane %v4041, %v4608
        %v4610 = vcombine.high %v4026, %v4026
        %v4612 = vunpack.c.l.s4 1983009808
        %v4613 = vunpack.c.0.s8 %v4612
        %v4614 = vlaneseq
        %v4615 = vshrl.u32 %v4614, 7
        %v4616 = vsub.s32 %v4613, %v4615
        %v4617 = vrot.slane %v4026, %v4616
        %v4619 = vunpack.c.l.s4 1983009808
        %v4620 = vunpack.c.0.s8 %v4619
        %v4621 = vlaneseq
        %v4622 = vshrl.u32 %v4621, 7
        %v4623 = vsub.s32 %v4620, %v4622
        %v4624 = vrot.slane %v4610, %v4623
        %v4625 = vcombine.high %v4617, %v4617
        %v4626 = vcombine.high %v4624, %v4624
        %v4627 = vcombine.high %v3974, %v3974
        %v4629 = vunpack.c.l.s4 1983009808
        %v4630 = vunpack.c.0.s8 %v4629
        %v4631 = vlaneseq
        %v4632 = vshrl.u32 %v4631, 7
        %v4633 = vsub.s32 %v4630, %v4632
        %v4634 = vrot.slane %v3974, %v4633
        %v4636 = vunpack.c.l.s4 1983009808
        %v4637 = vunpack.c.0.s8 %v4636
        %v4638 = vlaneseq
        %v4639 = vshrl.u32 %v4638, 7
        %v4640 = vsub.s32 %v4637, %v4639
        %v4641 = vrot.slane %v4627, %v4640
        %v4642 = vcombine.high %v4634, %v4634
        %v4643 = vcombine.high %v4641, %v4641
        %v4645 = vunpack.c.l.s4 1983009808
        %v4646 = vunpack.c.0.s8 %v4645
        %v4647 = vlaneseq
        %v4648 = vshrl.u32 %v4647, 7
        %v4649 = vsub.s32 %v4646, %v4648
        %v4650 = vrot.slane %v4042, %v4649
        %v4651 = vcombine.high %v4027, %v4027
        %v4653 = vunpack.c.l.s4 1983009808
        %v4654 = vunpack.c.0.s8 %v4653
        %v4655 = vlaneseq
        %v4656 = vshrl.u32 %v4655, 7
        %v4657 = vsub.s32 %v4654, %v4656
        %v4658 = vrot.slane %v4027, %v4657
        %v4660 = vunpack.c.l.s4 1983009808
        %v4661 = vunpack.c.0.s8 %v4660
        %v4662 = vlaneseq
        %v4663 = vshrl.u32 %v4662, 7
        %v4664 = vsub.s32 %v4661, %v4663
        %v4665 = vrot.slane %v4651, %v4664
        %v4666 = vcombine.high %v4658, %v4658
        %v4667 = vcombine.high %v4665, %v4665
        %v4668 = vcombine.high %v3977, %v3977
        %v4670 = vunpack.c.l.s4 1983009808
        %v4671 = vunpack.c.0.s8 %v4670
        %v4672 = vlaneseq
        %v4673 = vshrl.u32 %v4672, 7
        %v4674 = vsub.s32 %v4671, %v4673
        %v4675 = vrot.slane %v3977, %v4674
        %v4677 = vunpack.c.l.s4 1983009808
        %v4678 = vunpack.c.0.s8 %v4677
        %v4679 = vlaneseq
        %v4680 = vshrl.u32 %v4679, 7
        %v4681 = vsub.s32 %v4678, %v4680
        %v4682 = vrot.slane %v4668, %v4681
        %v4683 = vcombine.high %v4675, %v4675
        %v4684 = vcombine.high %v4682, %v4682
        %v4686 = vunpack.c.l.s4 1983009808
        %v4687 = vunpack.c.0.s8 %v4686
        %v4688 = vlaneseq
        %v4689 = vshrl.u32 %v4688, 7
        %v4690 = vsub.s32 %v4687, %v4689
        %v4691 = vrot.slane %v4043, %v4690
        %v4692 = vcombine.high %v4028, %v4028
        %v4694 = vunpack.c.l.s4 1983009808
        %v4695 = vunpack.c.0.s8 %v4694
        %v4696 = vlaneseq
        %v4697 = vshrl.u32 %v4696, 7
        %v4698 = vsub.s32 %v4695, %v4697
        %v4699 = vrot.slane %v4028, %v4698
        %v4701 = vunpack.c.l.s4 1983009808
        %v4702 = vunpack.c.0.s8 %v4701
        %v4703 = vlaneseq
        %v4704 = vshrl.u32 %v4703, 7
        %v4705 = vsub.s32 %v4702, %v4704
        %v4706 = vrot.slane %v4692, %v4705
        %v4707 = vcombine.high %v4699, %v4699
        %v4708 = vcombine.high %v4706, %v4706
        %v4709 = vcombine.high %v3980, %v3980
        %v4711 = vunpack.c.l.s4 1983009808
        %v4712 = vunpack.c.0.s8 %v4711
        %v4713 = vlaneseq
        %v4714 = vshrl.u32 %v4713, 7
        %v4715 = vsub.s32 %v4712, %v4714
        %v4716 = vrot.slane %v3980, %v4715
        %v4718 = vunpack.c.l.s4 1983009808
        %v4719 = vunpack.c.0.s8 %v4718
        %v4720 = vlaneseq
        %v4721 = vshrl.u32 %v4720, 7
        %v4722 = vsub.s32 %v4719, %v4721
        %v4723 = vrot.slane %v4709, %v4722
        %v4724 = vcombine.high %v4716, %v4716
        %v4725 = vcombine.high %v4723, %v4723
        %v4727 = vunpack.c.l.s4 1983009808
        %v4728 = vunpack.c.0.s8 %v4727
        %v4729 = vlaneseq
        %v4730 = vshrl.u32 %v4729, 7
        %v4731 = vsub.s32 %v4728, %v4730
        %v4732 = vrot.slane %v4044, %v4731
        %v4733 = vcombine.low %v4084, %v4084
        %v4734 = vcombine.low %v4092, %v4091
        %v4736 = vunpack.c.l.s4 1983009808
        %v4737 = vunpack.c.0.s8 %v4736
        %v4738 = vlaneseq
        %v4739 = vshrl.u32 %v4738, 7
        %v4740 = vsub.s32 %v4737, %v4739
        %v4741 = vrot.slane %v4733, %v4740
        %v4743 = vunpack.c.l.s4 1983009808
        %v4744 = vunpack.c.0.s8 %v4743
        %v4745 = vlaneseq
        %v4746 = vshrl.u32 %v4745, 7
        %v4747 = vsub.s32 %v4744, %v4746
        %v4748 = vrot.slane %v4734, %v4747
        %v4749 = vcombine.low %v4741, %v4748
        %v4750 = vcombine.low %v4093, %v4101
        %v4751 = vcombine.low %v4109, %v4108
        %v4753 = vunpack.c.l.s4 1983009808
        %v4754 = vunpack.c.0.s8 %v4753
        %v4755 = vlaneseq
        %v4756 = vshrl.u32 %v4755, 7
        %v4757 = vsub.s32 %v4754, %v4756
        %v4758 = vrot.slane %v4750, %v4757
        %v4760 = vunpack.c.l.s4 1983009808
        %v4761 = vunpack.c.0.s8 %v4760
        %v4762 = vlaneseq
        %v4763 = vshrl.u32 %v4762, 7
        %v4764 = vsub.s32 %v4761, %v4763
        %v4765 = vrot.slane %v4751, %v4764
        %v4766 = vcombine.low %v4758, %v4765
        %v4767 = vcombine.low %v4110, %v4117
        %v4768 = vcombine.low %v4125, %v4133
        %v4770 = vunpack.c.l.s4 1983009808
        %v4771 = vunpack.c.0.s8 %v4770
        %v4772 = vlaneseq
        %v4773 = vshrl.u32 %v4772, 7
        %v4774 = vsub.s32 %v4771, %v4773
        %v4775 = vrot.slane %v4767, %v4774
        %v4777 = vunpack.c.l.s4 1983009808
        %v4778 = vunpack.c.0.s8 %v4777
        %v4779 = vlaneseq
        %v4780 = vshrl.u32 %v4779, 7
        %v4781 = vsub.s32 %v4778, %v4780
        %v4782 = vrot.slane %v4768, %v4781
        %v4783 = vcombine.low %v4775, %v4782
        %v4784 = vcombine.low %v4132, %v4134
        %v4785 = vcombine.low %v4142, %v4150
        %v4787 = vunpack.c.l.s4 1983009808
        %v4788 = vunpack.c.0.s8 %v4787
        %v4789 = vlaneseq
        %v4790 = vshrl.u32 %v4789, 7
        %v4791 = vsub.s32 %v4788, %v4790
        %v4792 = vrot.slane %v4784, %v4791
        %v4794 = vunpack.c.l.s4 1983009808
        %v4795 = vunpack.c.0.s8 %v4794
        %v4796 = vlaneseq
        %v4797 = vshrl.u32 %v4796, 7
        %v4798 = vsub.s32 %v4795, %v4797
        %v4799 = vrot.slane %v4785, %v4798
        %v4800 = vcombine.low %v4792, %v4799
        %v4801 = vcombine.low %v4149, %v4151
        %v4802 = vcombine.low %v4158, %v4166
        %v4804 = vunpack.c.l.s4 1983009808
        %v4805 = vunpack.c.0.s8 %v4804
        %v4806 = vlaneseq
        %v4807 = vshrl.u32 %v4806, 7
        %v4808 = vsub.s32 %v4805, %v4807
        %v4809 = vrot.slane %v4801, %v4808
        %v4811 = vunpack.c.l.s4 1983009808
        %v4812 = vunpack.c.0.s8 %v4811
        %v4813 = vlaneseq
        %v4814 = vshrl.u32 %v4813, 7
        %v4815 = vsub.s32 %v4812, %v4814
        %v4816 = vrot.slane %v4802, %v4815
        %v4817 = vcombine.low %v4809, %v4816
        %v4818 = vcombine.low %v4174, %v4173
        %v4819 = vcombine.low %v4175, %v4183
        %v4821 = vunpack.c.l.s4 1983009808
        %v4822 = vunpack.c.0.s8 %v4821
        %v4823 = vlaneseq
        %v4824 = vshrl.u32 %v4823, 7
        %v4825 = vsub.s32 %v4822, %v4824
        %v4826 = vrot.slane %v4818, %v4825
        %v4828 = vunpack.c.l.s4 1983009808
        %v4829 = vunpack.c.0.s8 %v4828
        %v4830 = vlaneseq
        %v4831 = vshrl.u32 %v4830, 7
        %v4832 = vsub.s32 %v4829, %v4831
        %v4833 = vrot.slane %v4819, %v4832
        %v4834 = vcombine.low %v4826, %v4833
        %v4835 = vcombine.low %v4191, %v4190
        %v4836 = vcombine.low %v4192, %v4199
        %v4838 = vunpack.c.l.s4 1983009808
        %v4839 = vunpack.c.0.s8 %v4838
        %v4840 = vlaneseq
        %v4841 = vshrl.u32 %v4840, 7
        %v4842 = vsub.s32 %v4839, %v4841
        %v4843 = vrot.slane %v4835, %v4842
        %v4845 = vunpack.c.l.s4 1983009808
        %v4846 = vunpack.c.0.s8 %v4845
        %v4847 = vlaneseq
        %v4848 = vshrl.u32 %v4847, 7
        %v4849 = vsub.s32 %v4846, %v4848
        %v4850 = vrot.slane %v4836, %v4849
        %v4851 = vcombine.low %v4843, %v4850
        %v4852 = vcombine.low %v4207, %v4215
        %v4853 = vcombine.low %v4214, %v4216
        %v4855 = vunpack.c.l.s4 1983009808
        %v4856 = vunpack.c.0.s8 %v4855
        %v4857 = vlaneseq
        %v4858 = vshrl.u32 %v4857, 7
        %v4859 = vsub.s32 %v4856, %v4858
        %v4860 = vrot.slane %v4852, %v4859
        %v4862 = vunpack.c.l.s4 1983009808
        %v4863 = vunpack.c.0.s8 %v4862
        %v4864 = vlaneseq
        %v4865 = vshrl.u32 %v4864, 7
        %v4866 = vsub.s32 %v4863, %v4865
        %v4867 = vrot.slane %v4853, %v4866
        %v4868 = vcombine.low %v4860, %v4867
        %v4869 = vcombine.low %v4224, %v4232
        %v4870 = vcombine.low %v4231, %v4233
        %v4872 = vunpack.c.l.s4 1983009808
        %v4873 = vunpack.c.0.s8 %v4872
        %v4874 = vlaneseq
        %v4875 = vshrl.u32 %v4874, 7
        %v4876 = vsub.s32 %v4873, %v4875
        %v4877 = vrot.slane %v4869, %v4876
        %v4879 = vunpack.c.l.s4 1983009808
        %v4880 = vunpack.c.0.s8 %v4879
        %v4881 = vlaneseq
        %v4882 = vshrl.u32 %v4881, 7
        %v4883 = vsub.s32 %v4880, %v4882
        %v4884 = vrot.slane %v4870, %v4883
        %v4885 = vcombine.low %v4877, %v4884
        %v4886 = vcombine.low %v4240, %v4248
        %v4887 = vcombine.low %v4256, %v4255
        %v4889 = vunpack.c.l.s4 1983009808
        %v4890 = vunpack.c.0.s8 %v4889
        %v4891 = vlaneseq
        %v4892 = vshrl.u32 %v4891, 7
        %v4893 = vsub.s32 %v4890, %v4892
        %v4894 = vrot.slane %v4886, %v4893
        %v4896 = vunpack.c.l.s4 1983009808
        %v4897 = vunpack.c.0.s8 %v4896
        %v4898 = vlaneseq
        %v4899 = vshrl.u32 %v4898, 7
        %v4900 = vsub.s32 %v4897, %v4899
        %v4901 = vrot.slane %v4887, %v4900
        %v4902 = vcombine.low %v4894, %v4901
        %v4903 = vcombine.low %v4257, %v4265
        %v4904 = vcombine.low %v4273, %v4272
        %v4906 = vunpack.c.l.s4 1983009808
        %v4907 = vunpack.c.0.s8 %v4906
        %v4908 = vlaneseq
        %v4909 = vshrl.u32 %v4908, 7
        %v4910 = vsub.s32 %v4907, %v4909
        %v4911 = vrot.slane %v4903, %v4910
        %v4913 = vunpack.c.l.s4 1983009808
        %v4914 = vunpack.c.0.s8 %v4913
        %v4915 = vlaneseq
        %v4916 = vshrl.u32 %v4915, 7
        %v4917 = vsub.s32 %v4914, %v4916
        %v4918 = vrot.slane %v4904, %v4917
        %v4919 = vcombine.low %v4911, %v4918
        %v4920 = vcombine.low %v4274, %v4281
        %v4921 = vcombine.low %v4289, %v4297
        %v4923 = vunpack.c.l.s4 1983009808
        %v4924 = vunpack.c.0.s8 %v4923
        %v4925 = vlaneseq
        %v4926 = vshrl.u32 %v4925, 7
        %v4927 = vsub.s32 %v4924, %v4926
        %v4928 = vrot.slane %v4920, %v4927
        %v4930 = vunpack.c.l.s4 1983009808
        %v4931 = vunpack.c.0.s8 %v4930
        %v4932 = vlaneseq
        %v4933 = vshrl.u32 %v4932, 7
        %v4934 = vsub.s32 %v4931, %v4933
        %v4935 = vrot.slane %v4921, %v4934
        %v4936 = vcombine.low %v4928, %v4935
        %v4937 = vcombine.low %v4296, %v4298
        %v4938 = vcombine.low %v4306, %v4314
        %v4940 = vunpack.c.l.s4 1983009808
        %v4941 = vunpack.c.0.s8 %v4940
        %v4942 = vlaneseq
        %v4943 = vshrl.u32 %v4942, 7
        %v4944 = vsub.s32 %v4941, %v4943
        %v4945 = vrot.slane %v4937, %v4944
        %v4947 = vunpack.c.l.s4 1983009808
        %v4948 = vunpack.c.0.s8 %v4947
        %v4949 = vlaneseq
        %v4950 = vshrl.u32 %v4949, 7
        %v4951 = vsub.s32 %v4948, %v4950
        %v4952 = vrot.slane %v4938, %v4951
        %v4953 = vcombine.low %v4945, %v4952
        %v4954 = vcombine.low %v4313, %v4315
        %v4955 = vcombine.low %v4322, %v4330
        %v4957 = vunpack.c.l.s4 1983009808
        %v4958 = vunpack.c.0.s8 %v4957
        %v4959 = vlaneseq
        %v4960 = vshrl.u32 %v4959, 7
        %v4961 = vsub.s32 %v4958, %v4960
        %v4962 = vrot.slane %v4954, %v4961
        %v4964 = vunpack.c.l.s4 1983009808
        %v4965 = vunpack.c.0.s8 %v4964
        %v4966 = vlaneseq
        %v4967 = vshrl.u32 %v4966, 7
        %v4968 = vsub.s32 %v4965, %v4967
        %v4969 = vrot.slane %v4955, %v4968
        %v4970 = vcombine.low %v4962, %v4969
        %v4971 = vcombine.low %v4338, %v4337
        %v4972 = vcombine.low %v4339, %v4347
        %v4974 = vunpack.c.l.s4 1983009808
        %v4975 = vunpack.c.0.s8 %v4974
        %v4976 = vlaneseq
        %v4977 = vshrl.u32 %v4976, 7
        %v4978 = vsub.s32 %v4975, %v4977
        %v4979 = vrot.slane %v4971, %v4978
        %v4981 = vunpack.c.l.s4 1983009808
        %v4982 = vunpack.c.0.s8 %v4981
        %v4983 = vlaneseq
        %v4984 = vshrl.u32 %v4983, 7
        %v4985 = vsub.s32 %v4982, %v4984
        %v4986 = vrot.slane %v4972, %v4985
        %v4987 = vcombine.low %v4979, %v4986
        %v4988 = vcombine.low %v4355, %v4354
        %v4989 = vcombine.low %v4356, %v4363
        %v4991 = vunpack.c.l.s4 1983009808
        %v4992 = vunpack.c.0.s8 %v4991
        %v4993 = vlaneseq
        %v4994 = vshrl.u32 %v4993, 7
        %v4995 = vsub.s32 %v4992, %v4994
        %v4996 = vrot.slane %v4988, %v4995
        %v4998 = vunpack.c.l.s4 1983009808
        %v4999 = vunpack.c.0.s8 %v4998
        %v5000 = vlaneseq
        %v5001 = vshrl.u32 %v5000, 7
        %v5002 = vsub.s32 %v4999, %v5001
        %v5003 = vrot.slane %v4989, %v5002
        %v5004 = vcombine.low %v4996, %v5003
        %v5005 = vcombine.low %v4371, %v4379
        %v5006 = vcombine.low %v4378, %v4380
        %v5008 = vunpack.c.l.s4 1983009808
        %v5009 = vunpack.c.0.s8 %v5008
        %v5010 = vlaneseq
        %v5011 = vshrl.u32 %v5010, 7
        %v5012 = vsub.s32 %v5009, %v5011
        %v5013 = vrot.slane %v5005, %v5012
        %v5015 = vunpack.c.l.s4 1983009808
        %v5016 = vunpack.c.0.s8 %v5015
        %v5017 = vlaneseq
        %v5018 = vshrl.u32 %v5017, 7
        %v5019 = vsub.s32 %v5016, %v5018
        %v5020 = vrot.slane %v5006, %v5019
        %v5021 = vcombine.low %v5013, %v5020
        %v5022 = vcombine.low %v4388, %v4396
        %v5023 = vcombine.low %v4395, %v4397
        %v5025 = vunpack.c.l.s4 1983009808
        %v5026 = vunpack.c.0.s8 %v5025
        %v5027 = vlaneseq
        %v5028 = vshrl.u32 %v5027, 7
        %v5029 = vsub.s32 %v5026, %v5028
        %v5030 = vrot.slane %v5022, %v5029
        %v5032 = vunpack.c.l.s4 1983009808
        %v5033 = vunpack.c.0.s8 %v5032
        %v5034 = vlaneseq
        %v5035 = vshrl.u32 %v5034, 7
        %v5036 = vsub.s32 %v5033, %v5035
        %v5037 = vrot.slane %v5023, %v5036
        %v5038 = vcombine.low %v5030, %v5037
        %v5039 = vcombine.low %v4404, %v4412
        %v5040 = vcombine.low %v4420, %v4419
        %v5042 = vunpack.c.l.s4 1983009808
        %v5043 = vunpack.c.0.s8 %v5042
        %v5044 = vlaneseq
        %v5045 = vshrl.u32 %v5044, 7
        %v5046 = vsub.s32 %v5043, %v5045
        %v5047 = vrot.slane %v5039, %v5046
        %v5049 = vunpack.c.l.s4 1983009808
        %v5050 = vunpack.c.0.s8 %v5049
        %v5051 = vlaneseq
        %v5052 = vshrl.u32 %v5051, 7
        %v5053 = vsub.s32 %v5050, %v5052
        %v5054 = vrot.slane %v5040, %v5053
        %v5055 = vcombine.low %v5047, %v5054
        %v5056 = vcombine.low %v4421, %v4429
        %v5057 = vcombine.low %v4437, %v4436
        %v5059 = vunpack.c.l.s4 1983009808
        %v5060 = vunpack.c.0.s8 %v5059
        %v5061 = vlaneseq
        %v5062 = vshrl.u32 %v5061, 7
        %v5063 = vsub.s32 %v5060, %v5062
        %v5064 = vrot.slane %v5056, %v5063
        %v5066 = vunpack.c.l.s4 1983009808
        %v5067 = vunpack.c.0.s8 %v5066
        %v5068 = vlaneseq
        %v5069 = vshrl.u32 %v5068, 7
        %v5070 = vsub.s32 %v5067, %v5069
        %v5071 = vrot.slane %v5057, %v5070
        %v5072 = vcombine.low %v5064, %v5071
        %v5073 = vcombine.low %v4438, %v4445
        %v5074 = vcombine.low %v4453, %v4461
        %v5076 = vunpack.c.l.s4 1983009808
        %v5077 = vunpack.c.0.s8 %v5076
        %v5078 = vlaneseq
        %v5079 = vshrl.u32 %v5078, 7
        %v5080 = vsub.s32 %v5077, %v5079
        %v5081 = vrot.slane %v5073, %v5080
        %v5083 = vunpack.c.l.s4 1983009808
        %v5084 = vunpack.c.0.s8 %v5083
        %v5085 = vlaneseq
        %v5086 = vshrl.u32 %v5085, 7
        %v5087 = vsub.s32 %v5084, %v5086
        %v5088 = vrot.slane %v5074, %v5087
        %v5089 = vcombine.low %v5081, %v5088
        %v5090 = vcombine.low %v4460, %v4462
        %v5091 = vcombine.low %v4470, %v4478
        %v5093 = vunpack.c.l.s4 1983009808
        %v5094 = vunpack.c.0.s8 %v5093
        %v5095 = vlaneseq
        %v5096 = vshrl.u32 %v5095, 7
        %v5097 = vsub.s32 %v5094, %v5096
        %v5098 = vrot.slane %v5090, %v5097
        %v5100 = vunpack.c.l.s4 1983009808
        %v5101 = vunpack.c.0.s8 %v5100
        %v5102 = vlaneseq
        %v5103 = vshrl.u32 %v5102, 7
        %v5104 = vsub.s32 %v5101, %v5103
        %v5105 = vrot.slane %v5091, %v5104
        %v5106 = vcombine.low %v5098, %v5105
        %v5107 = vcombine.low %v4477, %v4479
        %v5108 = vcombine.low %v4486, %v4494
        %v5110 = vunpack.c.l.s4 1983009808
        %v5111 = vunpack.c.0.s8 %v5110
        %v5112 = vlaneseq
        %v5113 = vshrl.u32 %v5112, 7
        %v5114 = vsub.s32 %v5111, %v5113
        %v5115 = vrot.slane %v5107, %v5114
        %v5117 = vunpack.c.l.s4 1983009808
        %v5118 = vunpack.c.0.s8 %v5117
        %v5119 = vlaneseq
        %v5120 = vshrl.u32 %v5119, 7
        %v5121 = vsub.s32 %v5118, %v5120
        %v5122 = vrot.slane %v5108, %v5121
        %v5123 = vcombine.low %v5115, %v5122
        %v5124 = vcombine.low %v4502, %v4501
        %v5125 = vcombine.low %v4503, %v4511
        %v5127 = vunpack.c.l.s4 1983009808
        %v5128 = vunpack.c.0.s8 %v5127
        %v5129 = vlaneseq
        %v5130 = vshrl.u32 %v5129, 7
        %v5131 = vsub.s32 %v5128, %v5130
        %v5132 = vrot.slane %v5124, %v5131
        %v5134 = vunpack.c.l.s4 1983009808
        %v5135 = vunpack.c.0.s8 %v5134
        %v5136 = vlaneseq
        %v5137 = vshrl.u32 %v5136, 7
        %v5138 = vsub.s32 %v5135, %v5137
        %v5139 = vrot.slane %v5125, %v5138
        %v5140 = vcombine.low %v5132, %v5139
        %v5141 = vcombine.low %v4519, %v4518
        %v5142 = vcombine.low %v4520, %v4527
        %v5144 = vunpack.c.l.s4 1983009808
        %v5145 = vunpack.c.0.s8 %v5144
        %v5146 = vlaneseq
        %v5147 = vshrl.u32 %v5146, 7
        %v5148 = vsub.s32 %v5145, %v5147
        %v5149 = vrot.slane %v5141, %v5148
        %v5151 = vunpack.c.l.s4 1983009808
        %v5152 = vunpack.c.0.s8 %v5151
        %v5153 = vlaneseq
        %v5154 = vshrl.u32 %v5153, 7
        %v5155 = vsub.s32 %v5152, %v5154
        %v5156 = vrot.slane %v5142, %v5155
        %v5157 = vcombine.low %v5149, %v5156
        %v5158 = vcombine.low %v4535, %v4543
        %v5159 = vcombine.low %v4542, %v4544
        %v5161 = vunpack.c.l.s4 1983009808
        %v5162 = vunpack.c.0.s8 %v5161
        %v5163 = vlaneseq
        %v5164 = vshrl.u32 %v5163, 7
        %v5165 = vsub.s32 %v5162, %v5164
        %v5166 = vrot.slane %v5158, %v5165
        %v5168 = vunpack.c.l.s4 1983009808
        %v5169 = vunpack.c.0.s8 %v5168
        %v5170 = vlaneseq
        %v5171 = vshrl.u32 %v5170, 7
        %v5172 = vsub.s32 %v5169, %v5171
        %v5173 = vrot.slane %v5159, %v5172
        %v5174 = vcombine.low %v5166, %v5173
        %v5175 = vcombine.low %v4552, %v4560
        %v5176 = vcombine.low %v4559, %v4561
        %v5178 = vunpack.c.l.s4 1983009808
        %v5179 = vunpack.c.0.s8 %v5178
        %v5180 = vlaneseq
        %v5181 = vshrl.u32 %v5180, 7
        %v5182 = vsub.s32 %v5179, %v5181
        %v5183 = vrot.slane %v5175, %v5182
        %v5185 = vunpack.c.l.s4 1983009808
        %v5186 = vunpack.c.0.s8 %v5185
        %v5187 = vlaneseq
        %v5188 = vshrl.u32 %v5187, 7
        %v5189 = vsub.s32 %v5186, %v5188
        %v5190 = vrot.slane %v5176, %v5189
        %v5191 = vcombine.low %v5183, %v5190
        %v5192 = vcombine.low %v4568, %v4576
        %v5193 = vcombine.low %v4584, %v4583
        %v5195 = vunpack.c.l.s4 1983009808
        %v5196 = vunpack.c.0.s8 %v5195
        %v5197 = vlaneseq
        %v5198 = vshrl.u32 %v5197, 7
        %v5199 = vsub.s32 %v5196, %v5198
        %v5200 = vrot.slane %v5192, %v5199
        %v5202 = vunpack.c.l.s4 1983009808
        %v5203 = vunpack.c.0.s8 %v5202
        %v5204 = vlaneseq
        %v5205 = vshrl.u32 %v5204, 7
        %v5206 = vsub.s32 %v5203, %v5205
        %v5207 = vrot.slane %v5193, %v5206
        %v5208 = vcombine.low %v5200, %v5207
        %v5209 = vcombine.low %v4585, %v4593
        %v5210 = vcombine.low %v4601, %v4600
        %v5212 = vunpack.c.l.s4 1983009808
        %v5213 = vunpack.c.0.s8 %v5212
        %v5214 = vlaneseq
        %v5215 = vshrl.u32 %v5214, 7
        %v5216 = vsub.s32 %v5213, %v5215
        %v5217 = vrot.slane %v5209, %v5216
        %v5219 = vunpack.c.l.s4 1983009808
        %v5220 = vunpack.c.0.s8 %v5219
        %v5221 = vlaneseq
        %v5222 = vshrl.u32 %v5221, 7
        %v5223 = vsub.s32 %v5220, %v5222
        %v5224 = vrot.slane %v5210, %v5223
        %v5225 = vcombine.low %v5217, %v5224
        %v5226 = vcombine.low %v4602, %v4609
        %v5227 = vcombine.low %v4617, %v4625
        %v5229 = vunpack.c.l.s4 1983009808
        %v5230 = vunpack.c.0.s8 %v5229
        %v5231 = vlaneseq
        %v5232 = vshrl.u32 %v5231, 7
        %v5233 = vsub.s32 %v5230, %v5232
        %v5234 = vrot.slane %v5226, %v5233
        %v5236 = vunpack.c.l.s4 1983009808
        %v5237 = vunpack.c.0.s8 %v5236
        %v5238 = vlaneseq
        %v5239 = vshrl.u32 %v5238, 7
        %v5240 = vsub.s32 %v5237, %v5239
        %v5241 = vrot.slane %v5227, %v5240
        %v5242 = vcombine.low %v5234, %v5241
        %v5243 = vcombine.low %v4624, %v4626
        %v5244 = vcombine.low %v4634, %v4642
        %v5246 = vunpack.c.l.s4 1983009808
        %v5247 = vunpack.c.0.s8 %v5246
        %v5248 = vlaneseq
        %v5249 = vshrl.u32 %v5248, 7
        %v5250 = vsub.s32 %v5247, %v5249
        %v5251 = vrot.slane %v5243, %v5250
        %v5253 = vunpack.c.l.s4 1983009808
        %v5254 = vunpack.c.0.s8 %v5253
        %v5255 = vlaneseq
        %v5256 = vshrl.u32 %v5255, 7
        %v5257 = vsub.s32 %v5254, %v5256
        %v5258 = vrot.slane %v5244, %v5257
        %v5259 = vcombine.low %v5251, %v5258
        %v5260 = vcombine.low %v4641, %v4643
        %v5261 = vcombine.low %v4650, %v4658
        %v5263 = vunpack.c.l.s4 1983009808
        %v5264 = vunpack.c.0.s8 %v5263
        %v5265 = vlaneseq
        %v5266 = vshrl.u32 %v5265, 7
        %v5267 = vsub.s32 %v5264, %v5266
        %v5268 = vrot.slane %v5260, %v5267
        %v5270 = vunpack.c.l.s4 1983009808
        %v5271 = vunpack.c.0.s8 %v5270
        %v5272 = vlaneseq
        %v5273 = vshrl.u32 %v5272, 7
        %v5274 = vsub.s32 %v5271, %v5273
        %v5275 = vrot.slane %v5261, %v5274
        %v5276 = vcombine.low %v5268, %v5275
        %v5277 = vcombine.low %v4666, %v4665
        %v5278 = vcombine.low %v4667, %v4675
        %v5280 = vunpack.c.l.s4 1983009808
        %v5281 = vunpack.c.0.s8 %v5280
        %v5282 = vlaneseq
        %v5283 = vshrl.u32 %v5282, 7
        %v5284 = vsub.s32 %v5281, %v5283
        %v5285 = vrot.slane %v5277, %v5284
        %v5287 = vunpack.c.l.s4 1983009808
        %v5288 = vunpack.c.0.s8 %v5287
        %v5289 = vlaneseq
        %v5290 = vshrl.u32 %v5289, 7
        %v5291 = vsub.s32 %v5288, %v5290
        %v5292 = vrot.slane %v5278, %v5291
        %v5293 = vcombine.low %v5285, %v5292
        %v5294 = vcombine.low %v4683, %v4682
        %v5295 = vcombine.low %v4684, %v4691
        %v5297 = vunpack.c.l.s4 1983009808
        %v5298 = vunpack.c.0.s8 %v5297
        %v5299 = vlaneseq
        %v5300 = vshrl.u32 %v5299, 7
        %v5301 = vsub.s32 %v5298, %v5300
        %v5302 = vrot.slane %v5294, %v5301
        %v5304 = vunpack.c.l.s4 1983009808
        %v5305 = vunpack.c.0.s8 %v5304
        %v5306 = vlaneseq
        %v5307 = vshrl.u32 %v5306, 7
        %v5308 = vsub.s32 %v5305, %v5307
        %v5309 = vrot.slane %v5295, %v5308
        %v5310 = vcombine.low %v5302, %v5309
        %v5311 = vcombine.low %v4699, %v4707
        %v5312 = vcombine.low %v4706, %v4708
        %v5314 = vunpack.c.l.s4 1983009808
        %v5315 = vunpack.c.0.s8 %v5314
        %v5316 = vlaneseq
        %v5317 = vshrl.u32 %v5316, 7
        %v5318 = vsub.s32 %v5315, %v5317
        %v5319 = vrot.slane %v5311, %v5318
        %v5321 = vunpack.c.l.s4 1983009808
        %v5322 = vunpack.c.0.s8 %v5321
        %v5323 = vlaneseq
        %v5324 = vshrl.u32 %v5323, 7
        %v5325 = vsub.s32 %v5322, %v5324
        %v5326 = vrot.slane %v5312, %v5325
        %v5327 = vcombine.low %v5319, %v5326
        %v5328 = vcombine.low %v4716, %v4724
        %v5329 = vcombine.low %v4723, %v4725
        %v5331 = vunpack.c.l.s4 1983009808
        %v5332 = vunpack.c.0.s8 %v5331
        %v5333 = vlaneseq
        %v5334 = vshrl.u32 %v5333, 7
        %v5335 = vsub.s32 %v5332, %v5334
        %v5336 = vrot.slane %v5328, %v5335
        %v5338 = vunpack.c.l.s4 1983009808
        %v5339 = vunpack.c.0.s8 %v5338
        %v5340 = vlaneseq
        %v5341 = vshrl.u32 %v5340, 7
        %v5342 = vsub.s32 %v5339, %v5341
        %v5343 = vrot.slane %v5329, %v5342
        %v5344 = vcombine.low %v5336, %v5343
        %v5346 = vunpack.c.l.s4 1983009808
        %v5347 = vunpack.c.0.s8 %v5346
        %v5348 = vlaneseq
        %v5349 = vshrl.u32 %v5348, 7
        %v5350 = vsub.s32 %v5347, %v5349
        %v5351 = vrot.slane %v4732, %v5350
        %vm5389 = vcmask 1041408
        %v5390 = vsel %vm5389, 0.0, %v4749
        %v5391 = vsel %vm5389, %v5351, 0.0
        %vm5392 = vcmask 31744
        %5393 = vst.msk [vmem:[#allocation2] sm:$0xff] %vm5392, 0.0
        %5394 = vst.msk [vmem:[#allocation2 + $0x8] sm:$0xff] %vm5392, 0.0
        %5395 = vst.msk [vmem:[#allocation2 + $0x10] sm:$0xff] %vm5392, %v5390
        %5396 = vst.msk [vmem:[#allocation2 + $0x18] sm:$0xff] %vm5392, %v4766
        %5397 = vst.msk [vmem:[#allocation2 + $0x20] sm:$0xff] %vm5392, %v4783
        %5398 = vst.msk [vmem:[#allocation2 + $0x28] sm:$0xff] %vm5392, %v4800
        %5399 = vst.msk [vmem:[#allocation2 + $0x30] sm:$0xff] %vm5392, %v4817
        %5400 = vst.msk [vmem:[#allocation2 + $0x38] sm:$0xff] %vm5392, %v4834
        %5401 = vst.msk [vmem:[#allocation2 + $0x40] sm:$0xff] %vm5392, %v4851
        %5402 = vst.msk [vmem:[#allocation2 + $0x48] sm:$0xff] %vm5392, %v4868
        %5403 = vst.msk [vmem:[#allocation2 + $0x50] sm:$0xff] %vm5392, %v4885
        %5404 = vst.msk [vmem:[#allocation2 + $0x58] sm:$0xff] %vm5392, %v4902
        %5405 = vst.msk [vmem:[#allocation2 + $0x60] sm:$0xff] %vm5392, %v4919
        %5406 = vst.msk [vmem:[#allocation2 + $0x68] sm:$0xff] %vm5392, %v4936
        %5407 = vst.msk [vmem:[#allocation2 + $0x70] sm:$0xff] %vm5392, %v4953
        %5408 = vst.msk [vmem:[#allocation2 + $0x78] sm:$0xff] %vm5392, %v4970
        %5409 = vst.msk [vmem:[#allocation2 + $0x80] sm:$0xff] %vm5392, %v4987
        %5410 = vst.msk [vmem:[#allocation2 + $0x88] sm:$0xff] %vm5392, %v5004
        %5411 = vst.msk [vmem:[#allocation2 + $0x90] sm:$0xff] %vm5392, %v5021
        %5412 = vst.msk [vmem:[#allocation2 + $0x98] sm:$0xff] %vm5392, %v5038
        %5413 = vst.msk [vmem:[#allocation2 + $0xa0] sm:$0xff] %vm5392, %v5055
        %5414 = vst.msk [vmem:[#allocation2 + $0xa8] sm:$0xff] %vm5392, %v5072
        %5415 = vst.msk [vmem:[#allocation2 + $0xb0] sm:$0xff] %vm5392, %v5089
        %5416 = vst.msk [vmem:[#allocation2 + $0xb8] sm:$0xff] %vm5392, %v5106
        %5417 = vst.msk [vmem:[#allocation2 + $0xc0] sm:$0xff] %vm5392, %v5123
        %5418 = vst.msk [vmem:[#allocation2 + $0xc8] sm:$0xff] %vm5392, %v5140
        %5419 = vst.msk [vmem:[#allocation2 + $0xd0] sm:$0xff] %vm5392, %v5157
        %5420 = vst.msk [vmem:[#allocation2 + $0xd8] sm:$0xff] %vm5392, %v5174
        %5421 = vst.msk [vmem:[#allocation2 + $0xe0] sm:$0xff] %vm5392, %v5191
        %5422 = vst.msk [vmem:[#allocation2 + $0xe8] sm:$0xff] %vm5392, %v5208
        %5423 = vst.msk [vmem:[#allocation2 + $0xf0] sm:$0xff] %vm5392, %v5225
        %5424 = vst.msk [vmem:[#allocation2 + $0xf8] sm:$0xff] %vm5392, %v5242
        %5425 = vst.msk [vmem:[#allocation2 + $0x100] sm:$0xff] %vm5392, %v5259
        %5426 = vst.msk [vmem:[#allocation2 + $0x108] sm:$0xff] %vm5392, %v5276
        %5427 = vst.msk [vmem:[#allocation2 + $0x110] sm:$0xff] %vm5392, %v5293
        %5428 = vst.msk [vmem:[#allocation2 + $0x118] sm:$0xff] %vm5392, %v5310
        %5429 = vst.msk [vmem:[#allocation2 + $0x120] sm:$0xff] %vm5392, %v5327
        %5430 = vst.msk [vmem:[#allocation2 + $0x128] sm:$0xff] %vm5392, %v5344
        %5431 = vst.msk [vmem:[#allocation2 + $0x130] sm:$0xff] %vm5392, %v5391
        %5432 = vst.msk [vmem:[#allocation2 + $0x138] sm:$0xff] %vm5392, 0.0
        %5433 = vst.msk [vmem:[#allocation2 + $0x140] sm:$0xff] %vm5392, 0.0
        %5434 = vst.msk [vmem:[#allocation2 + $0x148] sm:$0xff] %vm5392, 0.0
        %vm5435 = vcmask 29696
        %5436 = vst.msk [vmem:[#allocation2 + $0x150] sm:$0x3f] %vm5435, 0.0
        %5437 = vst [vmem:[#allocation3] sm:$0xff] 0.0
        %vm5438 = vcmask 699392
        %5439 = vst.msk [vmem:[#allocation3 + $0x8] sm:$0xf] %vm5438, 0.0
        %v5440 = vld [vmem:[%s296] sm:$0x1]
        %v5441 = vld [vmem:[%s296 + $0x10] sm:$0x1]
        %v5442 = vld [vmem:[%s296 + $0x20] sm:$0x1]
        %v5443 = vld [vmem:[%s296 + $0x30] sm:$0x1]
        %v5448 = vrot.slane %v5441, 7
        %vm5449 = vcmask 1041409
        %v5450 = vsel %vm5449, %v5448, %v5440
        %vm5451 = vcmask 1045509
        %v5452 = vsel %vm5451, %v5448, %v5450
        %v5453 = vrot.slane %v5442, 6
        %vm5454 = vcmask 1042434
        %v5455 = vsel %vm5454, %v5453, %v5452
        %vm5456 = vcmask 1046534
        %v5457 = vsel %vm5456, %v5453, %v5455
        %v5458 = vrot.slane %v5443, 5
        %vm5459 = vcmask 1043459
        %v5460 = vsel %vm5459, %v5458, %v5457
        %vm5461 = vcmask 1047559
        %v5462 = vsel %vm5461, %v5458, %v5460
        %5463 = vrot.lane.b32.xlu0 %v5462, 19
        %v5464 = vpop.permute.xlu0 %5463
        %vm5466 = vcmask 281752
        %5467 = vst.msk [vmem:[#allocation3] sm:$0xf] %vm5466, %v5464
        %v5468 = vld [vmem:[%s296 + $0x1] sm:$0x1]
        %v5469 = vld [vmem:[%s296 + $0x11] sm:$0x1]
        %v5470 = vld [vmem:[%s296 + $0x21] sm:$0x1]
        %v5471 = vld [vmem:[%s296 + $0x31] sm:$0x1]
        %v5476 = vrot.slane %v5469, 7
        %v5477 = vsel %vm5449, %v5476, %v5468
        %v5478 = vsel %vm5451, %v5476, %v5477
        %v5479 = vrot.slane %v5470, 6
        %v5480 = vsel %vm5454, %v5479, %v5478
        %v5481 = vsel %vm5456, %v5479, %v5480
        %v5482 = vrot.slane %v5471, 5
        %v5483 = vsel %vm5459, %v5482, %v5481
        %v5484 = vsel %vm5461, %v5482, %v5483
        %5485 = vrot.lane.b32.xlu0 %v5484, 37
        %v5486 = vpop.permute.xlu0 %5485
        %vm5488 = vcmask 429352
        %5489 = vst.msk [vmem:[#allocation3] sm:$0xf] %vm5488, %v5486
        %v5490 = vld [vmem:[%s296 + $0x2] sm:$0x1]
        %v5491 = vld [vmem:[%s296 + $0x12] sm:$0x1]
        %v5492 = vld [vmem:[%s296 + $0x22] sm:$0x1]
        %v5493 = vld [vmem:[%s296 + $0x32] sm:$0x1]
        %v5498 = vrot.slane %v5491, 7
        %v5499 = vsel %vm5449, %v5498, %v5490
        %v5500 = vsel %vm5451, %v5498, %v5499
        %v5501 = vrot.slane %v5492, 6
        %v5502 = vsel %vm5454, %v5501, %v5500
        %v5503 = vsel %vm5456, %v5501, %v5502
        %v5504 = vrot.slane %v5493, 5
        %v5505 = vsel %vm5459, %v5504, %v5503
        %v5506 = vsel %vm5461, %v5504, %v5505
        %5507 = vrot.lane.b32.xlu0 %v5506, 55
        %v5508 = vpop.permute.xlu0 %5507
        %vm5510 = vcmask 576952
        %5511 = vst.msk [vmem:[#allocation3] sm:$0xf] %vm5510, %v5508
        %v5512 = vld [vmem:[%s296 + $0x3] sm:$0x1]
        %v5513 = vld [vmem:[%s296 + $0x13] sm:$0x1]
        %v5514 = vld [vmem:[%s296 + $0x23] sm:$0x1]
        %v5515 = vld [vmem:[%s296 + $0x33] sm:$0x1]
        %v5520 = vrot.slane %v5513, 7
        %v5521 = vsel %vm5449, %v5520, %v5512
        %v5522 = vsel %vm5451, %v5520, %v5521
        %v5523 = vrot.slane %v5514, 6
        %v5524 = vsel %vm5454, %v5523, %v5522
        %v5525 = vsel %vm5456, %v5523, %v5524
        %v5526 = vrot.slane %v5515, 5
        %v5527 = vsel %vm5459, %v5526, %v5525
        %v5528 = vsel %vm5461, %v5526, %v5527
        %5529 = vrot.lane.b32.xlu0 %v5528, 73
        %v5530 = vpop.permute.xlu0 %5529
        %vm5532 = vcmask 724552
        %5533 = vst.msk [vmem:[#allocation3] sm:$0xf] %vm5532, %v5530
        %v5534 = vld [vmem:[%s296 + $0x4] sm:$0x1]
        %v5535 = vld [vmem:[%s296 + $0x14] sm:$0x1]
        %v5536 = vld [vmem:[%s296 + $0x24] sm:$0x1]
        %v5537 = vld [vmem:[%s296 + $0x34] sm:$0x1]
        %v5542 = vrot.slane %v5535, 7
        %v5543 = vsel %vm5449, %v5542, %v5534
        %v5544 = vsel %vm5451, %v5542, %v5543
        %v5545 = vrot.slane %v5536, 6
        %v5546 = vsel %vm5454, %v5545, %v5544
        %v5547 = vsel %vm5456, %v5545, %v5546
        %v5548 = vrot.slane %v5537, 5
        %v5549 = vsel %vm5459, %v5548, %v5547
        %v5550 = vsel %vm5461, %v5548, %v5549
        %5551 = vrot.lane.b32.xlu0 %v5550, 91
        %v5552 = vpop.permute.xlu0 %5551
        %vm5554 = vcmask 872152
        %5555 = vst.msk [vmem:[#allocation3] sm:$0xf] %vm5554, %v5552
        %v5556 = vld [vmem:[%s296 + $0x5] sm:$0x1]
        %v5557 = vld [vmem:[%s296 + $0x15] sm:$0x1]
        %v5558 = vld [vmem:[%s296 + $0x25] sm:$0x1]
        %v5559 = vld [vmem:[%s296 + $0x35] sm:$0x1]
        %v5564 = vrot.slane %v5557, 7
        %v5565 = vsel %vm5449, %v5564, %v5556
        %v5566 = vsel %vm5451, %v5564, %v5565
        %v5567 = vrot.slane %v5558, 6
        %v5568 = vsel %vm5454, %v5567, %v5566
        %v5569 = vsel %vm5456, %v5567, %v5568
        %v5570 = vrot.slane %v5559, 5
        %v5571 = vsel %vm5459, %v5570, %v5569
        %v5572 = vsel %vm5461, %v5570, %v5571
        %5573 = vrot.lane.b32.xlu0 %v5572, 109
        %v5574 = vpop.permute.xlu0 %5573
        %vm5576 = vcmask 1019752
        %5577 = vst.msk [vmem:[#allocation3] sm:$0xf] %vm5576, %v5574
        %v5578 = vld [vmem:[%s296 + $0x6] sm:$0x1]
        %v5579 = vld [vmem:[%s296 + $0x16] sm:$0x1]
        %v5580 = vld [vmem:[%s296 + $0x26] sm:$0x1]
        %v5581 = vld [vmem:[%s296 + $0x36] sm:$0x1]
        %v5586 = vrot.slane %v5579, 7
        %v5587 = vsel %vm5449, %v5586, %v5578
        %v5588 = vsel %vm5451, %v5586, %v5587
        %v5589 = vrot.slane %v5580, 6
        %v5590 = vsel %vm5454, %v5589, %v5588
        %v5591 = vsel %vm5456, %v5589, %v5590
        %v5592 = vrot.slane %v5581, 5
        %v5593 = vsel %vm5459, %v5592, %v5591
        %v5594 = vsel %vm5461, %v5592, %v5593
        %5595 = vrot.lane.b32.xlu0 %v5594, 127
        %v5596 = vpop.permute.xlu0 %5595
        %v5597 = vrot.slane %v5596, 4
        %vm5598 = vcmask 1039360
        %v5599 = vsel %vm5598, %v5597, %v5596
        %vm5601 = vcmask 1044472
        %vm5602 = vcmask 121860
        %vm5603 = vmor %vm5602, %vm5601
        %5604 = vst.msk [vmem:[#allocation3] sm:$0xff] %vm5603, %v5599
        %v5605 = vld [vmem:[%s296 + $0x7] sm:$0x1]
        %v5606 = vld [vmem:[%s296 + $0x17] sm:$0x1]
        %v5607 = vld [vmem:[%s296 + $0x27] sm:$0x1]
        %v5608 = vld [vmem:[%s296 + $0x37] sm:$0x1]
        %v5613 = vrot.slane %v5606, 7
        %v5614 = vsel %vm5449, %v5613, %v5605
        %v5615 = vsel %vm5451, %v5613, %v5614
        %v5616 = vrot.slane %v5607, 6
        %v5617 = vsel %vm5454, %v5616, %v5615
        %v5618 = vsel %vm5456, %v5616, %v5617
        %v5619 = vrot.slane %v5608, 5
        %v5620 = vsel %vm5459, %v5619, %v5618
        %v5621 = vsel %vm5461, %v5619, %v5620
        %5622 = vrot.lane.b32.xlu0 %v5621, 17
        %v5623 = vpop.permute.xlu0 %5622
        %vm5625 = vcmask 265352
        %5626 = vst.msk [vmem:[#allocation3 + $0x4] sm:$0xf] %vm5625, %v5623
        %v5627 = vld [vmem:[%s296 + $0x8] sm:$0x1]
        %v5628 = vld [vmem:[%s296 + $0x18] sm:$0x1]
        %v5629 = vld [vmem:[%s296 + $0x28] sm:$0x1]
        %v5630 = vld [vmem:[%s296 + $0x38] sm:$0x1]
        %v5635 = vrot.slane %v5628, 7
        %v5636 = vsel %vm5449, %v5635, %v5627
        %v5637 = vsel %vm5451, %v5635, %v5636
        %v5638 = vrot.slane %v5629, 6
        %v5639 = vsel %vm5454, %v5638, %v5637
        %v5640 = vsel %vm5456, %v5638, %v5639
        %v5641 = vrot.slane %v5630, 5
        %v5642 = vsel %vm5459, %v5641, %v5640
        %v5643 = vsel %vm5461, %v5641, %v5642
        %5644 = vrot.lane.b32.xlu0 %v5643, 35
        %v5645 = vpop.permute.xlu0 %5644
        %vm5647 = vcmask 412952
        %5648 = vst.msk [vmem:[#allocation3 + $0x4] sm:$0xf] %vm5647, %v5645
        %v5649 = vld [vmem:[%s296 + $0x9] sm:$0x1]
        %v5650 = vld [vmem:[%s296 + $0x19] sm:$0x1]
        %v5651 = vld [vmem:[%s296 + $0x29] sm:$0x1]
        %v5652 = vld [vmem:[%s296 + $0x39] sm:$0x1]
        %v5657 = vrot.slane %v5650, 7
        %v5658 = vsel %vm5449, %v5657, %v5649
        %v5659 = vsel %vm5451, %v5657, %v5658
        %v5660 = vrot.slane %v5651, 6
        %v5661 = vsel %vm5454, %v5660, %v5659
        %v5662 = vsel %vm5456, %v5660, %v5661
        %v5663 = vrot.slane %v5652, 5
        %v5664 = vsel %vm5459, %v5663, %v5662
        %v5665 = vsel %vm5461, %v5663, %v5664
        %5666 = vrot.lane.b32.xlu0 %v5665, 53
        %v5667 = vpop.permute.xlu0 %5666
        %vm5669 = vcmask 560552
        %5670 = vst.msk [vmem:[#allocation3 + $0x4] sm:$0xf] %vm5669, %v5667
        %v5671 = vld [vmem:[%s296 + $0xa] sm:$0x1]
        %v5672 = vld [vmem:[%s296 + $0x1a] sm:$0x1]
        %v5673 = vld [vmem:[%s296 + $0x2a] sm:$0x1]
        %v5674 = vld [vmem:[%s296 + $0x3a] sm:$0x1]
        %v5679 = vrot.slane %v5672, 7
        %v5680 = vsel %vm5449, %v5679, %v5671
        %v5681 = vsel %vm5451, %v5679, %v5680
        %v5682 = vrot.slane %v5673, 6
        %v5683 = vsel %vm5454, %v5682, %v5681
        %v5684 = vsel %vm5456, %v5682, %v5683
        %v5685 = vrot.slane %v5674, 5
        %v5686 = vsel %vm5459, %v5685, %v5684
        %v5687 = vsel %vm5461, %v5685, %v5686
        %5688 = vrot.lane.b32.xlu0 %v5687, 71
        %v5689 = vpop.permute.xlu0 %5688
        %vm5691 = vcmask 708152
        %5692 = vst.msk [vmem:[#allocation3 + $0x4] sm:$0xf] %vm5691, %v5689
        %v5693 = vld [vmem:[%s296 + $0xb] sm:$0x1]
        %v5694 = vld [vmem:[%s296 + $0x1b] sm:$0x1]
        %v5695 = vld [vmem:[%s296 + $0x2b] sm:$0x1]
        %v5696 = vld [vmem:[%s296 + $0x3b] sm:$0x1]
        %v5701 = vrot.slane %v5694, 7
        %v5702 = vsel %vm5449, %v5701, %v5693
        %v5703 = vsel %vm5451, %v5701, %v5702
        %v5704 = vrot.slane %v5695, 6
        %v5705 = vsel %vm5454, %v5704, %v5703
        %v5706 = vsel %vm5456, %v5704, %v5705
        %v5707 = vrot.slane %v5696, 5
        %v5708 = vsel %vm5459, %v5707, %v5706
        %v5709 = vsel %vm5461, %v5707, %v5708
        %5710 = vrot.lane.b32.xlu0 %v5709, 89
        %v5711 = vpop.permute.xlu0 %5710
        %vm5713 = vcmask 855752
        %5714 = vst.msk [vmem:[#allocation3 + $0x4] sm:$0xf] %vm5713, %v5711
        %v5715 = vld [vmem:[%s296 + $0xc] sm:$0x1]
        %v5716 = vld [vmem:[%s296 + $0x1c] sm:$0x1]
        %v5717 = vld [vmem:[%s296 + $0x2c] sm:$0x1]
        %v5718 = vld [vmem:[%s296 + $0x3c] sm:$0x1]
        %v5723 = vrot.slane %v5716, 7
        %v5724 = vsel %vm5449, %v5723, %v5715
        %v5725 = vsel %vm5451, %v5723, %v5724
        %v5726 = vrot.slane %v5717, 6
        %v5727 = vsel %vm5454, %v5726, %v5725
        %v5728 = vsel %vm5456, %v5726, %v5727
        %v5729 = vrot.slane %v5718, 5
        %v5730 = vsel %vm5459, %v5729, %v5728
        %v5731 = vsel %vm5461, %v5729, %v5730
        %5732 = vrot.lane.b32.xlu0 %v5731, 107
        %v5733 = vpop.permute.xlu0 %5732
        %vm5735 = vcmask 1003352
        %5736 = vst.msk [vmem:[#allocation3 + $0x4] sm:$0xf] %vm5735, %v5733
        %v5737 = vld [vmem:[%s296 + $0xd] sm:$0x1]
        %v5738 = vld [vmem:[%s296 + $0x1d] sm:$0x1]
        %v5739 = vld [vmem:[%s296 + $0x2d] sm:$0x1]
        %v5740 = vld [vmem:[%s296 + $0x3d] sm:$0x1]
        %v5745 = vrot.slane %v5738, 7
        %v5746 = vsel %vm5449, %v5745, %v5737
        %v5747 = vsel %vm5451, %v5745, %v5746
        %v5748 = vrot.slane %v5739, 6
        %v5749 = vsel %vm5454, %v5748, %v5747
        %v5750 = vsel %vm5456, %v5748, %v5749
        %v5751 = vrot.slane %v5740, 5
        %v5752 = vsel %vm5459, %v5751, %v5750
        %v5753 = vsel %vm5461, %v5751, %v5752
        %5754 = vrot.lane.b32.xlu0 %v5753, 125
        %v5755 = vpop.permute.xlu0 %5754
        %v5756 = vrot.slane %v5755, 4
        %vm5757 = vcmask 1022976
        %v5758 = vsel %vm5757, %v5756, %v5755
        %vm5760 = vcmask 1044456
        %vm5761 = vcmask 105476
        %vm5762 = vmor %vm5761, %vm5760
        %5763 = vst.msk [vmem:[#allocation3 + $0x4] sm:$0xff] %vm5762, %v5758
        %v5764 = vld [vmem:[%s296 + $0xe] sm:$0x1]
        %v5765 = vld [vmem:[%s296 + $0x1e] sm:$0x1]
        %v5766 = vld [vmem:[%s296 + $0x2e] sm:$0x1]
        %v5767 = vld [vmem:[%s296 + $0x3e] sm:$0x1]
        %v5772 = vrot.slane %v5765, 7
        %v5773 = vsel %vm5449, %v5772, %v5764
        %v5774 = vsel %vm5451, %v5772, %v5773
        %v5775 = vrot.slane %v5766, 6
        %v5776 = vsel %vm5454, %v5775, %v5774
        %v5777 = vsel %vm5456, %v5775, %v5776
        %v5778 = vrot.slane %v5767, 5
        %v5779 = vsel %vm5459, %v5778, %v5777
        %v5780 = vsel %vm5461, %v5778, %v5779
        %5781 = vrot.lane.b32.xlu0 %v5780, 15
        %v5782 = vpop.permute.xlu0 %5781
        %vm5784 = vcmask 248952
        %5785 = vst.msk [vmem:[#allocation3 + $0x8] sm:$0xf] %vm5784, %v5782
        %v5786 = vld [vmem:[%s296 + $0xf] sm:$0x1]
        %v5787 = vld [vmem:[%s296 + $0x1f] sm:$0x1]
        %v5788 = vld [vmem:[%s296 + $0x2f] sm:$0x1]
        %v5789 = vld [vmem:[%s296 + $0x3f] sm:$0x1]
        %v5794 = vrot.slane %v5787, 7
        %v5795 = vsel %vm5449, %v5794, %v5786
        %v5796 = vsel %vm5451, %v5794, %v5795
        %v5797 = vrot.slane %v5788, 6
        %v5798 = vsel %vm5454, %v5797, %v5796
        %v5799 = vsel %vm5456, %v5797, %v5798
        %v5800 = vrot.slane %v5789, 5
        %v5801 = vsel %vm5459, %v5800, %v5799
        %v5802 = vsel %vm5461, %v5800, %v5801
        %5803 = vrot.lane.b32.xlu0 %v5802, 33
        %v5804 = vpop.permute.xlu0 %5803
        %vm5806 = vcmask 396552
        %5807 = vst.msk [vmem:[#allocation3 + $0x8] sm:$0xf] %vm5806, %v5804
        %v5808 = vld [vmem:[#allocation2] sm:$0xff]
        %v5809 = vld [vmem:[#allocation2 + $0x8] sm:$0xff]
        %v5810 = vld [vmem:[#allocation2 + $0x10] sm:$0xff]
        %v5811 = vld [vmem:[#allocation2 + $0x18] sm:$0xff]
        %v5812 = vld [vmem:[#allocation2 + $0x20] sm:$0xff]
        %v5813 = vld [vmem:[#allocation2 + $0x28] sm:$0xff]
        %v5814 = vld [vmem:[#allocation2 + $0x30] sm:$0xff]
        %v5815 = vld [vmem:[#allocation2 + $0x38] sm:$0xff]
        %v5816 = vld [vmem:[#allocation2 + $0x40] sm:$0xff]
        %v5817 = vld [vmem:[#allocation2 + $0x48] sm:$0xff]
        %v5818 = vld [vmem:[#allocation2 + $0x50] sm:$0xff]
        %v5819 = vld [vmem:[#allocation2 + $0x58] sm:$0xff]
        %v5820 = vld [vmem:[#allocation2 + $0x60] sm:$0xff]
        %v5821 = vld [vmem:[#allocation2 + $0x68] sm:$0xff]
        %v5822 = vld [vmem:[#allocation2 + $0x70] sm:$0xff]
        %v5823 = vld [vmem:[#allocation2 + $0x78] sm:$0xff]
        %v5824 = vld [vmem:[#allocation2 + $0x80] sm:$0xff]
        %v5825 = vld [vmem:[#allocation2 + $0x88] sm:$0xff]
        %v5826 = vld [vmem:[#allocation2 + $0x90] sm:$0xff]
        %v5827 = vld [vmem:[#allocation2 + $0x98] sm:$0xff]
        %v5828 = vld [vmem:[#allocation2 + $0xa0] sm:$0xff]
        %v5829 = vld [vmem:[#allocation2 + $0xa8] sm:$0xff]
        %v5830 = vld [vmem:[#allocation2 + $0xb0] sm:$0xff]
        %v5831 = vld [vmem:[#allocation2 + $0xb8] sm:$0xff]
        %v5832 = vld [vmem:[#allocation2 + $0xc0] sm:$0xff]
        %v5833 = vld [vmem:[#allocation2 + $0xc8] sm:$0xff]
        %v5834 = vld [vmem:[#allocation2 + $0xd0] sm:$0xff]
        %v5835 = vld [vmem:[#allocation2 + $0xd8] sm:$0xff]
        %v5836 = vld [vmem:[#allocation2 + $0xe0] sm:$0xff]
        %v5837 = vld [vmem:[#allocation2 + $0xe8] sm:$0xff]
        %v5838 = vld [vmem:[#allocation2 + $0xf0] sm:$0xff]
        %v5839 = vld [vmem:[#allocation2 + $0xf8] sm:$0xff]
        %v5840 = vld [vmem:[#allocation2 + $0x100] sm:$0xff]
        %v5841 = vld [vmem:[#allocation2 + $0x108] sm:$0xff]
        %v5842 = vld [vmem:[#allocation2 + $0x110] sm:$0xff]
        %v5843 = vld [vmem:[#allocation2 + $0x118] sm:$0xff]
        %5844 = vst.msk [vmem:[#allocation4] sm:$0xff] %vm5392, %v5808
        %5845 = vst.msk [vmem:[#allocation4 + $0x8] sm:$0xff] %vm5392, %v5809
        %5846 = vst.msk [vmem:[#allocation4 + $0x10] sm:$0xff] %vm5392, %v5810
        %5847 = vst.msk [vmem:[#allocation4 + $0x18] sm:$0xff] %vm5392, %v5811
        %5848 = vst.msk [vmem:[#allocation4 + $0x20] sm:$0xff] %vm5392, %v5812
        %5849 = vst.msk [vmem:[#allocation4 + $0x28] sm:$0xff] %vm5392, %v5813
        %5850 = vst.msk [vmem:[#allocation4 + $0x30] sm:$0xff] %vm5392, %v5814
        %5851 = vst.msk [vmem:[#allocation4 + $0x38] sm:$0xff] %vm5392, %v5815
        %5852 = vst.msk [vmem:[#allocation4 + $0x40] sm:$0xff] %vm5392, %v5816
        %5853 = vst.msk [vmem:[#allocation4 + $0x48] sm:$0xff] %vm5392, %v5817
        %5854 = vst.msk [vmem:[#allocation4 + $0x50] sm:$0xff] %vm5392, %v5818
        %5855 = vst.msk [vmem:[#allocation4 + $0x58] sm:$0xff] %vm5392, %v5819
        %5856 = vst.msk [vmem:[#allocation4 + $0x60] sm:$0xff] %vm5392, %v5820
        %5857 = vst.msk [vmem:[#allocation4 + $0x68] sm:$0xff] %vm5392, %v5821
        %5858 = vst.msk [vmem:[#allocation4 + $0x70] sm:$0xff] %vm5392, %v5822
        %5859 = vst.msk [vmem:[#allocation4 + $0x78] sm:$0xff] %vm5392, %v5823
        %5860 = vst.msk [vmem:[#allocation4 + $0x80] sm:$0xff] %vm5392, %v5824
        %5861 = vst.msk [vmem:[#allocation4 + $0x88] sm:$0xff] %vm5392, %v5825
        %5862 = vst.msk [vmem:[#allocation4 + $0x90] sm:$0xff] %vm5392, %v5826
        %5863 = vst.msk [vmem:[#allocation4 + $0x98] sm:$0xff] %vm5392, %v5827
        %5864 = vst.msk [vmem:[#allocation4 + $0xa0] sm:$0xff] %vm5392, %v5828
        %5865 = vst.msk [vmem:[#allocation4 + $0xa8] sm:$0xff] %vm5392, %v5829
        %5866 = vst.msk [vmem:[#allocation4 + $0xb0] sm:$0xff] %vm5392, %v5830
        %5867 = vst.msk [vmem:[#allocation4 + $0xb8] sm:$0xff] %vm5392, %v5831
        %5868 = vst.msk [vmem:[#allocation4 + $0xc0] sm:$0xff] %vm5392, %v5832
        %5869 = vst.msk [vmem:[#allocation4 + $0xc8] sm:$0xff] %vm5392, %v5833
        %5870 = vst.msk [vmem:[#allocation4 + $0xd0] sm:$0xff] %vm5392, %v5834
        %5871 = vst.msk [vmem:[#allocation4 + $0xd8] sm:$0xff] %vm5392, %v5835
        %5872 = vst.msk [vmem:[#allocation4 + $0xe0] sm:$0xff] %vm5392, %v5836
        %5873 = vst.msk [vmem:[#allocation4 + $0xe8] sm:$0xff] %vm5392, %v5837
        %5874 = vst.msk [vmem:[#allocation4 + $0xf0] sm:$0xff] %vm5392, %v5838
        %5875 = vst.msk [vmem:[#allocation4 + $0xf8] sm:$0xff] %vm5392, %v5839
        %5876 = vst.msk [vmem:[#allocation4 + $0x100] sm:$0xff] %vm5392, %v5840
        %5877 = vst.msk [vmem:[#allocation4 + $0x108] sm:$0xff] %vm5392, %v5841
        %5878 = vst.msk [vmem:[#allocation4 + $0x110] sm:$0xff] %vm5392, %v5842
        %5879 = vst.msk [vmem:[#allocation4 + $0x118] sm:$0xff] %vm5392, %v5843
        %v5880 = vld [vmem:[#allocation3] sm:$0xff]
        %v5881 = vld [vmem:[#allocation3 + $0x8] sm:$0xf]
        %v5883 = vcombine.high %v5880, %v5880
        %5885 = vst [vmem:[#allocation5] sm:$0xf] %v5880
        %5886 = vst [vmem:[#allocation5 + $0x8] sm:$0xf] %v5883
        %vm5887 = vcmask 257024
        %5888 = vst.msk [vmem:[#allocation5 + $0x10] sm:$0xf] %vm5887, %v5881
        %v5889 = vld [vmem:[#allocation2 + $0x1] sm:$0xff]
        %v5890 = vld [vmem:[#allocation2 + $0x9] sm:$0xff]
        %v5891 = vld [vmem:[#allocation2 + $0x11] sm:$0xff]
        %v5892 = vld [vmem:[#allocation2 + $0x19] sm:$0xff]
        %v5893 = vld [vmem:[#allocation2 + $0x21] sm:$0xff]
        %v5894 = vld [vmem:[#allocation2 + $0x29] sm:$0xff]
        %v5895 = vld [vmem:[#allocation2 + $0x31] sm:$0xff]
        %v5896 = vld [vmem:[#allocation2 + $0x39] sm:$0xff]
        %v5897 = vld [vmem:[#allocation2 + $0x41] sm:$0xff]
        %v5898 = vld [vmem:[#allocation2 + $0x49] sm:$0xff]
        %v5899 = vld [vmem:[#allocation2 + $0x51] sm:$0xff]
        %v5900 = vld [vmem:[#allocation2 + $0x59] sm:$0xff]
        %v5901 = vld [vmem:[#allocation2 + $0x61] sm:$0xff]
        %v5902 = vld [vmem:[#allocation2 + $0x69] sm:$0xff]
        %v5903 = vld [vmem:[#allocation2 + $0x71] sm:$0xff]
        %v5904 = vld [vmem:[#allocation2 + $0x79] sm:$0xff]
        %v5905 = vld [vmem:[#allocation2 + $0x81] sm:$0xff]
        %v5906 = vld [vmem:[#allocation2 + $0x89] sm:$0xff]
        %v5907 = vld [vmem:[#allocation2 + $0x91] sm:$0xff]
        %v5908 = vld [vmem:[#allocation2 + $0x99] sm:$0xff]
        %v5909 = vld [vmem:[#allocation2 + $0xa1] sm:$0xff]
        %v5910 = vld [vmem:[#allocation2 + $0xa9] sm:$0xff]
        %v5911 = vld [vmem:[#allocation2 + $0xb1] sm:$0xff]
        %v5912 = vld [vmem:[#allocation2 + $0xb9] sm:$0xff]
        %v5913 = vld [vmem:[#allocation2 + $0xc1] sm:$0xff]
        %v5914 = vld [vmem:[#allocation2 + $0xc9] sm:$0xff]
        %v5915 = vld [vmem:[#allocation2 + $0xd1] sm:$0xff]
        %v5916 = vld [vmem:[#allocation2 + $0xd9] sm:$0xff]
        %v5917 = vld [vmem:[#allocation2 + $0xe1] sm:$0xff]
        %v5918 = vld [vmem:[#allocation2 + $0xe9] sm:$0xff]
        %v5919 = vld [vmem:[#allocation2 + $0xf1] sm:$0xff]
        %v5920 = vld [vmem:[#allocation2 + $0xf9] sm:$0xff]
        %v5921 = vld [vmem:[#allocation2 + $0x101] sm:$0xff]
        %v5922 = vld [vmem:[#allocation2 + $0x109] sm:$0xff]
        %v5923 = vld [vmem:[#allocation2 + $0x111] sm:$0xff]
        %v5924 = vld [vmem:[#allocation2 + $0x119] sm:$0xff]
        %5961 = vrot.lane.b32.xlu0 %v5889, 4
        %v5962 = vpop.permute.xlu0 %5961
        %5963 = vrot.lane.b32.xlu0 %v5890, 4
        %v5964 = vpop.permute.xlu0 %5963
        %5965 = vrot.lane.b32.xlu0 %v5891, 4
        %v5966 = vpop.permute.xlu0 %5965
        %5967 = vrot.lane.b32.xlu0 %v5892, 4
        %v5968 = vpop.permute.xlu0 %5967
        %5969 = vrot.lane.b32.xlu0 %v5893, 4
        %v5970 = vpop.permute.xlu0 %5969
        %5971 = vrot.lane.b32.xlu0 %v5894, 4
        %v5972 = vpop.permute.xlu0 %5971
        %5973 = vrot.lane.b32.xlu0 %v5895, 4
        %v5974 = vpop.permute.xlu0 %5973
        %5975 = vrot.lane.b32.xlu0 %v5896, 4
        %v5976 = vpop.permute.xlu0 %5975
        %5977 = vrot.lane.b32.xlu0 %v5897, 4
        %v5978 = vpop.permute.xlu0 %5977
        %5979 = vrot.lane.b32.xlu0 %v5898, 4
        %v5980 = vpop.permute.xlu0 %5979
        %5981 = vrot.lane.b32.xlu0 %v5899, 4
        %v5982 = vpop.permute.xlu0 %5981
        %5983 = vrot.lane.b32.xlu0 %v5900, 4
        %v5984 = vpop.permute.xlu0 %5983
        %5985 = vrot.lane.b32.xlu0 %v5901, 4
        %v5986 = vpop.permute.xlu0 %5985
        %5987 = vrot.lane.b32.xlu0 %v5902, 4
        %v5988 = vpop.permute.xlu0 %5987
        %5989 = vrot.lane.b32.xlu0 %v5903, 4
        %v5990 = vpop.permute.xlu0 %5989
        %5991 = vrot.lane.b32.xlu0 %v5904, 4
        %v5992 = vpop.permute.xlu0 %5991
        %5993 = vrot.lane.b32.xlu0 %v5905, 4
        %v5994 = vpop.permute.xlu0 %5993
        %5995 = vrot.lane.b32.xlu0 %v5906, 4
        %v5996 = vpop.permute.xlu0 %5995
        %5997 = vrot.lane.b32.xlu0 %v5907, 4
        %v5998 = vpop.permute.xlu0 %5997
        %5999 = vrot.lane.b32.xlu0 %v5908, 4
        %v6000 = vpop.permute.xlu0 %5999
        %6001 = vrot.lane.b32.xlu0 %v5909, 4
        %v6002 = vpop.permute.xlu0 %6001
        %6003 = vrot.lane.b32.xlu0 %v5910, 4
        %v6004 = vpop.permute.xlu0 %6003
        %6005 = vrot.lane.b32.xlu0 %v5911, 4
        %v6006 = vpop.permute.xlu0 %6005
        %6007 = vrot.lane.b32.xlu0 %v5912, 4
        %v6008 = vpop.permute.xlu0 %6007
        %6009 = vrot.lane.b32.xlu0 %v5913, 4
        %v6010 = vpop.permute.xlu0 %6009
        %6011 = vrot.lane.b32.xlu0 %v5914, 4
        %v6012 = vpop.permute.xlu0 %6011
        %6013 = vrot.lane.b32.xlu0 %v5915, 4
        %v6014 = vpop.permute.xlu0 %6013
        %6015 = vrot.lane.b32.xlu0 %v5916, 4
        %v6016 = vpop.permute.xlu0 %6015
        %6017 = vrot.lane.b32.xlu0 %v5917, 4
        %v6018 = vpop.permute.xlu0 %6017
        %6019 = vrot.lane.b32.xlu0 %v5918, 4
        %v6020 = vpop.permute.xlu0 %6019
        %6021 = vrot.lane.b32.xlu0 %v5919, 4
        %v6022 = vpop.permute.xlu0 %6021
        %6023 = vrot.lane.b32.xlu0 %v5920, 4
        %v6024 = vpop.permute.xlu0 %6023
        %6025 = vrot.lane.b32.xlu0 %v5921, 4
        %v6026 = vpop.permute.xlu0 %6025
        %6027 = vrot.lane.b32.xlu0 %v5922, 4
        %v6028 = vpop.permute.xlu0 %6027
        %6029 = vrot.lane.b32.xlu0 %v5923, 4
        %v6030 = vpop.permute.xlu0 %6029
        %6031 = vrot.lane.b32.xlu0 %v5924, 4
        %v6032 = vpop.permute.xlu0 %6031
        %vm6069 = vcmask 64544
        %6070 = vst.msk [vmem:[#allocation4] sm:$0xff] %vm6069, %v5962
        %6071 = vst.msk [vmem:[#allocation4 + $0x8] sm:$0xff] %vm6069, %v5964
        %6072 = vst.msk [vmem:[#allocation4 + $0x10] sm:$0xff] %vm6069, %v5966
        %6073 = vst.msk [vmem:[#allocation4 + $0x18] sm:$0xff] %vm6069, %v5968
        %6074 = vst.msk [vmem:[#allocation4 + $0x20] sm:$0xff] %vm6069, %v5970
        %6075 = vst.msk [vmem:[#allocation4 + $0x28] sm:$0xff] %vm6069, %v5972
        %6076 = vst.msk [vmem:[#allocation4 + $0x30] sm:$0xff] %vm6069, %v5974
        %6077 = vst.msk [vmem:[#allocation4 + $0x38] sm:$0xff] %vm6069, %v5976
        %6078 = vst.msk [vmem:[#allocation4 + $0x40] sm:$0xff] %vm6069, %v5978
        %6079 = vst.msk [vmem:[#allocation4 + $0x48] sm:$0xff] %vm6069, %v5980
        %6080 = vst.msk [vmem:[#allocation4 + $0x50] sm:$0xff] %vm6069, %v5982
        %6081 = vst.msk [vmem:[#allocation4 + $0x58] sm:$0xff] %vm6069, %v5984
        %6082 = vst.msk [vmem:[#allocation4 + $0x60] sm:$0xff] %vm6069, %v5986
        %6083 = vst.msk [vmem:[#allocation4 + $0x68] sm:$0xff] %vm6069, %v5988
        %6084 = vst.msk [vmem:[#allocation4 + $0x70] sm:$0xff] %vm6069, %v5990
        %6085 = vst.msk [vmem:[#allocation4 + $0x78] sm:$0xff] %vm6069, %v5992
        %6086 = vst.msk [vmem:[#allocation4 + $0x80] sm:$0xff] %vm6069, %v5994
        %6087 = vst.msk [vmem:[#allocation4 + $0x88] sm:$0xff] %vm6069, %v5996
        %6088 = vst.msk [vmem:[#allocation4 + $0x90] sm:$0xff] %vm6069, %v5998
        %6089 = vst.msk [vmem:[#allocation4 + $0x98] sm:$0xff] %vm6069, %v6000
        %6090 = vst.msk [vmem:[#allocation4 + $0xa0] sm:$0xff] %vm6069, %v6002
        %6091 = vst.msk [vmem:[#allocation4 + $0xa8] sm:$0xff] %vm6069, %v6004
        %6092 = vst.msk [vmem:[#allocation4 + $0xb0] sm:$0xff] %vm6069, %v6006
        %6093 = vst.msk [vmem:[#allocation4 + $0xb8] sm:$0xff] %vm6069, %v6008
        %6094 = vst.msk [vmem:[#allocation4 + $0xc0] sm:$0xff] %vm6069, %v6010
        %6095 = vst.msk [vmem:[#allocation4 + $0xc8] sm:$0xff] %vm6069, %v6012
        %6096 = vst.msk [vmem:[#allocation4 + $0xd0] sm:$0xff] %vm6069, %v6014
        %6097 = vst.msk [vmem:[#allocation4 + $0xd8] sm:$0xff] %vm6069, %v6016
        %6098 = vst.msk [vmem:[#allocation4 + $0xe0] sm:$0xff] %vm6069, %v6018
        %6099 = vst.msk [vmem:[#allocation4 + $0xe8] sm:$0xff] %vm6069, %v6020
        %6100 = vst.msk [vmem:[#allocation4 + $0xf0] sm:$0xff] %vm6069, %v6022
        %6101 = vst.msk [vmem:[#allocation4 + $0xf8] sm:$0xff] %vm6069, %v6024
        %6102 = vst.msk [vmem:[#allocation4 + $0x100] sm:$0xff] %vm6069, %v6026
        %6103 = vst.msk [vmem:[#allocation4 + $0x108] sm:$0xff] %vm6069, %v6028
        %6104 = vst.msk [vmem:[#allocation4 + $0x110] sm:$0xff] %vm6069, %v6030
        %6105 = vst.msk [vmem:[#allocation4 + $0x118] sm:$0xff] %vm6069, %v6032
        %v6106 = vld [vmem:[#allocation3] sm:$0xff]
        %v6107 = vld [vmem:[#allocation3 + $0x8] sm:$0xf]
        %v6110 = vcombine.low %v6106, %v6106
        %v6111 = vcombine.low %v6107, %v6107
        %6112 = vrot.lane.b32.xlu0 %v6110, 127
        %v6113 = vpop.permute.xlu0 %6112
        %6114 = vrot.lane.b32.xlu0 %v6106, 127
        %v6115 = vpop.permute.xlu0 %6114
        %6116 = vrot.lane.b32.xlu0 %v6111, 127
        %v6117 = vpop.permute.xlu0 %6116
        %v6118 = vsel %vm5598, %v6113, %v6115
        %v6119 = vsel %vm5598, %v6115, %v6117
        %6123 = vst [vmem:[#allocation5] sm:$0xf0] %v6118
        %6124 = vst [vmem:[#allocation5 + $0x8] sm:$0xf0] %v6119
        %vm6125 = vcmask 261124
        %6126 = vst.msk [vmem:[#allocation5 + $0x10] sm:$0xf0] %vm6125, %v6117
        %v6127 = vld [vmem:[#allocation2 + $0x2] sm:$0xff]
        %v6128 = vld [vmem:[#allocation2 + $0xa] sm:$0xff]
        %v6129 = vld [vmem:[#allocation2 + $0x12] sm:$0xff]
        %v6130 = vld [vmem:[#allocation2 + $0x1a] sm:$0xff]
        %v6131 = vld [vmem:[#allocation2 + $0x22] sm:$0xff]
        %v6132 = vld [vmem:[#allocation2 + $0x2a] sm:$0xff]
        %v6133 = vld [vmem:[#allocation2 + $0x32] sm:$0xff]
        %v6134 = vld [vmem:[#allocation2 + $0x3a] sm:$0xff]
        %v6135 = vld [vmem:[#allocation2 + $0x42] sm:$0xff]
        %v6136 = vld [vmem:[#allocation2 + $0x4a] sm:$0xff]
        %v6137 = vld [vmem:[#allocation2 + $0x52] sm:$0xff]
        %v6138 = vld [vmem:[#allocation2 + $0x5a] sm:$0xff]
        %v6139 = vld [vmem:[#allocation2 + $0x62] sm:$0xff]
        %v6140 = vld [vmem:[#allocation2 + $0x6a] sm:$0xff]
        %v6141 = vld [vmem:[#allocation2 + $0x72] sm:$0xff]
        %v6142 = vld [vmem:[#allocation2 + $0x7a] sm:$0xff]
        %v6143 = vld [vmem:[#allocation2 + $0x82] sm:$0xff]
        %v6144 = vld [vmem:[#allocation2 + $0x8a] sm:$0xff]
        %v6145 = vld [vmem:[#allocation2 + $0x92] sm:$0xff]
        %v6146 = vld [vmem:[#allocation2 + $0x9a] sm:$0xff]
        %v6147 = vld [vmem:[#allocation2 + $0xa2] sm:$0xff]
        %v6148 = vld [vmem:[#allocation2 + $0xaa] sm:$0xff]
        %v6149 = vld [vmem:[#allocation2 + $0xb2] sm:$0xff]
        %v6150 = vld [vmem:[#allocation2 + $0xba] sm:$0xff]
        %v6151 = vld [vmem:[#allocation2 + $0xc2] sm:$0xff]
        %v6152 = vld [vmem:[#allocation2 + $0xca] sm:$0xff]
        %v6153 = vld [vmem:[#allocation2 + $0xd2] sm:$0xff]
        %v6154 = vld [vmem:[#allocation2 + $0xda] sm:$0xff]
        %v6155 = vld [vmem:[#allocation2 + $0xe2] sm:$0xff]
        %v6156 = vld [vmem:[#allocation2 + $0xea] sm:$0xff]
        %v6157 = vld [vmem:[#allocation2 + $0xf2] sm:$0xff]
        %v6158 = vld [vmem:[#allocation2 + $0xfa] sm:$0xff]
        %v6159 = vld [vmem:[#allocation2 + $0x102] sm:$0xff]
        %v6160 = vld [vmem:[#allocation2 + $0x10a] sm:$0xff]
        %v6161 = vld [vmem:[#allocation2 + $0x112] sm:$0xff]
        %v6162 = vld [vmem:[#allocation2 + $0x11a] sm:$0xff]
        %6199 = vrot.lane.b32.xlu0 %v6127, 8
        %v6200 = vpop.permute.xlu0 %6199
        %6201 = vrot.lane.b32.xlu0 %v6128, 8
        %v6202 = vpop.permute.xlu0 %6201
        %6203 = vrot.lane.b32.xlu0 %v6129, 8
        %v6204 = vpop.permute.xlu0 %6203
        %6205 = vrot.lane.b32.xlu0 %v6130, 8
        %v6206 = vpop.permute.xlu0 %6205
        %6207 = vrot.lane.b32.xlu0 %v6131, 8
        %v6208 = vpop.permute.xlu0 %6207
        %6209 = vrot.lane.b32.xlu0 %v6132, 8
        %v6210 = vpop.permute.xlu0 %6209
        %6211 = vrot.lane.b32.xlu0 %v6133, 8
        %v6212 = vpop.permute.xlu0 %6211
        %6213 = vrot.lane.b32.xlu0 %v6134, 8
        %v6214 = vpop.permute.xlu0 %6213
        %6215 = vrot.lane.b32.xlu0 %v6135, 8
        %v6216 = vpop.permute.xlu0 %6215
        %6217 = vrot.lane.b32.xlu0 %v6136, 8
        %v6218 = vpop.permute.xlu0 %6217
        %6219 = vrot.lane.b32.xlu0 %v6137, 8
        %v6220 = vpop.permute.xlu0 %6219
        %6221 = vrot.lane.b32.xlu0 %v6138, 8
        %v6222 = vpop.permute.xlu0 %6221
        %6223 = vrot.lane.b32.xlu0 %v6139, 8
        %v6224 = vpop.permute.xlu0 %6223
        %6225 = vrot.lane.b32.xlu0 %v6140, 8
        %v6226 = vpop.permute.xlu0 %6225
        %6227 = vrot.lane.b32.xlu0 %v6141, 8
        %v6228 = vpop.permute.xlu0 %6227
        %6229 = vrot.lane.b32.xlu0 %v6142, 8
        %v6230 = vpop.permute.xlu0 %6229
        %6231 = vrot.lane.b32.xlu0 %v6143, 8
        %v6232 = vpop.permute.xlu0 %6231
        %6233 = vrot.lane.b32.xlu0 %v6144, 8
        %v6234 = vpop.permute.xlu0 %6233
        %6235 = vrot.lane.b32.xlu0 %v6145, 8
        %v6236 = vpop.permute.xlu0 %6235
        %6237 = vrot.lane.b32.xlu0 %v6146, 8
        %v6238 = vpop.permute.xlu0 %6237
        %6239 = vrot.lane.b32.xlu0 %v6147, 8
        %v6240 = vpop.permute.xlu0 %6239
        %6241 = vrot.lane.b32.xlu0 %v6148, 8
        %v6242 = vpop.permute.xlu0 %6241
        %6243 = vrot.lane.b32.xlu0 %v6149, 8
        %v6244 = vpop.permute.xlu0 %6243
        %6245 = vrot.lane.b32.xlu0 %v6150, 8
        %v6246 = vpop.permute.xlu0 %6245
        %6247 = vrot.lane.b32.xlu0 %v6151, 8
        %v6248 = vpop.permute.xlu0 %6247
        %6249 = vrot.lane.b32.xlu0 %v6152, 8
        %v6250 = vpop.permute.xlu0 %6249
        %6251 = vrot.lane.b32.xlu0 %v6153, 8
        %v6252 = vpop.permute.xlu0 %6251
        %6253 = vrot.lane.b32.xlu0 %v6154, 8
        %v6254 = vpop.permute.xlu0 %6253
        %6255 = vrot.lane.b32.xlu0 %v6155, 8
        %v6256 = vpop.permute.xlu0 %6255
        %6257 = vrot.lane.b32.xlu0 %v6156, 8
        %v6258 = vpop.permute.xlu0 %6257
        %6259 = vrot.lane.b32.xlu0 %v6157, 8
        %v6260 = vpop.permute.xlu0 %6259
        %6261 = vrot.lane.b32.xlu0 %v6158, 8
        %v6262 = vpop.permute.xlu0 %6261
        %6263 = vrot.lane.b32.xlu0 %v6159, 8
        %v6264 = vpop.permute.xlu0 %6263
        %6265 = vrot.lane.b32.xlu0 %v6160, 8
        %v6266 = vpop.permute.xlu0 %6265
        %6267 = vrot.lane.b32.xlu0 %v6161, 8
        %v6268 = vpop.permute.xlu0 %6267
        %6269 = vrot.lane.b32.xlu0 %v6162, 8
        %v6270 = vpop.permute.xlu0 %6269
        %vm6307 = vcmask 97344
        %6308 = vst.msk [vmem:[#allocation4] sm:$0xff] %vm6307, %v6200
        %6309 = vst.msk [vmem:[#allocation4 + $0x8] sm:$0xff] %vm6307, %v6202
        %6310 = vst.msk [vmem:[#allocation4 + $0x10] sm:$0xff] %vm6307, %v6204
        %6311 = vst.msk [vmem:[#allocation4 + $0x18] sm:$0xff] %vm6307, %v6206
        %6312 = vst.msk [vmem:[#allocation4 + $0x20] sm:$0xff] %vm6307, %v6208
        %6313 = vst.msk [vmem:[#allocation4 + $0x28] sm:$0xff] %vm6307, %v6210
        %6314 = vst.msk [vmem:[#allocation4 + $0x30] sm:$0xff] %vm6307, %v6212
        %6315 = vst.msk [vmem:[#allocation4 + $0x38] sm:$0xff] %vm6307, %v6214
        %6316 = vst.msk [vmem:[#allocation4 + $0x40] sm:$0xff] %vm6307, %v6216
        %6317 = vst.msk [vmem:[#allocation4 + $0x48] sm:$0xff] %vm6307, %v6218
        %6318 = vst.msk [vmem:[#allocation4 + $0x50] sm:$0xff] %vm6307, %v6220
        %6319 = vst.msk [vmem:[#allocation4 + $0x58] sm:$0xff] %vm6307, %v6222
        %6320 = vst.msk [vmem:[#allocation4 + $0x60] sm:$0xff] %vm6307, %v6224
        %6321 = vst.msk [vmem:[#allocation4 + $0x68] sm:$0xff] %vm6307, %v6226
        %6322 = vst.msk [vmem:[#allocation4 + $0x70] sm:$0xff] %vm6307, %v6228
        %6323 = vst.msk [vmem:[#allocation4 + $0x78] sm:$0xff] %vm6307, %v6230
        %6324 = vst.msk [vmem:[#allocation4 + $0x80] sm:$0xff] %vm6307, %v6232
        %6325 = vst.msk [vmem:[#allocation4 + $0x88] sm:$0xff] %vm6307, %v6234
        %6326 = vst.msk [vmem:[#allocation4 + $0x90] sm:$0xff] %vm6307, %v6236
        %6327 = vst.msk [vmem:[#allocation4 + $0x98] sm:$0xff] %vm6307, %v6238
        %6328 = vst.msk [vmem:[#allocation4 + $0xa0] sm:$0xff] %vm6307, %v6240
        %6329 = vst.msk [vmem:[#allocation4 + $0xa8] sm:$0xff] %vm6307, %v6242
        %6330 = vst.msk [vmem:[#allocation4 + $0xb0] sm:$0xff] %vm6307, %v6244
        %6331 = vst.msk [vmem:[#allocation4 + $0xb8] sm:$0xff] %vm6307, %v6246
        %6332 = vst.msk [vmem:[#allocation4 + $0xc0] sm:$0xff] %vm6307, %v6248
        %6333 = vst.msk [vmem:[#allocation4 + $0xc8] sm:$0xff] %vm6307, %v6250
        %6334 = vst.msk [vmem:[#allocation4 + $0xd0] sm:$0xff] %vm6307, %v6252
        %6335 = vst.msk [vmem:[#allocation4 + $0xd8] sm:$0xff] %vm6307, %v6254
        %6336 = vst.msk [vmem:[#allocation4 + $0xe0] sm:$0xff] %vm6307, %v6256
        %6337 = vst.msk [vmem:[#allocation4 + $0xe8] sm:$0xff] %vm6307, %v6258
        %6338 = vst.msk [vmem:[#allocation4 + $0xf0] sm:$0xff] %vm6307, %v6260
        %6339 = vst.msk [vmem:[#allocation4 + $0xf8] sm:$0xff] %vm6307, %v6262
        %6340 = vst.msk [vmem:[#allocation4 + $0x100] sm:$0xff] %vm6307, %v6264
        %6341 = vst.msk [vmem:[#allocation4 + $0x108] sm:$0xff] %vm6307, %v6266
        %6342 = vst.msk [vmem:[#allocation4 + $0x110] sm:$0xff] %vm6307, %v6268
        %6343 = vst.msk [vmem:[#allocation4 + $0x118] sm:$0xff] %vm6307, %v6270
        %v6344 = vld [vmem:[#allocation3] sm:$0xff]
        %v6345 = vld [vmem:[#allocation3 + $0x8] sm:$0xf]
        %v6348 = vcombine.high %v6344, %v6344
        %6349 = vrot.lane.b32.xlu0 %v6344, 126
        %v6350 = vpop.permute.xlu0 %6349
        %6351 = vrot.lane.b32.xlu0 %v6348, 126
        %v6352 = vpop.permute.xlu0 %6351
        %6353 = vrot.lane.b32.xlu0 %v6345, 126
        %v6354 = vpop.permute.xlu0 %6353
        %vm6355 = vcmask 1031168
        %v6356 = vsel %vm6355, %v6350, %v6352
        %v6357 = vsel %vm6355, %v6352, %v6354
        %6361 = vst [vmem:[#allocation5 + $0x18] sm:$0xf] %v6356
        %6362 = vst [vmem:[#allocation5 + $0x20] sm:$0xf] %v6357
        %6363 = vst.msk [vmem:[#allocation5 + $0x28] sm:$0xf] %vm5887, %v6354
        %v6364 = vld [vmem:[#allocation2 + $0x12] sm:$0xff]
        %v6365 = vld [vmem:[#allocation2 + $0x1a] sm:$0xff]
        %v6366 = vld [vmem:[#allocation2 + $0x22] sm:$0xff]
        %v6367 = vld [vmem:[#allocation2 + $0x2a] sm:$0xff]
        %v6368 = vld [vmem:[#allocation2 + $0x32] sm:$0xff]
        %v6369 = vld [vmem:[#allocation2 + $0x3a] sm:$0xff]
        %v6370 = vld [vmem:[#allocation2 + $0x42] sm:$0xff]
        %v6371 = vld [vmem:[#allocation2 + $0x4a] sm:$0xff]
        %v6372 = vld [vmem:[#allocation2 + $0x52] sm:$0xff]
        %v6373 = vld [vmem:[#allocation2 + $0x5a] sm:$0xff]
        %v6374 = vld [vmem:[#allocation2 + $0x62] sm:$0xff]
        %v6375 = vld [vmem:[#allocation2 + $0x6a] sm:$0xff]
        %v6376 = vld [vmem:[#allocation2 + $0x72] sm:$0xff]
        %v6377 = vld [vmem:[#allocation2 + $0x7a] sm:$0xff]
        %v6378 = vld [vmem:[#allocation2 + $0x82] sm:$0xff]
        %v6379 = vld [vmem:[#allocation2 + $0x8a] sm:$0xff]
        %v6380 = vld [vmem:[#allocation2 + $0x92] sm:$0xff]
        %v6381 = vld [vmem:[#allocation2 + $0x9a] sm:$0xff]
        %v6382 = vld [vmem:[#allocation2 + $0xa2] sm:$0xff]
        %v6383 = vld [vmem:[#allocation2 + $0xaa] sm:$0xff]
        %v6384 = vld [vmem:[#allocation2 + $0xb2] sm:$0xff]
        %v6385 = vld [vmem:[#allocation2 + $0xba] sm:$0xff]
        %v6386 = vld [vmem:[#allocation2 + $0xc2] sm:$0xff]
        %v6387 = vld [vmem:[#allocation2 + $0xca] sm:$0xff]
        %v6388 = vld [vmem:[#allocation2 + $0xd2] sm:$0xff]
        %v6389 = vld [vmem:[#allocation2 + $0xda] sm:$0xff]
        %v6390 = vld [vmem:[#allocation2 + $0xe2] sm:$0xff]
        %v6391 = vld [vmem:[#allocation2 + $0xea] sm:$0xff]
        %v6392 = vld [vmem:[#allocation2 + $0xf2] sm:$0xff]
        %v6393 = vld [vmem:[#allocation2 + $0xfa] sm:$0xff]
        %v6394 = vld [vmem:[#allocation2 + $0x102] sm:$0xff]
        %v6395 = vld [vmem:[#allocation2 + $0x10a] sm:$0xff]
        %v6396 = vld [vmem:[#allocation2 + $0x112] sm:$0xff]
        %v6397 = vld [vmem:[#allocation2 + $0x11a] sm:$0xff]
        %v6398 = vld [vmem:[#allocation2 + $0x122] sm:$0xff]
        %v6399 = vld [vmem:[#allocation2 + $0x12a] sm:$0xff]
        %6436 = vrot.lane.b32.xlu0 %v6364, 12
        %v6437 = vpop.permute.xlu0 %6436
        %6438 = vrot.lane.b32.xlu0 %v6365, 12
        %v6439 = vpop.permute.xlu0 %6438
        %6440 = vrot.lane.b32.xlu0 %v6366, 12
        %v6441 = vpop.permute.xlu0 %6440
        %6442 = vrot.lane.b32.xlu0 %v6367, 12
        %v6443 = vpop.permute.xlu0 %6442
        %6444 = vrot.lane.b32.xlu0 %v6368, 12
        %v6445 = vpop.permute.xlu0 %6444
        %6446 = vrot.lane.b32.xlu0 %v6369, 12
        %v6447 = vpop.permute.xlu0 %6446
        %6448 = vrot.lane.b32.xlu0 %v6370, 12
        %v6449 = vpop.permute.xlu0 %6448
        %6450 = vrot.lane.b32.xlu0 %v6371, 12
        %v6451 = vpop.permute.xlu0 %6450
        %6452 = vrot.lane.b32.xlu0 %v6372, 12
        %v6453 = vpop.permute.xlu0 %6452
        %6454 = vrot.lane.b32.xlu0 %v6373, 12
        %v6455 = vpop.permute.xlu0 %6454
        %6456 = vrot.lane.b32.xlu0 %v6374, 12
        %v6457 = vpop.permute.xlu0 %6456
        %6458 = vrot.lane.b32.xlu0 %v6375, 12
        %v6459 = vpop.permute.xlu0 %6458
        %6460 = vrot.lane.b32.xlu0 %v6376, 12
        %v6461 = vpop.permute.xlu0 %6460
        %6462 = vrot.lane.b32.xlu0 %v6377, 12
        %v6463 = vpop.permute.xlu0 %6462
        %6464 = vrot.lane.b32.xlu0 %v6378, 12
        %v6465 = vpop.permute.xlu0 %6464
        %6466 = vrot.lane.b32.xlu0 %v6379, 12
        %v6467 = vpop.permute.xlu0 %6466
        %6468 = vrot.lane.b32.xlu0 %v6380, 12
        %v6469 = vpop.permute.xlu0 %6468
        %6470 = vrot.lane.b32.xlu0 %v6381, 12
        %v6471 = vpop.permute.xlu0 %6470
        %6472 = vrot.lane.b32.xlu0 %v6382, 12
        %v6473 = vpop.permute.xlu0 %6472
        %6474 = vrot.lane.b32.xlu0 %v6383, 12
        %v6475 = vpop.permute.xlu0 %6474
        %6476 = vrot.lane.b32.xlu0 %v6384, 12
        %v6477 = vpop.permute.xlu0 %6476
        %6478 = vrot.lane.b32.xlu0 %v6385, 12
        %v6479 = vpop.permute.xlu0 %6478
        %6480 = vrot.lane.b32.xlu0 %v6386, 12
        %v6481 = vpop.permute.xlu0 %6480
        %6482 = vrot.lane.b32.xlu0 %v6387, 12
        %v6483 = vpop.permute.xlu0 %6482
        %6484 = vrot.lane.b32.xlu0 %v6388, 12
        %v6485 = vpop.permute.xlu0 %6484
        %6486 = vrot.lane.b32.xlu0 %v6389, 12
        %v6487 = vpop.permute.xlu0 %6486
        %6488 = vrot.lane.b32.xlu0 %v6390, 12
        %v6489 = vpop.permute.xlu0 %6488
        %6490 = vrot.lane.b32.xlu0 %v6391, 12
        %v6491 = vpop.permute.xlu0 %6490
        %6492 = vrot.lane.b32.xlu0 %v6392, 12
        %v6493 = vpop.permute.xlu0 %6492
        %6494 = vrot.lane.b32.xlu0 %v6393, 12
        %v6495 = vpop.permute.xlu0 %6494
        %6496 = vrot.lane.b32.xlu0 %v6394, 12
        %v6497 = vpop.permute.xlu0 %6496
        %6498 = vrot.lane.b32.xlu0 %v6395, 12
        %v6499 = vpop.permute.xlu0 %6498
        %6500 = vrot.lane.b32.xlu0 %v6396, 12
        %v6501 = vpop.permute.xlu0 %6500
        %6502 = vrot.lane.b32.xlu0 %v6397, 12
        %v6503 = vpop.permute.xlu0 %6502
        %6504 = vrot.lane.b32.xlu0 %v6398, 12
        %v6505 = vpop.permute.xlu0 %6504
        %6506 = vrot.lane.b32.xlu0 %v6399, 12
        %v6507 = vpop.permute.xlu0 %6506
        %vm6544 = vcmask 130144
        %6545 = vst.msk [vmem:[#allocation4] sm:$0xff] %vm6544, %v6437
        %6546 = vst.msk [vmem:[#allocation4 + $0x8] sm:$0xff] %vm6544, %v6439
        %6547 = vst.msk [vmem:[#allocation4 + $0x10] sm:$0xff] %vm6544, %v6441
        %6548 = vst.msk [vmem:[#allocation4 + $0x18] sm:$0xff] %vm6544, %v6443
        %6549 = vst.msk [vmem:[#allocation4 + $0x20] sm:$0xff] %vm6544, %v6445
        %6550 = vst.msk [vmem:[#allocation4 + $0x28] sm:$0xff] %vm6544, %v6447
        %6551 = vst.msk [vmem:[#allocation4 + $0x30] sm:$0xff] %vm6544, %v6449
        %6552 = vst.msk [vmem:[#allocation4 + $0x38] sm:$0xff] %vm6544, %v6451
        %6553 = vst.msk [vmem:[#allocation4 + $0x40] sm:$0xff] %vm6544, %v6453
        %6554 = vst.msk [vmem:[#allocation4 + $0x48] sm:$0xff] %vm6544, %v6455
        %6555 = vst.msk [vmem:[#allocation4 + $0x50] sm:$0xff] %vm6544, %v6457
        %6556 = vst.msk [vmem:[#allocation4 + $0x58] sm:$0xff] %vm6544, %v6459
        %6557 = vst.msk [vmem:[#allocation4 + $0x60] sm:$0xff] %vm6544, %v6461
        %6558 = vst.msk [vmem:[#allocation4 + $0x68] sm:$0xff] %vm6544, %v6463
        %6559 = vst.msk [vmem:[#allocation4 + $0x70] sm:$0xff] %vm6544, %v6465
        %6560 = vst.msk [vmem:[#allocation4 + $0x78] sm:$0xff] %vm6544, %v6467
        %6561 = vst.msk [vmem:[#allocation4 + $0x80] sm:$0xff] %vm6544, %v6469
        %6562 = vst.msk [vmem:[#allocation4 + $0x88] sm:$0xff] %vm6544, %v6471
        %6563 = vst.msk [vmem:[#allocation4 + $0x90] sm:$0xff] %vm6544, %v6473
        %6564 = vst.msk [vmem:[#allocation4 + $0x98] sm:$0xff] %vm6544, %v6475
        %6565 = vst.msk [vmem:[#allocation4 + $0xa0] sm:$0xff] %vm6544, %v6477
        %6566 = vst.msk [vmem:[#allocation4 + $0xa8] sm:$0xff] %vm6544, %v6479
        %6567 = vst.msk [vmem:[#allocation4 + $0xb0] sm:$0xff] %vm6544, %v6481
        %6568 = vst.msk [vmem:[#allocation4 + $0xb8] sm:$0xff] %vm6544, %v6483
        %6569 = vst.msk [vmem:[#allocation4 + $0xc0] sm:$0xff] %vm6544, %v6485
        %6570 = vst.msk [vmem:[#allocation4 + $0xc8] sm:$0xff] %vm6544, %v6487
        %6571 = vst.msk [vmem:[#allocation4 + $0xd0] sm:$0xff] %vm6544, %v6489
        %6572 = vst.msk [vmem:[#allocation4 + $0xd8] sm:$0xff] %vm6544, %v6491
        %6573 = vst.msk [vmem:[#allocation4 + $0xe0] sm:$0xff] %vm6544, %v6493
        %6574 = vst.msk [vmem:[#allocation4 + $0xe8] sm:$0xff] %vm6544, %v6495
        %6575 = vst.msk [vmem:[#allocation4 + $0xf0] sm:$0xff] %vm6544, %v6497
        %6576 = vst.msk [vmem:[#allocation4 + $0xf8] sm:$0xff] %vm6544, %v6499
        %6577 = vst.msk [vmem:[#allocation4 + $0x100] sm:$0xff] %vm6544, %v6501
        %6578 = vst.msk [vmem:[#allocation4 + $0x108] sm:$0xff] %vm6544, %v6503
        %6579 = vst.msk [vmem:[#allocation4 + $0x110] sm:$0xff] %vm6544, %v6505
        %6580 = vst.msk [vmem:[#allocation4 + $0x118] sm:$0xff] %vm6544, %v6507
        %v6581 = vld [vmem:[#allocation3] sm:$0xff]
        %v6582 = vld [vmem:[#allocation3 + $0x8] sm:$0xf]
        %v6585 = vcombine.low %v6581, %v6581
        %v6586 = vcombine.low %v6582, %v6582
        %6587 = vrot.lane.b32.xlu0 %v6585, 110
        %v6588 = vpop.permute.xlu0 %6587
        %6589 = vrot.lane.b32.xlu0 %v6581, 110
        %v6590 = vpop.permute.xlu0 %6589
        %6591 = vrot.lane.b32.xlu0 %v6586, 110
        %v6592 = vpop.permute.xlu0 %6591
        %vm6593 = vcmask 900096
        %v6594 = vsel %vm6593, %v6588, %v6590
        %v6595 = vsel %vm6593, %v6590, %v6592
        %6599 = vst [vmem:[#allocation5 + $0x18] sm:$0xf0] %v6594
        %6600 = vst [vmem:[#allocation5 + $0x20] sm:$0xf0] %v6595
        %6601 = vst.msk [vmem:[#allocation5 + $0x28] sm:$0xf0] %vm6125, %v6592
        %v6602 = vld [vmem:[#allocation2 + $0x13] sm:$0xff]
        %v6603 = vld [vmem:[#allocation2 + $0x1b] sm:$0xff]
        %v6604 = vld [vmem:[#allocation2 + $0x23] sm:$0xff]
        %v6605 = vld [vmem:[#allocation2 + $0x2b] sm:$0xff]
        %v6606 = vld [vmem:[#allocation2 + $0x33] sm:$0xff]
        %v6607 = vld [vmem:[#allocation2 + $0x3b] sm:$0xff]
        %v6608 = vld [vmem:[#allocation2 + $0x43] sm:$0xff]
        %v6609 = vld [vmem:[#allocation2 + $0x4b] sm:$0xff]
        %v6610 = vld [vmem:[#allocation2 + $0x53] sm:$0xff]
        %v6611 = vld [vmem:[#allocation2 + $0x5b] sm:$0xff]
        %v6612 = vld [vmem:[#allocation2 + $0x63] sm:$0xff]
        %v6613 = vld [vmem:[#allocation2 + $0x6b] sm:$0xff]
        %v6614 = vld [vmem:[#allocation2 + $0x73] sm:$0xff]
        %v6615 = vld [vmem:[#allocation2 + $0x7b] sm:$0xff]
        %v6616 = vld [vmem:[#allocation2 + $0x83] sm:$0xff]
        %v6617 = vld [vmem:[#allocation2 + $0x8b] sm:$0xff]
        %v6618 = vld [vmem:[#allocation2 + $0x93] sm:$0xff]
        %v6619 = vld [vmem:[#allocation2 + $0x9b] sm:$0xff]
        %v6620 = vld [vmem:[#allocation2 + $0xa3] sm:$0xff]
        %v6621 = vld [vmem:[#allocation2 + $0xab] sm:$0xff]
        %v6622 = vld [vmem:[#allocation2 + $0xb3] sm:$0xff]
        %v6623 = vld [vmem:[#allocation2 + $0xbb] sm:$0xff]
        %v6624 = vld [vmem:[#allocation2 + $0xc3] sm:$0xff]
        %v6625 = vld [vmem:[#allocation2 + $0xcb] sm:$0xff]
        %v6626 = vld [vmem:[#allocation2 + $0xd3] sm:$0xff]
        %v6627 = vld [vmem:[#allocation2 + $0xdb] sm:$0xff]
        %v6628 = vld [vmem:[#allocation2 + $0xe3] sm:$0xff]
        %v6629 = vld [vmem:[#allocation2 + $0xeb] sm:$0xff]
        %v6630 = vld [vmem:[#allocation2 + $0xf3] sm:$0xff]
        %v6631 = vld [vmem:[#allocation2 + $0xfb] sm:$0xff]
        %v6632 = vld [vmem:[#allocation2 + $0x103] sm:$0xff]
        %v6633 = vld [vmem:[#allocation2 + $0x10b] sm:$0xff]
        %v6634 = vld [vmem:[#allocation2 + $0x113] sm:$0xff]
        %v6635 = vld [vmem:[#allocation2 + $0x11b] sm:$0xff]
        %v6636 = vld [vmem:[#allocation2 + $0x123] sm:$0xff]
        %v6637 = vld [vmem:[#allocation2 + $0x12b] sm:$0xff]
        %6674 = vrot.lane.b32.xlu0 %v6602, 16
        %v6675 = vpop.permute.xlu0 %6674
        %6676 = vrot.lane.b32.xlu0 %v6603, 16
        %v6677 = vpop.permute.xlu0 %6676
        %6678 = vrot.lane.b32.xlu0 %v6604, 16
        %v6679 = vpop.permute.xlu0 %6678
        %6680 = vrot.lane.b32.xlu0 %v6605, 16
        %v6681 = vpop.permute.xlu0 %6680
        %6682 = vrot.lane.b32.xlu0 %v6606, 16
        %v6683 = vpop.permute.xlu0 %6682
        %6684 = vrot.lane.b32.xlu0 %v6607, 16
        %v6685 = vpop.permute.xlu0 %6684
        %6686 = vrot.lane.b32.xlu0 %v6608, 16
        %v6687 = vpop.permute.xlu0 %6686
        %6688 = vrot.lane.b32.xlu0 %v6609, 16
        %v6689 = vpop.permute.xlu0 %6688
        %6690 = vrot.lane.b32.xlu0 %v6610, 16
        %v6691 = vpop.permute.xlu0 %6690
        %6692 = vrot.lane.b32.xlu0 %v6611, 16
        %v6693 = vpop.permute.xlu0 %6692
        %6694 = vrot.lane.b32.xlu0 %v6612, 16
        %v6695 = vpop.permute.xlu0 %6694
        %6696 = vrot.lane.b32.xlu0 %v6613, 16
        %v6697 = vpop.permute.xlu0 %6696
        %6698 = vrot.lane.b32.xlu0 %v6614, 16
        %v6699 = vpop.permute.xlu0 %6698
        %6700 = vrot.lane.b32.xlu0 %v6615, 16
        %v6701 = vpop.permute.xlu0 %6700
        %6702 = vrot.lane.b32.xlu0 %v6616, 16
        %v6703 = vpop.permute.xlu0 %6702
        %6704 = vrot.lane.b32.xlu0 %v6617, 16
        %v6705 = vpop.permute.xlu0 %6704
        %6706 = vrot.lane.b32.xlu0 %v6618, 16
        %v6707 = vpop.permute.xlu0 %6706
        %6708 = vrot.lane.b32.xlu0 %v6619, 16
        %v6709 = vpop.permute.xlu0 %6708
        %6710 = vrot.lane.b32.xlu0 %v6620, 16
        %v6711 = vpop.permute.xlu0 %6710
        %6712 = vrot.lane.b32.xlu0 %v6621, 16
        %v6713 = vpop.permute.xlu0 %6712
        %6714 = vrot.lane.b32.xlu0 %v6622, 16
        %v6715 = vpop.permute.xlu0 %6714
        %6716 = vrot.lane.b32.xlu0 %v6623, 16
        %v6717 = vpop.permute.xlu0 %6716
        %6718 = vrot.lane.b32.xlu0 %v6624, 16
        %v6719 = vpop.permute.xlu0 %6718
        %6720 = vrot.lane.b32.xlu0 %v6625, 16
        %v6721 = vpop.permute.xlu0 %6720
        %6722 = vrot.lane.b32.xlu0 %v6626, 16
        %v6723 = vpop.permute.xlu0 %6722
        %6724 = vrot.lane.b32.xlu0 %v6627, 16
        %v6725 = vpop.permute.xlu0 %6724
        %6726 = vrot.lane.b32.xlu0 %v6628, 16
        %v6727 = vpop.permute.xlu0 %6726
        %6728 = vrot.lane.b32.xlu0 %v6629, 16
        %v6729 = vpop.permute.xlu0 %6728
        %6730 = vrot.lane.b32.xlu0 %v6630, 16
        %v6731 = vpop.permute.xlu0 %6730
        %6732 = vrot.lane.b32.xlu0 %v6631, 16
        %v6733 = vpop.permute.xlu0 %6732
        %6734 = vrot.lane.b32.xlu0 %v6632, 16
        %v6735 = vpop.permute.xlu0 %6734
        %6736 = vrot.lane.b32.xlu0 %v6633, 16
        %v6737 = vpop.permute.xlu0 %6736
        %6738 = vrot.lane.b32.xlu0 %v6634, 16
        %v6739 = vpop.permute.xlu0 %6738
        %6740 = vrot.lane.b32.xlu0 %v6635, 16
        %v6741 = vpop.permute.xlu0 %6740
        %6742 = vrot.lane.b32.xlu0 %v6636, 16
        %v6743 = vpop.permute.xlu0 %6742
        %6744 = vrot.lane.b32.xlu0 %v6637, 16
        %v6745 = vpop.permute.xlu0 %6744
        %vm6782 = vcmask 162944
        %6783 = vst.msk [vmem:[#allocation4] sm:$0xff] %vm6782, %v6675
        %6784 = vst.msk [vmem:[#allocation4 + $0x8] sm:$0xff] %vm6782, %v6677
        %6785 = vst.msk [vmem:[#allocation4 + $0x10] sm:$0xff] %vm6782, %v6679
        %6786 = vst.msk [vmem:[#allocation4 + $0x18] sm:$0xff] %vm6782, %v6681
        %6787 = vst.msk [vmem:[#allocation4 + $0x20] sm:$0xff] %vm6782, %v6683
        %6788 = vst.msk [vmem:[#allocation4 + $0x28] sm:$0xff] %vm6782, %v6685
        %6789 = vst.msk [vmem:[#allocation4 + $0x30] sm:$0xff] %vm6782, %v6687
        %6790 = vst.msk [vmem:[#allocation4 + $0x38] sm:$0xff] %vm6782, %v6689
        %6791 = vst.msk [vmem:[#allocation4 + $0x40] sm:$0xff] %vm6782, %v6691
        %6792 = vst.msk [vmem:[#allocation4 + $0x48] sm:$0xff] %vm6782, %v6693
        %6793 = vst.msk [vmem:[#allocation4 + $0x50] sm:$0xff] %vm6782, %v6695
        %6794 = vst.msk [vmem:[#allocation4 + $0x58] sm:$0xff] %vm6782, %v6697
        %6795 = vst.msk [vmem:[#allocation4 + $0x60] sm:$0xff] %vm6782, %v6699
        %6796 = vst.msk [vmem:[#allocation4 + $0x68] sm:$0xff] %vm6782, %v6701
        %6797 = vst.msk [vmem:[#allocation4 + $0x70] sm:$0xff] %vm6782, %v6703
        %6798 = vst.msk [vmem:[#allocation4 + $0x78] sm:$0xff] %vm6782, %v6705
        %6799 = vst.msk [vmem:[#allocation4 + $0x80] sm:$0xff] %vm6782, %v6707
        %6800 = vst.msk [vmem:[#allocation4 + $0x88] sm:$0xff] %vm6782, %v6709
        %6801 = vst.msk [vmem:[#allocation4 + $0x90] sm:$0xff] %vm6782, %v6711
        %6802 = vst.msk [vmem:[#allocation4 + $0x98] sm:$0xff] %vm6782, %v6713
        %6803 = vst.msk [vmem:[#allocation4 + $0xa0] sm:$0xff] %vm6782, %v6715
        %6804 = vst.msk [vmem:[#allocation4 + $0xa8] sm:$0xff] %vm6782, %v6717
        %6805 = vst.msk [vmem:[#allocation4 + $0xb0] sm:$0xff] %vm6782, %v6719
        %6806 = vst.msk [vmem:[#allocation4 + $0xb8] sm:$0xff] %vm6782, %v6721
        %6807 = vst.msk [vmem:[#allocation4 + $0xc0] sm:$0xff] %vm6782, %v6723
        %6808 = vst.msk [vmem:[#allocation4 + $0xc8] sm:$0xff] %vm6782, %v6725
        %6809 = vst.msk [vmem:[#allocation4 + $0xd0] sm:$0xff] %vm6782, %v6727
        %6810 = vst.msk [vmem:[#allocation4 + $0xd8] sm:$0xff] %vm6782, %v6729
        %6811 = vst.msk [vmem:[#allocation4 + $0xe0] sm:$0xff] %vm6782, %v6731
        %6812 = vst.msk [vmem:[#allocation4 + $0xe8] sm:$0xff] %vm6782, %v6733
        %6813 = vst.msk [vmem:[#allocation4 + $0xf0] sm:$0xff] %vm6782, %v6735
        %6814 = vst.msk [vmem:[#allocation4 + $0xf8] sm:$0xff] %vm6782, %v6737
        %6815 = vst.msk [vmem:[#allocation4 + $0x100] sm:$0xff] %vm6782, %v6739
        %6816 = vst.msk [vmem:[#allocation4 + $0x108] sm:$0xff] %vm6782, %v6741
        %6817 = vst.msk [vmem:[#allocation4 + $0x110] sm:$0xff] %vm6782, %v6743
        %6818 = vst.msk [vmem:[#allocation4 + $0x118] sm:$0xff] %vm6782, %v6745
        %v6819 = vld [vmem:[#allocation3] sm:$0xff]
        %v6820 = vld [vmem:[#allocation3 + $0x8] sm:$0xf]
        %v6823 = vcombine.high %v6819, %v6819
        %6824 = vrot.lane.b32.xlu0 %v6819, 109
        %v6825 = vpop.permute.xlu0 %6824
        %6826 = vrot.lane.b32.xlu0 %v6823, 109
        %v6827 = vpop.permute.xlu0 %6826
        %6828 = vrot.lane.b32.xlu0 %v6820, 109
        %v6829 = vpop.permute.xlu0 %6828
        %vm6830 = vcmask 891904
        %v6831 = vsel %vm6830, %v6825, %v6827
        %v6832 = vsel %vm6830, %v6827, %v6829
        %6836 = vst [vmem:[#allocation5 + $0x30] sm:$0xf] %v6831
        %6837 = vst [vmem:[#allocation5 + $0x38] sm:$0xf] %v6832
        %6838 = vst.msk [vmem:[#allocation5 + $0x40] sm:$0xf] %vm5887, %v6829
        %v6839 = vld [vmem:[#allocation2 + $0x14] sm:$0xff]
        %v6840 = vld [vmem:[#allocation2 + $0x1c] sm:$0xff]
        %v6841 = vld [vmem:[#allocation2 + $0x24] sm:$0xff]
        %v6842 = vld [vmem:[#allocation2 + $0x2c] sm:$0xff]
        %v6843 = vld [vmem:[#allocation2 + $0x34] sm:$0xff]
        %v6844 = vld [vmem:[#allocation2 + $0x3c] sm:$0xff]
        %v6845 = vld [vmem:[#allocation2 + $0x44] sm:$0xff]
        %v6846 = vld [vmem:[#allocation2 + $0x4c] sm:$0xff]
        %v6847 = vld [vmem:[#allocation2 + $0x54] sm:$0xff]
        %v6848 = vld [vmem:[#allocation2 + $0x5c] sm:$0xff]
        %v6849 = vld [vmem:[#allocation2 + $0x64] sm:$0xff]
        %v6850 = vld [vmem:[#allocation2 + $0x6c] sm:$0xff]
        %v6851 = vld [vmem:[#allocation2 + $0x74] sm:$0xff]
        %v6852 = vld [vmem:[#allocation2 + $0x7c] sm:$0xff]
        %v6853 = vld [vmem:[#allocation2 + $0x84] sm:$0xff]
        %v6854 = vld [vmem:[#allocation2 + $0x8c] sm:$0xff]
        %v6855 = vld [vmem:[#allocation2 + $0x94] sm:$0xff]
        %v6856 = vld [vmem:[#allocation2 + $0x9c] sm:$0xff]
        %v6857 = vld [vmem:[#allocation2 + $0xa4] sm:$0xff]
        %v6858 = vld [vmem:[#allocation2 + $0xac] sm:$0xff]
        %v6859 = vld [vmem:[#allocation2 + $0xb4] sm:$0xff]
        %v6860 = vld [vmem:[#allocation2 + $0xbc] sm:$0xff]
        %v6861 = vld [vmem:[#allocation2 + $0xc4] sm:$0xff]
        %v6862 = vld [vmem:[#allocation2 + $0xcc] sm:$0xff]
        %v6863 = vld [vmem:[#allocation2 + $0xd4] sm:$0xff]
        %v6864 = vld [vmem:[#allocation2 + $0xdc] sm:$0xff]
        %v6865 = vld [vmem:[#allocation2 + $0xe4] sm:$0xff]
        %v6866 = vld [vmem:[#allocation2 + $0xec] sm:$0xff]
        %v6867 = vld [vmem:[#allocation2 + $0xf4] sm:$0xff]
        %v6868 = vld [vmem:[#allocation2 + $0xfc] sm:$0xff]
        %v6869 = vld [vmem:[#allocation2 + $0x104] sm:$0xff]
        %v6870 = vld [vmem:[#allocation2 + $0x10c] sm:$0xff]
        %v6871 = vld [vmem:[#allocation2 + $0x114] sm:$0xff]
        %v6872 = vld [vmem:[#allocation2 + $0x11c] sm:$0xff]
        %v6873 = vld [vmem:[#allocation2 + $0x124] sm:$0xff]
        %v6874 = vld [vmem:[#allocation2 + $0x12c] sm:$0xff]
        %6911 = vrot.lane.b32.xlu0 %v6839, 20
        %v6912 = vpop.permute.xlu0 %6911
        %6913 = vrot.lane.b32.xlu0 %v6840, 20
        %v6914 = vpop.permute.xlu0 %6913
        %6915 = vrot.lane.b32.xlu0 %v6841, 20
        %v6916 = vpop.permute.xlu0 %6915
        %6917 = vrot.lane.b32.xlu0 %v6842, 20
        %v6918 = vpop.permute.xlu0 %6917
        %6919 = vrot.lane.b32.xlu0 %v6843, 20
        %v6920 = vpop.permute.xlu0 %6919
        %6921 = vrot.lane.b32.xlu0 %v6844, 20
        %v6922 = vpop.permute.xlu0 %6921
        %6923 = vrot.lane.b32.xlu0 %v6845, 20
        %v6924 = vpop.permute.xlu0 %6923
        %6925 = vrot.lane.b32.xlu0 %v6846, 20
        %v6926 = vpop.permute.xlu0 %6925
        %6927 = vrot.lane.b32.xlu0 %v6847, 20
        %v6928 = vpop.permute.xlu0 %6927
        %6929 = vrot.lane.b32.xlu0 %v6848, 20
        %v6930 = vpop.permute.xlu0 %6929
        %6931 = vrot.lane.b32.xlu0 %v6849, 20
        %v6932 = vpop.permute.xlu0 %6931
        %6933 = vrot.lane.b32.xlu0 %v6850, 20
        %v6934 = vpop.permute.xlu0 %6933
        %6935 = vrot.lane.b32.xlu0 %v6851, 20
        %v6936 = vpop.permute.xlu0 %6935
        %6937 = vrot.lane.b32.xlu0 %v6852, 20
        %v6938 = vpop.permute.xlu0 %6937
        %6939 = vrot.lane.b32.xlu0 %v6853, 20
        %v6940 = vpop.permute.xlu0 %6939
        %6941 = vrot.lane.b32.xlu0 %v6854, 20
        %v6942 = vpop.permute.xlu0 %6941
        %6943 = vrot.lane.b32.xlu0 %v6855, 20
        %v6944 = vpop.permute.xlu0 %6943
        %6945 = vrot.lane.b32.xlu0 %v6856, 20
        %v6946 = vpop.permute.xlu0 %6945
        %6947 = vrot.lane.b32.xlu0 %v6857, 20
        %v6948 = vpop.permute.xlu0 %6947
        %6949 = vrot.lane.b32.xlu0 %v6858, 20
        %v6950 = vpop.permute.xlu0 %6949
        %6951 = vrot.lane.b32.xlu0 %v6859, 20
        %v6952 = vpop.permute.xlu0 %6951
        %6953 = vrot.lane.b32.xlu0 %v6860, 20
        %v6954 = vpop.permute.xlu0 %6953
        %6955 = vrot.lane.b32.xlu0 %v6861, 20
        %v6956 = vpop.permute.xlu0 %6955
        %6957 = vrot.lane.b32.xlu0 %v6862, 20
        %v6958 = vpop.permute.xlu0 %6957
        %6959 = vrot.lane.b32.xlu0 %v6863, 20
        %v6960 = vpop.permute.xlu0 %6959
        %6961 = vrot.lane.b32.xlu0 %v6864, 20
        %v6962 = vpop.permute.xlu0 %6961
        %6963 = vrot.lane.b32.xlu0 %v6865, 20
        %v6964 = vpop.permute.xlu0 %6963
        %6965 = vrot.lane.b32.xlu0 %v6866, 20
        %v6966 = vpop.permute.xlu0 %6965
        %6967 = vrot.lane.b32.xlu0 %v6867, 20
        %v6968 = vpop.permute.xlu0 %6967
        %6969 = vrot.lane.b32.xlu0 %v6868, 20
        %v6970 = vpop.permute.xlu0 %6969
        %6971 = vrot.lane.b32.xlu0 %v6869, 20
        %v6972 = vpop.permute.xlu0 %6971
        %6973 = vrot.lane.b32.xlu0 %v6870, 20
        %v6974 = vpop.permute.xlu0 %6973
        %6975 = vrot.lane.b32.xlu0 %v6871, 20
        %v6976 = vpop.permute.xlu0 %6975
        %6977 = vrot.lane.b32.xlu0 %v6872, 20
        %v6978 = vpop.permute.xlu0 %6977
        %6979 = vrot.lane.b32.xlu0 %v6873, 20
        %v6980 = vpop.permute.xlu0 %6979
        %6981 = vrot.lane.b32.xlu0 %v6874, 20
        %v6982 = vpop.permute.xlu0 %6981
        %vm7019 = vcmask 195744
        %7020 = vst.msk [vmem:[#allocation4] sm:$0xff] %vm7019, %v6912
        %7021 = vst.msk [vmem:[#allocation4 + $0x8] sm:$0xff] %vm7019, %v6914
        %7022 = vst.msk [vmem:[#allocation4 + $0x10] sm:$0xff] %vm7019, %v6916
        %7023 = vst.msk [vmem:[#allocation4 + $0x18] sm:$0xff] %vm7019, %v6918
        %7024 = vst.msk [vmem:[#allocation4 + $0x20] sm:$0xff] %vm7019, %v6920
        %7025 = vst.msk [vmem:[#allocation4 + $0x28] sm:$0xff] %vm7019, %v6922
        %7026 = vst.msk [vmem:[#allocation4 + $0x30] sm:$0xff] %vm7019, %v6924
        %7027 = vst.msk [vmem:[#allocation4 + $0x38] sm:$0xff] %vm7019, %v6926
        %7028 = vst.msk [vmem:[#allocation4 + $0x40] sm:$0xff] %vm7019, %v6928
        %7029 = vst.msk [vmem:[#allocation4 + $0x48] sm:$0xff] %vm7019, %v6930
        %7030 = vst.msk [vmem:[#allocation4 + $0x50] sm:$0xff] %vm7019, %v6932
        %7031 = vst.msk [vmem:[#allocation4 + $0x58] sm:$0xff] %vm7019, %v6934
        %7032 = vst.msk [vmem:[#allocation4 + $0x60] sm:$0xff] %vm7019, %v6936
        %7033 = vst.msk [vmem:[#allocation4 + $0x68] sm:$0xff] %vm7019, %v6938
        %7034 = vst.msk [vmem:[#allocation4 + $0x70] sm:$0xff] %vm7019, %v6940
        %7035 = vst.msk [vmem:[#allocation4 + $0x78] sm:$0xff] %vm7019, %v6942
        %7036 = vst.msk [vmem:[#allocation4 + $0x80] sm:$0xff] %vm7019, %v6944
        %7037 = vst.msk [vmem:[#allocation4 + $0x88] sm:$0xff] %vm7019, %v6946
        %7038 = vst.msk [vmem:[#allocation4 + $0x90] sm:$0xff] %vm7019, %v6948
        %7039 = vst.msk [vmem:[#allocation4 + $0x98] sm:$0xff] %vm7019, %v6950
        %7040 = vst.msk [vmem:[#allocation4 + $0xa0] sm:$0xff] %vm7019, %v6952
        %7041 = vst.msk [vmem:[#allocation4 + $0xa8] sm:$0xff] %vm7019, %v6954
        %7042 = vst.msk [vmem:[#allocation4 + $0xb0] sm:$0xff] %vm7019, %v6956
        %7043 = vst.msk [vmem:[#allocation4 + $0xb8] sm:$0xff] %vm7019, %v6958
        %7044 = vst.msk [vmem:[#allocation4 + $0xc0] sm:$0xff] %vm7019, %v6960
        %7045 = vst.msk [vmem:[#allocation4 + $0xc8] sm:$0xff] %vm7019, %v6962
        %7046 = vst.msk [vmem:[#allocation4 + $0xd0] sm:$0xff] %vm7019, %v6964
        %7047 = vst.msk [vmem:[#allocation4 + $0xd8] sm:$0xff] %vm7019, %v6966
        %7048 = vst.msk [vmem:[#allocation4 + $0xe0] sm:$0xff] %vm7019, %v6968
        %7049 = vst.msk [vmem:[#allocation4 + $0xe8] sm:$0xff] %vm7019, %v6970
        %7050 = vst.msk [vmem:[#allocation4 + $0xf0] sm:$0xff] %vm7019, %v6972
        %7051 = vst.msk [vmem:[#allocation4 + $0xf8] sm:$0xff] %vm7019, %v6974
        %7052 = vst.msk [vmem:[#allocation4 + $0x100] sm:$0xff] %vm7019, %v6976
        %7053 = vst.msk [vmem:[#allocation4 + $0x108] sm:$0xff] %vm7019, %v6978
        %7054 = vst.msk [vmem:[#allocation4 + $0x110] sm:$0xff] %vm7019, %v6980
        %7055 = vst.msk [vmem:[#allocation4 + $0x118] sm:$0xff] %vm7019, %v6982
        %v7056 = vld [vmem:[#allocation3] sm:$0xff]
        %v7057 = vld [vmem:[#allocation3 + $0x8] sm:$0xf]
        %v7060 = vcombine.low %v7056, %v7056
        %v7061 = vcombine.low %v7057, %v7057
        %7062 = vrot.lane.b32.xlu0 %v7060, 108
        %v7063 = vpop.permute.xlu0 %7062
        %7064 = vrot.lane.b32.xlu0 %v7056, 108
        %v7065 = vpop.permute.xlu0 %7064
        %7066 = vrot.lane.b32.xlu0 %v7061, 108
        %v7067 = vpop.permute.xlu0 %7066
        %vm7068 = vcmask 883712
        %v7069 = vsel %vm7068, %v7063, %v7065
        %v7070 = vsel %vm7068, %v7065, %v7067
        %7074 = vst [vmem:[#allocation5 + $0x30] sm:$0xf0] %v7069
        %7075 = vst [vmem:[#allocation5 + $0x38] sm:$0xf0] %v7070
        %7076 = vst.msk [vmem:[#allocation5 + $0x40] sm:$0xf0] %vm6125, %v7067
        %v7077 = vld [vmem:[#allocation2 + $0x24] sm:$0xff]
        %v7078 = vld [vmem:[#allocation2 + $0x2c] sm:$0xff]
        %v7079 = vld [vmem:[#allocation2 + $0x34] sm:$0xff]
        %v7080 = vld [vmem:[#allocation2 + $0x3c] sm:$0xff]
        %v7081 = vld [vmem:[#allocation2 + $0x44] sm:$0xff]
        %v7082 = vld [vmem:[#allocation2 + $0x4c] sm:$0xff]
        %v7083 = vld [vmem:[#allocation2 + $0x54] sm:$0xff]
        %v7084 = vld [vmem:[#allocation2 + $0x5c] sm:$0xff]
        %v7085 = vld [vmem:[#allocation2 + $0x64] sm:$0xff]
        %v7086 = vld [vmem:[#allocation2 + $0x6c] sm:$0xff]
        %v7087 = vld [vmem:[#allocation2 + $0x74] sm:$0xff]
        %v7088 = vld [vmem:[#allocation2 + $0x7c] sm:$0xff]
        %v7089 = vld [vmem:[#allocation2 + $0x84] sm:$0xff]
        %v7090 = vld [vmem:[#allocation2 + $0x8c] sm:$0xff]
        %v7091 = vld [vmem:[#allocation2 + $0x94] sm:$0xff]
        %v7092 = vld [vmem:[#allocation2 + $0x9c] sm:$0xff]
        %v7093 = vld [vmem:[#allocation2 + $0xa4] sm:$0xff]
        %v7094 = vld [vmem:[#allocation2 + $0xac] sm:$0xff]
        %v7095 = vld [vmem:[#allocation2 + $0xb4] sm:$0xff]
        %v7096 = vld [vmem:[#allocation2 + $0xbc] sm:$0xff]
        %v7097 = vld [vmem:[#allocation2 + $0xc4] sm:$0xff]
        %v7098 = vld [vmem:[#allocation2 + $0xcc] sm:$0xff]
        %v7099 = vld [vmem:[#allocation2 + $0xd4] sm:$0xff]
        %v7100 = vld [vmem:[#allocation2 + $0xdc] sm:$0xff]
        %v7101 = vld [vmem:[#allocation2 + $0xe4] sm:$0xff]
        %v7102 = vld [vmem:[#allocation2 + $0xec] sm:$0xff]
        %v7103 = vld [vmem:[#allocation2 + $0xf4] sm:$0xff]
        %v7104 = vld [vmem:[#allocation2 + $0xfc] sm:$0xff]
        %v7105 = vld [vmem:[#allocation2 + $0x104] sm:$0xff]
        %v7106 = vld [vmem:[#allocation2 + $0x10c] sm:$0xff]
        %v7107 = vld [vmem:[#allocation2 + $0x114] sm:$0xff]
        %v7108 = vld [vmem:[#allocation2 + $0x11c] sm:$0xff]
        %v7109 = vld [vmem:[#allocation2 + $0x124] sm:$0xff]
        %v7110 = vld [vmem:[#allocation2 + $0x12c] sm:$0xff]
        %v7111 = vld [vmem:[#allocation2 + $0x134] sm:$0xff]
        %v7112 = vld [vmem:[#allocation2 + $0x13c] sm:$0xff]
        %7149 = vrot.lane.b32.xlu0 %v7077, 24
        %v7150 = vpop.permute.xlu0 %7149
        %7151 = vrot.lane.b32.xlu0 %v7078, 24
        %v7152 = vpop.permute.xlu0 %7151
        %7153 = vrot.lane.b32.xlu0 %v7079, 24
        %v7154 = vpop.permute.xlu0 %7153
        %7155 = vrot.lane.b32.xlu0 %v7080, 24
        %v7156 = vpop.permute.xlu0 %7155
        %7157 = vrot.lane.b32.xlu0 %v7081, 24
        %v7158 = vpop.permute.xlu0 %7157
        %7159 = vrot.lane.b32.xlu0 %v7082, 24
        %v7160 = vpop.permute.xlu0 %7159
        %7161 = vrot.lane.b32.xlu0 %v7083, 24
        %v7162 = vpop.permute.xlu0 %7161
        %7163 = vrot.lane.b32.xlu0 %v7084, 24
        %v7164 = vpop.permute.xlu0 %7163
        %7165 = vrot.lane.b32.xlu0 %v7085, 24
        %v7166 = vpop.permute.xlu0 %7165
        %7167 = vrot.lane.b32.xlu0 %v7086, 24
        %v7168 = vpop.permute.xlu0 %7167
        %7169 = vrot.lane.b32.xlu0 %v7087, 24
        %v7170 = vpop.permute.xlu0 %7169
        %7171 = vrot.lane.b32.xlu0 %v7088, 24
        %v7172 = vpop.permute.xlu0 %7171
        %7173 = vrot.lane.b32.xlu0 %v7089, 24
        %v7174 = vpop.permute.xlu0 %7173
        %7175 = vrot.lane.b32.xlu0 %v7090, 24
        %v7176 = vpop.permute.xlu0 %7175
        %7177 = vrot.lane.b32.xlu0 %v7091, 24
        %v7178 = vpop.permute.xlu0 %7177
        %7179 = vrot.lane.b32.xlu0 %v7092, 24
        %v7180 = vpop.permute.xlu0 %7179
        %7181 = vrot.lane.b32.xlu0 %v7093, 24
        %v7182 = vpop.permute.xlu0 %7181
        %7183 = vrot.lane.b32.xlu0 %v7094, 24
        %v7184 = vpop.permute.xlu0 %7183
        %7185 = vrot.lane.b32.xlu0 %v7095, 24
        %v7186 = vpop.permute.xlu0 %7185
        %7187 = vrot.lane.b32.xlu0 %v7096, 24
        %v7188 = vpop.permute.xlu0 %7187
        %7189 = vrot.lane.b32.xlu0 %v7097, 24
        %v7190 = vpop.permute.xlu0 %7189
        %7191 = vrot.lane.b32.xlu0 %v7098, 24
        %v7192 = vpop.permute.xlu0 %7191
        %7193 = vrot.lane.b32.xlu0 %v7099, 24
        %v7194 = vpop.permute.xlu0 %7193
        %7195 = vrot.lane.b32.xlu0 %v7100, 24
        %v7196 = vpop.permute.xlu0 %7195
        %7197 = vrot.lane.b32.xlu0 %v7101, 24
        %v7198 = vpop.permute.xlu0 %7197
        %7199 = vrot.lane.b32.xlu0 %v7102, 24
        %v7200 = vpop.permute.xlu0 %7199
        %7201 = vrot.lane.b32.xlu0 %v7103, 24
        %v7202 = vpop.permute.xlu0 %7201
        %7203 = vrot.lane.b32.xlu0 %v7104, 24
        %v7204 = vpop.permute.xlu0 %7203
        %7205 = vrot.lane.b32.xlu0 %v7105, 24
        %v7206 = vpop.permute.xlu0 %7205
        %7207 = vrot.lane.b32.xlu0 %v7106, 24
        %v7208 = vpop.permute.xlu0 %7207
        %7209 = vrot.lane.b32.xlu0 %v7107, 24
        %v7210 = vpop.permute.xlu0 %7209
        %7211 = vrot.lane.b32.xlu0 %v7108, 24
        %v7212 = vpop.permute.xlu0 %7211
        %7213 = vrot.lane.b32.xlu0 %v7109, 24
        %v7214 = vpop.permute.xlu0 %7213
        %7215 = vrot.lane.b32.xlu0 %v7110, 24
        %v7216 = vpop.permute.xlu0 %7215
        %7217 = vrot.lane.b32.xlu0 %v7111, 24
        %v7218 = vpop.permute.xlu0 %7217
        %7219 = vrot.lane.b32.xlu0 %v7112, 24
        %v7220 = vpop.permute.xlu0 %7219
        %vm7257 = vcmask 228544
        %7258 = vst.msk [vmem:[#allocation4] sm:$0xff] %vm7257, %v7150
        %7259 = vst.msk [vmem:[#allocation4 + $0x8] sm:$0xff] %vm7257, %v7152
        %7260 = vst.msk [vmem:[#allocation4 + $0x10] sm:$0xff] %vm7257, %v7154
        %7261 = vst.msk [vmem:[#allocation4 + $0x18] sm:$0xff] %vm7257, %v7156
        %7262 = vst.msk [vmem:[#allocation4 + $0x20] sm:$0xff] %vm7257, %v7158
        %7263 = vst.msk [vmem:[#allocation4 + $0x28] sm:$0xff] %vm7257, %v7160
        %7264 = vst.msk [vmem:[#allocation4 + $0x30] sm:$0xff] %vm7257, %v7162
        %7265 = vst.msk [vmem:[#allocation4 + $0x38] sm:$0xff] %vm7257, %v7164
        %7266 = vst.msk [vmem:[#allocation4 + $0x40] sm:$0xff] %vm7257, %v7166
        %7267 = vst.msk [vmem:[#allocation4 + $0x48] sm:$0xff] %vm7257, %v7168
        %7268 = vst.msk [vmem:[#allocation4 + $0x50] sm:$0xff] %vm7257, %v7170
        %7269 = vst.msk [vmem:[#allocation4 + $0x58] sm:$0xff] %vm7257, %v7172
        %7270 = vst.msk [vmem:[#allocation4 + $0x60] sm:$0xff] %vm7257, %v7174
        %7271 = vst.msk [vmem:[#allocation4 + $0x68] sm:$0xff] %vm7257, %v7176
        %7272 = vst.msk [vmem:[#allocation4 + $0x70] sm:$0xff] %vm7257, %v7178
        %7273 = vst.msk [vmem:[#allocation4 + $0x78] sm:$0xff] %vm7257, %v7180
        %7274 = vst.msk [vmem:[#allocation4 + $0x80] sm:$0xff] %vm7257, %v7182
        %7275 = vst.msk [vmem:[#allocation4 + $0x88] sm:$0xff] %vm7257, %v7184
        %7276 = vst.msk [vmem:[#allocation4 + $0x90] sm:$0xff] %vm7257, %v7186
        %7277 = vst.msk [vmem:[#allocation4 + $0x98] sm:$0xff] %vm7257, %v7188
        %7278 = vst.msk [vmem:[#allocation4 + $0xa0] sm:$0xff] %vm7257, %v7190
        %7279 = vst.msk [vmem:[#allocation4 + $0xa8] sm:$0xff] %vm7257, %v7192
        %7280 = vst.msk [vmem:[#allocation4 + $0xb0] sm:$0xff] %vm7257, %v7194
        %7281 = vst.msk [vmem:[#allocation4 + $0xb8] sm:$0xff] %vm7257, %v7196
        %7282 = vst.msk [vmem:[#allocation4 + $0xc0] sm:$0xff] %vm7257, %v7198
        %7283 = vst.msk [vmem:[#allocation4 + $0xc8] sm:$0xff] %vm7257, %v7200
        %7284 = vst.msk [vmem:[#allocation4 + $0xd0] sm:$0xff] %vm7257, %v7202
        %7285 = vst.msk [vmem:[#allocation4 + $0xd8] sm:$0xff] %vm7257, %v7204
        %7286 = vst.msk [vmem:[#allocation4 + $0xe0] sm:$0xff] %vm7257, %v7206
        %7287 = vst.msk [vmem:[#allocation4 + $0xe8] sm:$0xff] %vm7257, %v7208
        %7288 = vst.msk [vmem:[#allocation4 + $0xf0] sm:$0xff] %vm7257, %v7210
        %7289 = vst.msk [vmem:[#allocation4 + $0xf8] sm:$0xff] %vm7257, %v7212
        %7290 = vst.msk [vmem:[#allocation4 + $0x100] sm:$0xff] %vm7257, %v7214
        %7291 = vst.msk [vmem:[#allocation4 + $0x108] sm:$0xff] %vm7257, %v7216
        %7292 = vst.msk [vmem:[#allocation4 + $0x110] sm:$0xff] %vm7257, %v7218
        %7293 = vst.msk [vmem:[#allocation4 + $0x118] sm:$0xff] %vm7257, %v7220
        %v7294 = vld [vmem:[#allocation3] sm:$0xff]
        %v7295 = vld [vmem:[#allocation3 + $0x8] sm:$0xf]
        %v7298 = vcombine.high %v7294, %v7294
        %7299 = vrot.lane.b32.xlu0 %v7294, 92
        %v7300 = vpop.permute.xlu0 %7299
        %7301 = vrot.lane.b32.xlu0 %v7298, 92
        %v7302 = vpop.permute.xlu0 %7301
        %7303 = vrot.lane.b32.xlu0 %v7295, 92
        %v7304 = vpop.permute.xlu0 %7303
        %vm7305 = vcmask 752640
        %v7306 = vsel %vm7305, %v7300, %v7302
        %v7307 = vsel %vm7305, %v7302, %v7304
        %7311 = vst [vmem:[#allocation5 + $0x48] sm:$0xf] %v7306
        %7312 = vst [vmem:[#allocation5 + $0x50] sm:$0xf] %v7307
        %7313 = vst.msk [vmem:[#allocation5 + $0x58] sm:$0xf] %vm5887, %v7304
        %v7314 = vld [vmem:[#allocation2 + $0x25] sm:$0xff]
        %v7315 = vld [vmem:[#allocation2 + $0x2d] sm:$0xff]
        %v7316 = vld [vmem:[#allocation2 + $0x35] sm:$0xff]
        %v7317 = vld [vmem:[#allocation2 + $0x3d] sm:$0xff]
        %v7318 = vld [vmem:[#allocation2 + $0x45] sm:$0xff]
        %v7319 = vld [vmem:[#allocation2 + $0x4d] sm:$0xff]
        %v7320 = vld [vmem:[#allocation2 + $0x55] sm:$0xff]
        %v7321 = vld [vmem:[#allocation2 + $0x5d] sm:$0xff]
        %v7322 = vld [vmem:[#allocation2 + $0x65] sm:$0xff]
        %v7323 = vld [vmem:[#allocation2 + $0x6d] sm:$0xff]
        %v7324 = vld [vmem:[#allocation2 + $0x75] sm:$0xff]
        %v7325 = vld [vmem:[#allocation2 + $0x7d] sm:$0xff]
        %v7326 = vld [vmem:[#allocation2 + $0x85] sm:$0xff]
        %v7327 = vld [vmem:[#allocation2 + $0x8d] sm:$0xff]
        %v7328 = vld [vmem:[#allocation2 + $0x95] sm:$0xff]
        %v7329 = vld [vmem:[#allocation2 + $0x9d] sm:$0xff]
        %v7330 = vld [vmem:[#allocation2 + $0xa5] sm:$0xff]
        %v7331 = vld [vmem:[#allocation2 + $0xad] sm:$0xff]
        %v7332 = vld [vmem:[#allocation2 + $0xb5] sm:$0xff]
        %v7333 = vld [vmem:[#allocation2 + $0xbd] sm:$0xff]
        %v7334 = vld [vmem:[#allocation2 + $0xc5] sm:$0xff]
        %v7335 = vld [vmem:[#allocation2 + $0xcd] sm:$0xff]
        %v7336 = vld [vmem:[#allocation2 + $0xd5] sm:$0xff]
        %v7337 = vld [vmem:[#allocation2 + $0xdd] sm:$0xff]
        %v7338 = vld [vmem:[#allocation2 + $0xe5] sm:$0xff]
        %v7339 = vld [vmem:[#allocation2 + $0xed] sm:$0xff]
        %v7340 = vld [vmem:[#allocation2 + $0xf5] sm:$0xff]
        %v7341 = vld [vmem:[#allocation2 + $0xfd] sm:$0xff]
        %v7342 = vld [vmem:[#allocation2 + $0x105] sm:$0xff]
        %v7343 = vld [vmem:[#allocation2 + $0x10d] sm:$0xff]
        %v7344 = vld [vmem:[#allocation2 + $0x115] sm:$0xff]
        %v7345 = vld [vmem:[#allocation2 + $0x11d] sm:$0xff]
        %v7346 = vld [vmem:[#allocation2 + $0x125] sm:$0xff]
        %v7347 = vld [vmem:[#allocation2 + $0x12d] sm:$0xff]
        %v7348 = vld [vmem:[#allocation2 + $0x135] sm:$0xff]
        %v7349 = vld [vmem:[#allocation2 + $0x13d] sm:$0xff]
        %7386 = vrot.lane.b32.xlu0 %v7314, 28
        %v7387 = vpop.permute.xlu0 %7386
        %7388 = vrot.lane.b32.xlu0 %v7315, 28
        %v7389 = vpop.permute.xlu0 %7388
        %7390 = vrot.lane.b32.xlu0 %v7316, 28
        %v7391 = vpop.permute.xlu0 %7390
        %7392 = vrot.lane.b32.xlu0 %v7317, 28
        %v7393 = vpop.permute.xlu0 %7392
        %7394 = vrot.lane.b32.xlu0 %v7318, 28
        %v7395 = vpop.permute.xlu0 %7394
        %7396 = vrot.lane.b32.xlu0 %v7319, 28
        %v7397 = vpop.permute.xlu0 %7396
        %7398 = vrot.lane.b32.xlu0 %v7320, 28
        %v7399 = vpop.permute.xlu0 %7398
        %7400 = vrot.lane.b32.xlu0 %v7321, 28
        %v7401 = vpop.permute.xlu0 %7400
        %7402 = vrot.lane.b32.xlu0 %v7322, 28
        %v7403 = vpop.permute.xlu0 %7402
        %7404 = vrot.lane.b32.xlu0 %v7323, 28
        %v7405 = vpop.permute.xlu0 %7404
        %7406 = vrot.lane.b32.xlu0 %v7324, 28
        %v7407 = vpop.permute.xlu0 %7406
        %7408 = vrot.lane.b32.xlu0 %v7325, 28
        %v7409 = vpop.permute.xlu0 %7408
        %7410 = vrot.lane.b32.xlu0 %v7326, 28
        %v7411 = vpop.permute.xlu0 %7410
        %7412 = vrot.lane.b32.xlu0 %v7327, 28
        %v7413 = vpop.permute.xlu0 %7412
        %7414 = vrot.lane.b32.xlu0 %v7328, 28
        %v7415 = vpop.permute.xlu0 %7414
        %7416 = vrot.lane.b32.xlu0 %v7329, 28
        %v7417 = vpop.permute.xlu0 %7416
        %7418 = vrot.lane.b32.xlu0 %v7330, 28
        %v7419 = vpop.permute.xlu0 %7418
        %7420 = vrot.lane.b32.xlu0 %v7331, 28
        %v7421 = vpop.permute.xlu0 %7420
        %7422 = vrot.lane.b32.xlu0 %v7332, 28
        %v7423 = vpop.permute.xlu0 %7422
        %7424 = vrot.lane.b32.xlu0 %v7333, 28
        %v7425 = vpop.permute.xlu0 %7424
        %7426 = vrot.lane.b32.xlu0 %v7334, 28
        %v7427 = vpop.permute.xlu0 %7426
        %7428 = vrot.lane.b32.xlu0 %v7335, 28
        %v7429 = vpop.permute.xlu0 %7428
        %7430 = vrot.lane.b32.xlu0 %v7336, 28
        %v7431 = vpop.permute.xlu0 %7430
        %7432 = vrot.lane.b32.xlu0 %v7337, 28
        %v7433 = vpop.permute.xlu0 %7432
        %7434 = vrot.lane.b32.xlu0 %v7338, 28
        %v7435 = vpop.permute.xlu0 %7434
        %7436 = vrot.lane.b32.xlu0 %v7339, 28
        %v7437 = vpop.permute.xlu0 %7436
        %7438 = vrot.lane.b32.xlu0 %v7340, 28
        %v7439 = vpop.permute.xlu0 %7438
        %7440 = vrot.lane.b32.xlu0 %v7341, 28
        %v7441 = vpop.permute.xlu0 %7440
        %7442 = vrot.lane.b32.xlu0 %v7342, 28
        %v7443 = vpop.permute.xlu0 %7442
        %7444 = vrot.lane.b32.xlu0 %v7343, 28
        %v7445 = vpop.permute.xlu0 %7444
        %7446 = vrot.lane.b32.xlu0 %v7344, 28
        %v7447 = vpop.permute.xlu0 %7446
        %7448 = vrot.lane.b32.xlu0 %v7345, 28
        %v7449 = vpop.permute.xlu0 %7448
        %7450 = vrot.lane.b32.xlu0 %v7346, 28
        %v7451 = vpop.permute.xlu0 %7450
        %7452 = vrot.lane.b32.xlu0 %v7347, 28
        %v7453 = vpop.permute.xlu0 %7452
        %7454 = vrot.lane.b32.xlu0 %v7348, 28
        %v7455 = vpop.permute.xlu0 %7454
        %7456 = vrot.lane.b32.xlu0 %v7349, 28
        %v7457 = vpop.permute.xlu0 %7456
        %vm7494 = vcmask 261344
        %7495 = vst.msk [vmem:[#allocation4] sm:$0xff] %vm7494, %v7387
        %7496 = vst.msk [vmem:[#allocation4 + $0x8] sm:$0xff] %vm7494, %v7389
        %7497 = vst.msk [vmem:[#allocation4 + $0x10] sm:$0xff] %vm7494, %v7391
        %7498 = vst.msk [vmem:[#allocation4 + $0x18] sm:$0xff] %vm7494, %v7393
        %7499 = vst.msk [vmem:[#allocation4 + $0x20] sm:$0xff] %vm7494, %v7395
        %7500 = vst.msk [vmem:[#allocation4 + $0x28] sm:$0xff] %vm7494, %v7397
        %7501 = vst.msk [vmem:[#allocation4 + $0x30] sm:$0xff] %vm7494, %v7399
        %7502 = vst.msk [vmem:[#allocation4 + $0x38] sm:$0xff] %vm7494, %v7401
        %7503 = vst.msk [vmem:[#allocation4 + $0x40] sm:$0xff] %vm7494, %v7403
        %7504 = vst.msk [vmem:[#allocation4 + $0x48] sm:$0xff] %vm7494, %v7405
        %7505 = vst.msk [vmem:[#allocation4 + $0x50] sm:$0xff] %vm7494, %v7407
        %7506 = vst.msk [vmem:[#allocation4 + $0x58] sm:$0xff] %vm7494, %v7409
        %7507 = vst.msk [vmem:[#allocation4 + $0x60] sm:$0xff] %vm7494, %v7411
        %7508 = vst.msk [vmem:[#allocation4 + $0x68] sm:$0xff] %vm7494, %v7413
        %7509 = vst.msk [vmem:[#allocation4 + $0x70] sm:$0xff] %vm7494, %v7415
        %7510 = vst.msk [vmem:[#allocation4 + $0x78] sm:$0xff] %vm7494, %v7417
        %7511 = vst.msk [vmem:[#allocation4 + $0x80] sm:$0xff] %vm7494, %v7419
        %7512 = vst.msk [vmem:[#allocation4 + $0x88] sm:$0xff] %vm7494, %v7421
        %7513 = vst.msk [vmem:[#allocation4 + $0x90] sm:$0xff] %vm7494, %v7423
        %7514 = vst.msk [vmem:[#allocation4 + $0x98] sm:$0xff] %vm7494, %v7425
        %7515 = vst.msk [vmem:[#allocation4 + $0xa0] sm:$0xff] %vm7494, %v7427
        %7516 = vst.msk [vmem:[#allocation4 + $0xa8] sm:$0xff] %vm7494, %v7429
        %7517 = vst.msk [vmem:[#allocation4 + $0xb0] sm:$0xff] %vm7494, %v7431
        %7518 = vst.msk [vmem:[#allocation4 + $0xb8] sm:$0xff] %vm7494, %v7433
        %7519 = vst.msk [vmem:[#allocation4 + $0xc0] sm:$0xff] %vm7494, %v7435
        %7520 = vst.msk [vmem:[#allocation4 + $0xc8] sm:$0xff] %vm7494, %v7437
        %7521 = vst.msk [vmem:[#allocation4 + $0xd0] sm:$0xff] %vm7494, %v7439
        %7522 = vst.msk [vmem:[#allocation4 + $0xd8] sm:$0xff] %vm7494, %v7441
        %7523 = vst.msk [vmem:[#allocation4 + $0xe0] sm:$0xff] %vm7494, %v7443
        %7524 = vst.msk [vmem:[#allocation4 + $0xe8] sm:$0xff] %vm7494, %v7445
        %7525 = vst.msk [vmem:[#allocation4 + $0xf0] sm:$0xff] %vm7494, %v7447
        %7526 = vst.msk [vmem:[#allocation4 + $0xf8] sm:$0xff] %vm7494, %v7449
        %7527 = vst.msk [vmem:[#allocation4 + $0x100] sm:$0xff] %vm7494, %v7451
        %7528 = vst.msk [vmem:[#allocation4 + $0x108] sm:$0xff] %vm7494, %v7453
        %7529 = vst.msk [vmem:[#allocation4 + $0x110] sm:$0xff] %vm7494, %v7455
        %7530 = vst.msk [vmem:[#allocation4 + $0x118] sm:$0xff] %vm7494, %v7457
        %v7531 = vld [vmem:[#allocation3] sm:$0xff]
        %v7532 = vld [vmem:[#allocation3 + $0x8] sm:$0xf]
        %v7535 = vcombine.low %v7531, %v7531
        %v7536 = vcombine.low %v7532, %v7532
        %7537 = vrot.lane.b32.xlu0 %v7535, 91
        %v7538 = vpop.permute.xlu0 %7537
        %7539 = vrot.lane.b32.xlu0 %v7531, 91
        %v7540 = vpop.permute.xlu0 %7539
        %7541 = vrot.lane.b32.xlu0 %v7536, 91
        %v7542 = vpop.permute.xlu0 %7541
        %vm7543 = vcmask 744448
        %v7544 = vsel %vm7543, %v7538, %v7540
        %v7545 = vsel %vm7543, %v7540, %v7542
        %7549 = vst [vmem:[#allocation5 + $0x48] sm:$0xf0] %v7544
        %7550 = vst [vmem:[#allocation5 + $0x50] sm:$0xf0] %v7545
        %7551 = vst.msk [vmem:[#allocation5 + $0x58] sm:$0xf0] %vm6125, %v7542
        %v7552 = vld [vmem:[#allocation2 + $0x26] sm:$0xff]
        %v7553 = vld [vmem:[#allocation2 + $0x2e] sm:$0xff]
        %v7554 = vld [vmem:[#allocation2 + $0x36] sm:$0xff]
        %v7555 = vld [vmem:[#allocation2 + $0x3e] sm:$0xff]
        %v7556 = vld [vmem:[#allocation2 + $0x46] sm:$0xff]
        %v7557 = vld [vmem:[#allocation2 + $0x4e] sm:$0xff]
        %v7558 = vld [vmem:[#allocation2 + $0x56] sm:$0xff]
        %v7559 = vld [vmem:[#allocation2 + $0x5e] sm:$0xff]
        %v7560 = vld [vmem:[#allocation2 + $0x66] sm:$0xff]
        %v7561 = vld [vmem:[#allocation2 + $0x6e] sm:$0xff]
        %v7562 = vld [vmem:[#allocation2 + $0x76] sm:$0xff]
        %v7563 = vld [vmem:[#allocation2 + $0x7e] sm:$0xff]
        %v7564 = vld [vmem:[#allocation2 + $0x86] sm:$0xff]
        %v7565 = vld [vmem:[#allocation2 + $0x8e] sm:$0xff]
        %v7566 = vld [vmem:[#allocation2 + $0x96] sm:$0xff]
        %v7567 = vld [vmem:[#allocation2 + $0x9e] sm:$0xff]
        %v7568 = vld [vmem:[#allocation2 + $0xa6] sm:$0xff]
        %v7569 = vld [vmem:[#allocation2 + $0xae] sm:$0xff]
        %v7570 = vld [vmem:[#allocation2 + $0xb6] sm:$0xff]
        %v7571 = vld [vmem:[#allocation2 + $0xbe] sm:$0xff]
        %v7572 = vld [vmem:[#allocation2 + $0xc6] sm:$0xff]
        %v7573 = vld [vmem:[#allocation2 + $0xce] sm:$0xff]
        %v7574 = vld [vmem:[#allocation2 + $0xd6] sm:$0xff]
        %v7575 = vld [vmem:[#allocation2 + $0xde] sm:$0xff]
        %v7576 = vld [vmem:[#allocation2 + $0xe6] sm:$0xff]
        %v7577 = vld [vmem:[#allocation2 + $0xee] sm:$0xff]
        %v7578 = vld [vmem:[#allocation2 + $0xf6] sm:$0xff]
        %v7579 = vld [vmem:[#allocation2 + $0xfe] sm:$0xff]
        %v7580 = vld [vmem:[#allocation2 + $0x106] sm:$0xff]
        %v7581 = vld [vmem:[#allocation2 + $0x10e] sm:$0xff]
        %v7582 = vld [vmem:[#allocation2 + $0x116] sm:$0xff]
        %v7583 = vld [vmem:[#allocation2 + $0x11e] sm:$0xff]
        %v7584 = vld [vmem:[#allocation2 + $0x126] sm:$0xff]
        %v7585 = vld [vmem:[#allocation2 + $0x12e] sm:$0xff]
        %v7586 = vld [vmem:[#allocation2 + $0x136] sm:$0xff]
        %v7587 = vld [vmem:[#allocation2 + $0x13e] sm:$0xff]
        %7624 = vrot.lane.b32.xlu0 %v7552, 32
        %v7625 = vpop.permute.xlu0 %7624
        %7626 = vrot.lane.b32.xlu0 %v7553, 32
        %v7627 = vpop.permute.xlu0 %7626
        %7628 = vrot.lane.b32.xlu0 %v7554, 32
        %v7629 = vpop.permute.xlu0 %7628
        %7630 = vrot.lane.b32.xlu0 %v7555, 32
        %v7631 = vpop.permute.xlu0 %7630
        %7632 = vrot.lane.b32.xlu0 %v7556, 32
        %v7633 = vpop.permute.xlu0 %7632
        %7634 = vrot.lane.b32.xlu0 %v7557, 32
        %v7635 = vpop.permute.xlu0 %7634
        %7636 = vrot.lane.b32.xlu0 %v7558, 32
        %v7637 = vpop.permute.xlu0 %7636
        %7638 = vrot.lane.b32.xlu0 %v7559, 32
        %v7639 = vpop.permute.xlu0 %7638
        %7640 = vrot.lane.b32.xlu0 %v7560, 32
        %v7641 = vpop.permute.xlu0 %7640
        %7642 = vrot.lane.b32.xlu0 %v7561, 32
        %v7643 = vpop.permute.xlu0 %7642
        %7644 = vrot.lane.b32.xlu0 %v7562, 32
        %v7645 = vpop.permute.xlu0 %7644
        %7646 = vrot.lane.b32.xlu0 %v7563, 32
        %v7647 = vpop.permute.xlu0 %7646
        %7648 = vrot.lane.b32.xlu0 %v7564, 32
        %v7649 = vpop.permute.xlu0 %7648
        %7650 = vrot.lane.b32.xlu0 %v7565, 32
        %v7651 = vpop.permute.xlu0 %7650
        %7652 = vrot.lane.b32.xlu0 %v7566, 32
        %v7653 = vpop.permute.xlu0 %7652
        %7654 = vrot.lane.b32.xlu0 %v7567, 32
        %v7655 = vpop.permute.xlu0 %7654
        %7656 = vrot.lane.b32.xlu0 %v7568, 32
        %v7657 = vpop.permute.xlu0 %7656
        %7658 = vrot.lane.b32.xlu0 %v7569, 32
        %v7659 = vpop.permute.xlu0 %7658
        %7660 = vrot.lane.b32.xlu0 %v7570, 32
        %v7661 = vpop.permute.xlu0 %7660
        %7662 = vrot.lane.b32.xlu0 %v7571, 32
        %v7663 = vpop.permute.xlu0 %7662
        %7664 = vrot.lane.b32.xlu0 %v7572, 32
        %v7665 = vpop.permute.xlu0 %7664
        %7666 = vrot.lane.b32.xlu0 %v7573, 32
        %v7667 = vpop.permute.xlu0 %7666
        %7668 = vrot.lane.b32.xlu0 %v7574, 32
        %v7669 = vpop.permute.xlu0 %7668
        %7670 = vrot.lane.b32.xlu0 %v7575, 32
        %v7671 = vpop.permute.xlu0 %7670
        %7672 = vrot.lane.b32.xlu0 %v7576, 32
        %v7673 = vpop.permute.xlu0 %7672
        %7674 = vrot.lane.b32.xlu0 %v7577, 32
        %v7675 = vpop.permute.xlu0 %7674
        %7676 = vrot.lane.b32.xlu0 %v7578, 32
        %v7677 = vpop.permute.xlu0 %7676
        %7678 = vrot.lane.b32.xlu0 %v7579, 32
        %v7679 = vpop.permute.xlu0 %7678
        %7680 = vrot.lane.b32.xlu0 %v7580, 32
        %v7681 = vpop.permute.xlu0 %7680
        %7682 = vrot.lane.b32.xlu0 %v7581, 32
        %v7683 = vpop.permute.xlu0 %7682
        %7684 = vrot.lane.b32.xlu0 %v7582, 32
        %v7685 = vpop.permute.xlu0 %7684
        %7686 = vrot.lane.b32.xlu0 %v7583, 32
        %v7687 = vpop.permute.xlu0 %7686
        %7688 = vrot.lane.b32.xlu0 %v7584, 32
        %v7689 = vpop.permute.xlu0 %7688
        %7690 = vrot.lane.b32.xlu0 %v7585, 32
        %v7691 = vpop.permute.xlu0 %7690
        %7692 = vrot.lane.b32.xlu0 %v7586, 32
        %v7693 = vpop.permute.xlu0 %7692
        %7694 = vrot.lane.b32.xlu0 %v7587, 32
        %v7695 = vpop.permute.xlu0 %7694
        %vm7732 = vcmask 294144
        %7733 = vst.msk [vmem:[#allocation4] sm:$0xff] %vm7732, %v7625
        %7734 = vst.msk [vmem:[#allocation4 + $0x8] sm:$0xff] %vm7732, %v7627
        %7735 = vst.msk [vmem:[#allocation4 + $0x10] sm:$0xff] %vm7732, %v7629
        %7736 = vst.msk [vmem:[#allocation4 + $0x18] sm:$0xff] %vm7732, %v7631
        %7737 = vst.msk [vmem:[#allocation4 + $0x20] sm:$0xff] %vm7732, %v7633
        %7738 = vst.msk [vmem:[#allocation4 + $0x28] sm:$0xff] %vm7732, %v7635
        %7739 = vst.msk [vmem:[#allocation4 + $0x30] sm:$0xff] %vm7732, %v7637
        %7740 = vst.msk [vmem:[#allocation4 + $0x38] sm:$0xff] %vm7732, %v7639
        %7741 = vst.msk [vmem:[#allocation4 + $0x40] sm:$0xff] %vm7732, %v7641
        %7742 = vst.msk [vmem:[#allocation4 + $0x48] sm:$0xff] %vm7732, %v7643
        %7743 = vst.msk [vmem:[#allocation4 + $0x50] sm:$0xff] %vm7732, %v7645
        %7744 = vst.msk [vmem:[#allocation4 + $0x58] sm:$0xff] %vm7732, %v7647
        %7745 = vst.msk [vmem:[#allocation4 + $0x60] sm:$0xff] %vm7732, %v7649
        %7746 = vst.msk [vmem:[#allocation4 + $0x68] sm:$0xff] %vm7732, %v7651
        %7747 = vst.msk [vmem:[#allocation4 + $0x70] sm:$0xff] %vm7732, %v7653
        %7748 = vst.msk [vmem:[#allocation4 + $0x78] sm:$0xff] %vm7732, %v7655
        %7749 = vst.msk [vmem:[#allocation4 + $0x80] sm:$0xff] %vm7732, %v7657
        %7750 = vst.msk [vmem:[#allocation4 + $0x88] sm:$0xff] %vm7732, %v7659
        %7751 = vst.msk [vmem:[#allocation4 + $0x90] sm:$0xff] %vm7732, %v7661
        %7752 = vst.msk [vmem:[#allocation4 + $0x98] sm:$0xff] %vm7732, %v7663
        %7753 = vst.msk [vmem:[#allocation4 + $0xa0] sm:$0xff] %vm7732, %v7665
        %7754 = vst.msk [vmem:[#allocation4 + $0xa8] sm:$0xff] %vm7732, %v7667
        %7755 = vst.msk [vmem:[#allocation4 + $0xb0] sm:$0xff] %vm7732, %v7669
        %7756 = vst.msk [vmem:[#allocation4 + $0xb8] sm:$0xff] %vm7732, %v7671
        %7757 = vst.msk [vmem:[#allocation4 + $0xc0] sm:$0xff] %vm7732, %v7673
        %7758 = vst.msk [vmem:[#allocation4 + $0xc8] sm:$0xff] %vm7732, %v7675
        %7759 = vst.msk [vmem:[#allocation4 + $0xd0] sm:$0xff] %vm7732, %v7677
        %7760 = vst.msk [vmem:[#allocation4 + $0xd8] sm:$0xff] %vm7732, %v7679
        %7761 = vst.msk [vmem:[#allocation4 + $0xe0] sm:$0xff] %vm7732, %v7681
        %7762 = vst.msk [vmem:[#allocation4 + $0xe8] sm:$0xff] %vm7732, %v7683
        %7763 = vst.msk [vmem:[#allocation4 + $0xf0] sm:$0xff] %vm7732, %v7685
        %7764 = vst.msk [vmem:[#allocation4 + $0xf8] sm:$0xff] %vm7732, %v7687
        %7765 = vst.msk [vmem:[#allocation4 + $0x100] sm:$0xff] %vm7732, %v7689
        %7766 = vst.msk [vmem:[#allocation4 + $0x108] sm:$0xff] %vm7732, %v7691
        %7767 = vst.msk [vmem:[#allocation4 + $0x110] sm:$0xff] %vm7732, %v7693
        %7768 = vst.msk [vmem:[#allocation4 + $0x118] sm:$0xff] %vm7732, %v7695
        %v7769 = vld [vmem:[#allocation3] sm:$0xff]
        %v7770 = vld [vmem:[#allocation3 + $0x8] sm:$0xf]
        %v7773 = vcombine.high %v7769, %v7769
        %7774 = vrot.lane.b32.xlu0 %v7769, 90
        %v7775 = vpop.permute.xlu0 %7774
        %7776 = vrot.lane.b32.xlu0 %v7773, 90
        %v7777 = vpop.permute.xlu0 %7776
        %7778 = vrot.lane.b32.xlu0 %v7770, 90
        %v7779 = vpop.permute.xlu0 %7778
        %vm7780 = vcmask 736256
        %v7781 = vsel %vm7780, %v7775, %v7777
        %v7782 = vsel %vm7780, %v7777, %v7779
        %7786 = vst [vmem:[#allocation5 + $0x60] sm:$0xf] %v7781
        %7787 = vst [vmem:[#allocation5 + $0x68] sm:$0xf] %v7782
        %7788 = vst.msk [vmem:[#allocation5 + $0x70] sm:$0xf] %vm5887, %v7779
        %v7789 = vld [vmem:[%s4] sm:$0xf]
        %v7790 = vld [vmem:[#allocation4] sm:$0xff]
        %v7791 = vld [vmem:[#allocation4 + $0x8] sm:$0xff]
        %v7792 = vld [vmem:[#allocation4 + $0x10] sm:$0xff]
        %v7793 = vld [vmem:[#allocation4 + $0x18] sm:$0xff]
        %v7794 = vld [vmem:[#allocation4 + $0x20] sm:$0xff]
        %v7795 = vld [vmem:[#allocation4 + $0x28] sm:$0xff]
        %v7796 = vld [vmem:[#allocation4 + $0x30] sm:$0xff]
        %v7797 = vld [vmem:[#allocation4 + $0x38] sm:$0xff]
        %v7798 = vld [vmem:[#allocation4 + $0x40] sm:$0xff]
        %v7799 = vld [vmem:[#allocation4 + $0x48] sm:$0xff]
        %v7800 = vld [vmem:[#allocation4 + $0x50] sm:$0xff]
        %v7801 = vld [vmem:[#allocation4 + $0x58] sm:$0xff]
        %v7802 = vld [vmem:[#allocation4 + $0x60] sm:$0xff]
        %v7803 = vld [vmem:[#allocation4 + $0x68] sm:$0xff]
        %v7804 = vld [vmem:[#allocation4 + $0x70] sm:$0xff]
        %v7805 = vld [vmem:[#allocation4 + $0x78] sm:$0xff]
        %v7806 = vld [vmem:[#allocation4 + $0x80] sm:$0xff]
        %v7807 = vld [vmem:[#allocation4 + $0x88] sm:$0xff]
        %v7808 = vld [vmem:[#allocation4 + $0x90] sm:$0xff]
        %v7809 = vld [vmem:[#allocation4 + $0x98] sm:$0xff]
        %v7810 = vld [vmem:[#allocation4 + $0xa0] sm:$0xff]
        %v7811 = vld [vmem:[#allocation4 + $0xa8] sm:$0xff]
        %v7812 = vld [vmem:[#allocation4 + $0xb0] sm:$0xff]
        %v7813 = vld [vmem:[#allocation4 + $0xb8] sm:$0xff]
        %v7814 = vld [vmem:[#allocation4 + $0xc0] sm:$0xff]
        %v7815 = vld [vmem:[#allocation4 + $0xc8] sm:$0xff]
        %v7816 = vld [vmem:[#allocation4 + $0xd0] sm:$0xff]
        %v7817 = vld [vmem:[#allocation4 + $0xd8] sm:$0xff]
        %v7818 = vld [vmem:[#allocation4 + $0xe0] sm:$0xff]
        %v7819 = vld [vmem:[#allocation4 + $0xe8] sm:$0xff]
        %v7820 = vld [vmem:[#allocation4 + $0xf0] sm:$0xff]
        %v7821 = vld [vmem:[#allocation4 + $0xf8] sm:$0xff]
        %v7822 = vld [vmem:[#allocation4 + $0x100] sm:$0xff]
        %v7823 = vld [vmem:[#allocation4 + $0x108] sm:$0xff]
        %v7824 = vld [vmem:[#allocation4 + $0x110] sm:$0xff]
        %v7825 = vld [vmem:[#allocation4 + $0x118] sm:$0xff]
        %v7826 = vld [vmem:[%s5] sm:$0xf]
        %v7827 = vld [vmem:[#allocation5] sm:$0xff]
        %v7828 = vld [vmem:[#allocation5 + $0x8] sm:$0xff]
        %v7829 = vld [vmem:[#allocation5 + $0x10] sm:$0xff]
        %v7830 = vld [vmem:[#allocation5 + $0x18] sm:$0xff]
        %v7831 = vld [vmem:[#allocation5 + $0x20] sm:$0xff]
        %v7832 = vld [vmem:[#allocation5 + $0x28] sm:$0xff]
        %v7833 = vld [vmem:[#allocation5 + $0x30] sm:$0xff]
        %v7834 = vld [vmem:[#allocation5 + $0x38] sm:$0xff]
        %v7835 = vld [vmem:[#allocation5 + $0x40] sm:$0xff]
        %v7836 = vld [vmem:[#allocation5 + $0x48] sm:$0xff]
        %v7837 = vld [vmem:[#allocation5 + $0x50] sm:$0xff]
        %v7838 = vld [vmem:[#allocation5 + $0x58] sm:$0xff]
        %v7839 = vld [vmem:[#allocation5 + $0x60] sm:$0xf]
        %v7840 = vld [vmem:[#allocation5 + $0x68] sm:$0xf]
        %v7841 = vld [vmem:[#allocation5 + $0x70] sm:$0xf]
        %vm7842 = vcmask 293888
        %v7844 = vsel %vm7842, %v7826, 0
        %vm7846 = vcmask 1043456
        %v7848 = vsel %vm7846, %v7839, 0
        %v7851 = vsel %vm7846, %v7840, 0
        %v7854 = vsel %vm7846, %v7841, 0
        %7856 = vmatprep.subr.mxu0 %v7828
        %7857 = vmatpush1.msra.mxu0 %v7827
        %7858 = vmatprep.subr.mxu0 %v7831
        %7859 = vmatpush1.msra.mxu0 %v7830
        %7860 = vmatprep.subr.mxu0 %v7834
        %7861 = vmatpush1.msra.mxu0 %v7833
        %7862 = vmatprep.subr.mxu0 %v7837
        %7863 = vmatpush1.msra.mxu0 %v7836
        %7864 = vmatprep.subr.mxu0 %v7851
        %7865 = vmatpush1.msra.mxu0 %v7848
        %7866 = vmatprep.subr.mxu0 0.0
        %7867 = vmatpush1.msra.mxu0 0.0
        %7868 = vmatprep.subr.mxu0 0.0
        %7869 = vmatpush1.msra.mxu0 0.0
        %7870 = vmatprep.subr.mxu0 0.0
        %7871 = vmatpush1.msra.mxu0 0.0
        %7872 = vmatprep.subr.mxu0 0.0
        %7873 = vmatpush1.msra.mxu0 0.0
        %7874 = vmatprep.subr.mxu0 0.0
        %7875 = vmatpush1.msra.mxu0 0.0
        %7876 = vmatprep.subr.mxu0 0.0
        %7877 = vmatpush1.msra.mxu0 0.0
        %7878 = vmatprep.subr.mxu0 0.0
        %7879 = vmatpush1.msra.mxu0 0.0
        %7880 = vmatprep.subr.mxu0 0.0
        %7881 = vmatpush1.msra.mxu0 0.0
        %7882 = vmatprep.subr.mxu0 0.0
        %7883 = vmatpush1.msra.mxu0 0.0
        %7884 = vmatprep.subr.mxu0 0.0
        %7885 = vmatpush1.msra.mxu0 0.0
        %7886 = vmatprep.subr.mxu0 0.0
        %7887 = vmatpush1.msra.mxu0 0.0
        %7888 = vmatprep.subr.mxu0 0.0
        %7889 = vmatpush1.msra.mxu0 0.0
        %7890 = vmatprep.subr.mxu0 0.0
        %7891 = vmatpush1.msra.mxu0 0.0
        %7892 = vmatprep.subr.mxu0 0.0
        %7893 = vmatpush1.msra.mxu0 0.0
        %7894 = vmatprep.subr.mxu0 0.0
        %7895 = vmatpush1.msra.mxu0 0.0
        %7896 = vmatprep.subr.mxu0 0.0
        %7897 = vmatpush1.msra.mxu0 0.0
        %7898 = vmatprep.subr.mxu0 0.0
        %7899 = vmatpush1.msra.mxu0 0.0
        %7900 = vmatprep.subr.mxu0 0.0
        %7901 = vmatpush1.msra.mxu0 0.0
        %7902 = vmatprep.subr.mxu0 0.0
        %7903 = vmatpush1.msra.mxu0 0.0
        %7904 = vmatprep.subr.mxu0 0.0
        %7905 = vmatpush1.msra.mxu0 0.0
        %7906 = vmatprep.subr.mxu0 0.0
        %7907 = vmatpush1.msra.mxu0 0.0
        %7908 = vmatprep.subr.mxu0 0.0
        %7909 = vmatpush1.msra.mxu0 0.0
        %7910 = vmatprep.subr.mxu0 0.0
        %7911 = vmatpush1.msra.mxu0 0.0
        %7912 = vmatprep.subr.mxu0 0.0
        %7913 = vmatpush1.msra.mxu0 0.0
        %7914 = vmatprep.subr.mxu0 0.0
        %7915 = vmatpush1.msra.mxu0 0.0
        %7916 = vmatprep.subr.mxu0 0.0
        %7917 = vmatpush1.msra.mxu0 0.0
        %7918 = vmatprep.subr.mxu0 0.0
        %7919 = vmatpush1.msra.mxu0 0.0
        %7920 = vmatprep.mubr.f32.mxu0 0.0
        %7921 = vmatmul.mubr.f32.gmra.mrb[0].mxu0 %v7844
        %v7922 = vpop.f32.mrb[0].mxu0
        %v7923 = vadd.f32 0.0, %v7922
        %v7924 = vpop.f32.mrb[0].mxu0
        %v7925 = vadd.f32 0.0, %v7924
        %7926 = vdwg.mxu0
        %7927 = vmatprep.subr.mxu0 0.0
        %7928 = vmatpush1.msra.mxu0 %v7829
        %7929 = vmatprep.subr.mxu0 0.0
        %7930 = vmatpush1.msra.mxu0 %v7832
        %7931 = vmatprep.subr.mxu0 0.0
        %7932 = vmatpush1.msra.mxu0 %v7835
        %7933 = vmatprep.subr.mxu0 0.0
        %7934 = vmatpush1.msra.mxu0 %v7838
        %7935 = vmatprep.subr.mxu0 0.0
        %7936 = vmatpush1.msra.mxu0 %v7854
        %7937 = vmatprep.subr.mxu0 0.0
        %7938 = vmatpush1.msra.mxu0 0.0
        %7939 = vmatprep.subr.mxu0 0.0
        %7940 = vmatpush1.msra.mxu0 0.0
        %7941 = vmatprep.subr.mxu0 0.0
        %7942 = vmatpush1.msra.mxu0 0.0
        %7943 = vmatprep.subr.mxu0 0.0
        %7944 = vmatpush1.msra.mxu0 0.0
        %7945 = vmatprep.subr.mxu0 0.0
        %7946 = vmatpush1.msra.mxu0 0.0
        %7947 = vmatprep.subr.mxu0 0.0
        %7948 = vmatpush1.msra.mxu0 0.0
        %7949 = vmatprep.subr.mxu0 0.0
        %7950 = vmatpush1.msra.mxu0 0.0
        %7951 = vmatprep.subr.mxu0 0.0
        %7952 = vmatpush1.msra.mxu0 0.0
        %7953 = vmatprep.subr.mxu0 0.0
        %7954 = vmatpush1.msra.mxu0 0.0
        %7955 = vmatprep.subr.mxu0 0.0
        %7956 = vmatpush1.msra.mxu0 0.0
        %7957 = vmatprep.subr.mxu0 0.0
        %7958 = vmatpush1.msra.mxu0 0.0
        %7959 = vmatprep.subr.mxu0 0.0
        %7960 = vmatpush1.msra.mxu0 0.0
        %7961 = vmatprep.subr.mxu0 0.0
        %7962 = vmatpush1.msra.mxu0 0.0
        %7963 = vmatprep.subr.mxu0 0.0
        %7964 = vmatpush1.msra.mxu0 0.0
        %7965 = vmatprep.subr.mxu0 0.0
        %7966 = vmatpush1.msra.mxu0 0.0
        %7967 = vmatprep.subr.mxu0 0.0
        %7968 = vmatpush1.msra.mxu0 0.0
        %7969 = vmatprep.subr.mxu0 0.0
        %7970 = vmatpush1.msra.mxu0 0.0
        %7971 = vmatprep.subr.mxu0 0.0
        %7972 = vmatpush1.msra.mxu0 0.0
        %7973 = vmatprep.subr.mxu0 0.0
        %7974 = vmatpush1.msra.mxu0 0.0
        %7975 = vmatprep.subr.mxu0 0.0
        %7976 = vmatpush1.msra.mxu0 0.0
        %7977 = vmatprep.subr.mxu0 0.0
        %7978 = vmatpush1.msra.mxu0 0.0
        %7979 = vmatprep.subr.mxu0 0.0
        %7980 = vmatpush1.msra.mxu0 0.0
        %7981 = vmatprep.subr.mxu0 0.0
        %7982 = vmatpush1.msra.mxu0 0.0
        %7983 = vmatprep.subr.mxu0 0.0
        %7984 = vmatpush1.msra.mxu0 0.0
        %7985 = vmatprep.subr.mxu0 0.0
        %7986 = vmatpush1.msra.mxu0 0.0
        %7987 = vmatprep.subr.mxu0 0.0
        %7988 = vmatpush1.msra.mxu0 0.0
        %7989 = vmatprep.subr.mxu0 0.0
        %7990 = vmatpush1.msra.mxu0 0.0
        %7991 = vmatprep.mubr.f32.mxu0 0.0
        %7992 = vmatmul.mubr.f32.gmra.mrb[0].mxu0 %v7844
        %v7993 = vpop.f32.mrb[0].mxu0
        %v7994 = vadd.f32 0.0, %v7993
        %v7995 = vpop.f32.mrb[0].mxu0
        %7996 = vdwg.mxu0
        %v7998 = vsel %vm7842, %v7789, 0
        %v8001 = vsel %vm7842, %v7790, 0
        %v8004 = vsel %vm7842, %v7791, 0
        %v8007 = vsel %vm7842, %v7792, 0
        %v8010 = vsel %vm7842, %v7793, 0
        %v8013 = vsel %vm7842, %v7794, 0
        %v8016 = vsel %vm7842, %v7795, 0
        %v8019 = vsel %vm7842, %v7796, 0
        %v8022 = vsel %vm7842, %v7797, 0
        %v8025 = vsel %vm7842, %v7798, 0
        %v8028 = vsel %vm7842, %v7799, 0
        %v8031 = vsel %vm7842, %v7800, 0
        %v8034 = vsel %vm7842, %v7801, 0
        %v8037 = vsel %vm7842, %v7802, 0
        %v8040 = vsel %vm7842, %v7803, 0
        %v8043 = vsel %vm7842, %v7804, 0
        %v8046 = vsel %vm7842, %v7805, 0
        %v8049 = vsel %vm7842, %v7806, 0
        %v8052 = vsel %vm7842, %v7807, 0
        %v8055 = vsel %vm7842, %v7808, 0
        %v8058 = vsel %vm7842, %v7809, 0
        %v8061 = vsel %vm7842, %v7810, 0
        %v8064 = vsel %vm7842, %v7811, 0
        %v8067 = vsel %vm7842, %v7812, 0
        %v8070 = vsel %vm7842, %v7813, 0
        %v8073 = vsel %vm7842, %v7814, 0
        %v8076 = vsel %vm7842, %v7815, 0
        %v8079 = vsel %vm7842, %v7816, 0
        %v8082 = vsel %vm7842, %v7817, 0
        %v8085 = vsel %vm7842, %v7818, 0
        %v8088 = vsel %vm7842, %v7819, 0
        %v8091 = vsel %vm7842, %v7820, 0
        %v8094 = vsel %vm7842, %v7821, 0
        %v8097 = vsel %vm7842, %v7822, 0
        %v8100 = vsel %vm7842, %v7823, 0
        %v8103 = vsel %vm7842, %v7824, 0
        %v8106 = vsel %vm7842, %v7825, 0
        %8108 = vmatprep.subr.mxu0 0.0
        %8109 = vmatpush1.xpose.msra.mxu0 %v8001
        %8110 = vmatprep.subr.mxu0 0.0
        %8111 = vmatpush1.xpose.msra.mxu0 %v8004
        %8112 = vmatprep.subr.mxu0 0.0
        %8113 = vmatpush1.xpose.msra.mxu0 %v8007
        %8114 = vmatprep.subr.mxu0 0.0
        %8115 = vmatpush1.xpose.msra.mxu0 %v8010
        %8116 = vmatprep.subr.mxu0 0.0
        %8117 = vmatpush1.xpose.msra.mxu0 %v8013
        %8118 = vmatprep.subr.mxu0 0.0
        %8119 = vmatpush1.xpose.msra.mxu0 %v8016
        %8120 = vmatprep.subr.mxu0 0.0
        %8121 = vmatpush1.xpose.msra.mxu0 %v8019
        %8122 = vmatprep.subr.mxu0 0.0
        %8123 = vmatpush1.xpose.msra.mxu0 %v8022
        %8124 = vmatprep.subr.mxu0 0.0
        %8125 = vmatpush1.xpose.msra.mxu0 %v8025
        %8126 = vmatprep.subr.mxu0 0.0
        %8127 = vmatpush1.xpose.msra.mxu0 %v8028
        %8128 = vmatprep.subr.mxu0 0.0
        %8129 = vmatpush1.xpose.msra.mxu0 %v8031
        %8130 = vmatprep.subr.mxu0 0.0
        %8131 = vmatpush1.xpose.msra.mxu0 %v8034
        %8132 = vmatprep.subr.mxu0 0.0
        %8133 = vmatpush1.xpose.msra.mxu0 %v8037
        %8134 = vmatprep.subr.mxu0 0.0
        %8135 = vmatpush1.xpose.msra.mxu0 %v8040
        %8136 = vmatprep.subr.mxu0 0.0
        %8137 = vmatpush1.xpose.msra.mxu0 %v8043
        %8138 = vmatprep.subr.mxu0 0.0
        %8139 = vmatpush1.xpose.msra.mxu0 %v8046
        %8140 = vmatprep.subr.mxu0 0.0
        %8141 = vmatpush1.xpose.msra.mxu0 %v8049
        %8142 = vmatprep.subr.mxu0 0.0
        %8143 = vmatpush1.xpose.msra.mxu0 %v8052
        %8144 = vmatprep.subr.mxu0 0.0
        %8145 = vmatpush1.xpose.msra.mxu0 %v8055
        %8146 = vmatprep.subr.mxu0 0.0
        %8147 = vmatpush1.xpose.msra.mxu0 %v8058
        %8148 = vmatprep.subr.mxu0 0.0
        %8149 = vmatpush1.xpose.msra.mxu0 %v8061
        %8150 = vmatprep.subr.mxu0 0.0
        %8151 = vmatpush1.xpose.msra.mxu0 %v8064
        %8152 = vmatprep.subr.mxu0 0.0
        %8153 = vmatpush1.xpose.msra.mxu0 %v8067
        %8154 = vmatprep.subr.mxu0 0.0
        %8155 = vmatpush1.xpose.msra.mxu0 %v8070
        %8156 = vmatprep.subr.mxu0 0.0
        %8157 = vmatpush1.xpose.msra.mxu0 %v8073
        %8158 = vmatprep.subr.mxu0 0.0
        %8159 = vmatpush1.xpose.msra.mxu0 %v8076
        %8160 = vmatprep.subr.mxu0 0.0
        %8161 = vmatpush1.xpose.msra.mxu0 %v8079
        %8162 = vmatprep.subr.mxu0 0.0
        %8163 = vmatpush1.xpose.msra.mxu0 %v8082
        %8164 = vmatprep.subr.mxu0 0.0
        %8165 = vmatpush1.xpose.msra.mxu0 %v8085
        %8166 = vmatprep.subr.mxu0 0.0
        %8167 = vmatpush1.xpose.msra.mxu0 %v8088
        %8168 = vmatprep.subr.mxu0 0.0
        %8169 = vmatpush1.xpose.msra.mxu0 %v8091
        %8170 = vmatprep.subr.mxu0 0.0
        %8171 = vmatpush1.xpose.msra.mxu0 %v8094
        %8172 = vmatprep.mubr.f32.mxu0 0.0
        %8173 = vmatmul.mubr.f32.gmra.mrb[0].mxu0 %v7998
        %v8174 = vpop.f32.mrb[0].mxu0
        %v8175 = vadd.f32 %v7923, %v8174
        %v8176 = vpop.f32.mrb[0].mxu0
        %v8177 = vadd.f32 %v7925, %v8176
        %8178 = vdwg.mxu0
        %8179 = vmatprep.subr.mxu0 0.0
        %8180 = vmatpush1.xpose.msra.mxu0 %v8097
        %8181 = vmatprep.subr.mxu0 0.0
        %8182 = vmatpush1.xpose.msra.mxu0 %v8100
        %8183 = vmatprep.subr.mxu0 0.0
        %8184 = vmatpush1.xpose.msra.mxu0 %v8103
        %8185 = vmatprep.subr.mxu0 0.0
        %8186 = vmatpush1.xpose.msra.mxu0 %v8106
        %8187 = vmatprep.subr.mxu0 0.0
        %8188 = vmatpush1.xpose.msra.mxu0 0.0
        %8189 = vmatprep.subr.mxu0 0.0
        %8190 = vmatpush1.xpose.msra.mxu0 0.0
        %8191 = vmatprep.subr.mxu0 0.0
        %8192 = vmatpush1.xpose.msra.mxu0 0.0
        %8193 = vmatprep.subr.mxu0 0.0
        %8194 = vmatpush1.xpose.msra.mxu0 0.0
        %8195 = vmatprep.subr.mxu0 0.0
        %8196 = vmatpush1.xpose.msra.mxu0 0.0
        %8197 = vmatprep.subr.mxu0 0.0
        %8198 = vmatpush1.xpose.msra.mxu0 0.0
        %8199 = vmatprep.subr.mxu0 0.0
        %8200 = vmatpush1.xpose.msra.mxu0 0.0
        %8201 = vmatprep.subr.mxu0 0.0
        %8202 = vmatpush1.xpose.msra.mxu0 0.0
        %8203 = vmatprep.subr.mxu0 0.0
        %8204 = vmatpush1.xpose.msra.mxu0 0.0
        %8205 = vmatprep.subr.mxu0 0.0
        %8206 = vmatpush1.xpose.msra.mxu0 0.0
        %8207 = vmatprep.subr.mxu0 0.0
        %8208 = vmatpush1.xpose.msra.mxu0 0.0
        %8209 = vmatprep.subr.mxu0 0.0
        %8210 = vmatpush1.xpose.msra.mxu0 0.0
        %8211 = vmatprep.subr.mxu0 0.0
        %8212 = vmatpush1.xpose.msra.mxu0 0.0
        %8213 = vmatprep.subr.mxu0 0.0
        %8214 = vmatpush1.xpose.msra.mxu0 0.0
        %8215 = vmatprep.subr.mxu0 0.0
        %8216 = vmatpush1.xpose.msra.mxu0 0.0
        %8217 = vmatprep.subr.mxu0 0.0
        %8218 = vmatpush1.xpose.msra.mxu0 0.0
        %8219 = vmatprep.subr.mxu0 0.0
        %8220 = vmatpush1.xpose.msra.mxu0 0.0
        %8221 = vmatprep.subr.mxu0 0.0
        %8222 = vmatpush1.xpose.msra.mxu0 0.0
        %8223 = vmatprep.subr.mxu0 0.0
        %8224 = vmatpush1.xpose.msra.mxu0 0.0
        %8225 = vmatprep.subr.mxu0 0.0
        %8226 = vmatpush1.xpose.msra.mxu0 0.0
        %8227 = vmatprep.subr.mxu0 0.0
        %8228 = vmatpush1.xpose.msra.mxu0 0.0
        %8229 = vmatprep.subr.mxu0 0.0
        %8230 = vmatpush1.xpose.msra.mxu0 0.0
        %8231 = vmatprep.subr.mxu0 0.0
        %8232 = vmatpush1.xpose.msra.mxu0 0.0
        %8233 = vmatprep.subr.mxu0 0.0
        %8234 = vmatpush1.xpose.msra.mxu0 0.0
        %8235 = vmatprep.subr.mxu0 0.0
        %8236 = vmatpush1.xpose.msra.mxu0 0.0
        %8237 = vmatprep.subr.mxu0 0.0
        %8238 = vmatpush1.xpose.msra.mxu0 0.0
        %8239 = vmatprep.subr.mxu0 0.0
        %8240 = vmatpush1.xpose.msra.mxu0 0.0
        %8241 = vmatprep.subr.mxu0 0.0
        %8242 = vmatpush1.xpose.msra.mxu0 0.0
        %8243 = vmatprep.mubr.f32.mxu0 0.0
        %8244 = vmatmul.mubr.f32.gmra.mrb[0].mxu0 %v7998
        %v8245 = vpop.f32.mrb[0].mxu0
        %v8246 = vadd.f32 %v7994, %v8245
        %v8247 = vpop.f32.mrb[0].mxu0
        %8248 = vdwg.mxu0
        %v8249 = vld [vmem:[%s6] sm:$0xf]
        %8251 = vset.pattern.permute.xlu0 0
        %8252 = vperm.xlu0 %8251, %v8249
        %v8253 = vpop.permute.xlu0 %8252
        %v8255 = vadd.f32 %v8175, %v8253
        %v8256 = vadd.f32 %v8177, %v8253
        %v8257 = vadd.f32 %v8246, %v8253
        %v8258 = vmax.f32 %v8255, 0.0
        %v8259 = vmax.f32 %v8256, 0.0
        %v8260 = vmax.f32 %v8257, 0.0
        %v8263 = vcombine.low %v8258, %v8259
        %8265 = vst [vmem:[#allocation6] sm:$0xff] %v8263
        %8266 = vst.msk [vmem:[#allocation6 + $0x8] sm:$0xf] %vm5887, %v8260
        %v8267 = vld [vmem:[#allocation6] sm:$0xf]
        %v8270 = vunpack.c.l.s4 1966171168
        %v8271 = vunpack.c.0.s8 %v8270
        %v8272 = vlaneseq
        %v8273 = vshrl.u32 %v8272, 7
        %v8274 = vsub.s32 %v8271, %v8273
        %v8275 = vrot.slane %v8267, %v8274
        %v8276 = vcombine.high %v8275, %v8275
        %v8278 = vunpack.c.l.s4 1966171168
        %v8279 = vunpack.c.0.s8 %v8278
        %v8280 = vlaneseq
        %v8281 = vshrl.u32 %v8280, 7
        %v8282 = vsub.s32 %v8279, %v8281
        %v8283 = vrot.slane %v8275, %v8282
        %v8285 = vunpack.c.l.s4 1966171168
        %v8286 = vunpack.c.0.s8 %v8285
        %v8287 = vlaneseq
        %v8288 = vshrl.u32 %v8287, 7
        %v8289 = vsub.s32 %v8286, %v8288
        %v8290 = vrot.slane %v8276, %v8289
        %v8291 = vcombine.high %v8283, %v8283
        %v8292 = vcombine.high %v8290, %v8290
        %vm8297 = vcmask 122880
        %8298 = vst.msk [vmem:[%s286] sm:$0x1] %vm8297, %v8283
        %8299 = vst.msk [vmem:[%s286 + $0x10] sm:$0x1] %vm8297, %v8290
        %8300 = vst.msk [vmem:[%s286 + $0x20] sm:$0x1] %vm8297, %v8291
        %8301 = vst.msk [vmem:[%s286 + $0x30] sm:$0x1] %vm8297, %v8292
        %v8302 = vld [vmem:[#allocation6] sm:$0xf]
        %v8305 = vunpack.c.l.s4 1966171168
        %v8306 = vunpack.c.0.s8 %v8305
        %v8307 = vlaneseq
        %v8308 = vshrl.u32 %v8307, 7
        %v8309 = vsub.s32 %v8306, %v8308
        %v8310 = vrot.slane %v8302, %v8309
        %v8311 = vcombine.high %v8310, %v8310
        %v8313 = vunpack.c.l.s4 1966171168
        %v8314 = vunpack.c.0.s8 %v8313
        %v8315 = vlaneseq
        %v8316 = vshrl.u32 %v8315, 7
        %v8317 = vsub.s32 %v8314, %v8316
        %v8318 = vrot.slane %v8310, %v8317
        %v8320 = vunpack.c.l.s4 1966171168
        %v8321 = vunpack.c.0.s8 %v8320
        %v8322 = vlaneseq
        %v8323 = vshrl.u32 %v8322, 7
        %v8324 = vsub.s32 %v8321, %v8323
        %v8325 = vrot.slane %v8311, %v8324
        %v8326 = vcombine.high %v8318, %v8318
        %v8327 = vcombine.high %v8325, %v8325
        %v8328 = vlaneseq
        %v8329 = vshrl.u32 %v8328, 7
        %v8330 = vsub.s32 0, %v8329
        %v8331 = vrot.slane %v8318, %v8330
        %v8332 = vlaneseq
        %v8333 = vshrl.u32 %v8332, 7
        %v8334 = vsub.s32 0, %v8333
        %v8335 = vrot.slane %v8325, %v8334
        %v8336 = vlaneseq
        %v8337 = vshrl.u32 %v8336, 7
        %v8338 = vsub.s32 0, %v8337
        %v8339 = vrot.slane %v8326, %v8338
        %v8340 = vlaneseq
        %v8341 = vshrl.u32 %v8340, 7
        %v8342 = vsub.s32 0, %v8341
        %v8343 = vrot.slane %v8327, %v8342
        %8344 = vrot.lane.b32.xlu0 %v8331, 110
        %v8345 = vpop.permute.xlu0 %8344
        %8346 = vrot.lane.b32.xlu0 %v8335, 110
        %v8347 = vpop.permute.xlu0 %8346
        %8348 = vrot.lane.b32.xlu0 %v8339, 110
        %v8349 = vpop.permute.xlu0 %8348
        %8350 = vrot.lane.b32.xlu0 %v8343, 110
        %v8351 = vpop.permute.xlu0 %8350
        %8356 = vst.msk [vmem:[%s286 + $0x1] sm:$0x1] %vm8297, %v8345
        %8357 = vst.msk [vmem:[%s286 + $0x11] sm:$0x1] %vm8297, %v8347
        %8358 = vst.msk [vmem:[%s286 + $0x21] sm:$0x1] %vm8297, %v8349
        %8359 = vst.msk [vmem:[%s286 + $0x31] sm:$0x1] %vm8297, %v8351
        %v8360 = vld [vmem:[#allocation6] sm:$0xf]
        %v8363 = vunpack.c.l.s4 1966171168
        %v8364 = vunpack.c.0.s8 %v8363
        %v8365 = vlaneseq
        %v8366 = vshrl.u32 %v8365, 7
        %v8367 = vsub.s32 %v8364, %v8366
        %v8368 = vrot.slane %v8360, %v8367
        %v8369 = vcombine.high %v8368, %v8368
        %v8371 = vunpack.c.l.s4 1966171168
        %v8372 = vunpack.c.0.s8 %v8371
        %v8373 = vlaneseq
        %v8374 = vshrl.u32 %v8373, 7
        %v8375 = vsub.s32 %v8372, %v8374
        %v8376 = vrot.slane %v8368, %v8375
        %v8378 = vunpack.c.l.s4 1966171168
        %v8379 = vunpack.c.0.s8 %v8378
        %v8380 = vlaneseq
        %v8381 = vshrl.u32 %v8380, 7
        %v8382 = vsub.s32 %v8379, %v8381
        %v8383 = vrot.slane %v8369, %v8382
        %v8384 = vcombine.high %v8376, %v8376
        %v8385 = vcombine.high %v8383, %v8383
        %v8386 = vlaneseq
        %v8387 = vshrl.u32 %v8386, 7
        %v8388 = vsub.s32 0, %v8387
        %v8389 = vrot.slane %v8376, %v8388
        %v8390 = vlaneseq
        %v8391 = vshrl.u32 %v8390, 7
        %v8392 = vsub.s32 0, %v8391
        %v8393 = vrot.slane %v8383, %v8392
        %v8394 = vlaneseq
        %v8395 = vshrl.u32 %v8394, 7
        %v8396 = vsub.s32 0, %v8395
        %v8397 = vrot.slane %v8384, %v8396
        %v8398 = vlaneseq
        %v8399 = vshrl.u32 %v8398, 7
        %v8400 = vsub.s32 0, %v8399
        %v8401 = vrot.slane %v8385, %v8400
        %8402 = vrot.lane.b32.xlu0 %v8389, 92
        %v8403 = vpop.permute.xlu0 %8402
        %8404 = vrot.lane.b32.xlu0 %v8393, 92
        %v8405 = vpop.permute.xlu0 %8404
        %8406 = vrot.lane.b32.xlu0 %v8397, 92
        %v8407 = vpop.permute.xlu0 %8406
        %8408 = vrot.lane.b32.xlu0 %v8401, 92
        %v8409 = vpop.permute.xlu0 %8408
        %8414 = vst.msk [vmem:[%s286 + $0x2] sm:$0x1] %vm8297, %v8403
        %8415 = vst.msk [vmem:[%s286 + $0x12] sm:$0x1] %vm8297, %v8405
        %8416 = vst.msk [vmem:[%s286 + $0x22] sm:$0x1] %vm8297, %v8407
        %8417 = vst.msk [vmem:[%s286 + $0x32] sm:$0x1] %vm8297, %v8409
        %v8418 = vld [vmem:[#allocation6] sm:$0xf]
        %v8421 = vunpack.c.l.s4 1966171168
        %v8422 = vunpack.c.0.s8 %v8421
        %v8423 = vlaneseq
        %v8424 = vshrl.u32 %v8423, 7
        %v8425 = vsub.s32 %v8422, %v8424
        %v8426 = vrot.slane %v8418, %v8425
        %v8427 = vcombine.high %v8426, %v8426
        %v8429 = vunpack.c.l.s4 1966171168
        %v8430 = vunpack.c.0.s8 %v8429
        %v8431 = vlaneseq
        %v8432 = vshrl.u32 %v8431, 7
        %v8433 = vsub.s32 %v8430, %v8432
        %v8434 = vrot.slane %v8426, %v8433
        %v8436 = vunpack.c.l.s4 1966171168
        %v8437 = vunpack.c.0.s8 %v8436
        %v8438 = vlaneseq
        %v8439 = vshrl.u32 %v8438, 7
        %v8440 = vsub.s32 %v8437, %v8439
        %v8441 = vrot.slane %v8427, %v8440
        %v8442 = vcombine.high %v8434, %v8434
        %v8443 = vcombine.high %v8441, %v8441
        %v8444 = vlaneseq
        %v8445 = vshrl.u32 %v8444, 7
        %v8446 = vsub.s32 0, %v8445
        %v8447 = vrot.slane %v8434, %v8446
        %v8448 = vlaneseq
        %v8449 = vshrl.u32 %v8448, 7
        %v8450 = vsub.s32 0, %v8449
        %v8451 = vrot.slane %v8441, %v8450
        %v8452 = vlaneseq
        %v8453 = vshrl.u32 %v8452, 7
        %v8454 = vsub.s32 0, %v8453
        %v8455 = vrot.slane %v8442, %v8454
        %v8456 = vlaneseq
        %v8457 = vshrl.u32 %v8456, 7
        %v8458 = vsub.s32 0, %v8457
        %v8459 = vrot.slane %v8443, %v8458
        %8460 = vrot.lane.b32.xlu0 %v8447, 74
        %v8461 = vpop.permute.xlu0 %8460
        %8462 = vrot.lane.b32.xlu0 %v8451, 74
        %v8463 = vpop.permute.xlu0 %8462
        %8464 = vrot.lane.b32.xlu0 %v8455, 74
        %v8465 = vpop.permute.xlu0 %8464
        %8466 = vrot.lane.b32.xlu0 %v8459, 74
        %v8467 = vpop.permute.xlu0 %8466
        %8472 = vst.msk [vmem:[%s286 + $0x3] sm:$0x1] %vm8297, %v8461
        %8473 = vst.msk [vmem:[%s286 + $0x13] sm:$0x1] %vm8297, %v8463
        %8474 = vst.msk [vmem:[%s286 + $0x23] sm:$0x1] %vm8297, %v8465
        %8475 = vst.msk [vmem:[%s286 + $0x33] sm:$0x1] %vm8297, %v8467
        %v8476 = vld [vmem:[#allocation6] sm:$0xf]
        %v8479 = vunpack.c.l.s4 1966171168
        %v8480 = vunpack.c.0.s8 %v8479
        %v8481 = vlaneseq
        %v8482 = vshrl.u32 %v8481, 7
        %v8483 = vsub.s32 %v8480, %v8482
        %v8484 = vrot.slane %v8476, %v8483
        %v8485 = vcombine.high %v8484, %v8484
        %v8487 = vunpack.c.l.s4 1966171168
        %v8488 = vunpack.c.0.s8 %v8487
        %v8489 = vlaneseq
        %v8490 = vshrl.u32 %v8489, 7
        %v8491 = vsub.s32 %v8488, %v8490
        %v8492 = vrot.slane %v8484, %v8491
        %v8494 = vunpack.c.l.s4 1966171168
        %v8495 = vunpack.c.0.s8 %v8494
        %v8496 = vlaneseq
        %v8497 = vshrl.u32 %v8496, 7
        %v8498 = vsub.s32 %v8495, %v8497
        %v8499 = vrot.slane %v8485, %v8498
        %v8500 = vcombine.high %v8492, %v8492
        %v8501 = vcombine.high %v8499, %v8499
        %v8502 = vlaneseq
        %v8503 = vshrl.u32 %v8502, 7
        %v8504 = vsub.s32 0, %v8503
        %v8505 = vrot.slane %v8492, %v8504
        %v8506 = vlaneseq
        %v8507 = vshrl.u32 %v8506, 7
        %v8508 = vsub.s32 0, %v8507
        %v8509 = vrot.slane %v8499, %v8508
        %v8510 = vlaneseq
        %v8511 = vshrl.u32 %v8510, 7
        %v8512 = vsub.s32 0, %v8511
        %v8513 = vrot.slane %v8500, %v8512
        %v8514 = vlaneseq
        %v8515 = vshrl.u32 %v8514, 7
        %v8516 = vsub.s32 0, %v8515
        %v8517 = vrot.slane %v8501, %v8516
        %8518 = vrot.lane.b32.xlu0 %v8505, 56
        %v8519 = vpop.permute.xlu0 %8518
        %8520 = vrot.lane.b32.xlu0 %v8509, 56
        %v8521 = vpop.permute.xlu0 %8520
        %8522 = vrot.lane.b32.xlu0 %v8513, 56
        %v8523 = vpop.permute.xlu0 %8522
        %8524 = vrot.lane.b32.xlu0 %v8517, 56
        %v8525 = vpop.permute.xlu0 %8524
        %8530 = vst.msk [vmem:[%s286 + $0x4] sm:$0x1] %vm8297, %v8519
        %8531 = vst.msk [vmem:[%s286 + $0x14] sm:$0x1] %vm8297, %v8521
        %8532 = vst.msk [vmem:[%s286 + $0x24] sm:$0x1] %vm8297, %v8523
        %8533 = vst.msk [vmem:[%s286 + $0x34] sm:$0x1] %vm8297, %v8525
        %v8534 = vld [vmem:[#allocation6] sm:$0xf]
        %v8537 = vunpack.c.l.s4 1966171168
        %v8538 = vunpack.c.0.s8 %v8537
        %v8539 = vlaneseq
        %v8540 = vshrl.u32 %v8539, 7
        %v8541 = vsub.s32 %v8538, %v8540
        %v8542 = vrot.slane %v8534, %v8541
        %v8543 = vcombine.high %v8542, %v8542
        %v8545 = vunpack.c.l.s4 1966171168
        %v8546 = vunpack.c.0.s8 %v8545
        %v8547 = vlaneseq
        %v8548 = vshrl.u32 %v8547, 7
        %v8549 = vsub.s32 %v8546, %v8548
        %v8550 = vrot.slane %v8542, %v8549
        %v8552 = vunpack.c.l.s4 1966171168
        %v8553 = vunpack.c.0.s8 %v8552
        %v8554 = vlaneseq
        %v8555 = vshrl.u32 %v8554, 7
        %v8556 = vsub.s32 %v8553, %v8555
        %v8557 = vrot.slane %v8543, %v8556
        %v8558 = vcombine.high %v8550, %v8550
        %v8559 = vcombine.high %v8557, %v8557
        %v8560 = vlaneseq
        %v8561 = vshrl.u32 %v8560, 7
        %v8562 = vsub.s32 0, %v8561
        %v8563 = vrot.slane %v8550, %v8562
        %v8564 = vlaneseq
        %v8565 = vshrl.u32 %v8564, 7
        %v8566 = vsub.s32 0, %v8565
        %v8567 = vrot.slane %v8557, %v8566
        %v8568 = vlaneseq
        %v8569 = vshrl.u32 %v8568, 7
        %v8570 = vsub.s32 0, %v8569
        %v8571 = vrot.slane %v8558, %v8570
        %v8572 = vlaneseq
        %v8573 = vshrl.u32 %v8572, 7
        %v8574 = vsub.s32 0, %v8573
        %v8575 = vrot.slane %v8559, %v8574
        %8576 = vrot.lane.b32.xlu0 %v8563, 38
        %v8577 = vpop.permute.xlu0 %8576
        %8578 = vrot.lane.b32.xlu0 %v8567, 38
        %v8579 = vpop.permute.xlu0 %8578
        %8580 = vrot.lane.b32.xlu0 %v8571, 38
        %v8581 = vpop.permute.xlu0 %8580
        %8582 = vrot.lane.b32.xlu0 %v8575, 38
        %v8583 = vpop.permute.xlu0 %8582
        %8588 = vst.msk [vmem:[%s286 + $0x5] sm:$0x1] %vm8297, %v8577
        %8589 = vst.msk [vmem:[%s286 + $0x15] sm:$0x1] %vm8297, %v8579
        %8590 = vst.msk [vmem:[%s286 + $0x25] sm:$0x1] %vm8297, %v8581
        %8591 = vst.msk [vmem:[%s286 + $0x35] sm:$0x1] %vm8297, %v8583
        %v8592 = vld [vmem:[#allocation6] sm:$0xf]
        %v8595 = vunpack.c.l.s4 1966171168
        %v8596 = vunpack.c.0.s8 %v8595
        %v8597 = vlaneseq
        %v8598 = vshrl.u32 %v8597, 7
        %v8599 = vsub.s32 %v8596, %v8598
        %v8600 = vrot.slane %v8592, %v8599
        %v8601 = vcombine.high %v8600, %v8600
        %v8603 = vunpack.c.l.s4 1966171168
        %v8604 = vunpack.c.0.s8 %v8603
        %v8605 = vlaneseq
        %v8606 = vshrl.u32 %v8605, 7
        %v8607 = vsub.s32 %v8604, %v8606
        %v8608 = vrot.slane %v8600, %v8607
        %v8610 = vunpack.c.l.s4 1966171168
        %v8611 = vunpack.c.0.s8 %v8610
        %v8612 = vlaneseq
        %v8613 = vshrl.u32 %v8612, 7
        %v8614 = vsub.s32 %v8611, %v8613
        %v8615 = vrot.slane %v8601, %v8614
        %v8616 = vcombine.high %v8608, %v8608
        %v8617 = vcombine.high %v8615, %v8615
        %v8618 = vlaneseq
        %v8619 = vshrl.u32 %v8618, 7
        %v8620 = vsub.s32 0, %v8619
        %v8621 = vrot.slane %v8608, %v8620
        %v8622 = vlaneseq
        %v8623 = vshrl.u32 %v8622, 7
        %v8624 = vsub.s32 0, %v8623
        %v8625 = vrot.slane %v8615, %v8624
        %v8626 = vlaneseq
        %v8627 = vshrl.u32 %v8626, 7
        %v8628 = vsub.s32 0, %v8627
        %v8629 = vrot.slane %v8616, %v8628
        %v8630 = vlaneseq
        %v8631 = vshrl.u32 %v8630, 7
        %v8632 = vsub.s32 0, %v8631
        %v8633 = vrot.slane %v8617, %v8632
        %8634 = vrot.lane.b32.xlu0 %v8621, 20
        %v8635 = vpop.permute.xlu0 %8634
        %8636 = vrot.lane.b32.xlu0 %v8625, 20
        %v8637 = vpop.permute.xlu0 %8636
        %8638 = vrot.lane.b32.xlu0 %v8629, 20
        %v8639 = vpop.permute.xlu0 %8638
        %8640 = vrot.lane.b32.xlu0 %v8633, 20
        %v8641 = vpop.permute.xlu0 %8640
        %8646 = vst.msk [vmem:[%s286 + $0x6] sm:$0x1] %vm8297, %v8635
        %8647 = vst.msk [vmem:[%s286 + $0x16] sm:$0x1] %vm8297, %v8637
        %8648 = vst.msk [vmem:[%s286 + $0x26] sm:$0x1] %vm8297, %v8639
        %8649 = vst.msk [vmem:[%s286 + $0x36] sm:$0x1] %vm8297, %v8641
        %v8650 = vld [vmem:[#allocation6] sm:$0xff]
        %v8653 = vunpack.c.l.s4 1966171168
        %v8654 = vunpack.c.0.s8 %v8653
        %v8655 = vlaneseq
        %v8656 = vshrl.u32 %v8655, 7
        %v8657 = vsub.s32 %v8654, %v8656
        %v8658 = vrot.slane %v8650, %v8657
        %v8659 = vcombine.high %v8658, %v8658
        %v8661 = vunpack.c.l.s4 1966171168
        %v8662 = vunpack.c.0.s8 %v8661
        %v8663 = vlaneseq
        %v8664 = vshrl.u32 %v8663, 7
        %v8665 = vsub.s32 %v8662, %v8664
        %v8666 = vrot.slane %v8658, %v8665
        %v8668 = vunpack.c.l.s4 1966171168
        %v8669 = vunpack.c.0.s8 %v8668
        %v8670 = vlaneseq
        %v8671 = vshrl.u32 %v8670, 7
        %v8672 = vsub.s32 %v8669, %v8671
        %v8673 = vrot.slane %v8659, %v8672
        %v8674 = vcombine.high %v8666, %v8666
        %v8675 = vcombine.high %v8673, %v8673
        %v8676 = vlaneseq
        %v8677 = vshrl.u32 %v8676, 7
        %v8678 = vsub.s32 0, %v8677
        %v8679 = vrot.slane %v8666, %v8678
        %v8680 = vlaneseq
        %v8681 = vshrl.u32 %v8680, 7
        %v8682 = vsub.s32 1, %v8681
        %v8683 = vrot.slane %v8666, %v8682
        %v8684 = vlaneseq
        %v8685 = vshrl.u32 %v8684, 7
        %v8686 = vsub.s32 0, %v8685
        %v8687 = vrot.slane %v8673, %v8686
        %v8688 = vlaneseq
        %v8689 = vshrl.u32 %v8688, 7
        %v8690 = vsub.s32 1, %v8689
        %v8691 = vrot.slane %v8673, %v8690
        %v8692 = vlaneseq
        %v8693 = vshrl.u32 %v8692, 7
        %v8694 = vsub.s32 0, %v8693
        %v8695 = vrot.slane %v8674, %v8694
        %v8696 = vlaneseq
        %v8697 = vshrl.u32 %v8696, 7
        %v8698 = vsub.s32 1, %v8697
        %v8699 = vrot.slane %v8674, %v8698
        %v8700 = vlaneseq
        %v8701 = vshrl.u32 %v8700, 7
        %v8702 = vsub.s32 0, %v8701
        %v8703 = vrot.slane %v8675, %v8702
        %v8704 = vlaneseq
        %v8705 = vshrl.u32 %v8704, 7
        %v8706 = vsub.s32 1, %v8705
        %v8707 = vrot.slane %v8675, %v8706
        %8708 = vrot.lane.b32.xlu0 %v8679, 2
        %v8709 = vpop.permute.xlu0 %8708
        %8710 = vrot.lane.b32.xlu0 %v8683, 2
        %v8711 = vpop.permute.xlu0 %8710
        %8712 = vrot.lane.b32.xlu0 %v8687, 2
        %v8713 = vpop.permute.xlu0 %8712
        %8714 = vrot.lane.b32.xlu0 %v8691, 2
        %v8715 = vpop.permute.xlu0 %8714
        %8716 = vrot.lane.b32.xlu0 %v8695, 2
        %v8717 = vpop.permute.xlu0 %8716
        %8718 = vrot.lane.b32.xlu0 %v8699, 2
        %v8719 = vpop.permute.xlu0 %8718
        %8720 = vrot.lane.b32.xlu0 %v8703, 2
        %v8721 = vpop.permute.xlu0 %8720
        %8722 = vrot.lane.b32.xlu0 %v8707, 2
        %v8723 = vpop.permute.xlu0 %8722
        %vm8724 = vcmask 15360
        %v8725 = vsel %vm8724, %v8709, %v8711
        %v8726 = vsel %vm8724, %v8713, %v8715
        %v8727 = vsel %vm8724, %v8717, %v8719
        %v8728 = vsel %vm8724, %v8721, %v8723
        %8733 = vst.msk [vmem:[%s286 + $0x7] sm:$0x1] %vm8297, %v8725
        %8734 = vst.msk [vmem:[%s286 + $0x17] sm:$0x1] %vm8297, %v8726
        %8735 = vst.msk [vmem:[%s286 + $0x27] sm:$0x1] %vm8297, %v8727
        %8736 = vst.msk [vmem:[%s286 + $0x37] sm:$0x1] %vm8297, %v8728
        %v8737 = vld [vmem:[#allocation6 + $0x4] sm:$0xf]
        %v8740 = vunpack.c.l.s4 1966171168
        %v8741 = vunpack.c.0.s8 %v8740
        %v8742 = vlaneseq
        %v8743 = vshrl.u32 %v8742, 7
        %v8744 = vsub.s32 %v8741, %v8743
        %v8745 = vrot.slane %v8737, %v8744
        %v8746 = vcombine.high %v8745, %v8745
        %v8748 = vunpack.c.l.s4 1966171168
        %v8749 = vunpack.c.0.s8 %v8748
        %v8750 = vlaneseq
        %v8751 = vshrl.u32 %v8750, 7
        %v8752 = vsub.s32 %v8749, %v8751
        %v8753 = vrot.slane %v8745, %v8752
        %v8755 = vunpack.c.l.s4 1966171168
        %v8756 = vunpack.c.0.s8 %v8755
        %v8757 = vlaneseq
        %v8758 = vshrl.u32 %v8757, 7
        %v8759 = vsub.s32 %v8756, %v8758
        %v8760 = vrot.slane %v8746, %v8759
        %v8761 = vcombine.high %v8753, %v8753
        %v8762 = vcombine.high %v8760, %v8760
        %v8763 = vlaneseq
        %v8764 = vshrl.u32 %v8763, 7
        %v8765 = vsub.s32 0, %v8764
        %v8766 = vrot.slane %v8753, %v8765
        %v8767 = vlaneseq
        %v8768 = vshrl.u32 %v8767, 7
        %v8769 = vsub.s32 0, %v8768
        %v8770 = vrot.slane %v8760, %v8769
        %v8771 = vlaneseq
        %v8772 = vshrl.u32 %v8771, 7
        %v8773 = vsub.s32 0, %v8772
        %v8774 = vrot.slane %v8761, %v8773
        %v8775 = vlaneseq
        %v8776 = vshrl.u32 %v8775, 7
        %v8777 = vsub.s32 0, %v8776
        %v8778 = vrot.slane %v8762, %v8777
        %8779 = vrot.lane.b32.xlu0 %v8766, 112
        %v8780 = vpop.permute.xlu0 %8779
        %8781 = vrot.lane.b32.xlu0 %v8770, 112
        %v8782 = vpop.permute.xlu0 %8781
        %8783 = vrot.lane.b32.xlu0 %v8774, 112
        %v8784 = vpop.permute.xlu0 %8783
        %8785 = vrot.lane.b32.xlu0 %v8778, 112
        %v8786 = vpop.permute.xlu0 %8785
        %8791 = vst.msk [vmem:[%s286 + $0x8] sm:$0x1] %vm8297, %v8780
        %8792 = vst.msk [vmem:[%s286 + $0x18] sm:$0x1] %vm8297, %v8782
        %8793 = vst.msk [vmem:[%s286 + $0x28] sm:$0x1] %vm8297, %v8784
        %8794 = vst.msk [vmem:[%s286 + $0x38] sm:$0x1] %vm8297, %v8786
        %v8795 = vld [vmem:[#allocation6 + $0x4] sm:$0xf]
        %v8798 = vunpack.c.l.s4 1966171168
        %v8799 = vunpack.c.0.s8 %v8798
        %v8800 = vlaneseq
        %v8801 = vshrl.u32 %v8800, 7
        %v8802 = vsub.s32 %v8799, %v8801
        %v8803 = vrot.slane %v8795, %v8802
        %v8804 = vcombine.high %v8803, %v8803
        %v8806 = vunpack.c.l.s4 1966171168
        %v8807 = vunpack.c.0.s8 %v8806
        %v8808 = vlaneseq
        %v8809 = vshrl.u32 %v8808, 7
        %v8810 = vsub.s32 %v8807, %v8809
        %v8811 = vrot.slane %v8803, %v8810
        %v8813 = vunpack.c.l.s4 1966171168
        %v8814 = vunpack.c.0.s8 %v8813
        %v8815 = vlaneseq
        %v8816 = vshrl.u32 %v8815, 7
        %v8817 = vsub.s32 %v8814, %v8816
        %v8818 = vrot.slane %v8804, %v8817
        %v8819 = vcombine.high %v8811, %v8811
        %v8820 = vcombine.high %v8818, %v8818
        %v8821 = vlaneseq
        %v8822 = vshrl.u32 %v8821, 7
        %v8823 = vsub.s32 0, %v8822
        %v8824 = vrot.slane %v8811, %v8823
        %v8825 = vlaneseq
        %v8826 = vshrl.u32 %v8825, 7
        %v8827 = vsub.s32 0, %v8826
        %v8828 = vrot.slane %v8818, %v8827
        %v8829 = vlaneseq
        %v8830 = vshrl.u32 %v8829, 7
        %v8831 = vsub.s32 0, %v8830
        %v8832 = vrot.slane %v8819, %v8831
        %v8833 = vlaneseq
        %v8834 = vshrl.u32 %v8833, 7
        %v8835 = vsub.s32 0, %v8834
        %v8836 = vrot.slane %v8820, %v8835
        %8837 = vrot.lane.b32.xlu0 %v8824, 94
        %v8838 = vpop.permute.xlu0 %8837
        %8839 = vrot.lane.b32.xlu0 %v8828, 94
        %v8840 = vpop.permute.xlu0 %8839
        %8841 = vrot.lane.b32.xlu0 %v8832, 94
        %v8842 = vpop.permute.xlu0 %8841
        %8843 = vrot.lane.b32.xlu0 %v8836, 94
        %v8844 = vpop.permute.xlu0 %8843
        %8849 = vst.msk [vmem:[%s286 + $0x9] sm:$0x1] %vm8297, %v8838
        %8850 = vst.msk [vmem:[%s286 + $0x19] sm:$0x1] %vm8297, %v8840
        %8851 = vst.msk [vmem:[%s286 + $0x29] sm:$0x1] %vm8297, %v8842
        %8852 = vst.msk [vmem:[%s286 + $0x39] sm:$0x1] %vm8297, %v8844
        %v8853 = vld [vmem:[#allocation6 + $0x4] sm:$0xf]
        %v8856 = vunpack.c.l.s4 1966171168
        %v8857 = vunpack.c.0.s8 %v8856
        %v8858 = vlaneseq
        %v8859 = vshrl.u32 %v8858, 7
        %v8860 = vsub.s32 %v8857, %v8859
        %v8861 = vrot.slane %v8853, %v8860
        %v8862 = vcombine.high %v8861, %v8861
        %v8864 = vunpack.c.l.s4 1966171168
        %v8865 = vunpack.c.0.s8 %v8864
        %v8866 = vlaneseq
        %v8867 = vshrl.u32 %v8866, 7
        %v8868 = vsub.s32 %v8865, %v8867
        %v8869 = vrot.slane %v8861, %v8868
        %v8871 = vunpack.c.l.s4 1966171168
        %v8872 = vunpack.c.0.s8 %v8871
        %v8873 = vlaneseq
        %v8874 = vshrl.u32 %v8873, 7
        %v8875 = vsub.s32 %v8872, %v8874
        %v8876 = vrot.slane %v8862, %v8875
        %v8877 = vcombine.high %v8869, %v8869
        %v8878 = vcombine.high %v8876, %v8876
        %v8879 = vlaneseq
        %v8880 = vshrl.u32 %v8879, 7
        %v8881 = vsub.s32 0, %v8880
        %v8882 = vrot.slane %v8869, %v8881
        %v8883 = vlaneseq
        %v8884 = vshrl.u32 %v8883, 7
        %v8885 = vsub.s32 0, %v8884
        %v8886 = vrot.slane %v8876, %v8885
        %v8887 = vlaneseq
        %v8888 = vshrl.u32 %v8887, 7
        %v8889 = vsub.s32 0, %v8888
        %v8890 = vrot.slane %v8877, %v8889
        %v8891 = vlaneseq
        %v8892 = vshrl.u32 %v8891, 7
        %v8893 = vsub.s32 0, %v8892
        %v8894 = vrot.slane %v8878, %v8893
        %8895 = vrot.lane.b32.xlu0 %v8882, 76
        %v8896 = vpop.permute.xlu0 %8895
        %8897 = vrot.lane.b32.xlu0 %v8886, 76
        %v8898 = vpop.permute.xlu0 %8897
        %8899 = vrot.lane.b32.xlu0 %v8890, 76
        %v8900 = vpop.permute.xlu0 %8899
        %8901 = vrot.lane.b32.xlu0 %v8894, 76
        %v8902 = vpop.permute.xlu0 %8901
        %8907 = vst.msk [vmem:[%s286 + $0xa] sm:$0x1] %vm8297, %v8896
        %8908 = vst.msk [vmem:[%s286 + $0x1a] sm:$0x1] %vm8297, %v8898
        %8909 = vst.msk [vmem:[%s286 + $0x2a] sm:$0x1] %vm8297, %v8900
        %8910 = vst.msk [vmem:[%s286 + $0x3a] sm:$0x1] %vm8297, %v8902
        %v8911 = vld [vmem:[#allocation6 + $0x4] sm:$0xf]
        %v8914 = vunpack.c.l.s4 1966171168
        %v8915 = vunpack.c.0.s8 %v8914
        %v8916 = vlaneseq
        %v8917 = vshrl.u32 %v8916, 7
        %v8918 = vsub.s32 %v8915, %v8917
        %v8919 = vrot.slane %v8911, %v8918
        %v8920 = vcombine.high %v8919, %v8919
        %v8922 = vunpack.c.l.s4 1966171168
        %v8923 = vunpack.c.0.s8 %v8922
        %v8924 = vlaneseq
        %v8925 = vshrl.u32 %v8924, 7
        %v8926 = vsub.s32 %v8923, %v8925
        %v8927 = vrot.slane %v8919, %v8926
        %v8929 = vunpack.c.l.s4 1966171168
        %v8930 = vunpack.c.0.s8 %v8929
        %v8931 = vlaneseq
        %v8932 = vshrl.u32 %v8931, 7
        %v8933 = vsub.s32 %v8930, %v8932
        %v8934 = vrot.slane %v8920, %v8933
        %v8935 = vcombine.high %v8927, %v8927
        %v8936 = vcombine.high %v8934, %v8934
        %v8937 = vlaneseq
        %v8938 = vshrl.u32 %v8937, 7
        %v8939 = vsub.s32 0, %v8938
        %v8940 = vrot.slane %v8927, %v8939
        %v8941 = vlaneseq
        %v8942 = vshrl.u32 %v8941, 7
        %v8943 = vsub.s32 0, %v8942
        %v8944 = vrot.slane %v8934, %v8943
        %v8945 = vlaneseq
        %v8946 = vshrl.u32 %v8945, 7
        %v8947 = vsub.s32 0, %v8946
        %v8948 = vrot.slane %v8935, %v8947
        %v8949 = vlaneseq
        %v8950 = vshrl.u32 %v8949, 7
        %v8951 = vsub.s32 0, %v8950
        %v8952 = vrot.slane %v8936, %v8951
        %8953 = vrot.lane.b32.xlu0 %v8940, 58
        %v8954 = vpop.permute.xlu0 %8953
        %8955 = vrot.lane.b32.xlu0 %v8944, 58
        %v8956 = vpop.permute.xlu0 %8955
        %8957 = vrot.lane.b32.xlu0 %v8948, 58
        %v8958 = vpop.permute.xlu0 %8957
        %8959 = vrot.lane.b32.xlu0 %v8952, 58
        %v8960 = vpop.permute.xlu0 %8959
        %8965 = vst.msk [vmem:[%s286 + $0xb] sm:$0x1] %vm8297, %v8954
        %8966 = vst.msk [vmem:[%s286 + $0x1b] sm:$0x1] %vm8297, %v8956
        %8967 = vst.msk [vmem:[%s286 + $0x2b] sm:$0x1] %vm8297, %v8958
        %8968 = vst.msk [vmem:[%s286 + $0x3b] sm:$0x1] %vm8297, %v8960
        %v8969 = vld [vmem:[#allocation6 + $0x4] sm:$0xf]
        %v8972 = vunpack.c.l.s4 1966171168
        %v8973 = vunpack.c.0.s8 %v8972
        %v8974 = vlaneseq
        %v8975 = vshrl.u32 %v8974, 7
        %v8976 = vsub.s32 %v8973, %v8975
        %v8977 = vrot.slane %v8969, %v8976
        %v8978 = vcombine.high %v8977, %v8977
        %v8980 = vunpack.c.l.s4 1966171168
        %v8981 = vunpack.c.0.s8 %v8980
        %v8982 = vlaneseq
        %v8983 = vshrl.u32 %v8982, 7
        %v8984 = vsub.s32 %v8981, %v8983
        %v8985 = vrot.slane %v8977, %v8984
        %v8987 = vunpack.c.l.s4 1966171168
        %v8988 = vunpack.c.0.s8 %v8987
        %v8989 = vlaneseq
        %v8990 = vshrl.u32 %v8989, 7
        %v8991 = vsub.s32 %v8988, %v8990
        %v8992 = vrot.slane %v8978, %v8991
        %v8993 = vcombine.high %v8985, %v8985
        %v8994 = vcombine.high %v8992, %v8992
        %v8995 = vlaneseq
        %v8996 = vshrl.u32 %v8995, 7
        %v8997 = vsub.s32 0, %v8996
        %v8998 = vrot.slane %v8985, %v8997
        %v8999 = vlaneseq
        %v9000 = vshrl.u32 %v8999, 7
        %v9001 = vsub.s32 0, %v9000
        %v9002 = vrot.slane %v8992, %v9001
        %v9003 = vlaneseq
        %v9004 = vshrl.u32 %v9003, 7
        %v9005 = vsub.s32 0, %v9004
        %v9006 = vrot.slane %v8993, %v9005
        %v9007 = vlaneseq
        %v9008 = vshrl.u32 %v9007, 7
        %v9009 = vsub.s32 0, %v9008
        %v9010 = vrot.slane %v8994, %v9009
        %9011 = vrot.lane.b32.xlu0 %v8998, 40
        %v9012 = vpop.permute.xlu0 %9011
        %9013 = vrot.lane.b32.xlu0 %v9002, 40
        %v9014 = vpop.permute.xlu0 %9013
        %9015 = vrot.lane.b32.xlu0 %v9006, 40
        %v9016 = vpop.permute.xlu0 %9015
        %9017 = vrot.lane.b32.xlu0 %v9010, 40
        %v9018 = vpop.permute.xlu0 %9017
        %9023 = vst.msk [vmem:[%s286 + $0xc] sm:$0x1] %vm8297, %v9012
        %9024 = vst.msk [vmem:[%s286 + $0x1c] sm:$0x1] %vm8297, %v9014
        %9025 = vst.msk [vmem:[%s286 + $0x2c] sm:$0x1] %vm8297, %v9016
        %9026 = vst.msk [vmem:[%s286 + $0x3c] sm:$0x1] %vm8297, %v9018
        %v9027 = vld [vmem:[#allocation6 + $0x4] sm:$0xf]
        %v9030 = vunpack.c.l.s4 1966171168
        %v9031 = vunpack.c.0.s8 %v9030
        %v9032 = vlaneseq
        %v9033 = vshrl.u32 %v9032, 7
        %v9034 = vsub.s32 %v9031, %v9033
        %v9035 = vrot.slane %v9027, %v9034
        %v9036 = vcombine.high %v9035, %v9035
        %v9038 = vunpack.c.l.s4 1966171168
        %v9039 = vunpack.c.0.s8 %v9038
        %v9040 = vlaneseq
        %v9041 = vshrl.u32 %v9040, 7
        %v9042 = vsub.s32 %v9039, %v9041
        %v9043 = vrot.slane %v9035, %v9042
        %v9045 = vunpack.c.l.s4 1966171168
        %v9046 = vunpack.c.0.s8 %v9045
        %v9047 = vlaneseq
        %v9048 = vshrl.u32 %v9047, 7
        %v9049 = vsub.s32 %v9046, %v9048
        %v9050 = vrot.slane %v9036, %v9049
        %v9051 = vcombine.high %v9043, %v9043
        %v9052 = vcombine.high %v9050, %v9050
        %v9053 = vlaneseq
        %v9054 = vshrl.u32 %v9053, 7
        %v9055 = vsub.s32 0, %v9054
        %v9056 = vrot.slane %v9043, %v9055
        %v9057 = vlaneseq
        %v9058 = vshrl.u32 %v9057, 7
        %v9059 = vsub.s32 0, %v9058
        %v9060 = vrot.slane %v9050, %v9059
        %v9061 = vlaneseq
        %v9062 = vshrl.u32 %v9061, 7
        %v9063 = vsub.s32 0, %v9062
        %v9064 = vrot.slane %v9051, %v9063
        %v9065 = vlaneseq
        %v9066 = vshrl.u32 %v9065, 7
        %v9067 = vsub.s32 0, %v9066
        %v9068 = vrot.slane %v9052, %v9067
        %9069 = vrot.lane.b32.xlu0 %v9056, 22
        %v9070 = vpop.permute.xlu0 %9069
        %9071 = vrot.lane.b32.xlu0 %v9060, 22
        %v9072 = vpop.permute.xlu0 %9071
        %9073 = vrot.lane.b32.xlu0 %v9064, 22
        %v9074 = vpop.permute.xlu0 %9073
        %9075 = vrot.lane.b32.xlu0 %v9068, 22
        %v9076 = vpop.permute.xlu0 %9075
        %9081 = vst.msk [vmem:[%s286 + $0xd] sm:$0x1] %vm8297, %v9070
        %9082 = vst.msk [vmem:[%s286 + $0x1d] sm:$0x1] %vm8297, %v9072
        %9083 = vst.msk [vmem:[%s286 + $0x2d] sm:$0x1] %vm8297, %v9074
        %9084 = vst.msk [vmem:[%s286 + $0x3d] sm:$0x1] %vm8297, %v9076
        %v9085 = vld [vmem:[#allocation6 + $0x4] sm:$0xff]
        %v9088 = vunpack.c.l.s4 1966171168
        %v9089 = vunpack.c.0.s8 %v9088
        %v9090 = vlaneseq
        %v9091 = vshrl.u32 %v9090, 7
        %v9092 = vsub.s32 %v9089, %v9091
        %v9093 = vrot.slane %v9085, %v9092
        %v9094 = vcombine.high %v9093, %v9093
        %v9096 = vunpack.c.l.s4 1966171168
        %v9097 = vunpack.c.0.s8 %v9096
        %v9098 = vlaneseq
        %v9099 = vshrl.u32 %v9098, 7
        %v9100 = vsub.s32 %v9097, %v9099
        %v9101 = vrot.slane %v9093, %v9100
        %v9103 = vunpack.c.l.s4 1966171168
        %v9104 = vunpack.c.0.s8 %v9103
        %v9105 = vlaneseq
        %v9106 = vshrl.u32 %v9105, 7
        %v9107 = vsub.s32 %v9104, %v9106
        %v9108 = vrot.slane %v9094, %v9107
        %v9109 = vcombine.high %v9101, %v9101
        %v9110 = vcombine.high %v9108, %v9108
        %v9111 = vlaneseq
        %v9112 = vshrl.u32 %v9111, 7
        %v9113 = vsub.s32 0, %v9112
        %v9114 = vrot.slane %v9101, %v9113
        %v9115 = vlaneseq
        %v9116 = vshrl.u32 %v9115, 7
        %v9117 = vsub.s32 1, %v9116
        %v9118 = vrot.slane %v9101, %v9117
        %v9119 = vlaneseq
        %v9120 = vshrl.u32 %v9119, 7
        %v9121 = vsub.s32 0, %v9120
        %v9122 = vrot.slane %v9108, %v9121
        %v9123 = vlaneseq
        %v9124 = vshrl.u32 %v9123, 7
        %v9125 = vsub.s32 1, %v9124
        %v9126 = vrot.slane %v9108, %v9125
        %v9127 = vlaneseq
        %v9128 = vshrl.u32 %v9127, 7
        %v9129 = vsub.s32 0, %v9128
        %v9130 = vrot.slane %v9109, %v9129
        %v9131 = vlaneseq
        %v9132 = vshrl.u32 %v9131, 7
        %v9133 = vsub.s32 1, %v9132
        %v9134 = vrot.slane %v9109, %v9133
        %v9135 = vlaneseq
        %v9136 = vshrl.u32 %v9135, 7
        %v9137 = vsub.s32 0, %v9136
        %v9138 = vrot.slane %v9110, %v9137
        %v9139 = vlaneseq
        %v9140 = vshrl.u32 %v9139, 7
        %v9141 = vsub.s32 1, %v9140
        %v9142 = vrot.slane %v9110, %v9141
        %9143 = vrot.lane.b32.xlu0 %v9114, 4
        %v9144 = vpop.permute.xlu0 %9143
        %9145 = vrot.lane.b32.xlu0 %v9118, 4
        %v9146 = vpop.permute.xlu0 %9145
        %9147 = vrot.lane.b32.xlu0 %v9122, 4
        %v9148 = vpop.permute.xlu0 %9147
        %9149 = vrot.lane.b32.xlu0 %v9126, 4
        %v9150 = vpop.permute.xlu0 %9149
        %9151 = vrot.lane.b32.xlu0 %v9130, 4
        %v9152 = vpop.permute.xlu0 %9151
        %9153 = vrot.lane.b32.xlu0 %v9134, 4
        %v9154 = vpop.permute.xlu0 %9153
        %9155 = vrot.lane.b32.xlu0 %v9138, 4
        %v9156 = vpop.permute.xlu0 %9155
        %9157 = vrot.lane.b32.xlu0 %v9142, 4
        %v9158 = vpop.permute.xlu0 %9157
        %v9159 = vsel %vm5392, %v9144, %v9146
        %v9160 = vsel %vm5392, %v9148, %v9150
        %v9161 = vsel %vm5392, %v9152, %v9154
        %v9162 = vsel %vm5392, %v9156, %v9158
        %9167 = vst.msk [vmem:[%s286 + $0xe] sm:$0x1] %vm8297, %v9159
        %9168 = vst.msk [vmem:[%s286 + $0x1e] sm:$0x1] %vm8297, %v9160
        %9169 = vst.msk [vmem:[%s286 + $0x2e] sm:$0x1] %vm8297, %v9161
        %9170 = vst.msk [vmem:[%s286 + $0x3e] sm:$0x1] %vm8297, %v9162
        %v9171 = vld [vmem:[#allocation6 + $0x8] sm:$0xf]
        %v9174 = vunpack.c.l.s4 1966171168
        %v9175 = vunpack.c.0.s8 %v9174
        %v9176 = vlaneseq
        %v9177 = vshrl.u32 %v9176, 7
        %v9178 = vsub.s32 %v9175, %v9177
        %v9179 = vrot.slane %v9171, %v9178
        %v9180 = vcombine.high %v9179, %v9179
        %v9182 = vunpack.c.l.s4 1966171168
        %v9183 = vunpack.c.0.s8 %v9182
        %v9184 = vlaneseq
        %v9185 = vshrl.u32 %v9184, 7
        %v9186 = vsub.s32 %v9183, %v9185
        %v9187 = vrot.slane %v9179, %v9186
        %v9189 = vunpack.c.l.s4 1966171168
        %v9190 = vunpack.c.0.s8 %v9189
        %v9191 = vlaneseq
        %v9192 = vshrl.u32 %v9191, 7
        %v9193 = vsub.s32 %v9190, %v9192
        %v9194 = vrot.slane %v9180, %v9193
        %v9195 = vcombine.high %v9187, %v9187
        %v9196 = vcombine.high %v9194, %v9194
        %v9197 = vlaneseq
        %v9198 = vshrl.u32 %v9197, 7
        %v9199 = vsub.s32 0, %v9198
        %v9200 = vrot.slane %v9187, %v9199
        %v9201 = vlaneseq
        %v9202 = vshrl.u32 %v9201, 7
        %v9203 = vsub.s32 0, %v9202
        %v9204 = vrot.slane %v9194, %v9203
        %v9205 = vlaneseq
        %v9206 = vshrl.u32 %v9205, 7
        %v9207 = vsub.s32 0, %v9206
        %v9208 = vrot.slane %v9195, %v9207
        %v9209 = vlaneseq
        %v9210 = vshrl.u32 %v9209, 7
        %v9211 = vsub.s32 0, %v9210
        %v9212 = vrot.slane %v9196, %v9211
        %9213 = vrot.lane.b32.xlu0 %v9200, 114
        %v9214 = vpop.permute.xlu0 %9213
        %9215 = vrot.lane.b32.xlu0 %v9204, 114
        %v9216 = vpop.permute.xlu0 %9215
        %9217 = vrot.lane.b32.xlu0 %v9208, 114
        %v9218 = vpop.permute.xlu0 %9217
        %9219 = vrot.lane.b32.xlu0 %v9212, 114
        %v9220 = vpop.permute.xlu0 %9219
        %9225 = vst.msk [vmem:[%s286 + $0xf] sm:$0x1] %vm8297, %v9214
        %9226 = vst.msk [vmem:[%s286 + $0x1f] sm:$0x1] %vm8297, %v9216
        %9227 = vst.msk [vmem:[%s286 + $0x2f] sm:$0x1] %vm8297, %v9218
        %9228 = vst.msk [vmem:[%s286 + $0x3f] sm:$0x1] %vm8297, %v9220
        %s9229 = sand.u32 %s186, 1
        %s9230 = scalar_lea.sflag [#allocation8], %s9229
        %s9231 = sand.u32 %s186, 1
        %s9232 = smul.addr %s9231, 64
        %s9233 = scalar_lea.vmem [#allocation7], %s9232
        // Predicated region
        $region49: #{decoder_forward.1} parent=47 // pred_check
          %p9234 = pneg %p196
        $region50: #{decoder_forward.1} parent=47 // pred_check_branch
          %9236 = sbr.rel (%p9234) target = $region52
        $region51: #{decoder_forward.1} parent=47 // pred_region
          %s9238 = ssub.s32 1024, 1024
          %9239 = vsyncadd %s9230, %s9238
          %s9240 = smul.addr %s21, 8
          %s9241 = smul.addr %s9240, 128
          %s9242 = scalar_lea.hbm %s7, %s9241
          %s9243 = sshll.u32 %s9233, 4
          %s9244 = int_to_ptr.vmem [resolvable:$true] %s9243
          %9249 = dma.vmem_to_hbm [thread:$0]  %s9244, 1024, %s9242, %s9230, 128, 128, 8
        $region52: #{decoder_forward.1} parent=47 // pred_fallthru
          _
      $region48: #{decoder_forward.1} parent=5 // pred_fallthru
        _
      %p9250 = scmp.le.s32.totalorder 2, %s16
      // Predicated region
      $region53: #{decoder_forward.1} parent=5 // pred_check
        %p9251 = pneg %p9250
      $region54: #{decoder_forward.1} parent=5 // pred_check_branch
        %9253 = sbr.rel (%p9251) target = $region56
      $region55: #{decoder_forward.1} parent=5 // pred_region
        %s9254 = ssub.s32 %s16, 2
        // Predicated region
        $region57: #{decoder_forward.1} parent=55 // pred_check
          %p9255 = pneg %p202
        $region58: #{decoder_forward.1} parent=55 // pred_check_branch
          %9257 = sbr.rel (%p9255) target = $region60
        $region59: #{decoder_forward.1} parent=55 // pred_region
          %s9258 = sand.u32 %s187, 1
          %s9259 = scalar_lea.sflag [#allocation8], %s9258
          %s9260 = sand.u32 %s187, 1
          %s9261 = smul.addr %s9260, 64
          %s9262 = scalar_lea.vmem [#allocation7], %s9261
          %9263 = dma.done %s9259, 1024
        $region60: #{decoder_forward.1} parent=55 // pred_fallthru
          _
      $region56: #{decoder_forward.1} parent=5 // pred_fallthru
        _
    $region6: #{decoder_forward.1} parent=1 // loop_footer
      %s20 = sadd.s32 1, %s16
    $region7: #{decoder_forward.1} parent=1 // loop_footer_branch
      %15 = sbr.rel target = $region3
    $region8: #{decoder_forward.1} parent=1 // loop_exit
      _
    %9264 = vsyncpa [#allocation8], 1
    %s9265 = scalar_lea.sflag [#allocation8], 1
    %9266 = vsyncpa %s9265, 1

</llo_original>
